<compile_context>
chip_gen: v7x
topology: tpu7x:2x2x1
jax: 0.10.0
libtpu: 0.0.40
codegen_flags: <defaults>
</compile_context>

<pallas_src>
import numpy as np
import jax
import jax.numpy as jnp
from jax.experimental import pallas as pl
from jax.experimental.pallas import tpu as pltpu

TB = 128                              # batch tile (lane-minor); multiple of 128
D1 = (0, 1, 7, 8)                     # distinct conv1 lane shifts (units of TB)
D2 = (0, 1, 2, 7, 8, 9, 14, 15, 16)   # distinct conv2 lane shifts (units of TB)
N1 = 41                               # conv1 tile positions kept (covers sh,sw<6)
N2 = 25                               # conv2 tile positions kept (covers wh,ww<4)


def _max4(a, b, c, d):
    return jnp.maximum(jnp.maximum(a, b), jnp.maximum(c, d))


# ------------------------------ fused kernel --------------------------------

def _lenet_kernel(xr_ref, w1_ref, b1_ref, w2_ref, b2_ref, w3_ref, b3_ref,
                  w4_ref, b4_ref, out_ref, x4_ref, x2_ref):
    # ---- conv1: stack the 4 lane-shifted residue copies (all 128-aligned) ---
    for g, d in enumerate(D1):
        x4_ref[g * 16:(g + 1) * 16, :] = xr_ref[:, d * TB:(d + N1) * TB]
    y1 = jnp.dot(w1_ref[...], x4_ref[...], preferred_element_type=jnp.float32)
    y1 = jnp.maximum(y1 + b1_ref[...], 0.0)                 # [128, N1*TB]

    # ---- pool1 (2x2): elementwise max over 4 residue classes, same lane ----
    pblocks = []
    for ph in range(2):
        for pw in range(2):
            cls = [((2 * ph + r) * 4 + (2 * pw + s))
                   for r in range(2) for s in range(2)]
            pblocks.append(_max4(*[y1[c * 8:(c + 1) * 8, :] for c in cls]))
    pstack = jnp.concatenate(pblocks, axis=0)               # [32, N1*TB]

    # ---- conv2: stack the 9 lane-shifted copies of the pooled planes --------
    for gi, d in enumerate(D2):
        x2_ref[gi * 32:(gi + 1) * 32, :] = pstack[:, d * TB:(d + N2) * TB]
    y2 = jnp.dot(w2_ref[...], x2_ref[...], preferred_element_type=jnp.float32)
    y2 = jnp.maximum(y2 + b2_ref[...], 0.0)                 # [64, N2*TB]

    # ---- pool2 (2x2): elementwise max over the 4 conv2 output parity classes
    z = _max4(y2[0:16, :], y2[16:32, :], y2[32:48, :], y2[48:64, :])  # [16, N2*TB]

    # ---- flatten: 16 aligned [16, TB] lane slices -> [256, TB] --------------
    a = jnp.concatenate(
        [z[:, (wh * 7 + ww) * TB:(wh * 7 + ww + 1) * TB]
         for wh in range(4) for ww in range(4)], axis=0)    # [256, TB]

    # ---- fc1 + relu, fc2 + softmax (batch stays on lanes) -------------------
    h = jnp.dot(w3_ref[...], a, preferred_element_type=jnp.float32)
    h = jnp.maximum(h + b3_ref[...], 0.0)                   # [128, TB]
    logits = jnp.dot(w4_ref[...], h, preferred_element_type=jnp.float32) + b4_ref[...]
    logits = logits - jnp.max(logits, axis=0, keepdims=True)
    e = jnp.exp(logits)
    out_ref[...] = e / jnp.sum(e, axis=0, keepdims=True)    # exact normalization


# ------------------------------ host wrappers --------------------------------

def prepare_params(params):
    """One-time re-layout of the PyTorch-style weights (done once)."""
    c1w = np.asarray(params["conv1_w"], np.float32)         # [6, 1, 5, 5]
    c1b = np.asarray(params["conv1_b"], np.float32)
    c2w = np.asarray(params["conv2_w"], np.float32)         # [16, 6, 5, 5]
    c2b = np.asarray(params["conv2_b"], np.float32)
    f1w = np.asarray(params["fc1_w"], np.float32)           # [120, 256]
    f1b = np.asarray(params["fc1_b"], np.float32)
    f2w = np.asarray(params["fc2_w"], np.float32)           # [10, 120]
    f2b = np.asarray(params["fc2_b"], np.float32)

    # conv1 as ONE [128, 64] matmul: row = (out residue class)*8 + oc,
    # col = (shift group)*16 + (input residue class).
    w1 = np.zeros((128, 64), np.float32)
    b1 = np.zeros((128, 1), np.float32)
    for mh in range(4):
        for mw in range(4):
            c = mh * 4 + mw
            b1[c * 8:c * 8 + 6, 0] = c1b
            for kh in range(5):
                for kw in range(5):
                    rh, dh = (mh + kh) % 4, (mh + kh) // 4
                    rw, dw = (mw + kw) % 4, (mw + kw) // 4
                    g = D1.index(7 * dh + dw)
                    ci = rh * 4 + rw
                    w1[c * 8:c * 8 + 6, g * 16 + ci] = c1w[:, 0, kh, kw]

    # conv2 as ONE [64, 288] matmul: row = (out parity class)*16 + oc,
    # col = (shift)*32 + (input parity class)*8 + ic.
    w2 = np.zeros((64, 288), np.float32)
    b2 = np.zeros((64, 1), np.float32)
    for sh in range(2):
        for sw in range(2):
            cc = sh * 2 + sw
            b2[cc * 16:(cc + 1) * 16, 0] = c2b
            for kh in range(5):
                for kw in range(5):
                    ph, eh = (sh + kh) % 2, (sh + kh) // 2
                    pw, ew = (sw + kw) % 2, (sw + kw) // 2
                    gi = D2.index(7 * eh + ew)
                    pp = ph * 2 + pw
                    col = gi * 32 + pp * 8
                    w2[cc * 16:(cc + 1) * 16, col:col + 6] = c2w[:, :, kh, kw]

    # fc1: kernel activation row order is (wh*4+ww)*16 + oc ; torch is oc*16 + (wh*4+ww)
    w3 = np.zeros((128, 256), np.float32)
    w3[:120, :] = f1w.reshape(120, 16, 16).transpose(0, 2, 1).reshape(120, 256)
    b3 = np.zeros((128, 1), np.float32)
    b3[:120, 0] = f1b

    w4 = np.zeros((10, 128), np.float32)
    w4[:, :120] = f2w
    b4 = f2b.reshape(10, 1).astype(np.float32)

    out = dict(w1=w1, b1=b1, w2=w2, b2=b2, w3=w3, b3=b3, w4=w4, b4=b4)
    return {k: jnp.asarray(v) for k, v in out.items()}


def nn_forward(x, prep):
    """x: [B, 1, 28, 28] float32 (NCHW). Returns [B, 10] softmax probs."""
    B = x.shape[0]
    nt = -(-B // TB)                   # number of batch tiles (batch padded up)
    Bp = nt * TB

    xp = jnp.asarray(x, jnp.float32).reshape(B, 28, 28)
    if Bp != B:
        xp = jnp.pad(xp, ((0, Bp - B), (0, 0), (0, 0)))
    # residue-mod-4 split, batch-minor lanes: xr[t, rh*4+rw, (th*7+tw)*TB + b]
    xr = (xp.reshape(nt, TB, 7, 4, 7, 4)
            .transpose(0, 3, 5, 2, 4, 1)
            .reshape(nt, 16, 49 * TB))

    const = lambda t: (0, 0)
    out = pl.pallas_call(
        _lenet_kernel,
        out_shape=jax.ShapeDtypeStruct((10, Bp), jnp.float32),
        grid_spec=pltpu.PrefetchScalarGridSpec(
            num_scalar_prefetch=0,
            grid=(nt,),
            in_specs=[
                pl.BlockSpec((None, 16, 49 * TB), lambda t: (t, 0, 0)),  # input
                pl.BlockSpec((128, 64), const),     # conv1 (folded) weights
                pl.BlockSpec((128, 1), const),      # conv1 bias
                pl.BlockSpec((64, 288), const),     # conv2 (folded) weights
                pl.BlockSpec((64, 1), const),       # conv2 bias
                pl.BlockSpec((128, 256), const),    # fc1 weights (re-indexed)
                pl.BlockSpec((128, 1), const),      # fc1 bias
                pl.BlockSpec((10, 128), const),     # fc2 weights
                pl.BlockSpec((10, 1), const),       # fc2 bias
            ],
            out_specs=pl.BlockSpec((10, TB), lambda t: (0, t)),
            scratch_shapes=[
                pltpu.VMEM((16 * len(D1), N1 * TB), jnp.float32),  # shifted input
                pltpu.VMEM((32 * len(D2), N2 * TB), jnp.float32),  # shifted pool1
            ],
        ),
        compiler_params=pltpu.CompilerParams(
            # on v7x, pltpu.CORE_PARALLEL can be used to split tiles across TCs
            dimension_semantics=("parallel",),
            vmem_limit_bytes=40 * 1024 * 1024,
        ),
    )(xr, prep["w1"], prep["b1"], prep["w2"], prep["b2"],
      prep["w3"], prep["b3"], prep["w4"], prep["b4"])
    return out.T[:B]


# ---------------------------- reference (pure JAX) ---------------------------

def nn_forward_ref(x, params):
    def conv(x, w, b):
        y = jax.lax.conv_general_dilated(
            x, w, window_strides=(1, 1), padding="VALID",
            dimension_numbers=("NCHW", "OIHW", "NCHW"))
        return jnp.maximum(y + b[None, :, None, None], 0.0)

    def pool(x):  # NCHW 2x2 maxpool
        B, C, H, W = x.shape
        return jnp.max(x.reshape(B, C, H // 2, 2, W // 2, 2), axis=(3, 5))

    y = pool(conv(x, params["conv1_w"], params["conv1_b"]))
    y = pool(conv(y, params["conv2_w"], params["conv2_b"]))
    flat = y.reshape(y.shape[0], 16 * 4 * 4)
    h = jnp.maximum(flat @ params["fc1_w"].T + params["fc1_b"], 0.0)
    logits = h @ params["fc2_w"].T + params["fc2_b"]
    return jax.nn.softmax(logits, axis=1)


# --------------------------------- main ---------------------------------------

def init_params(key):
    ks = jax.random.split(key, 8)
    s = 0.1
    return {
        "conv1_w": s * jax.random.normal(ks[0], (6, 1, 5, 5), jnp.float32),
        "conv1_b": s * jax.random.normal(ks[1], (6,), jnp.float32),
        "conv2_w": s * jax.random.normal(ks[2], (16, 6, 5, 5), jnp.float32),
        "conv2_b": s * jax.random.normal(ks[3], (16,), jnp.float32),
        "fc1_w":  s * jax.random.normal(ks[4], (120, 256), jnp.float32),
        "fc1_b":  s * jax.random.normal(ks[5], (120,), jnp.float32),
        "fc2_w":  s * jax.random.normal(ks[6], (10, 120), jnp.float32),
        "fc2_b":  s * jax.random.normal(ks[7], (10,), jnp.float32),
    }


if __name__ == "__main__":
    key = jax.random.PRNGKey(0)
    pkey, xkey = jax.random.split(key)
    params = init_params(pkey)
    prep = prepare_params(params)

    # MNIST-shaped input required by fc1 (16*4*4): batch=2, 1 channel, 28x28 NCHW.
    x = jax.random.normal(xkey, (2, 1, 28, 28), jnp.float32)

    fwd = jax.jit(nn_forward)
    out = jax.block_until_ready(fwd(x, prep))
    ref = jax.block_until_ready(nn_forward_ref(x, params))

    assert out.shape == (2, 10)
    assert bool(jnp.all(jnp.isfinite(out)))
    # exact softmax normalization in the kernel -> rows sum to 1
    assert jnp.allclose(jnp.sum(out, axis=1), 1.0, atol=1e-3)
    # tolerance covers MXU default-precision matmuls on both paths
    assert jnp.allclose(out, ref, atol=3e-3, rtol=3e-2)
    print("KERNEL_OK")
</pallas_src>

<mosaic_0001>
module attributes {stable_mosaic.version = 11 : i64} {
  func.func @_lenet_kernel(%arg0: i32, %arg1: memref<1x16x6272xf32, #tpu.memory_space<vmem>>, %arg2: memref<128x64xf32, #tpu.memory_space<vmem>>, %arg3: memref<128x1xf32, #tpu.memory_space<vmem>>, %arg4: memref<64x288xf32, #tpu.memory_space<vmem>>, %arg5: memref<64x1xf32, #tpu.memory_space<vmem>>, %arg6: memref<128x256xf32, #tpu.memory_space<vmem>>, %arg7: memref<128x1xf32, #tpu.memory_space<vmem>>, %arg8: memref<10x128xf32, #tpu.memory_space<vmem>>, %arg9: memref<10x1xf32, #tpu.memory_space<vmem>>, %arg10: memref<10x128xf32, #tpu.memory_space<vmem>>, %arg11: memref<64x5248xf32, #tpu.memory_space<vmem>>, %arg12: memref<288x3200xf32, #tpu.memory_space<vmem>>) attributes {dimension_semantics = [#tpu.dimension_semantics<parallel>], iteration_bounds = array<i64: 1>, scalar_prefetch = 0 : i64, scratch_operands = 2 : i64, tpu.core_type = #tpu.core_type<tc>, window_params = [{transform_indices = @transform_0, window_bounds = array<i64: 1, 16, 6272>}, {pipeline_mode = #tpu.pipeline_mode<synchronous>, transform_indices = @transform_1, window_bounds = array<i64: 128, 64>}, {pipeline_mode = #tpu.pipeline_mode<synchronous>, transform_indices = @transform_2, window_bounds = array<i64: 128, 1>}, {pipeline_mode = #tpu.pipeline_mode<synchronous>, transform_indices = @transform_3, window_bounds = array<i64: 64, 288>}, {pipeline_mode = #tpu.pipeline_mode<synchronous>, transform_indices = @transform_4, window_bounds = array<i64: 64, 1>}, {pipeline_mode = #tpu.pipeline_mode<synchronous>, transform_indices = @transform_5, window_bounds = array<i64: 128, 256>}, {pipeline_mode = #tpu.pipeline_mode<synchronous>, transform_indices = @transform_6, window_bounds = array<i64: 128, 1>}, {pipeline_mode = #tpu.pipeline_mode<synchronous>, transform_indices = @transform_7, window_bounds = array<i64: 10, 128>}, {pipeline_mode = #tpu.pipeline_mode<synchronous>, transform_indices = @transform_8, window_bounds = array<i64: 10, 1>}, {transform_indices = @transform_9, window_bounds = array<i64: 10, 128>}]} {
    %c0 = arith.constant 0 : index
    %c0_0 = arith.constant 0 : index
    %c0_1 = arith.constant 0 : index
    %0 = vector.load %arg1[%c0, %c0_0, %c0_1] : memref<1x16x6272xf32, #tpu.memory_space<vmem>>, vector<1x16x5248xf32>
    %1 = vector.shape_cast %0 : vector<1x16x5248xf32> to vector<16x5248xf32>
    %c0_2 = arith.constant 0 : index
    %c0_3 = arith.constant 0 : index
    %2 = vector.load %arg11[%c0_2, %c0_3] : memref<64x5248xf32, #tpu.memory_space<vmem>>, vector<16x5248xf32>
    tpu.vector_store %arg11[%c0_2, %c0_3], %1 {strides = array<i32>} : memref<64x5248xf32, #tpu.memory_space<vmem>>, vector<16x5248xf32>,
    %c0_4 = arith.constant 0 : index
    %c0_5 = arith.constant 0 : index
    %c128 = arith.constant 128 : index
    %3 = vector.load %arg1[%c0_4, %c0_5, %c128] : memref<1x16x6272xf32, #tpu.memory_space<vmem>>, vector<1x16x5248xf32>
    %4 = vector.shape_cast %3 : vector<1x16x5248xf32> to vector<16x5248xf32>
    %c16 = arith.constant 16 : index
    %c0_6 = arith.constant 0 : index
    %5 = vector.load %arg11[%c16, %c0_6] : memref<64x5248xf32, #tpu.memory_space<vmem>>, vector<16x5248xf32>
    tpu.vector_store %arg11[%c16, %c0_6], %4 {strides = array<i32>} : memref<64x5248xf32, #tpu.memory_space<vmem>>, vector<16x5248xf32>,
    %c0_7 = arith.constant 0 : index
    %c0_8 = arith.constant 0 : index
    %c896 = arith.constant 896 : index
    %6 = vector.load %arg1[%c0_7, %c0_8, %c896] : memref<1x16x6272xf32, #tpu.memory_space<vmem>>, vector<1x16x5248xf32>
    %7 = vector.shape_cast %6 : vector<1x16x5248xf32> to vector<16x5248xf32>
    %c32 = arith.constant 32 : index
    %c0_9 = arith.constant 0 : index
    %8 = vector.load %arg11[%c32, %c0_9] : memref<64x5248xf32, #tpu.memory_space<vmem>>, vector<16x5248xf32>
    tpu.vector_store %arg11[%c32, %c0_9], %7 {strides = array<i32>} : memref<64x5248xf32, #tpu.memory_space<vmem>>, vector<16x5248xf32>,
    %c0_10 = arith.constant 0 : index
    %c0_11 = arith.constant 0 : index
    %c1024 = arith.constant 1024 : index
    %9 = vector.load %arg1[%c0_10, %c0_11, %c1024] : memref<1x16x6272xf32, #tpu.memory_space<vmem>>, vector<1x16x5248xf32>
    %10 = vector.shape_cast %9 : vector<1x16x5248xf32> to vector<16x5248xf32>
    %c48 = arith.constant 48 : index
    %c0_12 = arith.constant 0 : index
    %11 = vector.load %arg11[%c48, %c0_12] : memref<64x5248xf32, #tpu.memory_space<vmem>>, vector<16x5248xf32>
    tpu.vector_store %arg11[%c48, %c0_12], %10 {strides = array<i32>} : memref<64x5248xf32, #tpu.memory_space<vmem>>, vector<16x5248xf32>,
    %c0_13 = arith.constant 0 : index
    %c0_14 = arith.constant 0 : index
    %12 = vector.load %arg2[%c0_13, %c0_14] : memref<128x64xf32, #tpu.memory_space<vmem>>, vector<128x64xf32>
    %c0_15 = arith.constant 0 : index
    %c0_16 = arith.constant 0 : index
    %13 = vector.load %arg11[%c0_15, %c0_16] : memref<64x5248xf32, #tpu.memory_space<vmem>>, vector<64x5248xf32>
    %cst = arith.constant dense<0.000000e+00> : vector<128x5248xf32>
    %14 = tpu.matmul %12, %13, %cst {dimension_numbers = #tpu.dot_dimension_numbers<[1], [0], [0], [1], [0, 0, 1, 1], [], []>} : vector<128x64xf32>, vector<64x5248xf32>, vector<128x5248xf32> -> vector<128x5248xf32>
    %c0_17 = arith.constant 0 : index
    %c0_18 = arith.constant 0 : index
    %15 = vector.load %arg3[%c0_17, %c0_18] : memref<128x1xf32, #tpu.memory_space<vmem>>, vector<128x1xf32>
    %16 = vector.broadcast %15 : vector<128x1xf32> to vector<128x5248xf32>
    %17 = arith.addf %14, %16 : vector<128x5248xf32>
    %cst_19 = arith.constant 0.000000e+00 : f32
    %18 = vector.broadcast %cst_19 : f32 to vector<128x5248xf32>
    %19 = arith.maximumf %17, %18 : vector<128x5248xf32>
    %20 = vector.extract_strided_slice %19 {offsets = [0, 0], sizes = [8, 5248], strides = [1, 1]} : vector<128x5248xf32> to vector<8x5248xf32>
    %21 = vector.extract_strided_slice %19 {offsets = [8, 0], sizes = [8, 5248], strides = [1, 1]} : vector<128x5248xf32> to vector<8x5248xf32>
    %22 = vector.extract_strided_slice %19 {offsets = [32, 0], sizes = [8, 5248], strides = [1, 1]} : vector<128x5248xf32> to vector<8x5248xf32>
    %23 = vector.extract_strided_slice %19 {offsets = [40, 0], sizes = [8, 5248], strides = [1, 1]} : vector<128x5248xf32> to vector<8x5248xf32>
    %24 = arith.maximumf %20, %21 : vector<8x5248xf32>
    %25 = arith.maximumf %22, %23 : vector<8x5248xf32>
    %26 = arith.maximumf %24, %25 : vector<8x5248xf32>
    %27 = vector.extract_strided_slice %19 {offsets = [16, 0], sizes = [8, 5248], strides = [1, 1]} : vector<128x5248xf32> to vector<8x5248xf32>
    %28 = vector.extract_strided_slice %19 {offsets = [24, 0], sizes = [8, 5248], strides = [1, 1]} : vector<128x5248xf32> to vector<8x5248xf32>
    %29 = vector.extract_strided_slice %19 {offsets = [48, 0], sizes = [8, 5248], strides = [1, 1]} : vector<128x5248xf32> to vector<8x5248xf32>
    %30 = vector.extract_strided_slice %19 {offsets = [56, 0], sizes = [8, 5248], strides = [1, 1]} : vector<128x5248xf32> to vector<8x5248xf32>
    %31 = arith.maximumf %27, %28 : vector<8x5248xf32>
    %32 = arith.maximumf %29, %30 : vector<8x5248xf32>
    %33 = arith.maximumf %31, %32 : vector<8x5248xf32>
    %34 = vector.extract_strided_slice %19 {offsets = [64, 0], sizes = [8, 5248], strides = [1, 1]} : vector<128x5248xf32> to vector<8x5248xf32>
    %35 = vector.extract_strided_slice %19 {offsets = [72, 0], sizes = [8, 5248], strides = [1, 1]} : vector<128x5248xf32> to vector<8x5248xf32>
    %36 = vector.extract_strided_slice %19 {offsets = [96, 0], sizes = [8, 5248], strides = [1, 1]} : vector<128x5248xf32> to vector<8x5248xf32>
    %37 = vector.extract_strided_slice %19 {offsets = [104, 0], sizes = [8, 5248], strides = [1, 1]} : vector<128x5248xf32> to vector<8x5248xf32>
    %38 = arith.maximumf %34, %35 : vector<8x5248xf32>
    %39 = arith.maximumf %36, %37 : vector<8x5248xf32>
    %40 = arith.maximumf %38, %39 : vector<8x5248xf32>
    %41 = vector.extract_strided_slice %19 {offsets = [80, 0], sizes = [8, 5248], strides = [1, 1]} : vector<128x5248xf32> to vector<8x5248xf32>
    %42 = vector.extract_strided_slice %19 {offsets = [88, 0], sizes = [8, 5248], strides = [1, 1]} : vector<128x5248xf32> to vector<8x5248xf32>
    %43 = vector.extract_strided_slice %19 {offsets = [112, 0], sizes = [8, 5248], strides = [1, 1]} : vector<128x5248xf32> to vector<8x5248xf32>
    %44 = vector.extract_strided_slice %19 {offsets = [120, 0], sizes = [8, 5248], strides = [1, 1]} : vector<128x5248xf32> to vector<8x5248xf32>
    %45 = arith.maximumf %41, %42 : vector<8x5248xf32>
    %46 = arith.maximumf %43, %44 : vector<8x5248xf32>
    %47 = arith.maximumf %45, %46 : vector<8x5248xf32>
    %48 = tpu.concatenate %26, %33, %40, %47 in 0 : vector<8x5248xf32>, vector<8x5248xf32>, vector<8x5248xf32>, vector<8x5248xf32> -> vector<32x5248xf32>
    %49 = vector.extract_strided_slice %48 {offsets = [0, 0], sizes = [32, 3200], strides = [1, 1]} : vector<32x5248xf32> to vector<32x3200xf32>
    %c0_20 = arith.constant 0 : index
    %c0_21 = arith.constant 0 : index
    %50 = vector.load %arg12[%c0_20, %c0_21] : memref<288x3200xf32, #tpu.memory_space<vmem>>, vector<32x3200xf32>
    tpu.vector_store %arg12[%c0_20, %c0_21], %49 {strides = array<i32>} : memref<288x3200xf32, #tpu.memory_space<vmem>>, vector<32x3200xf32>,
    %51 = vector.extract_strided_slice %48 {offsets = [0, 128], sizes = [32, 3200], strides = [1, 1]} : vector<32x5248xf32> to vector<32x3200xf32>
    %c32_22 = arith.constant 32 : index
    %c0_23 = arith.constant 0 : index
    %52 = vector.load %arg12[%c32_22, %c0_23] : memref<288x3200xf32, #tpu.memory_space<vmem>>, vector<32x3200xf32>
    tpu.vector_store %arg12[%c32_22, %c0_23], %51 {strides = array<i32>} : memref<288x3200xf32, #tpu.memory_space<vmem>>, vector<32x3200xf32>,
    %53 = vector.extract_strided_slice %48 {offsets = [0, 256], sizes = [32, 3200], strides = [1, 1]} : vector<32x5248xf32> to vector<32x3200xf32>
    %c64 = arith.constant 64 : index
    %c0_24 = arith.constant 0 : index
    %54 = vector.load %arg12[%c64, %c0_24] : memref<288x3200xf32, #tpu.memory_space<vmem>>, vector<32x3200xf32>
    tpu.vector_store %arg12[%c64, %c0_24], %53 {strides = array<i32>} : memref<288x3200xf32, #tpu.memory_space<vmem>>, vector<32x3200xf32>,
    %55 = vector.extract_strided_slice %48 {offsets = [0, 896], sizes = [32, 3200], strides = [1, 1]} : vector<32x5248xf32> to vector<32x3200xf32>
    %c96 = arith.constant 96 : index
    %c0_25 = arith.constant 0 : index
    %56 = vector.load %arg12[%c96, %c0_25] : memref<288x3200xf32, #tpu.memory_space<vmem>>, vector<32x3200xf32>
    tpu.vector_store %arg12[%c96, %c0_25], %55 {strides = array<i32>} : memref<288x3200xf32, #tpu.memory_space<vmem>>, vector<32x3200xf32>,
    %57 = vector.extract_strided_slice %48 {offsets = [0, 1024], sizes = [32, 3200], strides = [1, 1]} : vector<32x5248xf32> to vector<32x3200xf32>
    %c128_26 = arith.constant 128 : index
    %c0_27 = arith.constant 0 : index
    %58 = vector.load %arg12[%c128_26, %c0_27] : memref<288x3200xf32, #tpu.memory_space<vmem>>, vector<32x3200xf32>
    tpu.vector_store %arg12[%c128_26, %c0_27], %57 {strides = array<i32>} : memref<288x3200xf32, #tpu.memory_space<vmem>>, vector<32x3200xf32>,
    %59 = vector.extract_strided_slice %48 {offsets = [0, 1152], sizes = [32, 3200], strides = [1, 1]} : vector<32x5248xf32> to vector<32x3200xf32>
    %c160 = arith.constant 160 : index
    %c0_28 = arith.constant 0 : index
    %60 = vector.load %arg12[%c160, %c0_28] : memref<288x3200xf32, #tpu.memory_space<vmem>>, vector<32x3200xf32>
    tpu.vector_store %arg12[%c160, %c0_28], %59 {strides = array<i32>} : memref<288x3200xf32, #tpu.memory_space<vmem>>, vector<32x3200xf32>,
    %61 = vector.extract_strided_slice %48 {offsets = [0, 1792], sizes = [32, 3200], strides = [1, 1]} : vector<32x5248xf32> to vector<32x3200xf32>
    %c192 = arith.constant 192 : index
    %c0_29 = arith.constant 0 : index
    %62 = vector.load %arg12[%c192, %c0_29] : memref<288x3200xf32, #tpu.memory_space<vmem>>, vector<32x3200xf32>
    tpu.vector_store %arg12[%c192, %c0_29], %61 {strides = array<i32>} : memref<288x3200xf32, #tpu.memory_space<vmem>>, vector<32x3200xf32>,
    %63 = vector.extract_strided_slice %48 {offsets = [0, 1920], sizes = [32, 3200], strides = [1, 1]} : vector<32x5248xf32> to vector<32x3200xf32>
    %c224 = arith.constant 224 : index
    %c0_30 = arith.constant 0 : index
    %64 = vector.load %arg12[%c224, %c0_30] : memref<288x3200xf32, #tpu.memory_space<vmem>>, vector<32x3200xf32>
    tpu.vector_store %arg12[%c224, %c0_30], %63 {strides = array<i32>} : memref<288x3200xf32, #tpu.memory_space<vmem>>, vector<32x3200xf32>,
    %65 = vector.extract_strided_slice %48 {offsets = [0, 2048], sizes = [32, 3200], strides = [1, 1]} : vector<32x5248xf32> to vector<32x3200xf32>
    %c256 = arith.constant 256 : index
    %c0_31 = arith.constant 0 : index
    %66 = vector.load %arg12[%c256, %c0_31] : memref<288x3200xf32, #tpu.memory_space<vmem>>, vector<32x3200xf32>
    tpu.vector_store %arg12[%c256, %c0_31], %65 {strides = array<i32>} : memref<288x3200xf32, #tpu.memory_space<vmem>>, vector<32x3200xf32>,
    %c0_32 = arith.constant 0 : index
    %c0_33 = arith.constant 0 : index
    %67 = vector.load %arg4[%c0_32, %c0_33] : memref<64x288xf32, #tpu.memory_space<vmem>>, vector<64x288xf32>
    %c0_34 = arith.constant 0 : index
    %c0_35 = arith.constant 0 : index
    %68 = vector.load %arg12[%c0_34, %c0_35] : memref<288x3200xf32, #tpu.memory_space<vmem>>, vector<288x3200xf32>
    %cst_36 = arith.constant dense<0.000000e+00> : vector<64x3200xf32>
    %69 = tpu.matmul %67, %68, %cst_36 {dimension_numbers = #tpu.dot_dimension_numbers<[1], [0], [0], [1], [0, 0, 1, 1], [], []>} : vector<64x288xf32>, vector<288x3200xf32>, vector<64x3200xf32> -> vector<64x3200xf32>
    %c0_37 = arith.constant 0 : index
    %c0_38 = arith.constant 0 : index
    %70 = vector.load %arg5[%c0_37, %c0_38] : memref<64x1xf32, #tpu.memory_space<vmem>>, vector<64x1xf32>
    %71 = vector.broadcast %70 : vector<64x1xf32> to vector<64x3200xf32>
    %72 = arith.addf %69, %71 : vector<64x3200xf32>
    %cst_39 = arith.constant 0.000000e+00 : f32
    %73 = vector.broadcast %cst_39 : f32 to vector<64x3200xf32>
    %74 = arith.maximumf %72, %73 : vector<64x3200xf32>
    %75 = vector.extract_strided_slice %74 {offsets = [0, 0], sizes = [16, 3200], strides = [1, 1]} : vector<64x3200xf32> to vector<16x3200xf32>
    %76 = vector.extract_strided_slice %74 {offsets = [16, 0], sizes = [16, 3200], strides = [1, 1]} : vector<64x3200xf32> to vector<16x3200xf32>
    %77 = vector.extract_strided_slice %74 {offsets = [32, 0], sizes = [16, 3200], strides = [1, 1]} : vector<64x3200xf32> to vector<16x3200xf32>
    %78 = vector.extract_strided_slice %74 {offsets = [48, 0], sizes = [16, 3200], strides = [1, 1]} : vector<64x3200xf32> to vector<16x3200xf32>
    %79 = arith.maximumf %75, %76 : vector<16x3200xf32>
    %80 = arith.maximumf %77, %78 : vector<16x3200xf32>
    %81 = arith.maximumf %79, %80 : vector<16x3200xf32>
    %82 = vector.extract_strided_slice %81 {offsets = [0, 0], sizes = [16, 128], strides = [1, 1]} : vector<16x3200xf32> to vector<16x128xf32>
    %83 = vector.extract_strided_slice %81 {offsets = [0, 128], sizes = [16, 128], strides = [1, 1]} : vector<16x3200xf32> to vector<16x128xf32>
    %84 = vector.extract_strided_slice %81 {offsets = [0, 256], sizes = [16, 128], strides = [1, 1]} : vector<16x3200xf32> to vector<16x128xf32>
    %85 = vector.extract_strided_slice %81 {offsets = [0, 384], sizes = [16, 128], strides = [1, 1]} : vector<16x3200xf32> to vector<16x128xf32>
    %86 = vector.extract_strided_slice %81 {offsets = [0, 896], sizes = [16, 128], strides = [1, 1]} : vector<16x3200xf32> to vector<16x128xf32>
    %87 = vector.extract_strided_slice %81 {offsets = [0, 1024], sizes = [16, 128], strides = [1, 1]} : vector<16x3200xf32> to vector<16x128xf32>
    %88 = vector.extract_strided_slice %81 {offsets = [0, 1152], sizes = [16, 128], strides = [1, 1]} : vector<16x3200xf32> to vector<16x128xf32>
    %89 = vector.extract_strided_slice %81 {offsets = [0, 1280], sizes = [16, 128], strides = [1, 1]} : vector<16x3200xf32> to vector<16x128xf32>
    %90 = vector.extract_strided_slice %81 {offsets = [0, 1792], sizes = [16, 128], strides = [1, 1]} : vector<16x3200xf32> to vector<16x128xf32>
    %91 = vector.extract_strided_slice %81 {offsets = [0, 1920], sizes = [16, 128], strides = [1, 1]} : vector<16x3200xf32> to vector<16x128xf32>
    %92 = vector.extract_strided_slice %81 {offsets = [0, 2048], sizes = [16, 128], strides = [1, 1]} : vector<16x3200xf32> to vector<16x128xf32>
    %93 = vector.extract_strided_slice %81 {offsets = [0, 2176], sizes = [16, 128], strides = [1, 1]} : vector<16x3200xf32> to vector<16x128xf32>
    %94 = vector.extract_strided_slice %81 {offsets = [0, 2688], sizes = [16, 128], strides = [1, 1]} : vector<16x3200xf32> to vector<16x128xf32>
    %95 = vector.extract_strided_slice %81 {offsets = [0, 2816], sizes = [16, 128], strides = [1, 1]} : vector<16x3200xf32> to vector<16x128xf32>
    %96 = vector.extract_strided_slice %81 {offsets = [0, 2944], sizes = [16, 128], strides = [1, 1]} : vector<16x3200xf32> to vector<16x128xf32>
    %97 = vector.extract_strided_slice %81 {offsets = [0, 3072], sizes = [16, 128], strides = [1, 1]} : vector<16x3200xf32> to vector<16x128xf32>
    %98 = tpu.concatenate %82, %83, %84, %85, %86, %87, %88, %89, %90, %91, %92, %93, %94, %95, %96, %97 in 0 : vector<16x128xf32>, vector<16x128xf32>, vector<16x128xf32>, vector<16x128xf32>, vector<16x128xf32>, vector<16x128xf32>, vector<16x128xf32>, vector<16x128xf32>, vector<16x128xf32>, vector<16x128xf32>, vector<16x128xf32>, vector<16x128xf32>, vector<16x128xf32>, vector<16x128xf32>, vector<16x128xf32>, vector<16x128xf32> -> vector<256x128xf32>
    %c0_40 = arith.constant 0 : index
    %c0_41 = arith.constant 0 : index
    %99 = vector.load %arg6[%c0_40, %c0_41] : memref<128x256xf32, #tpu.memory_space<vmem>>, vector<128x256xf32>
    %cst_42 = arith.constant dense<0.000000e+00> : vector<128x128xf32>
    %100 = tpu.matmul %99, %98, %cst_42 {dimension_numbers = #tpu.dot_dimension_numbers<[1], [0], [0], [1], [0, 0, 1, 1], [], []>} : vector<128x256xf32>, vector<256x128xf32>, vector<128x128xf32> -> vector<128x128xf32>
    %c0_43 = arith.constant 0 : index
    %c0_44 = arith.constant 0 : index
    %101 = vector.load %arg7[%c0_43, %c0_44] : memref<128x1xf32, #tpu.memory_space<vmem>>, vector<128x1xf32>
    %102 = vector.broadcast %101 : vector<128x1xf32> to vector<128x128xf32>
    %103 = arith.addf %100, %102 : vector<128x128xf32>
    %cst_45 = arith.constant 0.000000e+00 : f32
    %104 = vector.broadcast %cst_45 : f32 to vector<128x128xf32>
    %105 = arith.maximumf %103, %104 : vector<128x128xf32>
    %c0_46 = arith.constant 0 : index
    %c0_47 = arith.constant 0 : index
    %106 = vector.load %arg8[%c0_46, %c0_47] : memref<10x128xf32, #tpu.memory_space<vmem>>, vector<10x128xf32>
    %cst_48 = arith.constant dense<0.000000e+00> : vector<10x128xf32>
    %107 = tpu.matmul %106, %105, %cst_48 {dimension_numbers = #tpu.dot_dimension_numbers<[1], [0], [0], [1], [0, 0, 1, 1], [], []>} : vector<10x128xf32>, vector<128x128xf32>, vector<10x128xf32> -> vector<10x128xf32>
    %c0_49 = arith.constant 0 : index
    %c0_50 = arith.constant 0 : index
    %108 = vector.load %arg9[%c0_49, %c0_50] : memref<10x1xf32, #tpu.memory_space<vmem>>, vector<10x1xf32>
    %109 = vector.broadcast %108 : vector<10x1xf32> to vector<10x128xf32>
    %110 = arith.addf %107, %109 : vector<10x128xf32>
    %cst_51 = arith.constant dense<0xFF800000> : vector<128xf32>
    %111 = vector.multi_reduction <maximumf>, %110, %cst_51 [0] : vector<10x128xf32> to vector<128xf32>
    %112 = vector.shape_cast %111 : vector<128xf32> to vector<1x128xf32>
    %113 = vector.broadcast %112 : vector<1x128xf32> to vector<10x128xf32>
    %114 = arith.subf %110, %113 : vector<10x128xf32>
    %115 = math.exp %114 : vector<10x128xf32>
    %cst_52 = arith.constant dense<0.000000e+00> : vector<128xf32>
    %116 = vector.multi_reduction <add>, %115, %cst_52 [0] : vector<10x128xf32> to vector<128xf32>
    %117 = vector.shape_cast %116 : vector<128xf32> to vector<1x128xf32>
    %118 = vector.broadcast %117 : vector<1x128xf32> to vector<10x128xf32>
    %119 = arith.divf %115, %118 : vector<10x128xf32>
    %c0_53 = arith.constant 0 : index
    %c0_54 = arith.constant 0 : index
    %120 = vector.load %arg10[%c0_53, %c0_54] : memref<10x128xf32, #tpu.memory_space<vmem>>, vector<10x128xf32>
    tpu.vector_store %arg10[%c0_53, %c0_54], %119 {strides = array<i32>} : memref<10x128xf32, #tpu.memory_space<vmem>>, vector<10x128xf32>,
    return
  }
  func.func @transform_0(%arg0: i32) -> (i32, i32, i32) {
    %c0_i32 = arith.constant 0 : i32
    %c0_i32_0 = arith.constant 0 : i32
    %c0_i32_1 = arith.constant 0 : i32
    return %arg0, %c0_i32, %c0_i32_0 : i32, i32, i32
  }
  func.func @transform_1(%arg0: i32) -> (i32, i32) {
    %c0_i32 = arith.constant 0 : i32
    %c0_i32_0 = arith.constant 0 : i32
    %c0_i32_1 = arith.constant 0 : i32
    return %c0_i32, %c0_i32_0 : i32, i32
  }
  func.func @transform_2(%arg0: i32) -> (i32, i32) {
    %c0_i32 = arith.constant 0 : i32
    %c0_i32_0 = arith.constant 0 : i32
    %c0_i32_1 = arith.constant 0 : i32
    return %c0_i32, %c0_i32_0 : i32, i32
  }
  func.func @transform_3(%arg0: i32) -> (i32, i32) {
    %c0_i32 = arith.constant 0 : i32
    %c0_i32_0 = arith.constant 0 : i32
    %c0_i32_1 = arith.constant 0 : i32
    return %c0_i32, %c0_i32_0 : i32, i32
  }
  func.func @transform_4(%arg0: i32) -> (i32, i32) {
    %c0_i32 = arith.constant 0 : i32
    %c0_i32_0 = arith.constant 0 : i32
    %c0_i32_1 = arith.constant 0 : i32
    return %c0_i32, %c0_i32_0 : i32, i32
  }
  func.func @transform_5(%arg0: i32) -> (i32, i32) {
    %c0_i32 = arith.constant 0 : i32
    %c0_i32_0 = arith.constant 0 : i32
    %c0_i32_1 = arith.constant 0 : i32
    return %c0_i32, %c0_i32_0 : i32, i32
  }
  func.func @transform_6(%arg0: i32) -> (i32, i32) {
    %c0_i32 = arith.constant 0 : i32
    %c0_i32_0 = arith.constant 0 : i32
    %c0_i32_1 = arith.constant 0 : i32
    return %c0_i32, %c0_i32_0 : i32, i32
  }
  func.func @transform_7(%arg0: i32) -> (i32, i32) {
    %c0_i32 = arith.constant 0 : i32
    %c0_i32_0 = arith.constant 0 : i32
    %c0_i32_1 = arith.constant 0 : i32
    return %c0_i32, %c0_i32_0 : i32, i32
  }
  func.func @transform_8(%arg0: i32) -> (i32, i32) {
    %c0_i32 = arith.constant 0 : i32
    %c0_i32_0 = arith.constant 0 : i32
    %c0_i32_1 = arith.constant 0 : i32
    return %c0_i32, %c0_i32_0 : i32, i32
  }
  func.func @transform_9(%arg0: i32) -> (i32, i32) {
    %c0_i32 = arith.constant 0 : i32
    %c0_i32_0 = arith.constant 0 : i32
    return %c0_i32, %arg0 : i32, i32
  }
}

</mosaic_0001>

<llo_original>
// kernel: nn_forward.1
$region0: #{nn_forward.1}
  #allocation0 [shape = 'u32[]', space=smem, size = 0x4, offset = 0x4, fixed_abs, tag = 'smem constant byte address 0x4 - core index']
  #allocation1 [shape = 'u32[144,128]{1,0:T(1,128)}', space=vmem, size = 0x12000, scoped, tag = 'internal scratch']
  #allocation2 [shape = 'f32[64,5248]{1,0:T(8,128)}', space=vmem, size = 0x148000, scoped, tag = 'scratch operand']
  #allocation3 [shape = 'f32[288,3200]{1,0:T(8,128)}', space=vmem, size = 0x384000, scoped, tag = 'scratch operand']
  %s0 = inlined_call_operand.vmem [shape: f32[1,16,6272], index: 0, kind: input, shape index: {}]
  %s1 = inlined_call_operand.vmem [shape: f32[128,64], index: 1, kind: input, shape index: {}]
  %s2 = inlined_call_operand.vmem [shape: f32[128,1], index: 2, kind: input, shape index: {}]
  %s3 = inlined_call_operand.vmem [shape: f32[64,288], index: 3, kind: input, shape index: {}]
  %s4 = inlined_call_operand.vmem [shape: f32[64,1], index: 4, kind: input, shape index: {}]
  %s5 = inlined_call_operand.vmem [shape: f32[128,256], index: 5, kind: input, shape index: {}]
  %s6 = inlined_call_operand.vmem [shape: f32[128,1], index: 6, kind: input, shape index: {}]
  %s7 = inlined_call_operand.vmem [shape: f32[10,128], index: 7, kind: input, shape index: {}]
  %s8 = inlined_call_operand.vmem [shape: f32[10,1], index: 8, kind: input, shape index: {}]
  %s9 = inlined_call_operand.vmem [shape: f32[10,128], index: 9, kind: output, shape index: {}]
  %s10 = sld [smem:[#allocation0]]
  $region46: #{nn_forward.1} parent=0
    _
  %s12 = ssub.s32 1, %s10
  %s13 = scalar_select 0, %s12, %s10
  // Predicated region
  $region2: #{nn_forward.1} parent=0 // pred_check
    _
  $region3: #{nn_forward.1} parent=0 // pred_check_branch
    %15 = sbr.rel (0) target = $region5
  $region4: #{nn_forward.1} parent=0 // pred_region
    _
  $region5: #{nn_forward.1} parent=0 // pred_fallthru
    _
  // Predicated region
  $region6: #{nn_forward.1} parent=0 // pred_check
    _
  $region7: #{nn_forward.1} parent=0 // pred_check_branch
    %17 = sbr.rel (0) target = $region9
  $region8: #{nn_forward.1} parent=0 // pred_region
    _
  $region9: #{nn_forward.1} parent=0 // pred_fallthru
    _
  // Predicated region
  $region10: #{nn_forward.1} parent=0 // pred_check
    _
  $region11: #{nn_forward.1} parent=0 // pred_check_branch
    %19 = sbr.rel (0) target = $region13
  $region12: #{nn_forward.1} parent=0 // pred_region
    _
  $region13: #{nn_forward.1} parent=0 // pred_fallthru
    _
  // Predicated region
  $region14: #{nn_forward.1} parent=0 // pred_check
    _
  $region15: #{nn_forward.1} parent=0 // pred_check_branch
    %21 = sbr.rel (0) target = $region17
  $region16: #{nn_forward.1} parent=0 // pred_region
    _
  $region17: #{nn_forward.1} parent=0 // pred_fallthru
    _
  // Predicated region
  $region18: #{nn_forward.1} parent=0 // pred_check
    _
  $region19: #{nn_forward.1} parent=0 // pred_check_branch
    %23 = sbr.rel (0) target = $region21
  $region20: #{nn_forward.1} parent=0 // pred_region
    _
  $region21: #{nn_forward.1} parent=0 // pred_fallthru
    _
  // Predicated region
  $region22: #{nn_forward.1} parent=0 // pred_check
    _
  $region23: #{nn_forward.1} parent=0 // pred_check_branch
    %25 = sbr.rel (0) target = $region25
  $region24: #{nn_forward.1} parent=0 // pred_region
    _
  $region25: #{nn_forward.1} parent=0 // pred_fallthru
    _
  // Predicated region
  $region26: #{nn_forward.1} parent=0 // pred_check
    _
  $region27: #{nn_forward.1} parent=0 // pred_check_branch
    %27 = sbr.rel (0) target = $region29
  $region28: #{nn_forward.1} parent=0 // pred_region
    _
  $region29: #{nn_forward.1} parent=0 // pred_fallthru
    _
  // Predicated region
  $region30: #{nn_forward.1} parent=0 // pred_check
    _
  $region31: #{nn_forward.1} parent=0 // pred_check_branch
    %29 = sbr.rel (0) target = $region33
  $region32: #{nn_forward.1} parent=0 // pred_region
    _
  $region33: #{nn_forward.1} parent=0 // pred_fallthru
    _
  // Predicated region
  $region34: #{nn_forward.1} parent=0 // pred_check
    _
  $region35: #{nn_forward.1} parent=0 // pred_check_branch
    %31 = sbr.rel (0) target = $region37
  $region36: #{nn_forward.1} parent=0 // pred_region
    _
  $region37: #{nn_forward.1} parent=0 // pred_fallthru
    _
  %v32 = vld [vmem:[%s0] sm:$0xff]
  %v33 = vld [vmem:[%s0 + $0x8] sm:$0xff]
  %v34 = vld [vmem:[%s0 + $0x10] sm:$0xff]
  %v35 = vld [vmem:[%s0 + $0x18] sm:$0xff]
  %v36 = vld [vmem:[%s0 + $0x20] sm:$0xff]
  %v37 = vld [vmem:[%s0 + $0x28] sm:$0xff]
  %v38 = vld [vmem:[%s0 + $0x30] sm:$0xff]
  %v39 = vld [vmem:[%s0 + $0x38] sm:$0xff]
  %v40 = vld [vmem:[%s0 + $0x40] sm:$0xff]
  %v41 = vld [vmem:[%s0 + $0x48] sm:$0xff]
  %v42 = vld [vmem:[%s0 + $0x50] sm:$0xff]
  %v43 = vld [vmem:[%s0 + $0x58] sm:$0xff]
  %v44 = vld [vmem:[%s0 + $0x60] sm:$0xff]
  %v45 = vld [vmem:[%s0 + $0x68] sm:$0xff]
  %v46 = vld [vmem:[%s0 + $0x70] sm:$0xff]
  %v47 = vld [vmem:[%s0 + $0x78] sm:$0xff]
  %v48 = vld [vmem:[%s0 + $0x80] sm:$0xff]
  %v49 = vld [vmem:[%s0 + $0x88] sm:$0xff]
  %v50 = vld [vmem:[%s0 + $0x90] sm:$0xff]
  %v51 = vld [vmem:[%s0 + $0x98] sm:$0xff]
  %v52 = vld [vmem:[%s0 + $0xa0] sm:$0xff]
  %v53 = vld [vmem:[%s0 + $0xa8] sm:$0xff]
  %v54 = vld [vmem:[%s0 + $0xb0] sm:$0xff]
  %v55 = vld [vmem:[%s0 + $0xb8] sm:$0xff]
  %v56 = vld [vmem:[%s0 + $0xc0] sm:$0xff]
  %v57 = vld [vmem:[%s0 + $0xc8] sm:$0xff]
  %v58 = vld [vmem:[%s0 + $0xd0] sm:$0xff]
  %v59 = vld [vmem:[%s0 + $0xd8] sm:$0xff]
  %v60 = vld [vmem:[%s0 + $0xe0] sm:$0xff]
  %v61 = vld [vmem:[%s0 + $0xe8] sm:$0xff]
  %v62 = vld [vmem:[%s0 + $0xf0] sm:$0xff]
  %v63 = vld [vmem:[%s0 + $0xf8] sm:$0xff]
  %v64 = vld [vmem:[%s0 + $0x100] sm:$0xff]
  %v65 = vld [vmem:[%s0 + $0x108] sm:$0xff]
  %v66 = vld [vmem:[%s0 + $0x110] sm:$0xff]
  %v67 = vld [vmem:[%s0 + $0x118] sm:$0xff]
  %v68 = vld [vmem:[%s0 + $0x120] sm:$0xff]
  %v69 = vld [vmem:[%s0 + $0x128] sm:$0xff]
  %v70 = vld [vmem:[%s0 + $0x130] sm:$0xff]
  %v71 = vld [vmem:[%s0 + $0x138] sm:$0xff]
  %v72 = vld [vmem:[%s0 + $0x140] sm:$0xff]
  %v73 = vld [vmem:[%s0 + $0x188] sm:$0xff]
  %v74 = vld [vmem:[%s0 + $0x190] sm:$0xff]
  %v75 = vld [vmem:[%s0 + $0x198] sm:$0xff]
  %v76 = vld [vmem:[%s0 + $0x1a0] sm:$0xff]
  %v77 = vld [vmem:[%s0 + $0x1a8] sm:$0xff]
  %v78 = vld [vmem:[%s0 + $0x1b0] sm:$0xff]
  %v79 = vld [vmem:[%s0 + $0x1b8] sm:$0xff]
  %v80 = vld [vmem:[%s0 + $0x1c0] sm:$0xff]
  %v81 = vld [vmem:[%s0 + $0x1c8] sm:$0xff]
  %v82 = vld [vmem:[%s0 + $0x1d0] sm:$0xff]
  %v83 = vld [vmem:[%s0 + $0x1d8] sm:$0xff]
  %v84 = vld [vmem:[%s0 + $0x1e0] sm:$0xff]
  %v85 = vld [vmem:[%s0 + $0x1e8] sm:$0xff]
  %v86 = vld [vmem:[%s0 + $0x1f0] sm:$0xff]
  %v87 = vld [vmem:[%s0 + $0x1f8] sm:$0xff]
  %v88 = vld [vmem:[%s0 + $0x200] sm:$0xff]
  %v89 = vld [vmem:[%s0 + $0x208] sm:$0xff]
  %v90 = vld [vmem:[%s0 + $0x210] sm:$0xff]
  %v91 = vld [vmem:[%s0 + $0x218] sm:$0xff]
  %v92 = vld [vmem:[%s0 + $0x220] sm:$0xff]
  %v93 = vld [vmem:[%s0 + $0x228] sm:$0xff]
  %v94 = vld [vmem:[%s0 + $0x230] sm:$0xff]
  %v95 = vld [vmem:[%s0 + $0x238] sm:$0xff]
  %v96 = vld [vmem:[%s0 + $0x240] sm:$0xff]
  %v97 = vld [vmem:[%s0 + $0x248] sm:$0xff]
  %v98 = vld [vmem:[%s0 + $0x250] sm:$0xff]
  %v99 = vld [vmem:[%s0 + $0x258] sm:$0xff]
  %v100 = vld [vmem:[%s0 + $0x260] sm:$0xff]
  %v101 = vld [vmem:[%s0 + $0x268] sm:$0xff]
  %v102 = vld [vmem:[%s0 + $0x270] sm:$0xff]
  %v103 = vld [vmem:[%s0 + $0x278] sm:$0xff]
  %v104 = vld [vmem:[%s0 + $0x280] sm:$0xff]
  %v105 = vld [vmem:[%s0 + $0x288] sm:$0xff]
  %v106 = vld [vmem:[%s0 + $0x290] sm:$0xff]
  %v107 = vld [vmem:[%s0 + $0x298] sm:$0xff]
  %v108 = vld [vmem:[%s0 + $0x2a0] sm:$0xff]
  %v109 = vld [vmem:[%s0 + $0x2a8] sm:$0xff]
  %v110 = vld [vmem:[%s0 + $0x2b0] sm:$0xff]
  %v111 = vld [vmem:[%s0 + $0x2b8] sm:$0xff]
  %v112 = vld [vmem:[%s0 + $0x2c0] sm:$0xff]
  %v113 = vld [vmem:[%s0 + $0x2c8] sm:$0xff]
  %114 = vst [vmem:[#allocation2] sm:$0xff] %v32
  %115 = vst [vmem:[#allocation2 + $0x8] sm:$0xff] %v33
  %116 = vst [vmem:[#allocation2 + $0x10] sm:$0xff] %v34
  %117 = vst [vmem:[#allocation2 + $0x18] sm:$0xff] %v35
  %118 = vst [vmem:[#allocation2 + $0x20] sm:$0xff] %v36
  %119 = vst [vmem:[#allocation2 + $0x28] sm:$0xff] %v37
  %120 = vst [vmem:[#allocation2 + $0x30] sm:$0xff] %v38
  %121 = vst [vmem:[#allocation2 + $0x38] sm:$0xff] %v39
  %122 = vst [vmem:[#allocation2 + $0x40] sm:$0xff] %v40
  %123 = vst [vmem:[#allocation2 + $0x48] sm:$0xff] %v41
  %124 = vst [vmem:[#allocation2 + $0x50] sm:$0xff] %v42
  %125 = vst [vmem:[#allocation2 + $0x58] sm:$0xff] %v43
  %126 = vst [vmem:[#allocation2 + $0x60] sm:$0xff] %v44
  %127 = vst [vmem:[#allocation2 + $0x68] sm:$0xff] %v45
  %128 = vst [vmem:[#allocation2 + $0x70] sm:$0xff] %v46
  %129 = vst [vmem:[#allocation2 + $0x78] sm:$0xff] %v47
  %130 = vst [vmem:[#allocation2 + $0x80] sm:$0xff] %v48
  %131 = vst [vmem:[#allocation2 + $0x88] sm:$0xff] %v49
  %132 = vst [vmem:[#allocation2 + $0x90] sm:$0xff] %v50
  %133 = vst [vmem:[#allocation2 + $0x98] sm:$0xff] %v51
  %134 = vst [vmem:[#allocation2 + $0xa0] sm:$0xff] %v52
  %135 = vst [vmem:[#allocation2 + $0xa8] sm:$0xff] %v53
  %136 = vst [vmem:[#allocation2 + $0xb0] sm:$0xff] %v54
  %137 = vst [vmem:[#allocation2 + $0xb8] sm:$0xff] %v55
  %138 = vst [vmem:[#allocation2 + $0xc0] sm:$0xff] %v56
  %139 = vst [vmem:[#allocation2 + $0xc8] sm:$0xff] %v57
  %140 = vst [vmem:[#allocation2 + $0xd0] sm:$0xff] %v58
  %141 = vst [vmem:[#allocation2 + $0xd8] sm:$0xff] %v59
  %142 = vst [vmem:[#allocation2 + $0xe0] sm:$0xff] %v60
  %143 = vst [vmem:[#allocation2 + $0xe8] sm:$0xff] %v61
  %144 = vst [vmem:[#allocation2 + $0xf0] sm:$0xff] %v62
  %145 = vst [vmem:[#allocation2 + $0xf8] sm:$0xff] %v63
  %146 = vst [vmem:[#allocation2 + $0x100] sm:$0xff] %v64
  %147 = vst [vmem:[#allocation2 + $0x108] sm:$0xff] %v65
  %148 = vst [vmem:[#allocation2 + $0x110] sm:$0xff] %v66
  %149 = vst [vmem:[#allocation2 + $0x118] sm:$0xff] %v67
  %150 = vst [vmem:[#allocation2 + $0x120] sm:$0xff] %v68
  %151 = vst [vmem:[#allocation2 + $0x128] sm:$0xff] %v69
  %152 = vst [vmem:[#allocation2 + $0x130] sm:$0xff] %v70
  %153 = vst [vmem:[#allocation2 + $0x138] sm:$0xff] %v71
  %154 = vst [vmem:[#allocation2 + $0x140] sm:$0xff] %v72
  %155 = vst [vmem:[#allocation2 + $0x148] sm:$0xff] %v73
  %156 = vst [vmem:[#allocation2 + $0x150] sm:$0xff] %v74
  %157 = vst [vmem:[#allocation2 + $0x158] sm:$0xff] %v75
  %158 = vst [vmem:[#allocation2 + $0x160] sm:$0xff] %v76
  %159 = vst [vmem:[#allocation2 + $0x168] sm:$0xff] %v77
  %160 = vst [vmem:[#allocation2 + $0x170] sm:$0xff] %v78
  %161 = vst [vmem:[#allocation2 + $0x178] sm:$0xff] %v79
  %162 = vst [vmem:[#allocation2 + $0x180] sm:$0xff] %v80
  %163 = vst [vmem:[#allocation2 + $0x188] sm:$0xff] %v81
  %164 = vst [vmem:[#allocation2 + $0x190] sm:$0xff] %v82
  %165 = vst [vmem:[#allocation2 + $0x198] sm:$0xff] %v83
  %166 = vst [vmem:[#allocation2 + $0x1a0] sm:$0xff] %v84
  %167 = vst [vmem:[#allocation2 + $0x1a8] sm:$0xff] %v85
  %168 = vst [vmem:[#allocation2 + $0x1b0] sm:$0xff] %v86
  %169 = vst [vmem:[#allocation2 + $0x1b8] sm:$0xff] %v87
  %170 = vst [vmem:[#allocation2 + $0x1c0] sm:$0xff] %v88
  %171 = vst [vmem:[#allocation2 + $0x1c8] sm:$0xff] %v89
  %172 = vst [vmem:[#allocation2 + $0x1d0] sm:$0xff] %v90
  %173 = vst [vmem:[#allocation2 + $0x1d8] sm:$0xff] %v91
  %174 = vst [vmem:[#allocation2 + $0x1e0] sm:$0xff] %v92
  %175 = vst [vmem:[#allocation2 + $0x1e8] sm:$0xff] %v93
  %176 = vst [vmem:[#allocation2 + $0x1f0] sm:$0xff] %v94
  %177 = vst [vmem:[#allocation2 + $0x1f8] sm:$0xff] %v95
  %178 = vst [vmem:[#allocation2 + $0x200] sm:$0xff] %v96
  %179 = vst [vmem:[#allocation2 + $0x208] sm:$0xff] %v97
  %180 = vst [vmem:[#allocation2 + $0x210] sm:$0xff] %v98
  %181 = vst [vmem:[#allocation2 + $0x218] sm:$0xff] %v99
  %182 = vst [vmem:[#allocation2 + $0x220] sm:$0xff] %v100
  %183 = vst [vmem:[#allocation2 + $0x228] sm:$0xff] %v101
  %184 = vst [vmem:[#allocation2 + $0x230] sm:$0xff] %v102
  %185 = vst [vmem:[#allocation2 + $0x238] sm:$0xff] %v103
  %186 = vst [vmem:[#allocation2 + $0x240] sm:$0xff] %v104
  %187 = vst [vmem:[#allocation2 + $0x248] sm:$0xff] %v105
  %188 = vst [vmem:[#allocation2 + $0x250] sm:$0xff] %v106
  %189 = vst [vmem:[#allocation2 + $0x258] sm:$0xff] %v107
  %190 = vst [vmem:[#allocation2 + $0x260] sm:$0xff] %v108
  %191 = vst [vmem:[#allocation2 + $0x268] sm:$0xff] %v109
  %192 = vst [vmem:[#allocation2 + $0x270] sm:$0xff] %v110
  %193 = vst [vmem:[#allocation2 + $0x278] sm:$0xff] %v111
  %194 = vst [vmem:[#allocation2 + $0x280] sm:$0xff] %v112
  %195 = vst [vmem:[#allocation2 + $0x288] sm:$0xff] %v113
  %v196 = vld [vmem:[%s0 + $0x8] sm:$0xff]
  %v197 = vld [vmem:[%s0 + $0x10] sm:$0xff]
  %v198 = vld [vmem:[%s0 + $0x18] sm:$0xff]
  %v199 = vld [vmem:[%s0 + $0x20] sm:$0xff]
  %v200 = vld [vmem:[%s0 + $0x28] sm:$0xff]
  %v201 = vld [vmem:[%s0 + $0x30] sm:$0xff]
  %v202 = vld [vmem:[%s0 + $0x38] sm:$0xff]
  %v203 = vld [vmem:[%s0 + $0x40] sm:$0xff]
  %v204 = vld [vmem:[%s0 + $0x48] sm:$0xff]
  %v205 = vld [vmem:[%s0 + $0x50] sm:$0xff]
  %v206 = vld [vmem:[%s0 + $0x58] sm:$0xff]
  %v207 = vld [vmem:[%s0 + $0x60] sm:$0xff]
  %v208 = vld [vmem:[%s0 + $0x68] sm:$0xff]
  %v209 = vld [vmem:[%s0 + $0x70] sm:$0xff]
  %v210 = vld [vmem:[%s0 + $0x78] sm:$0xff]
  %v211 = vld [vmem:[%s0 + $0x80] sm:$0xff]
  %v212 = vld [vmem:[%s0 + $0x88] sm:$0xff]
  %v213 = vld [vmem:[%s0 + $0x90] sm:$0xff]
  %v214 = vld [vmem:[%s0 + $0x98] sm:$0xff]
  %v215 = vld [vmem:[%s0 + $0xa0] sm:$0xff]
  %v216 = vld [vmem:[%s0 + $0xa8] sm:$0xff]
  %v217 = vld [vmem:[%s0 + $0xb0] sm:$0xff]
  %v218 = vld [vmem:[%s0 + $0xb8] sm:$0xff]
  %v219 = vld [vmem:[%s0 + $0xc0] sm:$0xff]
  %v220 = vld [vmem:[%s0 + $0xc8] sm:$0xff]
  %v221 = vld [vmem:[%s0 + $0xd0] sm:$0xff]
  %v222 = vld [vmem:[%s0 + $0xd8] sm:$0xff]
  %v223 = vld [vmem:[%s0 + $0xe0] sm:$0xff]
  %v224 = vld [vmem:[%s0 + $0xe8] sm:$0xff]
  %v225 = vld [vmem:[%s0 + $0xf0] sm:$0xff]
  %v226 = vld [vmem:[%s0 + $0xf8] sm:$0xff]
  %v227 = vld [vmem:[%s0 + $0x100] sm:$0xff]
  %v228 = vld [vmem:[%s0 + $0x108] sm:$0xff]
  %v229 = vld [vmem:[%s0 + $0x110] sm:$0xff]
  %v230 = vld [vmem:[%s0 + $0x118] sm:$0xff]
  %v231 = vld [vmem:[%s0 + $0x120] sm:$0xff]
  %v232 = vld [vmem:[%s0 + $0x128] sm:$0xff]
  %v233 = vld [vmem:[%s0 + $0x130] sm:$0xff]
  %v234 = vld [vmem:[%s0 + $0x138] sm:$0xff]
  %v235 = vld [vmem:[%s0 + $0x140] sm:$0xff]
  %v236 = vld [vmem:[%s0 + $0x148] sm:$0xff]
  %v237 = vld [vmem:[%s0 + $0x190] sm:$0xff]
  %v238 = vld [vmem:[%s0 + $0x198] sm:$0xff]
  %v239 = vld [vmem:[%s0 + $0x1a0] sm:$0xff]
  %v240 = vld [vmem:[%s0 + $0x1a8] sm:$0xff]
  %v241 = vld [vmem:[%s0 + $0x1b0] sm:$0xff]
  %v242 = vld [vmem:[%s0 + $0x1b8] sm:$0xff]
  %v243 = vld [vmem:[%s0 + $0x1c0] sm:$0xff]
  %v244 = vld [vmem:[%s0 + $0x1c8] sm:$0xff]
  %v245 = vld [vmem:[%s0 + $0x1d0] sm:$0xff]
  %v246 = vld [vmem:[%s0 + $0x1d8] sm:$0xff]
  %v247 = vld [vmem:[%s0 + $0x1e0] sm:$0xff]
  %v248 = vld [vmem:[%s0 + $0x1e8] sm:$0xff]
  %v249 = vld [vmem:[%s0 + $0x1f0] sm:$0xff]
  %v250 = vld [vmem:[%s0 + $0x1f8] sm:$0xff]
  %v251 = vld [vmem:[%s0 + $0x200] sm:$0xff]
  %v252 = vld [vmem:[%s0 + $0x208] sm:$0xff]
  %v253 = vld [vmem:[%s0 + $0x210] sm:$0xff]
  %v254 = vld [vmem:[%s0 + $0x218] sm:$0xff]
  %v255 = vld [vmem:[%s0 + $0x220] sm:$0xff]
  %v256 = vld [vmem:[%s0 + $0x228] sm:$0xff]
  %v257 = vld [vmem:[%s0 + $0x230] sm:$0xff]
  %v258 = vld [vmem:[%s0 + $0x238] sm:$0xff]
  %v259 = vld [vmem:[%s0 + $0x240] sm:$0xff]
  %v260 = vld [vmem:[%s0 + $0x248] sm:$0xff]
  %v261 = vld [vmem:[%s0 + $0x250] sm:$0xff]
  %v262 = vld [vmem:[%s0 + $0x258] sm:$0xff]
  %v263 = vld [vmem:[%s0 + $0x260] sm:$0xff]
  %v264 = vld [vmem:[%s0 + $0x268] sm:$0xff]
  %v265 = vld [vmem:[%s0 + $0x270] sm:$0xff]
  %v266 = vld [vmem:[%s0 + $0x278] sm:$0xff]
  %v267 = vld [vmem:[%s0 + $0x280] sm:$0xff]
  %v268 = vld [vmem:[%s0 + $0x288] sm:$0xff]
  %v269 = vld [vmem:[%s0 + $0x290] sm:$0xff]
  %v270 = vld [vmem:[%s0 + $0x298] sm:$0xff]
  %v271 = vld [vmem:[%s0 + $0x2a0] sm:$0xff]
  %v272 = vld [vmem:[%s0 + $0x2a8] sm:$0xff]
  %v273 = vld [vmem:[%s0 + $0x2b0] sm:$0xff]
  %v274 = vld [vmem:[%s0 + $0x2b8] sm:$0xff]
  %v275 = vld [vmem:[%s0 + $0x2c0] sm:$0xff]
  %v276 = vld [vmem:[%s0 + $0x2c8] sm:$0xff]
  %v277 = vld [vmem:[%s0 + $0x2d0] sm:$0xff]
  %278 = vst [vmem:[#allocation2 + $0x290] sm:$0xff] %v196
  %279 = vst [vmem:[#allocation2 + $0x298] sm:$0xff] %v197
  %280 = vst [vmem:[#allocation2 + $0x2a0] sm:$0xff] %v198
  %281 = vst [vmem:[#allocation2 + $0x2a8] sm:$0xff] %v199
  %282 = vst [vmem:[#allocation2 + $0x2b0] sm:$0xff] %v200
  %283 = vst [vmem:[#allocation2 + $0x2b8] sm:$0xff] %v201
  %284 = vst [vmem:[#allocation2 + $0x2c0] sm:$0xff] %v202
  %285 = vst [vmem:[#allocation2 + $0x2c8] sm:$0xff] %v203
  %286 = vst [vmem:[#allocation2 + $0x2d0] sm:$0xff] %v204
  %287 = vst [vmem:[#allocation2 + $0x2d8] sm:$0xff] %v205
  %288 = vst [vmem:[#allocation2 + $0x2e0] sm:$0xff] %v206
  %289 = vst [vmem:[#allocation2 + $0x2e8] sm:$0xff] %v207
  %290 = vst [vmem:[#allocation2 + $0x2f0] sm:$0xff] %v208
  %291 = vst [vmem:[#allocation2 + $0x2f8] sm:$0xff] %v209
  %292 = vst [vmem:[#allocation2 + $0x300] sm:$0xff] %v210
  %293 = vst [vmem:[#allocation2 + $0x308] sm:$0xff] %v211
  %294 = vst [vmem:[#allocation2 + $0x310] sm:$0xff] %v212
  %295 = vst [vmem:[#allocation2 + $0x318] sm:$0xff] %v213
  %296 = vst [vmem:[#allocation2 + $0x320] sm:$0xff] %v214
  %297 = vst [vmem:[#allocation2 + $0x328] sm:$0xff] %v215
  %298 = vst [vmem:[#allocation2 + $0x330] sm:$0xff] %v216
  %299 = vst [vmem:[#allocation2 + $0x338] sm:$0xff] %v217
  %300 = vst [vmem:[#allocation2 + $0x340] sm:$0xff] %v218
  %301 = vst [vmem:[#allocation2 + $0x348] sm:$0xff] %v219
  %302 = vst [vmem:[#allocation2 + $0x350] sm:$0xff] %v220
  %303 = vst [vmem:[#allocation2 + $0x358] sm:$0xff] %v221
  %304 = vst [vmem:[#allocation2 + $0x360] sm:$0xff] %v222
  %305 = vst [vmem:[#allocation2 + $0x368] sm:$0xff] %v223
  %306 = vst [vmem:[#allocation2 + $0x370] sm:$0xff] %v224
  %307 = vst [vmem:[#allocation2 + $0x378] sm:$0xff] %v225
  %308 = vst [vmem:[#allocation2 + $0x380] sm:$0xff] %v226
  %309 = vst [vmem:[#allocation2 + $0x388] sm:$0xff] %v227
  %310 = vst [vmem:[#allocation2 + $0x390] sm:$0xff] %v228
  %311 = vst [vmem:[#allocation2 + $0x398] sm:$0xff] %v229
  %312 = vst [vmem:[#allocation2 + $0x3a0] sm:$0xff] %v230
  %313 = vst [vmem:[#allocation2 + $0x3a8] sm:$0xff] %v231
  %314 = vst [vmem:[#allocation2 + $0x3b0] sm:$0xff] %v232
  %315 = vst [vmem:[#allocation2 + $0x3b8] sm:$0xff] %v233
  %316 = vst [vmem:[#allocation2 + $0x3c0] sm:$0xff] %v234
  %317 = vst [vmem:[#allocation2 + $0x3c8] sm:$0xff] %v235
  %318 = vst [vmem:[#allocation2 + $0x3d0] sm:$0xff] %v236
  %319 = vst [vmem:[#allocation2 + $0x3d8] sm:$0xff] %v237
  %320 = vst [vmem:[#allocation2 + $0x3e0] sm:$0xff] %v238
  %321 = vst [vmem:[#allocation2 + $0x3e8] sm:$0xff] %v239
  %322 = vst [vmem:[#allocation2 + $0x3f0] sm:$0xff] %v240
  %323 = vst [vmem:[#allocation2 + $0x3f8] sm:$0xff] %v241
  %324 = vst [vmem:[#allocation2 + $0x400] sm:$0xff] %v242
  %325 = vst [vmem:[#allocation2 + $0x408] sm:$0xff] %v243
  %326 = vst [vmem:[#allocation2 + $0x410] sm:$0xff] %v244
  %327 = vst [vmem:[#allocation2 + $0x418] sm:$0xff] %v245
  %328 = vst [vmem:[#allocation2 + $0x420] sm:$0xff] %v246
  %329 = vst [vmem:[#allocation2 + $0x428] sm:$0xff] %v247
  %330 = vst [vmem:[#allocation2 + $0x430] sm:$0xff] %v248
  %331 = vst [vmem:[#allocation2 + $0x438] sm:$0xff] %v249
  %332 = vst [vmem:[#allocation2 + $0x440] sm:$0xff] %v250
  %333 = vst [vmem:[#allocation2 + $0x448] sm:$0xff] %v251
  %334 = vst [vmem:[#allocation2 + $0x450] sm:$0xff] %v252
  %335 = vst [vmem:[#allocation2 + $0x458] sm:$0xff] %v253
  %336 = vst [vmem:[#allocation2 + $0x460] sm:$0xff] %v254
  %337 = vst [vmem:[#allocation2 + $0x468] sm:$0xff] %v255
  %338 = vst [vmem:[#allocation2 + $0x470] sm:$0xff] %v256
  %339 = vst [vmem:[#allocation2 + $0x478] sm:$0xff] %v257
  %340 = vst [vmem:[#allocation2 + $0x480] sm:$0xff] %v258
  %341 = vst [vmem:[#allocation2 + $0x488] sm:$0xff] %v259
  %342 = vst [vmem:[#allocation2 + $0x490] sm:$0xff] %v260
  %343 = vst [vmem:[#allocation2 + $0x498] sm:$0xff] %v261
  %344 = vst [vmem:[#allocation2 + $0x4a0] sm:$0xff] %v262
  %345 = vst [vmem:[#allocation2 + $0x4a8] sm:$0xff] %v263
  %346 = vst [vmem:[#allocation2 + $0x4b0] sm:$0xff] %v264
  %347 = vst [vmem:[#allocation2 + $0x4b8] sm:$0xff] %v265
  %348 = vst [vmem:[#allocation2 + $0x4c0] sm:$0xff] %v266
  %349 = vst [vmem:[#allocation2 + $0x4c8] sm:$0xff] %v267
  %350 = vst [vmem:[#allocation2 + $0x4d0] sm:$0xff] %v268
  %351 = vst [vmem:[#allocation2 + $0x4d8] sm:$0xff] %v269
  %352 = vst [vmem:[#allocation2 + $0x4e0] sm:$0xff] %v270
  %353 = vst [vmem:[#allocation2 + $0x4e8] sm:$0xff] %v271
  %354 = vst [vmem:[#allocation2 + $0x4f0] sm:$0xff] %v272
  %355 = vst [vmem:[#allocation2 + $0x4f8] sm:$0xff] %v273
  %356 = vst [vmem:[#allocation2 + $0x500] sm:$0xff] %v274
  %357 = vst [vmem:[#allocation2 + $0x508] sm:$0xff] %v275
  %358 = vst [vmem:[#allocation2 + $0x510] sm:$0xff] %v276
  %359 = vst [vmem:[#allocation2 + $0x518] sm:$0xff] %v277
  %v360 = vld [vmem:[%s0 + $0x38] sm:$0xff]
  %v361 = vld [vmem:[%s0 + $0x40] sm:$0xff]
  %v362 = vld [vmem:[%s0 + $0x48] sm:$0xff]
  %v363 = vld [vmem:[%s0 + $0x50] sm:$0xff]
  %v364 = vld [vmem:[%s0 + $0x58] sm:$0xff]
  %v365 = vld [vmem:[%s0 + $0x60] sm:$0xff]
  %v366 = vld [vmem:[%s0 + $0x68] sm:$0xff]
  %v367 = vld [vmem:[%s0 + $0x70] sm:$0xff]
  %v368 = vld [vmem:[%s0 + $0x78] sm:$0xff]
  %v369 = vld [vmem:[%s0 + $0x80] sm:$0xff]
  %v370 = vld [vmem:[%s0 + $0x88] sm:$0xff]
  %v371 = vld [vmem:[%s0 + $0x90] sm:$0xff]
  %v372 = vld [vmem:[%s0 + $0x98] sm:$0xff]
  %v373 = vld [vmem:[%s0 + $0xa0] sm:$0xff]
  %v374 = vld [vmem:[%s0 + $0xa8] sm:$0xff]
  %v375 = vld [vmem:[%s0 + $0xb0] sm:$0xff]
  %v376 = vld [vmem:[%s0 + $0xb8] sm:$0xff]
  %v377 = vld [vmem:[%s0 + $0xc0] sm:$0xff]
  %v378 = vld [vmem:[%s0 + $0xc8] sm:$0xff]
  %v379 = vld [vmem:[%s0 + $0xd0] sm:$0xff]
  %v380 = vld [vmem:[%s0 + $0xd8] sm:$0xff]
  %v381 = vld [vmem:[%s0 + $0xe0] sm:$0xff]
  %v382 = vld [vmem:[%s0 + $0xe8] sm:$0xff]
  %v383 = vld [vmem:[%s0 + $0xf0] sm:$0xff]
  %v384 = vld [vmem:[%s0 + $0xf8] sm:$0xff]
  %v385 = vld [vmem:[%s0 + $0x100] sm:$0xff]
  %v386 = vld [vmem:[%s0 + $0x108] sm:$0xff]
  %v387 = vld [vmem:[%s0 + $0x110] sm:$0xff]
  %v388 = vld [vmem:[%s0 + $0x118] sm:$0xff]
  %v389 = vld [vmem:[%s0 + $0x120] sm:$0xff]
  %v390 = vld [vmem:[%s0 + $0x128] sm:$0xff]
  %v391 = vld [vmem:[%s0 + $0x130] sm:$0xff]
  %v392 = vld [vmem:[%s0 + $0x138] sm:$0xff]
  %v393 = vld [vmem:[%s0 + $0x140] sm:$0xff]
  %v394 = vld [vmem:[%s0 + $0x148] sm:$0xff]
  %v395 = vld [vmem:[%s0 + $0x150] sm:$0xff]
  %v396 = vld [vmem:[%s0 + $0x158] sm:$0xff]
  %v397 = vld [vmem:[%s0 + $0x160] sm:$0xff]
  %v398 = vld [vmem:[%s0 + $0x168] sm:$0xff]
  %v399 = vld [vmem:[%s0 + $0x170] sm:$0xff]
  %v400 = vld [vmem:[%s0 + $0x178] sm:$0xff]
  %v401 = vld [vmem:[%s0 + $0x1c0] sm:$0xff]
  %v402 = vld [vmem:[%s0 + $0x1c8] sm:$0xff]
  %v403 = vld [vmem:[%s0 + $0x1d0] sm:$0xff]
  %v404 = vld [vmem:[%s0 + $0x1d8] sm:$0xff]
  %v405 = vld [vmem:[%s0 + $0x1e0] sm:$0xff]
  %v406 = vld [vmem:[%s0 + $0x1e8] sm:$0xff]
  %v407 = vld [vmem:[%s0 + $0x1f0] sm:$0xff]
  %v408 = vld [vmem:[%s0 + $0x1f8] sm:$0xff]
  %v409 = vld [vmem:[%s0 + $0x200] sm:$0xff]
  %v410 = vld [vmem:[%s0 + $0x208] sm:$0xff]
  %v411 = vld [vmem:[%s0 + $0x210] sm:$0xff]
  %v412 = vld [vmem:[%s0 + $0x218] sm:$0xff]
  %v413 = vld [vmem:[%s0 + $0x220] sm:$0xff]
  %v414 = vld [vmem:[%s0 + $0x228] sm:$0xff]
  %v415 = vld [vmem:[%s0 + $0x230] sm:$0xff]
  %v416 = vld [vmem:[%s0 + $0x238] sm:$0xff]
  %v417 = vld [vmem:[%s0 + $0x240] sm:$0xff]
  %v418 = vld [vmem:[%s0 + $0x248] sm:$0xff]
  %v419 = vld [vmem:[%s0 + $0x250] sm:$0xff]
  %v420 = vld [vmem:[%s0 + $0x258] sm:$0xff]
  %v421 = vld [vmem:[%s0 + $0x260] sm:$0xff]
  %v422 = vld [vmem:[%s0 + $0x268] sm:$0xff]
  %v423 = vld [vmem:[%s0 + $0x270] sm:$0xff]
  %v424 = vld [vmem:[%s0 + $0x278] sm:$0xff]
  %v425 = vld [vmem:[%s0 + $0x280] sm:$0xff]
  %v426 = vld [vmem:[%s0 + $0x288] sm:$0xff]
  %v427 = vld [vmem:[%s0 + $0x290] sm:$0xff]
  %v428 = vld [vmem:[%s0 + $0x298] sm:$0xff]
  %v429 = vld [vmem:[%s0 + $0x2a0] sm:$0xff]
  %v430 = vld [vmem:[%s0 + $0x2a8] sm:$0xff]
  %v431 = vld [vmem:[%s0 + $0x2b0] sm:$0xff]
  %v432 = vld [vmem:[%s0 + $0x2b8] sm:$0xff]
  %v433 = vld [vmem:[%s0 + $0x2c0] sm:$0xff]
  %v434 = vld [vmem:[%s0 + $0x2c8] sm:$0xff]
  %v435 = vld [vmem:[%s0 + $0x2d0] sm:$0xff]
  %v436 = vld [vmem:[%s0 + $0x2d8] sm:$0xff]
  %v437 = vld [vmem:[%s0 + $0x2e0] sm:$0xff]
  %v438 = vld [vmem:[%s0 + $0x2e8] sm:$0xff]
  %v439 = vld [vmem:[%s0 + $0x2f0] sm:$0xff]
  %v440 = vld [vmem:[%s0 + $0x2f8] sm:$0xff]
  %v441 = vld [vmem:[%s0 + $0x300] sm:$0xff]
  %442 = vst [vmem:[#allocation2 + $0x520] sm:$0xff] %v360
  %443 = vst [vmem:[#allocation2 + $0x528] sm:$0xff] %v361
  %444 = vst [vmem:[#allocation2 + $0x530] sm:$0xff] %v362
  %445 = vst [vmem:[#allocation2 + $0x538] sm:$0xff] %v363
  %446 = vst [vmem:[#allocation2 + $0x540] sm:$0xff] %v364
  %447 = vst [vmem:[#allocation2 + $0x548] sm:$0xff] %v365
  %448 = vst [vmem:[#allocation2 + $0x550] sm:$0xff] %v366
  %449 = vst [vmem:[#allocation2 + $0x558] sm:$0xff] %v367
  %450 = vst [vmem:[#allocation2 + $0x560] sm:$0xff] %v368
  %451 = vst [vmem:[#allocation2 + $0x568] sm:$0xff] %v369
  %452 = vst [vmem:[#allocation2 + $0x570] sm:$0xff] %v370
  %453 = vst [vmem:[#allocation2 + $0x578] sm:$0xff] %v371
  %454 = vst [vmem:[#allocation2 + $0x580] sm:$0xff] %v372
  %455 = vst [vmem:[#allocation2 + $0x588] sm:$0xff] %v373
  %456 = vst [vmem:[#allocation2 + $0x590] sm:$0xff] %v374
  %457 = vst [vmem:[#allocation2 + $0x598] sm:$0xff] %v375
  %458 = vst [vmem:[#allocation2 + $0x5a0] sm:$0xff] %v376
  %459 = vst [vmem:[#allocation2 + $0x5a8] sm:$0xff] %v377
  %460 = vst [vmem:[#allocation2 + $0x5b0] sm:$0xff] %v378
  %461 = vst [vmem:[#allocation2 + $0x5b8] sm:$0xff] %v379
  %462 = vst [vmem:[#allocation2 + $0x5c0] sm:$0xff] %v380
  %463 = vst [vmem:[#allocation2 + $0x5c8] sm:$0xff] %v381
  %464 = vst [vmem:[#allocation2 + $0x5d0] sm:$0xff] %v382
  %465 = vst [vmem:[#allocation2 + $0x5d8] sm:$0xff] %v383
  %466 = vst [vmem:[#allocation2 + $0x5e0] sm:$0xff] %v384
  %467 = vst [vmem:[#allocation2 + $0x5e8] sm:$0xff] %v385
  %468 = vst [vmem:[#allocation2 + $0x5f0] sm:$0xff] %v386
  %469 = vst [vmem:[#allocation2 + $0x5f8] sm:$0xff] %v387
  %470 = vst [vmem:[#allocation2 + $0x600] sm:$0xff] %v388
  %471 = vst [vmem:[#allocation2 + $0x608] sm:$0xff] %v389
  %472 = vst [vmem:[#allocation2 + $0x610] sm:$0xff] %v390
  %473 = vst [vmem:[#allocation2 + $0x618] sm:$0xff] %v391
  %474 = vst [vmem:[#allocation2 + $0x620] sm:$0xff] %v392
  %475 = vst [vmem:[#allocation2 + $0x628] sm:$0xff] %v393
  %476 = vst [vmem:[#allocation2 + $0x630] sm:$0xff] %v394
  %477 = vst [vmem:[#allocation2 + $0x638] sm:$0xff] %v395
  %478 = vst [vmem:[#allocation2 + $0x640] sm:$0xff] %v396
  %479 = vst [vmem:[#allocation2 + $0x648] sm:$0xff] %v397
  %480 = vst [vmem:[#allocation2 + $0x650] sm:$0xff] %v398
  %481 = vst [vmem:[#allocation2 + $0x658] sm:$0xff] %v399
  %482 = vst [vmem:[#allocation2 + $0x660] sm:$0xff] %v400
  %483 = vst [vmem:[#allocation2 + $0x668] sm:$0xff] %v401
  %484 = vst [vmem:[#allocation2 + $0x670] sm:$0xff] %v402
  %485 = vst [vmem:[#allocation2 + $0x678] sm:$0xff] %v403
  %486 = vst [vmem:[#allocation2 + $0x680] sm:$0xff] %v404
  %487 = vst [vmem:[#allocation2 + $0x688] sm:$0xff] %v405
  %488 = vst [vmem:[#allocation2 + $0x690] sm:$0xff] %v406
  %489 = vst [vmem:[#allocation2 + $0x698] sm:$0xff] %v407
  %490 = vst [vmem:[#allocation2 + $0x6a0] sm:$0xff] %v408
  %491 = vst [vmem:[#allocation2 + $0x6a8] sm:$0xff] %v409
  %492 = vst [vmem:[#allocation2 + $0x6b0] sm:$0xff] %v410
  %493 = vst [vmem:[#allocation2 + $0x6b8] sm:$0xff] %v411
  %494 = vst [vmem:[#allocation2 + $0x6c0] sm:$0xff] %v412
  %495 = vst [vmem:[#allocation2 + $0x6c8] sm:$0xff] %v413
  %496 = vst [vmem:[#allocation2 + $0x6d0] sm:$0xff] %v414
  %497 = vst [vmem:[#allocation2 + $0x6d8] sm:$0xff] %v415
  %498 = vst [vmem:[#allocation2 + $0x6e0] sm:$0xff] %v416
  %499 = vst [vmem:[#allocation2 + $0x6e8] sm:$0xff] %v417
  %500 = vst [vmem:[#allocation2 + $0x6f0] sm:$0xff] %v418
  %501 = vst [vmem:[#allocation2 + $0x6f8] sm:$0xff] %v419
  %502 = vst [vmem:[#allocation2 + $0x700] sm:$0xff] %v420
  %503 = vst [vmem:[#allocation2 + $0x708] sm:$0xff] %v421
  %504 = vst [vmem:[#allocation2 + $0x710] sm:$0xff] %v422
  %505 = vst [vmem:[#allocation2 + $0x718] sm:$0xff] %v423
  %506 = vst [vmem:[#allocation2 + $0x720] sm:$0xff] %v424
  %507 = vst [vmem:[#allocation2 + $0x728] sm:$0xff] %v425
  %508 = vst [vmem:[#allocation2 + $0x730] sm:$0xff] %v426
  %509 = vst [vmem:[#allocation2 + $0x738] sm:$0xff] %v427
  %510 = vst [vmem:[#allocation2 + $0x740] sm:$0xff] %v428
  %511 = vst [vmem:[#allocation2 + $0x748] sm:$0xff] %v429
  %512 = vst [vmem:[#allocation2 + $0x750] sm:$0xff] %v430
  %513 = vst [vmem:[#allocation2 + $0x758] sm:$0xff] %v431
  %514 = vst [vmem:[#allocation2 + $0x760] sm:$0xff] %v432
  %515 = vst [vmem:[#allocation2 + $0x768] sm:$0xff] %v433
  %516 = vst [vmem:[#allocation2 + $0x770] sm:$0xff] %v434
  %517 = vst [vmem:[#allocation2 + $0x778] sm:$0xff] %v435
  %518 = vst [vmem:[#allocation2 + $0x780] sm:$0xff] %v436
  %519 = vst [vmem:[#allocation2 + $0x788] sm:$0xff] %v437
  %520 = vst [vmem:[#allocation2 + $0x790] sm:$0xff] %v438
  %521 = vst [vmem:[#allocation2 + $0x798] sm:$0xff] %v439
  %522 = vst [vmem:[#allocation2 + $0x7a0] sm:$0xff] %v440
  %523 = vst [vmem:[#allocation2 + $0x7a8] sm:$0xff] %v441
  %v524 = vld [vmem:[%s0 + $0x40] sm:$0xff]
  %v525 = vld [vmem:[%s0 + $0x48] sm:$0xff]
  %v526 = vld [vmem:[%s0 + $0x50] sm:$0xff]
  %v527 = vld [vmem:[%s0 + $0x58] sm:$0xff]
  %v528 = vld [vmem:[%s0 + $0x60] sm:$0xff]
  %v529 = vld [vmem:[%s0 + $0x68] sm:$0xff]
  %v530 = vld [vmem:[%s0 + $0x70] sm:$0xff]
  %v531 = vld [vmem:[%s0 + $0x78] sm:$0xff]
  %v532 = vld [vmem:[%s0 + $0x80] sm:$0xff]
  %v533 = vld [vmem:[%s0 + $0x88] sm:$0xff]
  %v534 = vld [vmem:[%s0 + $0x90] sm:$0xff]
  %v535 = vld [vmem:[%s0 + $0x98] sm:$0xff]
  %v536 = vld [vmem:[%s0 + $0xa0] sm:$0xff]
  %v537 = vld [vmem:[%s0 + $0xa8] sm:$0xff]
  %v538 = vld [vmem:[%s0 + $0xb0] sm:$0xff]
  %v539 = vld [vmem:[%s0 + $0xb8] sm:$0xff]
  %v540 = vld [vmem:[%s0 + $0xc0] sm:$0xff]
  %v541 = vld [vmem:[%s0 + $0xc8] sm:$0xff]
  %v542 = vld [vmem:[%s0 + $0xd0] sm:$0xff]
  %v543 = vld [vmem:[%s0 + $0xd8] sm:$0xff]
  %v544 = vld [vmem:[%s0 + $0xe0] sm:$0xff]
  %v545 = vld [vmem:[%s0 + $0xe8] sm:$0xff]
  %v546 = vld [vmem:[%s0 + $0xf0] sm:$0xff]
  %v547 = vld [vmem:[%s0 + $0xf8] sm:$0xff]
  %v548 = vld [vmem:[%s0 + $0x100] sm:$0xff]
  %v549 = vld [vmem:[%s0 + $0x108] sm:$0xff]
  %v550 = vld [vmem:[%s0 + $0x110] sm:$0xff]
  %v551 = vld [vmem:[%s0 + $0x118] sm:$0xff]
  %v552 = vld [vmem:[%s0 + $0x120] sm:$0xff]
  %v553 = vld [vmem:[%s0 + $0x128] sm:$0xff]
  %v554 = vld [vmem:[%s0 + $0x130] sm:$0xff]
  %v555 = vld [vmem:[%s0 + $0x138] sm:$0xff]
  %v556 = vld [vmem:[%s0 + $0x140] sm:$0xff]
  %v557 = vld [vmem:[%s0 + $0x148] sm:$0xff]
  %v558 = vld [vmem:[%s0 + $0x150] sm:$0xff]
  %v559 = vld [vmem:[%s0 + $0x158] sm:$0xff]
  %v560 = vld [vmem:[%s0 + $0x160] sm:$0xff]
  %v561 = vld [vmem:[%s0 + $0x168] sm:$0xff]
  %v562 = vld [vmem:[%s0 + $0x170] sm:$0xff]
  %v563 = vld [vmem:[%s0 + $0x178] sm:$0xff]
  %v564 = vld [vmem:[%s0 + $0x180] sm:$0xff]
  %v565 = vld [vmem:[%s0 + $0x1c8] sm:$0xff]
  %v566 = vld [vmem:[%s0 + $0x1d0] sm:$0xff]
  %v567 = vld [vmem:[%s0 + $0x1d8] sm:$0xff]
  %v568 = vld [vmem:[%s0 + $0x1e0] sm:$0xff]
  %v569 = vld [vmem:[%s0 + $0x1e8] sm:$0xff]
  %v570 = vld [vmem:[%s0 + $0x1f0] sm:$0xff]
  %v571 = vld [vmem:[%s0 + $0x1f8] sm:$0xff]
  %v572 = vld [vmem:[%s0 + $0x200] sm:$0xff]
  %v573 = vld [vmem:[%s0 + $0x208] sm:$0xff]
  %v574 = vld [vmem:[%s0 + $0x210] sm:$0xff]
  %v575 = vld [vmem:[%s0 + $0x218] sm:$0xff]
  %v576 = vld [vmem:[%s0 + $0x220] sm:$0xff]
  %v577 = vld [vmem:[%s0 + $0x228] sm:$0xff]
  %v578 = vld [vmem:[%s0 + $0x230] sm:$0xff]
  %v579 = vld [vmem:[%s0 + $0x238] sm:$0xff]
  %v580 = vld [vmem:[%s0 + $0x240] sm:$0xff]
  %v581 = vld [vmem:[%s0 + $0x248] sm:$0xff]
  %v582 = vld [vmem:[%s0 + $0x250] sm:$0xff]
  %v583 = vld [vmem:[%s0 + $0x258] sm:$0xff]
  %v584 = vld [vmem:[%s0 + $0x260] sm:$0xff]
  %v585 = vld [vmem:[%s0 + $0x268] sm:$0xff]
  %v586 = vld [vmem:[%s0 + $0x270] sm:$0xff]
  %v587 = vld [vmem:[%s0 + $0x278] sm:$0xff]
  %v588 = vld [vmem:[%s0 + $0x280] sm:$0xff]
  %v589 = vld [vmem:[%s0 + $0x288] sm:$0xff]
  %v590 = vld [vmem:[%s0 + $0x290] sm:$0xff]
  %v591 = vld [vmem:[%s0 + $0x298] sm:$0xff]
  %v592 = vld [vmem:[%s0 + $0x2a0] sm:$0xff]
  %v593 = vld [vmem:[%s0 + $0x2a8] sm:$0xff]
  %v594 = vld [vmem:[%s0 + $0x2b0] sm:$0xff]
  %v595 = vld [vmem:[%s0 + $0x2b8] sm:$0xff]
  %v596 = vld [vmem:[%s0 + $0x2c0] sm:$0xff]
  %v597 = vld [vmem:[%s0 + $0x2c8] sm:$0xff]
  %v598 = vld [vmem:[%s0 + $0x2d0] sm:$0xff]
  %v599 = vld [vmem:[%s0 + $0x2d8] sm:$0xff]
  %v600 = vld [vmem:[%s0 + $0x2e0] sm:$0xff]
  %v601 = vld [vmem:[%s0 + $0x2e8] sm:$0xff]
  %v602 = vld [vmem:[%s0 + $0x2f0] sm:$0xff]
  %v603 = vld [vmem:[%s0 + $0x2f8] sm:$0xff]
  %v604 = vld [vmem:[%s0 + $0x300] sm:$0xff]
  %v605 = vld [vmem:[%s0 + $0x308] sm:$0xff]
  %606 = vst [vmem:[#allocation2 + $0x7b0] sm:$0xff] %v524
  %607 = vst [vmem:[#allocation2 + $0x7b8] sm:$0xff] %v525
  %608 = vst [vmem:[#allocation2 + $0x7c0] sm:$0xff] %v526
  %609 = vst [vmem:[#allocation2 + $0x7c8] sm:$0xff] %v527
  %610 = vst [vmem:[#allocation2 + $0x7d0] sm:$0xff] %v528
  %611 = vst [vmem:[#allocation2 + $0x7d8] sm:$0xff] %v529
  %612 = vst [vmem:[#allocation2 + $0x7e0] sm:$0xff] %v530
  %613 = vst [vmem:[#allocation2 + $0x7e8] sm:$0xff] %v531
  %614 = vst [vmem:[#allocation2 + $0x7f0] sm:$0xff] %v532
  %615 = vst [vmem:[#allocation2 + $0x7f8] sm:$0xff] %v533
  %616 = vst [vmem:[#allocation2 + $0x800] sm:$0xff] %v534
  %617 = vst [vmem:[#allocation2 + $0x808] sm:$0xff] %v535
  %618 = vst [vmem:[#allocation2 + $0x810] sm:$0xff] %v536
  %619 = vst [vmem:[#allocation2 + $0x818] sm:$0xff] %v537
  %620 = vst [vmem:[#allocation2 + $0x820] sm:$0xff] %v538
  %621 = vst [vmem:[#allocation2 + $0x828] sm:$0xff] %v539
  %622 = vst [vmem:[#allocation2 + $0x830] sm:$0xff] %v540
  %623 = vst [vmem:[#allocation2 + $0x838] sm:$0xff] %v541
  %624 = vst [vmem:[#allocation2 + $0x840] sm:$0xff] %v542
  %625 = vst [vmem:[#allocation2 + $0x848] sm:$0xff] %v543
  %626 = vst [vmem:[#allocation2 + $0x850] sm:$0xff] %v544
  %627 = vst [vmem:[#allocation2 + $0x858] sm:$0xff] %v545
  %628 = vst [vmem:[#allocation2 + $0x860] sm:$0xff] %v546
  %629 = vst [vmem:[#allocation2 + $0x868] sm:$0xff] %v547
  %630 = vst [vmem:[#allocation2 + $0x870] sm:$0xff] %v548
  %631 = vst [vmem:[#allocation2 + $0x878] sm:$0xff] %v549
  %632 = vst [vmem:[#allocation2 + $0x880] sm:$0xff] %v550
  %633 = vst [vmem:[#allocation2 + $0x888] sm:$0xff] %v551
  %634 = vst [vmem:[#allocation2 + $0x890] sm:$0xff] %v552
  %635 = vst [vmem:[#allocation2 + $0x898] sm:$0xff] %v553
  %636 = vst [vmem:[#allocation2 + $0x8a0] sm:$0xff] %v554
  %637 = vst [vmem:[#allocation2 + $0x8a8] sm:$0xff] %v555
  %638 = vst [vmem:[#allocation2 + $0x8b0] sm:$0xff] %v556
  %639 = vst [vmem:[#allocation2 + $0x8b8] sm:$0xff] %v557
  %640 = vst [vmem:[#allocation2 + $0x8c0] sm:$0xff] %v558
  %641 = vst [vmem:[#allocation2 + $0x8c8] sm:$0xff] %v559
  %642 = vst [vmem:[#allocation2 + $0x8d0] sm:$0xff] %v560
  %643 = vst [vmem:[#allocation2 + $0x8d8] sm:$0xff] %v561
  %644 = vst [vmem:[#allocation2 + $0x8e0] sm:$0xff] %v562
  %645 = vst [vmem:[#allocation2 + $0x8e8] sm:$0xff] %v563
  %646 = vst [vmem:[#allocation2 + $0x8f0] sm:$0xff] %v564
  %647 = vst [vmem:[#allocation2 + $0x8f8] sm:$0xff] %v565
  %648 = vst [vmem:[#allocation2 + $0x900] sm:$0xff] %v566
  %649 = vst [vmem:[#allocation2 + $0x908] sm:$0xff] %v567
  %650 = vst [vmem:[#allocation2 + $0x910] sm:$0xff] %v568
  %651 = vst [vmem:[#allocation2 + $0x918] sm:$0xff] %v569
  %652 = vst [vmem:[#allocation2 + $0x920] sm:$0xff] %v570
  %653 = vst [vmem:[#allocation2 + $0x928] sm:$0xff] %v571
  %654 = vst [vmem:[#allocation2 + $0x930] sm:$0xff] %v572
  %655 = vst [vmem:[#allocation2 + $0x938] sm:$0xff] %v573
  %656 = vst [vmem:[#allocation2 + $0x940] sm:$0xff] %v574
  %657 = vst [vmem:[#allocation2 + $0x948] sm:$0xff] %v575
  %658 = vst [vmem:[#allocation2 + $0x950] sm:$0xff] %v576
  %659 = vst [vmem:[#allocation2 + $0x958] sm:$0xff] %v577
  %660 = vst [vmem:[#allocation2 + $0x960] sm:$0xff] %v578
  %661 = vst [vmem:[#allocation2 + $0x968] sm:$0xff] %v579
  %662 = vst [vmem:[#allocation2 + $0x970] sm:$0xff] %v580
  %663 = vst [vmem:[#allocation2 + $0x978] sm:$0xff] %v581
  %664 = vst [vmem:[#allocation2 + $0x980] sm:$0xff] %v582
  %665 = vst [vmem:[#allocation2 + $0x988] sm:$0xff] %v583
  %666 = vst [vmem:[#allocation2 + $0x990] sm:$0xff] %v584
  %667 = vst [vmem:[#allocation2 + $0x998] sm:$0xff] %v585
  %668 = vst [vmem:[#allocation2 + $0x9a0] sm:$0xff] %v586
  %669 = vst [vmem:[#allocation2 + $0x9a8] sm:$0xff] %v587
  %670 = vst [vmem:[#allocation2 + $0x9b0] sm:$0xff] %v588
  %671 = vst [vmem:[#allocation2 + $0x9b8] sm:$0xff] %v589
  %672 = vst [vmem:[#allocation2 + $0x9c0] sm:$0xff] %v590
  %673 = vst [vmem:[#allocation2 + $0x9c8] sm:$0xff] %v591
  %674 = vst [vmem:[#allocation2 + $0x9d0] sm:$0xff] %v592
  %675 = vst [vmem:[#allocation2 + $0x9d8] sm:$0xff] %v593
  %676 = vst [vmem:[#allocation2 + $0x9e0] sm:$0xff] %v594
  %677 = vst [vmem:[#allocation2 + $0x9e8] sm:$0xff] %v595
  %678 = vst [vmem:[#allocation2 + $0x9f0] sm:$0xff] %v596
  %679 = vst [vmem:[#allocation2 + $0x9f8] sm:$0xff] %v597
  %680 = vst [vmem:[#allocation2 + $0xa00] sm:$0xff] %v598
  %681 = vst [vmem:[#allocation2 + $0xa08] sm:$0xff] %v599
  %682 = vst [vmem:[#allocation2 + $0xa10] sm:$0xff] %v600
  %683 = vst [vmem:[#allocation2 + $0xa18] sm:$0xff] %v601
  %684 = vst [vmem:[#allocation2 + $0xa20] sm:$0xff] %v602
  %685 = vst [vmem:[#allocation2 + $0xa28] sm:$0xff] %v603
  %686 = vst [vmem:[#allocation2 + $0xa30] sm:$0xff] %v604
  %687 = vst [vmem:[#allocation2 + $0xa38] sm:$0xff] %v605
  %v688 = vld [vmem:[%s1] sm:$0xff]
  %v689 = vld [vmem:[%s1 + $0x8] sm:$0xff]
  %v690 = vld [vmem:[%s1 + $0x10] sm:$0xff]
  %v691 = vld [vmem:[%s1 + $0x18] sm:$0xff]
  %v692 = vld [vmem:[%s1 + $0x20] sm:$0xff]
  %v693 = vld [vmem:[%s1 + $0x28] sm:$0xff]
  %v694 = vld [vmem:[%s1 + $0x30] sm:$0xff]
  %v695 = vld [vmem:[%s1 + $0x38] sm:$0xff]
  %v696 = vld [vmem:[%s1 + $0x40] sm:$0xff]
  %v697 = vld [vmem:[%s1 + $0x48] sm:$0xff]
  %v698 = vld [vmem:[%s1 + $0x50] sm:$0xff]
  %v699 = vld [vmem:[%s1 + $0x58] sm:$0xff]
  %v700 = vld [vmem:[%s1 + $0x60] sm:$0xff]
  %v701 = vld [vmem:[%s1 + $0x68] sm:$0xff]
  %v702 = vld [vmem:[%s1 + $0x70] sm:$0xff]
  %v703 = vld [vmem:[%s1 + $0x78] sm:$0xff]
  %v704 = vld [vmem:[#allocation2] sm:$0xff]
  %v705 = vld [vmem:[#allocation2 + $0x8] sm:$0xff]
  %v706 = vld [vmem:[#allocation2 + $0x10] sm:$0xff]
  %v707 = vld [vmem:[#allocation2 + $0x18] sm:$0xff]
  %v708 = vld [vmem:[#allocation2 + $0x20] sm:$0xff]
  %v709 = vld [vmem:[#allocation2 + $0x28] sm:$0xff]
  %v710 = vld [vmem:[#allocation2 + $0x30] sm:$0xff]
  %v711 = vld [vmem:[#allocation2 + $0x38] sm:$0xff]
  %v712 = vld [vmem:[#allocation2 + $0x40] sm:$0xff]
  %v713 = vld [vmem:[#allocation2 + $0x48] sm:$0xff]
  %v714 = vld [vmem:[#allocation2 + $0x50] sm:$0xff]
  %v715 = vld [vmem:[#allocation2 + $0x58] sm:$0xff]
  %v716 = vld [vmem:[#allocation2 + $0x60] sm:$0xff]
  %v717 = vld [vmem:[#allocation2 + $0x68] sm:$0xff]
  %v718 = vld [vmem:[#allocation2 + $0x70] sm:$0xff]
  %v719 = vld [vmem:[#allocation2 + $0x78] sm:$0xff]
  %v720 = vld [vmem:[#allocation2 + $0x80] sm:$0xff]
  %v721 = vld [vmem:[#allocation2 + $0x88] sm:$0xff]
  %v722 = vld [vmem:[#allocation2 + $0x90] sm:$0xff]
  %v723 = vld [vmem:[#allocation2 + $0x98] sm:$0xff]
  %v724 = vld [vmem:[#allocation2 + $0xa0] sm:$0xff]
  %v725 = vld [vmem:[#allocation2 + $0xa8] sm:$0xff]
  %v726 = vld [vmem:[#allocation2 + $0xb0] sm:$0xff]
  %v727 = vld [vmem:[#allocation2 + $0xb8] sm:$0xff]
  %v728 = vld [vmem:[#allocation2 + $0xc0] sm:$0xff]
  %v729 = vld [vmem:[#allocation2 + $0xc8] sm:$0xff]
  %v730 = vld [vmem:[#allocation2 + $0xd0] sm:$0xff]
  %v731 = vld [vmem:[#allocation2 + $0xd8] sm:$0xff]
  %v732 = vld [vmem:[#allocation2 + $0xe0] sm:$0xff]
  %v733 = vld [vmem:[#allocation2 + $0xe8] sm:$0xff]
  %v734 = vld [vmem:[#allocation2 + $0xf0] sm:$0xff]
  %v735 = vld [vmem:[#allocation2 + $0xf8] sm:$0xff]
  %v736 = vld [vmem:[#allocation2 + $0x100] sm:$0xff]
  %v737 = vld [vmem:[#allocation2 + $0x108] sm:$0xff]
  %v738 = vld [vmem:[#allocation2 + $0x110] sm:$0xff]
  %v739 = vld [vmem:[#allocation2 + $0x118] sm:$0xff]
  %v740 = vld [vmem:[#allocation2 + $0x120] sm:$0xff]
  %v741 = vld [vmem:[#allocation2 + $0x128] sm:$0xff]
  %v742 = vld [vmem:[#allocation2 + $0x130] sm:$0xff]
  %v743 = vld [vmem:[#allocation2 + $0x138] sm:$0xff]
  %v744 = vld [vmem:[#allocation2 + $0x140] sm:$0xff]
  %v745 = vld [vmem:[#allocation2 + $0x148] sm:$0xff]
  %v746 = vld [vmem:[#allocation2 + $0x150] sm:$0xff]
  %v747 = vld [vmem:[#allocation2 + $0x158] sm:$0xff]
  %v748 = vld [vmem:[#allocation2 + $0x160] sm:$0xff]
  %v749 = vld [vmem:[#allocation2 + $0x168] sm:$0xff]
  %v750 = vld [vmem:[#allocation2 + $0x170] sm:$0xff]
  %v751 = vld [vmem:[#allocation2 + $0x178] sm:$0xff]
  %v752 = vld [vmem:[#allocation2 + $0x180] sm:$0xff]
  %v753 = vld [vmem:[#allocation2 + $0x188] sm:$0xff]
  %v754 = vld [vmem:[#allocation2 + $0x190] sm:$0xff]
  %v755 = vld [vmem:[#allocation2 + $0x198] sm:$0xff]
  %v756 = vld [vmem:[#allocation2 + $0x1a0] sm:$0xff]
  %v757 = vld [vmem:[#allocation2 + $0x1a8] sm:$0xff]
  %v758 = vld [vmem:[#allocation2 + $0x1b0] sm:$0xff]
  %v759 = vld [vmem:[#allocation2 + $0x1b8] sm:$0xff]
  %v760 = vld [vmem:[#allocation2 + $0x1c0] sm:$0xff]
  %v761 = vld [vmem:[#allocation2 + $0x1c8] sm:$0xff]
  %v762 = vld [vmem:[#allocation2 + $0x1d0] sm:$0xff]
  %v763 = vld [vmem:[#allocation2 + $0x1d8] sm:$0xff]
  %v764 = vld [vmem:[#allocation2 + $0x1e0] sm:$0xff]
  %v765 = vld [vmem:[#allocation2 + $0x1e8] sm:$0xff]
  %v766 = vld [vmem:[#allocation2 + $0x1f0] sm:$0xff]
  %v767 = vld [vmem:[#allocation2 + $0x1f8] sm:$0xff]
  %v768 = vld [vmem:[#allocation2 + $0x200] sm:$0xff]
  %v769 = vld [vmem:[#allocation2 + $0x208] sm:$0xff]
  %v770 = vld [vmem:[#allocation2 + $0x210] sm:$0xff]
  %v771 = vld [vmem:[#allocation2 + $0x218] sm:$0xff]
  %v772 = vld [vmem:[#allocation2 + $0x220] sm:$0xff]
  %v773 = vld [vmem:[#allocation2 + $0x228] sm:$0xff]
  %v774 = vld [vmem:[#allocation2 + $0x230] sm:$0xff]
  %v775 = vld [vmem:[#allocation2 + $0x238] sm:$0xff]
  %v776 = vld [vmem:[#allocation2 + $0x240] sm:$0xff]
  %v777 = vld [vmem:[#allocation2 + $0x248] sm:$0xff]
  %v778 = vld [vmem:[#allocation2 + $0x250] sm:$0xff]
  %v779 = vld [vmem:[#allocation2 + $0x258] sm:$0xff]
  %v780 = vld [vmem:[#allocation2 + $0x260] sm:$0xff]
  %v781 = vld [vmem:[#allocation2 + $0x268] sm:$0xff]
  %v782 = vld [vmem:[#allocation2 + $0x270] sm:$0xff]
  %v783 = vld [vmem:[#allocation2 + $0x278] sm:$0xff]
  %v784 = vld [vmem:[#allocation2 + $0x280] sm:$0xff]
  %v785 = vld [vmem:[#allocation2 + $0x288] sm:$0xff]
  %v786 = vld [vmem:[#allocation2 + $0x290] sm:$0xff]
  %v787 = vld [vmem:[#allocation2 + $0x298] sm:$0xff]
  %v788 = vld [vmem:[#allocation2 + $0x2a0] sm:$0xff]
  %v789 = vld [vmem:[#allocation2 + $0x2a8] sm:$0xff]
  %v790 = vld [vmem:[#allocation2 + $0x2b0] sm:$0xff]
  %v791 = vld [vmem:[#allocation2 + $0x2b8] sm:$0xff]
  %v792 = vld [vmem:[#allocation2 + $0x2c0] sm:$0xff]
  %v793 = vld [vmem:[#allocation2 + $0x2c8] sm:$0xff]
  %v794 = vld [vmem:[#allocation2 + $0x2d0] sm:$0xff]
  %v795 = vld [vmem:[#allocation2 + $0x2d8] sm:$0xff]
  %v796 = vld [vmem:[#allocation2 + $0x2e0] sm:$0xff]
  %v797 = vld [vmem:[#allocation2 + $0x2e8] sm:$0xff]
  %v798 = vld [vmem:[#allocation2 + $0x2f0] sm:$0xff]
  %v799 = vld [vmem:[#allocation2 + $0x2f8] sm:$0xff]
  %v800 = vld [vmem:[#allocation2 + $0x300] sm:$0xff]
  %v801 = vld [vmem:[#allocation2 + $0x308] sm:$0xff]
  %v802 = vld [vmem:[#allocation2 + $0x310] sm:$0xff]
  %v803 = vld [vmem:[#allocation2 + $0x318] sm:$0xff]
  %v804 = vld [vmem:[#allocation2 + $0x320] sm:$0xff]
  %v805 = vld [vmem:[#allocation2 + $0x328] sm:$0xff]
  %v806 = vld [vmem:[#allocation2 + $0x330] sm:$0xff]
  %v807 = vld [vmem:[#allocation2 + $0x338] sm:$0xff]
  %v808 = vld [vmem:[#allocation2 + $0x340] sm:$0xff]
  %v809 = vld [vmem:[#allocation2 + $0x348] sm:$0xff]
  %v810 = vld [vmem:[#allocation2 + $0x350] sm:$0xff]
  %v811 = vld [vmem:[#allocation2 + $0x358] sm:$0xff]
  %v812 = vld [vmem:[#allocation2 + $0x360] sm:$0xff]
  %v813 = vld [vmem:[#allocation2 + $0x368] sm:$0xff]
  %v814 = vld [vmem:[#allocation2 + $0x370] sm:$0xff]
  %v815 = vld [vmem:[#allocation2 + $0x378] sm:$0xff]
  %v816 = vld [vmem:[#allocation2 + $0x380] sm:$0xff]
  %v817 = vld [vmem:[#allocation2 + $0x388] sm:$0xff]
  %v818 = vld [vmem:[#allocation2 + $0x390] sm:$0xff]
  %v819 = vld [vmem:[#allocation2 + $0x398] sm:$0xff]
  %v820 = vld [vmem:[#allocation2 + $0x3a0] sm:$0xff]
  %v821 = vld [vmem:[#allocation2 + $0x3a8] sm:$0xff]
  %v822 = vld [vmem:[#allocation2 + $0x3b0] sm:$0xff]
  %v823 = vld [vmem:[#allocation2 + $0x3b8] sm:$0xff]
  %v824 = vld [vmem:[#allocation2 + $0x3c0] sm:$0xff]
  %v825 = vld [vmem:[#allocation2 + $0x3c8] sm:$0xff]
  %v826 = vld [vmem:[#allocation2 + $0x3d0] sm:$0xff]
  %v827 = vld [vmem:[#allocation2 + $0x3d8] sm:$0xff]
  %v828 = vld [vmem:[#allocation2 + $0x3e0] sm:$0xff]
  %v829 = vld [vmem:[#allocation2 + $0x3e8] sm:$0xff]
  %v830 = vld [vmem:[#allocation2 + $0x3f0] sm:$0xff]
  %v831 = vld [vmem:[#allocation2 + $0x3f8] sm:$0xff]
  %v832 = vld [vmem:[#allocation2 + $0x400] sm:$0xff]
  %v833 = vld [vmem:[#allocation2 + $0x408] sm:$0xff]
  %v834 = vld [vmem:[#allocation2 + $0x410] sm:$0xff]
  %v835 = vld [vmem:[#allocation2 + $0x418] sm:$0xff]
  %v836 = vld [vmem:[#allocation2 + $0x420] sm:$0xff]
  %v837 = vld [vmem:[#allocation2 + $0x428] sm:$0xff]
  %v838 = vld [vmem:[#allocation2 + $0x430] sm:$0xff]
  %v839 = vld [vmem:[#allocation2 + $0x438] sm:$0xff]
  %v840 = vld [vmem:[#allocation2 + $0x440] sm:$0xff]
  %v841 = vld [vmem:[#allocation2 + $0x448] sm:$0xff]
  %v842 = vld [vmem:[#allocation2 + $0x450] sm:$0xff]
  %v843 = vld [vmem:[#allocation2 + $0x458] sm:$0xff]
  %v844 = vld [vmem:[#allocation2 + $0x460] sm:$0xff]
  %v845 = vld [vmem:[#allocation2 + $0x468] sm:$0xff]
  %v846 = vld [vmem:[#allocation2 + $0x470] sm:$0xff]
  %v847 = vld [vmem:[#allocation2 + $0x478] sm:$0xff]
  %v848 = vld [vmem:[#allocation2 + $0x480] sm:$0xff]
  %v849 = vld [vmem:[#allocation2 + $0x488] sm:$0xff]
  %v850 = vld [vmem:[#allocation2 + $0x490] sm:$0xff]
  %v851 = vld [vmem:[#allocation2 + $0x498] sm:$0xff]
  %v852 = vld [vmem:[#allocation2 + $0x4a0] sm:$0xff]
  %v853 = vld [vmem:[#allocation2 + $0x4a8] sm:$0xff]
  %v854 = vld [vmem:[#allocation2 + $0x4b0] sm:$0xff]
  %v855 = vld [vmem:[#allocation2 + $0x4b8] sm:$0xff]
  %v856 = vld [vmem:[#allocation2 + $0x4c0] sm:$0xff]
  %v857 = vld [vmem:[#allocation2 + $0x4c8] sm:$0xff]
  %v858 = vld [vmem:[#allocation2 + $0x4d0] sm:$0xff]
  %v859 = vld [vmem:[#allocation2 + $0x4d8] sm:$0xff]
  %v860 = vld [vmem:[#allocation2 + $0x4e0] sm:$0xff]
  %v861 = vld [vmem:[#allocation2 + $0x4e8] sm:$0xff]
  %v862 = vld [vmem:[#allocation2 + $0x4f0] sm:$0xff]
  %v863 = vld [vmem:[#allocation2 + $0x4f8] sm:$0xff]
  %v864 = vld [vmem:[#allocation2 + $0x500] sm:$0xff]
  %v865 = vld [vmem:[#allocation2 + $0x508] sm:$0xff]
  %v866 = vld [vmem:[#allocation2 + $0x510] sm:$0xff]
  %v867 = vld [vmem:[#allocation2 + $0x518] sm:$0xff]
  %v868 = vld [vmem:[#allocation2 + $0x520] sm:$0xff]
  %v869 = vld [vmem:[#allocation2 + $0x528] sm:$0xff]
  %v870 = vld [vmem:[#allocation2 + $0x530] sm:$0xff]
  %v871 = vld [vmem:[#allocation2 + $0x538] sm:$0xff]
  %v872 = vld [vmem:[#allocation2 + $0x540] sm:$0xff]
  %v873 = vld [vmem:[#allocation2 + $0x548] sm:$0xff]
  %v874 = vld [vmem:[#allocation2 + $0x550] sm:$0xff]
  %v875 = vld [vmem:[#allocation2 + $0x558] sm:$0xff]
  %v876 = vld [vmem:[#allocation2 + $0x560] sm:$0xff]
  %v877 = vld [vmem:[#allocation2 + $0x568] sm:$0xff]
  %v878 = vld [vmem:[#allocation2 + $0x570] sm:$0xff]
  %v879 = vld [vmem:[#allocation2 + $0x578] sm:$0xff]
  %v880 = vld [vmem:[#allocation2 + $0x580] sm:$0xff]
  %v881 = vld [vmem:[#allocation2 + $0x588] sm:$0xff]
  %v882 = vld [vmem:[#allocation2 + $0x590] sm:$0xff]
  %v883 = vld [vmem:[#allocation2 + $0x598] sm:$0xff]
  %v884 = vld [vmem:[#allocation2 + $0x5a0] sm:$0xff]
  %v885 = vld [vmem:[#allocation2 + $0x5a8] sm:$0xff]
  %v886 = vld [vmem:[#allocation2 + $0x5b0] sm:$0xff]
  %v887 = vld [vmem:[#allocation2 + $0x5b8] sm:$0xff]
  %v888 = vld [vmem:[#allocation2 + $0x5c0] sm:$0xff]
  %v889 = vld [vmem:[#allocation2 + $0x5c8] sm:$0xff]
  %v890 = vld [vmem:[#allocation2 + $0x5d0] sm:$0xff]
  %v891 = vld [vmem:[#allocation2 + $0x5d8] sm:$0xff]
  %v892 = vld [vmem:[#allocation2 + $0x5e0] sm:$0xff]
  %v893 = vld [vmem:[#allocation2 + $0x5e8] sm:$0xff]
  %v894 = vld [vmem:[#allocation2 + $0x5f0] sm:$0xff]
  %v895 = vld [vmem:[#allocation2 + $0x5f8] sm:$0xff]
  %v896 = vld [vmem:[#allocation2 + $0x600] sm:$0xff]
  %v897 = vld [vmem:[#allocation2 + $0x608] sm:$0xff]
  %v898 = vld [vmem:[#allocation2 + $0x610] sm:$0xff]
  %v899 = vld [vmem:[#allocation2 + $0x618] sm:$0xff]
  %v900 = vld [vmem:[#allocation2 + $0x620] sm:$0xff]
  %v901 = vld [vmem:[#allocation2 + $0x628] sm:$0xff]
  %v902 = vld [vmem:[#allocation2 + $0x630] sm:$0xff]
  %v903 = vld [vmem:[#allocation2 + $0x638] sm:$0xff]
  %v904 = vld [vmem:[#allocation2 + $0x640] sm:$0xff]
  %v905 = vld [vmem:[#allocation2 + $0x648] sm:$0xff]
  %v906 = vld [vmem:[#allocation2 + $0x650] sm:$0xff]
  %v907 = vld [vmem:[#allocation2 + $0x658] sm:$0xff]
  %v908 = vld [vmem:[#allocation2 + $0x660] sm:$0xff]
  %v909 = vld [vmem:[#allocation2 + $0x668] sm:$0xff]
  %v910 = vld [vmem:[#allocation2 + $0x670] sm:$0xff]
  %v911 = vld [vmem:[#allocation2 + $0x678] sm:$0xff]
  %v912 = vld [vmem:[#allocation2 + $0x680] sm:$0xff]
  %v913 = vld [vmem:[#allocation2 + $0x688] sm:$0xff]
  %v914 = vld [vmem:[#allocation2 + $0x690] sm:$0xff]
  %v915 = vld [vmem:[#allocation2 + $0x698] sm:$0xff]
  %v916 = vld [vmem:[#allocation2 + $0x6a0] sm:$0xff]
  %v917 = vld [vmem:[#allocation2 + $0x6a8] sm:$0xff]
  %v918 = vld [vmem:[#allocation2 + $0x6b0] sm:$0xff]
  %v919 = vld [vmem:[#allocation2 + $0x6b8] sm:$0xff]
  %v920 = vld [vmem:[#allocation2 + $0x6c0] sm:$0xff]
  %v921 = vld [vmem:[#allocation2 + $0x6c8] sm:$0xff]
  %v922 = vld [vmem:[#allocation2 + $0x6d0] sm:$0xff]
  %v923 = vld [vmem:[#allocation2 + $0x6d8] sm:$0xff]
  %v924 = vld [vmem:[#allocation2 + $0x6e0] sm:$0xff]
  %v925 = vld [vmem:[#allocation2 + $0x6e8] sm:$0xff]
  %v926 = vld [vmem:[#allocation2 + $0x6f0] sm:$0xff]
  %v927 = vld [vmem:[#allocation2 + $0x6f8] sm:$0xff]
  %v928 = vld [vmem:[#allocation2 + $0x700] sm:$0xff]
  %v929 = vld [vmem:[#allocation2 + $0x708] sm:$0xff]
  %v930 = vld [vmem:[#allocation2 + $0x710] sm:$0xff]
  %v931 = vld [vmem:[#allocation2 + $0x718] sm:$0xff]
  %v932 = vld [vmem:[#allocation2 + $0x720] sm:$0xff]
  %v933 = vld [vmem:[#allocation2 + $0x728] sm:$0xff]
  %v934 = vld [vmem:[#allocation2 + $0x730] sm:$0xff]
  %v935 = vld [vmem:[#allocation2 + $0x738] sm:$0xff]
  %v936 = vld [vmem:[#allocation2 + $0x740] sm:$0xff]
  %v937 = vld [vmem:[#allocation2 + $0x748] sm:$0xff]
  %v938 = vld [vmem:[#allocation2 + $0x750] sm:$0xff]
  %v939 = vld [vmem:[#allocation2 + $0x758] sm:$0xff]
  %v940 = vld [vmem:[#allocation2 + $0x760] sm:$0xff]
  %v941 = vld [vmem:[#allocation2 + $0x768] sm:$0xff]
  %v942 = vld [vmem:[#allocation2 + $0x770] sm:$0xff]
  %v943 = vld [vmem:[#allocation2 + $0x778] sm:$0xff]
  %v944 = vld [vmem:[#allocation2 + $0x780] sm:$0xff]
  %v945 = vld [vmem:[#allocation2 + $0x788] sm:$0xff]
  %v946 = vld [vmem:[#allocation2 + $0x790] sm:$0xff]
  %v947 = vld [vmem:[#allocation2 + $0x798] sm:$0xff]
  %v948 = vld [vmem:[#allocation2 + $0x7a0] sm:$0xff]
  %v949 = vld [vmem:[#allocation2 + $0x7a8] sm:$0xff]
  %v950 = vld [vmem:[#allocation2 + $0x7b0] sm:$0xff]
  %v951 = vld [vmem:[#allocation2 + $0x7b8] sm:$0xff]
  %v952 = vld [vmem:[#allocation2 + $0x7c0] sm:$0xff]
  %v953 = vld [vmem:[#allocation2 + $0x7c8] sm:$0xff]
  %v954 = vld [vmem:[#allocation2 + $0x7d0] sm:$0xff]
  %v955 = vld [vmem:[#allocation2 + $0x7d8] sm:$0xff]
  %v956 = vld [vmem:[#allocation2 + $0x7e0] sm:$0xff]
  %v957 = vld [vmem:[#allocation2 + $0x7e8] sm:$0xff]
  %v958 = vld [vmem:[#allocation2 + $0x7f0] sm:$0xff]
  %v959 = vld [vmem:[#allocation2 + $0x7f8] sm:$0xff]
  %v960 = vld [vmem:[#allocation2 + $0x800] sm:$0xff]
  %v961 = vld [vmem:[#allocation2 + $0x808] sm:$0xff]
  %v962 = vld [vmem:[#allocation2 + $0x810] sm:$0xff]
  %v963 = vld [vmem:[#allocation2 + $0x818] sm:$0xff]
  %v964 = vld [vmem:[#allocation2 + $0x820] sm:$0xff]
  %v965 = vld [vmem:[#allocation2 + $0x828] sm:$0xff]
  %v966 = vld [vmem:[#allocation2 + $0x830] sm:$0xff]
  %v967 = vld [vmem:[#allocation2 + $0x838] sm:$0xff]
  %v968 = vld [vmem:[#allocation2 + $0x840] sm:$0xff]
  %v969 = vld [vmem:[#allocation2 + $0x848] sm:$0xff]
  %v970 = vld [vmem:[#allocation2 + $0x850] sm:$0xff]
  %v971 = vld [vmem:[#allocation2 + $0x858] sm:$0xff]
  %v972 = vld [vmem:[#allocation2 + $0x860] sm:$0xff]
  %v973 = vld [vmem:[#allocation2 + $0x868] sm:$0xff]
  %v974 = vld [vmem:[#allocation2 + $0x870] sm:$0xff]
  %v975 = vld [vmem:[#allocation2 + $0x878] sm:$0xff]
  %v976 = vld [vmem:[#allocation2 + $0x880] sm:$0xff]
  %v977 = vld [vmem:[#allocation2 + $0x888] sm:$0xff]
  %v978 = vld [vmem:[#allocation2 + $0x890] sm:$0xff]
  %v979 = vld [vmem:[#allocation2 + $0x898] sm:$0xff]
  %v980 = vld [vmem:[#allocation2 + $0x8a0] sm:$0xff]
  %v981 = vld [vmem:[#allocation2 + $0x8a8] sm:$0xff]
  %v982 = vld [vmem:[#allocation2 + $0x8b0] sm:$0xff]
  %v983 = vld [vmem:[#allocation2 + $0x8b8] sm:$0xff]
  %v984 = vld [vmem:[#allocation2 + $0x8c0] sm:$0xff]
  %v985 = vld [vmem:[#allocation2 + $0x8c8] sm:$0xff]
  %v986 = vld [vmem:[#allocation2 + $0x8d0] sm:$0xff]
  %v987 = vld [vmem:[#allocation2 + $0x8d8] sm:$0xff]
  %v988 = vld [vmem:[#allocation2 + $0x8e0] sm:$0xff]
  %v989 = vld [vmem:[#allocation2 + $0x8e8] sm:$0xff]
  %v990 = vld [vmem:[#allocation2 + $0x8f0] sm:$0xff]
  %v991 = vld [vmem:[#allocation2 + $0x8f8] sm:$0xff]
  %v992 = vld [vmem:[#allocation2 + $0x900] sm:$0xff]
  %v993 = vld [vmem:[#allocation2 + $0x908] sm:$0xff]
  %v994 = vld [vmem:[#allocation2 + $0x910] sm:$0xff]
  %v995 = vld [vmem:[#allocation2 + $0x918] sm:$0xff]
  %v996 = vld [vmem:[#allocation2 + $0x920] sm:$0xff]
  %v997 = vld [vmem:[#allocation2 + $0x928] sm:$0xff]
  %v998 = vld [vmem:[#allocation2 + $0x930] sm:$0xff]
  %v999 = vld [vmem:[#allocation2 + $0x938] sm:$0xff]
  %v1000 = vld [vmem:[#allocation2 + $0x940] sm:$0xff]
  %v1001 = vld [vmem:[#allocation2 + $0x948] sm:$0xff]
  %v1002 = vld [vmem:[#allocation2 + $0x950] sm:$0xff]
  %v1003 = vld [vmem:[#allocation2 + $0x958] sm:$0xff]
  %v1004 = vld [vmem:[#allocation2 + $0x960] sm:$0xff]
  %v1005 = vld [vmem:[#allocation2 + $0x968] sm:$0xff]
  %v1006 = vld [vmem:[#allocation2 + $0x970] sm:$0xff]
  %v1007 = vld [vmem:[#allocation2 + $0x978] sm:$0xff]
  %v1008 = vld [vmem:[#allocation2 + $0x980] sm:$0xff]
  %v1009 = vld [vmem:[#allocation2 + $0x988] sm:$0xff]
  %v1010 = vld [vmem:[#allocation2 + $0x990] sm:$0xff]
  %v1011 = vld [vmem:[#allocation2 + $0x998] sm:$0xff]
  %v1012 = vld [vmem:[#allocation2 + $0x9a0] sm:$0xff]
  %v1013 = vld [vmem:[#allocation2 + $0x9a8] sm:$0xff]
  %v1014 = vld [vmem:[#allocation2 + $0x9b0] sm:$0xff]
  %v1015 = vld [vmem:[#allocation2 + $0x9b8] sm:$0xff]
  %v1016 = vld [vmem:[#allocation2 + $0x9c0] sm:$0xff]
  %v1017 = vld [vmem:[#allocation2 + $0x9c8] sm:$0xff]
  %v1018 = vld [vmem:[#allocation2 + $0x9d0] sm:$0xff]
  %v1019 = vld [vmem:[#allocation2 + $0x9d8] sm:$0xff]
  %v1020 = vld [vmem:[#allocation2 + $0x9e0] sm:$0xff]
  %v1021 = vld [vmem:[#allocation2 + $0x9e8] sm:$0xff]
  %v1022 = vld [vmem:[#allocation2 + $0x9f0] sm:$0xff]
  %v1023 = vld [vmem:[#allocation2 + $0x9f8] sm:$0xff]
  %v1024 = vld [vmem:[#allocation2 + $0xa00] sm:$0xff]
  %v1025 = vld [vmem:[#allocation2 + $0xa08] sm:$0xff]
  %v1026 = vld [vmem:[#allocation2 + $0xa10] sm:$0xff]
  %v1027 = vld [vmem:[#allocation2 + $0xa18] sm:$0xff]
  %v1028 = vld [vmem:[#allocation2 + $0xa20] sm:$0xff]
  %v1029 = vld [vmem:[#allocation2 + $0xa28] sm:$0xff]
  %v1030 = vld [vmem:[#allocation2 + $0xa30] sm:$0xff]
  %v1031 = vld [vmem:[#allocation2 + $0xa38] sm:$0xff]
  %v1032 = vld [vmem:[%s2] sm:$0xff]
  %v1033 = vld [vmem:[%s2 + $0x8] sm:$0xff]
  %v1034 = vld [vmem:[%s2 + $0x10] sm:$0xff]
  %v1035 = vld [vmem:[%s2 + $0x18] sm:$0xff]
  %v1036 = vld [vmem:[%s2 + $0x20] sm:$0xff]
  %v1037 = vld [vmem:[%s2 + $0x28] sm:$0xff]
  %v1038 = vld [vmem:[%s2 + $0x30] sm:$0xff]
  %v1039 = vld [vmem:[%s2 + $0x38] sm:$0xff]
  %v1040 = vld [vmem:[%s2 + $0x40] sm:$0xff]
  %v1041 = vld [vmem:[%s2 + $0x48] sm:$0xff]
  %v1042 = vld [vmem:[%s2 + $0x50] sm:$0xff]
  %v1043 = vld [vmem:[%s2 + $0x58] sm:$0xff]
  %v1044 = vld [vmem:[%s2 + $0x60] sm:$0xff]
  %v1045 = vld [vmem:[%s2 + $0x68] sm:$0xff]
  %v1046 = vld [vmem:[%s2 + $0x70] sm:$0xff]
  %v1047 = vld [vmem:[%s2 + $0x78] sm:$0xff]
  %1049 = vset.pattern.permute.xlu0 0
  %1050 = vperm.xlu0 %1049, %v1032
  %v1051 = vpop.permute.xlu0 %1050
  %1054 = vset.pattern.permute.xlu0 0
  %1055 = vperm.xlu0 %1054, %v1033
  %v1056 = vpop.permute.xlu0 %1055
  %1059 = vset.pattern.permute.xlu0 0
  %1060 = vperm.xlu0 %1059, %v1034
  %v1061 = vpop.permute.xlu0 %1060
  %1064 = vset.pattern.permute.xlu0 0
  %1065 = vperm.xlu0 %1064, %v1035
  %v1066 = vpop.permute.xlu0 %1065
  %1069 = vset.pattern.permute.xlu0 0
  %1070 = vperm.xlu0 %1069, %v1036
  %v1071 = vpop.permute.xlu0 %1070
  %1074 = vset.pattern.permute.xlu0 0
  %1075 = vperm.xlu0 %1074, %v1037
  %v1076 = vpop.permute.xlu0 %1075
  %1079 = vset.pattern.permute.xlu0 0
  %1080 = vperm.xlu0 %1079, %v1038
  %v1081 = vpop.permute.xlu0 %1080
  %1084 = vset.pattern.permute.xlu0 0
  %1085 = vperm.xlu0 %1084, %v1039
  %v1086 = vpop.permute.xlu0 %1085
  %1089 = vset.pattern.permute.xlu0 0
  %1090 = vperm.xlu0 %1089, %v1040
  %v1091 = vpop.permute.xlu0 %1090
  %1094 = vset.pattern.permute.xlu0 0
  %1095 = vperm.xlu0 %1094, %v1041
  %v1096 = vpop.permute.xlu0 %1095
  %1099 = vset.pattern.permute.xlu0 0
  %1100 = vperm.xlu0 %1099, %v1042
  %v1101 = vpop.permute.xlu0 %1100
  %1104 = vset.pattern.permute.xlu0 0
  %1105 = vperm.xlu0 %1104, %v1043
  %v1106 = vpop.permute.xlu0 %1105
  %1109 = vset.pattern.permute.xlu0 0
  %1110 = vperm.xlu0 %1109, %v1044
  %v1111 = vpop.permute.xlu0 %1110
  %1114 = vset.pattern.permute.xlu0 0
  %1115 = vperm.xlu0 %1114, %v1045
  %v1116 = vpop.permute.xlu0 %1115
  %1119 = vset.pattern.permute.xlu0 0
  %1120 = vperm.xlu0 %1119, %v1046
  %v1121 = vpop.permute.xlu0 %1120
  %1124 = vset.pattern.permute.xlu0 0
  %1125 = vperm.xlu0 %1124, %v1047
  %v1126 = vpop.permute.xlu0 %1125
  %vm1128 = vcmask 523264
  %v1130 = vsel %vm1128, %v688, 0
  %v1133 = vsel %vm1128, %v689, 0
  %v1136 = vsel %vm1128, %v690, 0
  %v1139 = vsel %vm1128, %v691, 0
  %v1142 = vsel %vm1128, %v692, 0
  %v1145 = vsel %vm1128, %v693, 0
  %v1148 = vsel %vm1128, %v694, 0
  %v1151 = vsel %vm1128, %v695, 0
  %v1154 = vsel %vm1128, %v696, 0
  %v1157 = vsel %vm1128, %v697, 0
  %v1160 = vsel %vm1128, %v698, 0
  %v1163 = vsel %vm1128, %v699, 0
  %v1166 = vsel %vm1128, %v700, 0
  %v1169 = vsel %vm1128, %v701, 0
  %v1172 = vsel %vm1128, %v702, 0
  %v1175 = vsel %vm1128, %v703, 0
  %1177 = vmatprep.subr.mxu0 %v705
  %1178 = vmatpush1.msra.mxu0 %v704
  %1179 = vmatprep.subr.mxu0 %v746
  %1180 = vmatpush1.msra.mxu0 %v745
  %1181 = vmatprep.subr.mxu0 %v787
  %1182 = vmatpush1.msra.mxu0 %v786
  %1183 = vmatprep.subr.mxu0 %v828
  %1184 = vmatpush1.msra.mxu0 %v827
  %1185 = vmatprep.subr.mxu0 %v869
  %1186 = vmatpush1.msra.mxu0 %v868
  %1187 = vmatprep.subr.mxu0 %v910
  %1188 = vmatpush1.msra.mxu0 %v909
  %1189 = vmatprep.subr.mxu0 %v951
  %1190 = vmatpush1.msra.mxu0 %v950
  %1191 = vmatprep.subr.mxu0 %v992
  %1192 = vmatpush1.msra.mxu0 %v991
  %1193 = vmatprep.subr.mxu0 0.0
  %1194 = vmatpush1.msra.mxu0 0.0
  %1195 = vmatprep.subr.mxu0 0.0
  %1196 = vmatpush1.msra.mxu0 0.0
  %1197 = vmatprep.subr.mxu0 0.0
  %1198 = vmatpush1.msra.mxu0 0.0
  %1199 = vmatprep.subr.mxu0 0.0
  %1200 = vmatpush1.msra.mxu0 0.0
  %1201 = vmatprep.subr.mxu0 0.0
  %1202 = vmatpush1.msra.mxu0 0.0
  %1203 = vmatprep.subr.mxu0 0.0
  %1204 = vmatpush1.msra.mxu0 0.0
  %1205 = vmatprep.subr.mxu0 0.0
  %1206 = vmatpush1.msra.mxu0 0.0
  %1207 = vmatprep.subr.mxu0 0.0
  %1208 = vmatpush1.msra.mxu0 0.0
  %1209 = vmatprep.subr.mxu0 0.0
  %1210 = vmatpush1.msra.mxu0 0.0
  %1211 = vmatprep.subr.mxu0 0.0
  %1212 = vmatpush1.msra.mxu0 0.0
  %1213 = vmatprep.subr.mxu0 0.0
  %1214 = vmatpush1.msra.mxu0 0.0
  %1215 = vmatprep.subr.mxu0 0.0
  %1216 = vmatpush1.msra.mxu0 0.0
  %1217 = vmatprep.subr.mxu0 0.0
  %1218 = vmatpush1.msra.mxu0 0.0
  %1219 = vmatprep.subr.mxu0 0.0
  %1220 = vmatpush1.msra.mxu0 0.0
  %1221 = vmatprep.subr.mxu0 0.0
  %1222 = vmatpush1.msra.mxu0 0.0
  %1223 = vmatprep.subr.mxu0 0.0
  %1224 = vmatpush1.msra.mxu0 0.0
  %1225 = vmatprep.subr.mxu0 0.0
  %1226 = vmatpush1.msra.mxu0 0.0
  %1227 = vmatprep.subr.mxu0 0.0
  %1228 = vmatpush1.msra.mxu0 0.0
  %1229 = vmatprep.subr.mxu0 0.0
  %1230 = vmatpush1.msra.mxu0 0.0
  %1231 = vmatprep.subr.mxu0 0.0
  %1232 = vmatpush1.msra.mxu0 0.0
  %1233 = vmatprep.subr.mxu0 0.0
  %1234 = vmatpush1.msra.mxu0 0.0
  %1235 = vmatprep.subr.mxu0 0.0
  %1236 = vmatpush1.msra.mxu0 0.0
  %1237 = vmatprep.subr.mxu0 0.0
  %1238 = vmatpush1.msra.mxu0 0.0
  %1239 = vmatprep.subr.mxu0 0.0
  %1240 = vmatpush1.msra.mxu0 0.0
  %1241 = vmatprep.mubr.f32.mxu0 0.0
  %1242 = vmatmul.mubr.f32.gmra.mrb[0].mxu0 %v1130
  %v1243 = vpop.f32.mrb[0].mxu0
  %v1244 = vadd.f32 %v1051, %v1243
  %v1245 = vpop.f32.mrb[0].mxu0
  %v1246 = vadd.f32 %v1051, %v1245
  %1247 = vmatprep.mubr.f32.mxu0 0.0
  %1248 = vmatmul.mubr.f32.gmra.mrb[0].mxu0 %v1133
  %v1249 = vpop.f32.mrb[0].mxu0
  %v1250 = vadd.f32 %v1056, %v1249
  %v1251 = vpop.f32.mrb[0].mxu0
  %v1252 = vadd.f32 %v1056, %v1251
  %1253 = vmatprep.mubr.f32.mxu0 0.0
  %1254 = vmatmul.mubr.f32.gmra.mrb[0].mxu0 %v1136
  %v1255 = vpop.f32.mrb[0].mxu0
  %v1256 = vadd.f32 %v1061, %v1255
  %v1257 = vpop.f32.mrb[0].mxu0
  %v1258 = vadd.f32 %v1061, %v1257
  %1259 = vmatprep.mubr.f32.mxu0 0.0
  %1260 = vmatmul.mubr.f32.gmra.mrb[0].mxu0 %v1139
  %v1261 = vpop.f32.mrb[0].mxu0
  %v1262 = vadd.f32 %v1066, %v1261
  %v1263 = vpop.f32.mrb[0].mxu0
  %v1264 = vadd.f32 %v1066, %v1263
  %1265 = vmatprep.mubr.f32.mxu0 0.0
  %1266 = vmatmul.mubr.f32.gmra.mrb[0].mxu0 %v1142
  %v1267 = vpop.f32.mrb[0].mxu0
  %v1268 = vadd.f32 %v1071, %v1267
  %v1269 = vpop.f32.mrb[0].mxu0
  %v1270 = vadd.f32 %v1071, %v1269
  %1271 = vmatprep.mubr.f32.mxu0 0.0
  %1272 = vmatmul.mubr.f32.gmra.mrb[0].mxu0 %v1145
  %v1273 = vpop.f32.mrb[0].mxu0
  %v1274 = vadd.f32 %v1076, %v1273
  %v1275 = vpop.f32.mrb[0].mxu0
  %v1276 = vadd.f32 %v1076, %v1275
  %1277 = vmatprep.mubr.f32.mxu0 0.0
  %1278 = vmatmul.mubr.f32.gmra.mrb[0].mxu0 %v1148
  %v1279 = vpop.f32.mrb[0].mxu0
  %v1280 = vadd.f32 %v1081, %v1279
  %v1281 = vpop.f32.mrb[0].mxu0
  %v1282 = vadd.f32 %v1081, %v1281
  %1283 = vmatprep.mubr.f32.mxu0 0.0
  %1284 = vmatmul.mubr.f32.gmra.mrb[0].mxu0 %v1151
  %v1285 = vpop.f32.mrb[0].mxu0
  %v1286 = vadd.f32 %v1086, %v1285
  %v1287 = vpop.f32.mrb[0].mxu0
  %v1288 = vadd.f32 %v1086, %v1287
  %1289 = vmatprep.mubr.f32.mxu0 0.0
  %1290 = vmatmul.mubr.f32.gmra.mrb[0].mxu0 %v1154
  %v1291 = vpop.f32.mrb[0].mxu0
  %v1292 = vadd.f32 %v1091, %v1291
  %v1293 = vpop.f32.mrb[0].mxu0
  %v1294 = vadd.f32 %v1091, %v1293
  %1295 = vmatprep.mubr.f32.mxu0 0.0
  %1296 = vmatmul.mubr.f32.gmra.mrb[0].mxu0 %v1157
  %v1297 = vpop.f32.mrb[0].mxu0
  %v1298 = vadd.f32 %v1096, %v1297
  %v1299 = vpop.f32.mrb[0].mxu0
  %v1300 = vadd.f32 %v1096, %v1299
  %1301 = vmatprep.mubr.f32.mxu0 0.0
  %1302 = vmatmul.mubr.f32.gmra.mrb[0].mxu0 %v1160
  %v1303 = vpop.f32.mrb[0].mxu0
  %v1304 = vadd.f32 %v1101, %v1303
  %v1305 = vpop.f32.mrb[0].mxu0
  %v1306 = vadd.f32 %v1101, %v1305
  %1307 = vmatprep.mubr.f32.mxu0 0.0
  %1308 = vmatmul.mubr.f32.gmra.mrb[0].mxu0 %v1163
  %v1309 = vpop.f32.mrb[0].mxu0
  %v1310 = vadd.f32 %v1106, %v1309
  %v1311 = vpop.f32.mrb[0].mxu0
  %v1312 = vadd.f32 %v1106, %v1311
  %1313 = vmatprep.mubr.f32.mxu0 0.0
  %1314 = vmatmul.mubr.f32.gmra.mrb[0].mxu0 %v1166
  %v1315 = vpop.f32.mrb[0].mxu0
  %v1316 = vadd.f32 %v1111, %v1315
  %v1317 = vpop.f32.mrb[0].mxu0
  %v1318 = vadd.f32 %v1111, %v1317
  %1319 = vmatprep.mubr.f32.mxu0 0.0
  %1320 = vmatmul.mubr.f32.gmra.mrb[0].mxu0 %v1169
  %v1321 = vpop.f32.mrb[0].mxu0
  %v1322 = vadd.f32 %v1116, %v1321
  %v1323 = vpop.f32.mrb[0].mxu0
  %v1324 = vadd.f32 %v1116, %v1323
  %1325 = vmatprep.mubr.f32.mxu0 0.0
  %1326 = vmatmul.mubr.f32.gmra.mrb[0].mxu0 %v1172
  %v1327 = vpop.f32.mrb[0].mxu0
  %v1328 = vadd.f32 %v1121, %v1327
  %v1329 = vpop.f32.mrb[0].mxu0
  %v1330 = vadd.f32 %v1121, %v1329
  %1331 = vmatprep.mubr.f32.mxu0 0.0
  %1332 = vmatmul.mubr.f32.gmra.mrb[0].mxu0 %v1175
  %v1333 = vpop.f32.mrb[0].mxu0
  %v1334 = vadd.f32 %v1126, %v1333
  %v1335 = vpop.f32.mrb[0].mxu0
  %v1336 = vadd.f32 %v1126, %v1335
  %1337 = vdwg.mxu0
  %1338 = vmatprep.subr.mxu0 %v707
  %1339 = vmatpush1.msra.mxu0 %v706
  %1340 = vmatprep.subr.mxu0 %v748
  %1341 = vmatpush1.msra.mxu0 %v747
  %1342 = vmatprep.subr.mxu0 %v789
  %1343 = vmatpush1.msra.mxu0 %v788
  %1344 = vmatprep.subr.mxu0 %v830
  %1345 = vmatpush1.msra.mxu0 %v829
  %1346 = vmatprep.subr.mxu0 %v871
  %1347 = vmatpush1.msra.mxu0 %v870
  %1348 = vmatprep.subr.mxu0 %v912
  %1349 = vmatpush1.msra.mxu0 %v911
  %1350 = vmatprep.subr.mxu0 %v953
  %1351 = vmatpush1.msra.mxu0 %v952
  %1352 = vmatprep.subr.mxu0 %v994
  %1353 = vmatpush1.msra.mxu0 %v993
  %1354 = vmatprep.subr.mxu0 0.0
  %1355 = vmatpush1.msra.mxu0 0.0
  %1356 = vmatprep.subr.mxu0 0.0
  %1357 = vmatpush1.msra.mxu0 0.0
  %1358 = vmatprep.subr.mxu0 0.0
  %1359 = vmatpush1.msra.mxu0 0.0
  %1360 = vmatprep.subr.mxu0 0.0
  %1361 = vmatpush1.msra.mxu0 0.0
  %1362 = vmatprep.subr.mxu0 0.0
  %1363 = vmatpush1.msra.mxu0 0.0
  %1364 = vmatprep.subr.mxu0 0.0
  %1365 = vmatpush1.msra.mxu0 0.0
  %1366 = vmatprep.subr.mxu0 0.0
  %1367 = vmatpush1.msra.mxu0 0.0
  %1368 = vmatprep.subr.mxu0 0.0
  %1369 = vmatpush1.msra.mxu0 0.0
  %1370 = vmatprep.subr.mxu0 0.0
  %1371 = vmatpush1.msra.mxu0 0.0
  %1372 = vmatprep.subr.mxu0 0.0
  %1373 = vmatpush1.msra.mxu0 0.0
  %1374 = vmatprep.subr.mxu0 0.0
  %1375 = vmatpush1.msra.mxu0 0.0
  %1376 = vmatprep.subr.mxu0 0.0
  %1377 = vmatpush1.msra.mxu0 0.0
  %1378 = vmatprep.subr.mxu0 0.0
  %1379 = vmatpush1.msra.mxu0 0.0
  %1380 = vmatprep.subr.mxu0 0.0
  %1381 = vmatpush1.msra.mxu0 0.0
  %1382 = vmatprep.subr.mxu0 0.0
  %1383 = vmatpush1.msra.mxu0 0.0
  %1384 = vmatprep.subr.mxu0 0.0
  %1385 = vmatpush1.msra.mxu0 0.0
  %1386 = vmatprep.subr.mxu0 0.0
  %1387 = vmatpush1.msra.mxu0 0.0
  %1388 = vmatprep.subr.mxu0 0.0
  %1389 = vmatpush1.msra.mxu0 0.0
  %1390 = vmatprep.subr.mxu0 0.0
  %1391 = vmatpush1.msra.mxu0 0.0
  %1392 = vmatprep.subr.mxu0 0.0
  %1393 = vmatpush1.msra.mxu0 0.0
  %1394 = vmatprep.subr.mxu0 0.0
  %1395 = vmatpush1.msra.mxu0 0.0
  %1396 = vmatprep.subr.mxu0 0.0
  %1397 = vmatpush1.msra.mxu0 0.0
  %1398 = vmatprep.subr.mxu0 0.0
  %1399 = vmatpush1.msra.mxu0 0.0
  %1400 = vmatprep.subr.mxu0 0.0
  %1401 = vmatpush1.msra.mxu0 0.0
  %1402 = vmatprep.mubr.f32.mxu0 0.0
  %1403 = vmatmul.mubr.f32.gmra.mrb[0].mxu0 %v1130
  %v1404 = vpop.f32.mrb[0].mxu0
  %v1405 = vadd.f32 %v1051, %v1404
  %v1406 = vpop.f32.mrb[0].mxu0
  %v1407 = vadd.f32 %v1051, %v1406
  %1408 = vmatprep.mubr.f32.mxu0 0.0
  %1409 = vmatmul.mubr.f32.gmra.mrb[0].mxu0 %v1133
  %v1410 = vpop.f32.mrb[0].mxu0
  %v1411 = vadd.f32 %v1056, %v1410
  %v1412 = vpop.f32.mrb[0].mxu0
  %v1413 = vadd.f32 %v1056, %v1412
  %1414 = vmatprep.mubr.f32.mxu0 0.0
  %1415 = vmatmul.mubr.f32.gmra.mrb[0].mxu0 %v1136
  %v1416 = vpop.f32.mrb[0].mxu0
  %v1417 = vadd.f32 %v1061, %v1416
  %v1418 = vpop.f32.mrb[0].mxu0
  %v1419 = vadd.f32 %v1061, %v1418
  %1420 = vmatprep.mubr.f32.mxu0 0.0
  %1421 = vmatmul.mubr.f32.gmra.mrb[0].mxu0 %v1139
  %v1422 = vpop.f32.mrb[0].mxu0
  %v1423 = vadd.f32 %v1066, %v1422
  %v1424 = vpop.f32.mrb[0].mxu0
  %v1425 = vadd.f32 %v1066, %v1424
  %1426 = vmatprep.mubr.f32.mxu0 0.0
  %1427 = vmatmul.mubr.f32.gmra.mrb[0].mxu0 %v1142
  %v1428 = vpop.f32.mrb[0].mxu0
  %v1429 = vadd.f32 %v1071, %v1428
  %v1430 = vpop.f32.mrb[0].mxu0
  %v1431 = vadd.f32 %v1071, %v1430
  %1432 = vmatprep.mubr.f32.mxu0 0.0
  %1433 = vmatmul.mubr.f32.gmra.mrb[0].mxu0 %v1145
  %v1434 = vpop.f32.mrb[0].mxu0
  %v1435 = vadd.f32 %v1076, %v1434
  %v1436 = vpop.f32.mrb[0].mxu0
  %v1437 = vadd.f32 %v1076, %v1436
  %1438 = vmatprep.mubr.f32.mxu0 0.0
  %1439 = vmatmul.mubr.f32.gmra.mrb[0].mxu0 %v1148
  %v1440 = vpop.f32.mrb[0].mxu0
  %v1441 = vadd.f32 %v1081, %v1440
  %v1442 = vpop.f32.mrb[0].mxu0
  %v1443 = vadd.f32 %v1081, %v1442
  %1444 = vmatprep.mubr.f32.mxu0 0.0
  %1445 = vmatmul.mubr.f32.gmra.mrb[0].mxu0 %v1151
  %v1446 = vpop.f32.mrb[0].mxu0
  %v1447 = vadd.f32 %v1086, %v1446
  %v1448 = vpop.f32.mrb[0].mxu0
  %v1449 = vadd.f32 %v1086, %v1448
  %1450 = vmatprep.mubr.f32.mxu0 0.0
  %1451 = vmatmul.mubr.f32.gmra.mrb[0].mxu0 %v1154
  %v1452 = vpop.f32.mrb[0].mxu0
  %v1453 = vadd.f32 %v1091, %v1452
  %v1454 = vpop.f32.mrb[0].mxu0
  %v1455 = vadd.f32 %v1091, %v1454
  %1456 = vmatprep.mubr.f32.mxu0 0.0
  %1457 = vmatmul.mubr.f32.gmra.mrb[0].mxu0 %v1157
  %v1458 = vpop.f32.mrb[0].mxu0
  %v1459 = vadd.f32 %v1096, %v1458
  %v1460 = vpop.f32.mrb[0].mxu0
  %v1461 = vadd.f32 %v1096, %v1460
  %1462 = vmatprep.mubr.f32.mxu0 0.0
  %1463 = vmatmul.mubr.f32.gmra.mrb[0].mxu0 %v1160
  %v1464 = vpop.f32.mrb[0].mxu0
  %v1465 = vadd.f32 %v1101, %v1464
  %v1466 = vpop.f32.mrb[0].mxu0
  %v1467 = vadd.f32 %v1101, %v1466
  %1468 = vmatprep.mubr.f32.mxu0 0.0
  %1469 = vmatmul.mubr.f32.gmra.mrb[0].mxu0 %v1163
  %v1470 = vpop.f32.mrb[0].mxu0
  %v1471 = vadd.f32 %v1106, %v1470
  %v1472 = vpop.f32.mrb[0].mxu0
  %v1473 = vadd.f32 %v1106, %v1472
  %1474 = vmatprep.mubr.f32.mxu0 0.0
  %1475 = vmatmul.mubr.f32.gmra.mrb[0].mxu0 %v1166
  %v1476 = vpop.f32.mrb[0].mxu0
  %v1477 = vadd.f32 %v1111, %v1476
  %v1478 = vpop.f32.mrb[0].mxu0
  %v1479 = vadd.f32 %v1111, %v1478
  %1480 = vmatprep.mubr.f32.mxu0 0.0
  %1481 = vmatmul.mubr.f32.gmra.mrb[0].mxu0 %v1169
  %v1482 = vpop.f32.mrb[0].mxu0
  %v1483 = vadd.f32 %v1116, %v1482
  %v1484 = vpop.f32.mrb[0].mxu0
  %v1485 = vadd.f32 %v1116, %v1484
  %1486 = vmatprep.mubr.f32.mxu0 0.0
  %1487 = vmatmul.mubr.f32.gmra.mrb[0].mxu0 %v1172
  %v1488 = vpop.f32.mrb[0].mxu0
  %v1489 = vadd.f32 %v1121, %v1488
  %v1490 = vpop.f32.mrb[0].mxu0
  %v1491 = vadd.f32 %v1121, %v1490
  %1492 = vmatprep.mubr.f32.mxu0 0.0
  %1493 = vmatmul.mubr.f32.gmra.mrb[0].mxu0 %v1175
  %v1494 = vpop.f32.mrb[0].mxu0
  %v1495 = vadd.f32 %v1126, %v1494
  %v1496 = vpop.f32.mrb[0].mxu0
  %v1497 = vadd.f32 %v1126, %v1496
  %1498 = vdwg.mxu0
  %1499 = vmatprep.subr.mxu0 %v709
  %1500 = vmatpush1.msra.mxu0 %v708
  %1501 = vmatprep.subr.mxu0 %v750
  %1502 = vmatpush1.msra.mxu0 %v749
  %1503 = vmatprep.subr.mxu0 %v791
  %1504 = vmatpush1.msra.mxu0 %v790
  %1505 = vmatprep.subr.mxu0 %v832
  %1506 = vmatpush1.msra.mxu0 %v831
  %1507 = vmatprep.subr.mxu0 %v873
  %1508 = vmatpush1.msra.mxu0 %v872
  %1509 = vmatprep.subr.mxu0 %v914
  %1510 = vmatpush1.msra.mxu0 %v913
  %1511 = vmatprep.subr.mxu0 %v955
  %1512 = vmatpush1.msra.mxu0 %v954
  %1513 = vmatprep.subr.mxu0 %v996
  %1514 = vmatpush1.msra.mxu0 %v995
  %1515 = vmatprep.subr.mxu0 0.0
  %1516 = vmatpush1.msra.mxu0 0.0
  %1517 = vmatprep.subr.mxu0 0.0
  %1518 = vmatpush1.msra.mxu0 0.0
  %1519 = vmatprep.subr.mxu0 0.0
  %1520 = vmatpush1.msra.mxu0 0.0
  %1521 = vmatprep.subr.mxu0 0.0
  %1522 = vmatpush1.msra.mxu0 0.0
  %1523 = vmatprep.subr.mxu0 0.0
  %1524 = vmatpush1.msra.mxu0 0.0
  %1525 = vmatprep.subr.mxu0 0.0
  %1526 = vmatpush1.msra.mxu0 0.0
  %1527 = vmatprep.subr.mxu0 0.0
  %1528 = vmatpush1.msra.mxu0 0.0
  %1529 = vmatprep.subr.mxu0 0.0
  %1530 = vmatpush1.msra.mxu0 0.0
  %1531 = vmatprep.subr.mxu0 0.0
  %1532 = vmatpush1.msra.mxu0 0.0
  %1533 = vmatprep.subr.mxu0 0.0
  %1534 = vmatpush1.msra.mxu0 0.0
  %1535 = vmatprep.subr.mxu0 0.0
  %1536 = vmatpush1.msra.mxu0 0.0
  %1537 = vmatprep.subr.mxu0 0.0
  %1538 = vmatpush1.msra.mxu0 0.0
  %1539 = vmatprep.subr.mxu0 0.0
  %1540 = vmatpush1.msra.mxu0 0.0
  %1541 = vmatprep.subr.mxu0 0.0
  %1542 = vmatpush1.msra.mxu0 0.0
  %1543 = vmatprep.subr.mxu0 0.0
  %1544 = vmatpush1.msra.mxu0 0.0
  %1545 = vmatprep.subr.mxu0 0.0
  %1546 = vmatpush1.msra.mxu0 0.0
  %1547 = vmatprep.subr.mxu0 0.0
  %1548 = vmatpush1.msra.mxu0 0.0
  %1549 = vmatprep.subr.mxu0 0.0
  %1550 = vmatpush1.msra.mxu0 0.0
  %1551 = vmatprep.subr.mxu0 0.0
  %1552 = vmatpush1.msra.mxu0 0.0
  %1553 = vmatprep.subr.mxu0 0.0
  %1554 = vmatpush1.msra.mxu0 0.0
  %1555 = vmatprep.subr.mxu0 0.0
  %1556 = vmatpush1.msra.mxu0 0.0
  %1557 = vmatprep.subr.mxu0 0.0
  %1558 = vmatpush1.msra.mxu0 0.0
  %1559 = vmatprep.subr.mxu0 0.0
  %1560 = vmatpush1.msra.mxu0 0.0
  %1561 = vmatprep.subr.mxu0 0.0
  %1562 = vmatpush1.msra.mxu0 0.0
  %1563 = vmatprep.mubr.f32.mxu0 0.0
  %1564 = vmatmul.mubr.f32.gmra.mrb[0].mxu0 %v1130
  %v1565 = vpop.f32.mrb[0].mxu0
  %v1566 = vadd.f32 %v1051, %v1565
  %v1567 = vpop.f32.mrb[0].mxu0
  %v1568 = vadd.f32 %v1051, %v1567
  %1569 = vmatprep.mubr.f32.mxu0 0.0
  %1570 = vmatmul.mubr.f32.gmra.mrb[0].mxu0 %v1133
  %v1571 = vpop.f32.mrb[0].mxu0
  %v1572 = vadd.f32 %v1056, %v1571
  %v1573 = vpop.f32.mrb[0].mxu0
  %v1574 = vadd.f32 %v1056, %v1573
  %1575 = vmatprep.mubr.f32.mxu0 0.0
  %1576 = vmatmul.mubr.f32.gmra.mrb[0].mxu0 %v1136
  %v1577 = vpop.f32.mrb[0].mxu0
  %v1578 = vadd.f32 %v1061, %v1577
  %v1579 = vpop.f32.mrb[0].mxu0
  %v1580 = vadd.f32 %v1061, %v1579
  %1581 = vmatprep.mubr.f32.mxu0 0.0
  %1582 = vmatmul.mubr.f32.gmra.mrb[0].mxu0 %v1139
  %v1583 = vpop.f32.mrb[0].mxu0
  %v1584 = vadd.f32 %v1066, %v1583
  %v1585 = vpop.f32.mrb[0].mxu0
  %v1586 = vadd.f32 %v1066, %v1585
  %1587 = vmatprep.mubr.f32.mxu0 0.0
  %1588 = vmatmul.mubr.f32.gmra.mrb[0].mxu0 %v1142
  %v1589 = vpop.f32.mrb[0].mxu0
  %v1590 = vadd.f32 %v1071, %v1589
  %v1591 = vpop.f32.mrb[0].mxu0
  %v1592 = vadd.f32 %v1071, %v1591
  %1593 = vmatprep.mubr.f32.mxu0 0.0
  %1594 = vmatmul.mubr.f32.gmra.mrb[0].mxu0 %v1145
  %v1595 = vpop.f32.mrb[0].mxu0
  %v1596 = vadd.f32 %v1076, %v1595
  %v1597 = vpop.f32.mrb[0].mxu0
  %v1598 = vadd.f32 %v1076, %v1597
  %1599 = vmatprep.mubr.f32.mxu0 0.0
  %1600 = vmatmul.mubr.f32.gmra.mrb[0].mxu0 %v1148
  %v1601 = vpop.f32.mrb[0].mxu0
  %v1602 = vadd.f32 %v1081, %v1601
  %v1603 = vpop.f32.mrb[0].mxu0
  %v1604 = vadd.f32 %v1081, %v1603
  %1605 = vmatprep.mubr.f32.mxu0 0.0
  %1606 = vmatmul.mubr.f32.gmra.mrb[0].mxu0 %v1151
  %v1607 = vpop.f32.mrb[0].mxu0
  %v1608 = vadd.f32 %v1086, %v1607
  %v1609 = vpop.f32.mrb[0].mxu0
  %v1610 = vadd.f32 %v1086, %v1609
  %1611 = vmatprep.mubr.f32.mxu0 0.0
  %1612 = vmatmul.mubr.f32.gmra.mrb[0].mxu0 %v1154
  %v1613 = vpop.f32.mrb[0].mxu0
  %v1614 = vadd.f32 %v1091, %v1613
  %v1615 = vpop.f32.mrb[0].mxu0
  %v1616 = vadd.f32 %v1091, %v1615
  %1617 = vmatprep.mubr.f32.mxu0 0.0
  %1618 = vmatmul.mubr.f32.gmra.mrb[0].mxu0 %v1157
  %v1619 = vpop.f32.mrb[0].mxu0
  %v1620 = vadd.f32 %v1096, %v1619
  %v1621 = vpop.f32.mrb[0].mxu0
  %v1622 = vadd.f32 %v1096, %v1621
  %1623 = vmatprep.mubr.f32.mxu0 0.0
  %1624 = vmatmul.mubr.f32.gmra.mrb[0].mxu0 %v1160
  %v1625 = vpop.f32.mrb[0].mxu0
  %v1626 = vadd.f32 %v1101, %v1625
  %v1627 = vpop.f32.mrb[0].mxu0
  %v1628 = vadd.f32 %v1101, %v1627
  %1629 = vmatprep.mubr.f32.mxu0 0.0
  %1630 = vmatmul.mubr.f32.gmra.mrb[0].mxu0 %v1163
  %v1631 = vpop.f32.mrb[0].mxu0
  %v1632 = vadd.f32 %v1106, %v1631
  %v1633 = vpop.f32.mrb[0].mxu0
  %v1634 = vadd.f32 %v1106, %v1633
  %1635 = vmatprep.mubr.f32.mxu0 0.0
  %1636 = vmatmul.mubr.f32.gmra.mrb[0].mxu0 %v1166
  %v1637 = vpop.f32.mrb[0].mxu0
  %v1638 = vadd.f32 %v1111, %v1637
  %v1639 = vpop.f32.mrb[0].mxu0
  %v1640 = vadd.f32 %v1111, %v1639
  %1641 = vmatprep.mubr.f32.mxu0 0.0
  %1642 = vmatmul.mubr.f32.gmra.mrb[0].mxu0 %v1169
  %v1643 = vpop.f32.mrb[0].mxu0
  %v1644 = vadd.f32 %v1116, %v1643
  %v1645 = vpop.f32.mrb[0].mxu0
  %v1646 = vadd.f32 %v1116, %v1645
  %1647 = vmatprep.mubr.f32.mxu0 0.0
  %1648 = vmatmul.mubr.f32.gmra.mrb[0].mxu0 %v1172
  %v1649 = vpop.f32.mrb[0].mxu0
  %v1650 = vadd.f32 %v1121, %v1649
  %v1651 = vpop.f32.mrb[0].mxu0
  %v1652 = vadd.f32 %v1121, %v1651
  %1653 = vmatprep.mubr.f32.mxu0 0.0
  %1654 = vmatmul.mubr.f32.gmra.mrb[0].mxu0 %v1175
  %v1655 = vpop.f32.mrb[0].mxu0
  %v1656 = vadd.f32 %v1126, %v1655
  %v1657 = vpop.f32.mrb[0].mxu0
  %v1658 = vadd.f32 %v1126, %v1657
  %1659 = vdwg.mxu0
  %1660 = vmatprep.subr.mxu0 %v711
  %1661 = vmatpush1.msra.mxu0 %v710
  %1662 = vmatprep.subr.mxu0 %v752
  %1663 = vmatpush1.msra.mxu0 %v751
  %1664 = vmatprep.subr.mxu0 %v793
  %1665 = vmatpush1.msra.mxu0 %v792
  %1666 = vmatprep.subr.mxu0 %v834
  %1667 = vmatpush1.msra.mxu0 %v833
  %1668 = vmatprep.subr.mxu0 %v875
  %1669 = vmatpush1.msra.mxu0 %v874
  %1670 = vmatprep.subr.mxu0 %v916
  %1671 = vmatpush1.msra.mxu0 %v915
  %1672 = vmatprep.subr.mxu0 %v957
  %1673 = vmatpush1.msra.mxu0 %v956
  %1674 = vmatprep.subr.mxu0 %v998
  %1675 = vmatpush1.msra.mxu0 %v997
  %1676 = vmatprep.subr.mxu0 0.0
  %1677 = vmatpush1.msra.mxu0 0.0
  %1678 = vmatprep.subr.mxu0 0.0
  %1679 = vmatpush1.msra.mxu0 0.0
  %1680 = vmatprep.subr.mxu0 0.0
  %1681 = vmatpush1.msra.mxu0 0.0
  %1682 = vmatprep.subr.mxu0 0.0
  %1683 = vmatpush1.msra.mxu0 0.0
  %1684 = vmatprep.subr.mxu0 0.0
  %1685 = vmatpush1.msra.mxu0 0.0
  %1686 = vmatprep.subr.mxu0 0.0
  %1687 = vmatpush1.msra.mxu0 0.0
  %1688 = vmatprep.subr.mxu0 0.0
  %1689 = vmatpush1.msra.mxu0 0.0
  %1690 = vmatprep.subr.mxu0 0.0
  %1691 = vmatpush1.msra.mxu0 0.0
  %1692 = vmatprep.subr.mxu0 0.0
  %1693 = vmatpush1.msra.mxu0 0.0
  %1694 = vmatprep.subr.mxu0 0.0
  %1695 = vmatpush1.msra.mxu0 0.0
  %1696 = vmatprep.subr.mxu0 0.0
  %1697 = vmatpush1.msra.mxu0 0.0
  %1698 = vmatprep.subr.mxu0 0.0
  %1699 = vmatpush1.msra.mxu0 0.0
  %1700 = vmatprep.subr.mxu0 0.0
  %1701 = vmatpush1.msra.mxu0 0.0
  %1702 = vmatprep.subr.mxu0 0.0
  %1703 = vmatpush1.msra.mxu0 0.0
  %1704 = vmatprep.subr.mxu0 0.0
  %1705 = vmatpush1.msra.mxu0 0.0
  %1706 = vmatprep.subr.mxu0 0.0
  %1707 = vmatpush1.msra.mxu0 0.0
  %1708 = vmatprep.subr.mxu0 0.0
  %1709 = vmatpush1.msra.mxu0 0.0
  %1710 = vmatprep.subr.mxu0 0.0
  %1711 = vmatpush1.msra.mxu0 0.0
  %1712 = vmatprep.subr.mxu0 0.0
  %1713 = vmatpush1.msra.mxu0 0.0
  %1714 = vmatprep.subr.mxu0 0.0
  %1715 = vmatpush1.msra.mxu0 0.0
  %1716 = vmatprep.subr.mxu0 0.0
  %1717 = vmatpush1.msra.mxu0 0.0
  %1718 = vmatprep.subr.mxu0 0.0
  %1719 = vmatpush1.msra.mxu0 0.0
  %1720 = vmatprep.subr.mxu0 0.0
  %1721 = vmatpush1.msra.mxu0 0.0
  %1722 = vmatprep.subr.mxu0 0.0
  %1723 = vmatpush1.msra.mxu0 0.0
  %1724 = vmatprep.mubr.f32.mxu0 0.0
  %1725 = vmatmul.mubr.f32.gmra.mrb[0].mxu0 %v1130
  %v1726 = vpop.f32.mrb[0].mxu0
  %v1727 = vadd.f32 %v1051, %v1726
  %v1728 = vpop.f32.mrb[0].mxu0
  %v1729 = vadd.f32 %v1051, %v1728
  %1730 = vmatprep.mubr.f32.mxu0 0.0
  %1731 = vmatmul.mubr.f32.gmra.mrb[0].mxu0 %v1133
  %v1732 = vpop.f32.mrb[0].mxu0
  %v1733 = vadd.f32 %v1056, %v1732
  %v1734 = vpop.f32.mrb[0].mxu0
  %v1735 = vadd.f32 %v1056, %v1734
  %1736 = vmatprep.mubr.f32.mxu0 0.0
  %1737 = vmatmul.mubr.f32.gmra.mrb[0].mxu0 %v1136
  %v1738 = vpop.f32.mrb[0].mxu0
  %v1739 = vadd.f32 %v1061, %v1738
  %v1740 = vpop.f32.mrb[0].mxu0
  %v1741 = vadd.f32 %v1061, %v1740
  %1742 = vmatprep.mubr.f32.mxu0 0.0
  %1743 = vmatmul.mubr.f32.gmra.mrb[0].mxu0 %v1139
  %v1744 = vpop.f32.mrb[0].mxu0
  %v1745 = vadd.f32 %v1066, %v1744
  %v1746 = vpop.f32.mrb[0].mxu0
  %v1747 = vadd.f32 %v1066, %v1746
  %1748 = vmatprep.mubr.f32.mxu0 0.0
  %1749 = vmatmul.mubr.f32.gmra.mrb[0].mxu0 %v1142
  %v1750 = vpop.f32.mrb[0].mxu0
  %v1751 = vadd.f32 %v1071, %v1750
  %v1752 = vpop.f32.mrb[0].mxu0
  %v1753 = vadd.f32 %v1071, %v1752
  %1754 = vmatprep.mubr.f32.mxu0 0.0
  %1755 = vmatmul.mubr.f32.gmra.mrb[0].mxu0 %v1145
  %v1756 = vpop.f32.mrb[0].mxu0
  %v1757 = vadd.f32 %v1076, %v1756
  %v1758 = vpop.f32.mrb[0].mxu0
  %v1759 = vadd.f32 %v1076, %v1758
  %1760 = vmatprep.mubr.f32.mxu0 0.0
  %1761 = vmatmul.mubr.f32.gmra.mrb[0].mxu0 %v1148
  %v1762 = vpop.f32.mrb[0].mxu0
  %v1763 = vadd.f32 %v1081, %v1762
  %v1764 = vpop.f32.mrb[0].mxu0
  %v1765 = vadd.f32 %v1081, %v1764
  %1766 = vmatprep.mubr.f32.mxu0 0.0
  %1767 = vmatmul.mubr.f32.gmra.mrb[0].mxu0 %v1151
  %v1768 = vpop.f32.mrb[0].mxu0
  %v1769 = vadd.f32 %v1086, %v1768
  %v1770 = vpop.f32.mrb[0].mxu0
  %v1771 = vadd.f32 %v1086, %v1770
  %1772 = vmatprep.mubr.f32.mxu0 0.0
  %1773 = vmatmul.mubr.f32.gmra.mrb[0].mxu0 %v1154
  %v1774 = vpop.f32.mrb[0].mxu0
  %v1775 = vadd.f32 %v1091, %v1774
  %v1776 = vpop.f32.mrb[0].mxu0
  %v1777 = vadd.f32 %v1091, %v1776
  %1778 = vmatprep.mubr.f32.mxu0 0.0
  %1779 = vmatmul.mubr.f32.gmra.mrb[0].mxu0 %v1157
  %v1780 = vpop.f32.mrb[0].mxu0
  %v1781 = vadd.f32 %v1096, %v1780
  %v1782 = vpop.f32.mrb[0].mxu0
  %v1783 = vadd.f32 %v1096, %v1782
  %1784 = vmatprep.mubr.f32.mxu0 0.0
  %1785 = vmatmul.mubr.f32.gmra.mrb[0].mxu0 %v1160
  %v1786 = vpop.f32.mrb[0].mxu0
  %v1787 = vadd.f32 %v1101, %v1786
  %v1788 = vpop.f32.mrb[0].mxu0
  %v1789 = vadd.f32 %v1101, %v1788
  %1790 = vmatprep.mubr.f32.mxu0 0.0
  %1791 = vmatmul.mubr.f32.gmra.mrb[0].mxu0 %v1163
  %v1792 = vpop.f32.mrb[0].mxu0
  %v1793 = vadd.f32 %v1106, %v1792
  %v1794 = vpop.f32.mrb[0].mxu0
  %v1795 = vadd.f32 %v1106, %v1794
  %1796 = vmatprep.mubr.f32.mxu0 0.0
  %1797 = vmatmul.mubr.f32.gmra.mrb[0].mxu0 %v1166
  %v1798 = vpop.f32.mrb[0].mxu0
  %v1799 = vadd.f32 %v1111, %v1798
  %v1800 = vpop.f32.mrb[0].mxu0
  %v1801 = vadd.f32 %v1111, %v1800
  %1802 = vmatprep.mubr.f32.mxu0 0.0
  %1803 = vmatmul.mubr.f32.gmra.mrb[0].mxu0 %v1169
  %v1804 = vpop.f32.mrb[0].mxu0
  %v1805 = vadd.f32 %v1116, %v1804
  %v1806 = vpop.f32.mrb[0].mxu0
  %v1807 = vadd.f32 %v1116, %v1806
  %1808 = vmatprep.mubr.f32.mxu0 0.0
  %1809 = vmatmul.mubr.f32.gmra.mrb[0].mxu0 %v1172
  %v1810 = vpop.f32.mrb[0].mxu0
  %v1811 = vadd.f32 %v1121, %v1810
  %v1812 = vpop.f32.mrb[0].mxu0
  %v1813 = vadd.f32 %v1121, %v1812
  %1814 = vmatprep.mubr.f32.mxu0 0.0
  %1815 = vmatmul.mubr.f32.gmra.mrb[0].mxu0 %v1175
  %v1816 = vpop.f32.mrb[0].mxu0
  %v1817 = vadd.f32 %v1126, %v1816
  %v1818 = vpop.f32.mrb[0].mxu0
  %v1819 = vadd.f32 %v1126, %v1818
  %1820 = vdwg.mxu0
  %1821 = vmatprep.subr.mxu0 %v713
  %1822 = vmatpush1.msra.mxu0 %v712
  %1823 = vmatprep.subr.mxu0 %v754
  %1824 = vmatpush1.msra.mxu0 %v753
  %1825 = vmatprep.subr.mxu0 %v795
  %1826 = vmatpush1.msra.mxu0 %v794
  %1827 = vmatprep.subr.mxu0 %v836
  %1828 = vmatpush1.msra.mxu0 %v835
  %1829 = vmatprep.subr.mxu0 %v877
  %1830 = vmatpush1.msra.mxu0 %v876
  %1831 = vmatprep.subr.mxu0 %v918
  %1832 = vmatpush1.msra.mxu0 %v917
  %1833 = vmatprep.subr.mxu0 %v959
  %1834 = vmatpush1.msra.mxu0 %v958
  %1835 = vmatprep.subr.mxu0 %v1000
  %1836 = vmatpush1.msra.mxu0 %v999
  %1837 = vmatprep.subr.mxu0 0.0
  %1838 = vmatpush1.msra.mxu0 0.0
  %1839 = vmatprep.subr.mxu0 0.0
  %1840 = vmatpush1.msra.mxu0 0.0
  %1841 = vmatprep.subr.mxu0 0.0
  %1842 = vmatpush1.msra.mxu0 0.0
  %1843 = vmatprep.subr.mxu0 0.0
  %1844 = vmatpush1.msra.mxu0 0.0
  %1845 = vmatprep.subr.mxu0 0.0
  %1846 = vmatpush1.msra.mxu0 0.0
  %1847 = vmatprep.subr.mxu0 0.0
  %1848 = vmatpush1.msra.mxu0 0.0
  %1849 = vmatprep.subr.mxu0 0.0
  %1850 = vmatpush1.msra.mxu0 0.0
  %1851 = vmatprep.subr.mxu0 0.0
  %1852 = vmatpush1.msra.mxu0 0.0
  %1853 = vmatprep.subr.mxu0 0.0
  %1854 = vmatpush1.msra.mxu0 0.0
  %1855 = vmatprep.subr.mxu0 0.0
  %1856 = vmatpush1.msra.mxu0 0.0
  %1857 = vmatprep.subr.mxu0 0.0
  %1858 = vmatpush1.msra.mxu0 0.0
  %1859 = vmatprep.subr.mxu0 0.0
  %1860 = vmatpush1.msra.mxu0 0.0
  %1861 = vmatprep.subr.mxu0 0.0
  %1862 = vmatpush1.msra.mxu0 0.0
  %1863 = vmatprep.subr.mxu0 0.0
  %1864 = vmatpush1.msra.mxu0 0.0
  %1865 = vmatprep.subr.mxu0 0.0
  %1866 = vmatpush1.msra.mxu0 0.0
  %1867 = vmatprep.subr.mxu0 0.0
  %1868 = vmatpush1.msra.mxu0 0.0
  %1869 = vmatprep.subr.mxu0 0.0
  %1870 = vmatpush1.msra.mxu0 0.0
  %1871 = vmatprep.subr.mxu0 0.0
  %1872 = vmatpush1.msra.mxu0 0.0
  %1873 = vmatprep.subr.mxu0 0.0
  %1874 = vmatpush1.msra.mxu0 0.0
  %1875 = vmatprep.subr.mxu0 0.0
  %1876 = vmatpush1.msra.mxu0 0.0
  %1877 = vmatprep.subr.mxu0 0.0
  %1878 = vmatpush1.msra.mxu0 0.0
  %1879 = vmatprep.subr.mxu0 0.0
  %1880 = vmatpush1.msra.mxu0 0.0
  %1881 = vmatprep.subr.mxu0 0.0
  %1882 = vmatpush1.msra.mxu0 0.0
  %1883 = vmatprep.subr.mxu0 0.0
  %1884 = vmatpush1.msra.mxu0 0.0
  %1885 = vmatprep.mubr.f32.mxu0 0.0
  %1886 = vmatmul.mubr.f32.gmra.mrb[0].mxu0 %v1130
  %v1887 = vpop.f32.mrb[0].mxu0
  %v1888 = vadd.f32 %v1051, %v1887
  %v1889 = vpop.f32.mrb[0].mxu0
  %v1890 = vadd.f32 %v1051, %v1889
  %1891 = vmatprep.mubr.f32.mxu0 0.0
  %1892 = vmatmul.mubr.f32.gmra.mrb[0].mxu0 %v1133
  %v1893 = vpop.f32.mrb[0].mxu0
  %v1894 = vadd.f32 %v1056, %v1893
  %v1895 = vpop.f32.mrb[0].mxu0
  %v1896 = vadd.f32 %v1056, %v1895
  %1897 = vmatprep.mubr.f32.mxu0 0.0
  %1898 = vmatmul.mubr.f32.gmra.mrb[0].mxu0 %v1136
  %v1899 = vpop.f32.mrb[0].mxu0
  %v1900 = vadd.f32 %v1061, %v1899
  %v1901 = vpop.f32.mrb[0].mxu0
  %v1902 = vadd.f32 %v1061, %v1901
  %1903 = vmatprep.mubr.f32.mxu0 0.0
  %1904 = vmatmul.mubr.f32.gmra.mrb[0].mxu0 %v1139
  %v1905 = vpop.f32.mrb[0].mxu0
  %v1906 = vadd.f32 %v1066, %v1905
  %v1907 = vpop.f32.mrb[0].mxu0
  %v1908 = vadd.f32 %v1066, %v1907
  %1909 = vmatprep.mubr.f32.mxu0 0.0
  %1910 = vmatmul.mubr.f32.gmra.mrb[0].mxu0 %v1142
  %v1911 = vpop.f32.mrb[0].mxu0
  %v1912 = vadd.f32 %v1071, %v1911
  %v1913 = vpop.f32.mrb[0].mxu0
  %v1914 = vadd.f32 %v1071, %v1913
  %1915 = vmatprep.mubr.f32.mxu0 0.0
  %1916 = vmatmul.mubr.f32.gmra.mrb[0].mxu0 %v1145
  %v1917 = vpop.f32.mrb[0].mxu0
  %v1918 = vadd.f32 %v1076, %v1917
  %v1919 = vpop.f32.mrb[0].mxu0
  %v1920 = vadd.f32 %v1076, %v1919
  %1921 = vmatprep.mubr.f32.mxu0 0.0
  %1922 = vmatmul.mubr.f32.gmra.mrb[0].mxu0 %v1148
  %v1923 = vpop.f32.mrb[0].mxu0
  %v1924 = vadd.f32 %v1081, %v1923
  %v1925 = vpop.f32.mrb[0].mxu0
  %v1926 = vadd.f32 %v1081, %v1925
  %1927 = vmatprep.mubr.f32.mxu0 0.0
  %1928 = vmatmul.mubr.f32.gmra.mrb[0].mxu0 %v1151
  %v1929 = vpop.f32.mrb[0].mxu0
  %v1930 = vadd.f32 %v1086, %v1929
  %v1931 = vpop.f32.mrb[0].mxu0
  %v1932 = vadd.f32 %v1086, %v1931
  %1933 = vmatprep.mubr.f32.mxu0 0.0
  %1934 = vmatmul.mubr.f32.gmra.mrb[0].mxu0 %v1154
  %v1935 = vpop.f32.mrb[0].mxu0
  %v1936 = vadd.f32 %v1091, %v1935
  %v1937 = vpop.f32.mrb[0].mxu0
  %v1938 = vadd.f32 %v1091, %v1937
  %1939 = vmatprep.mubr.f32.mxu0 0.0
  %1940 = vmatmul.mubr.f32.gmra.mrb[0].mxu0 %v1157
  %v1941 = vpop.f32.mrb[0].mxu0
  %v1942 = vadd.f32 %v1096, %v1941
  %v1943 = vpop.f32.mrb[0].mxu0
  %v1944 = vadd.f32 %v1096, %v1943
  %1945 = vmatprep.mubr.f32.mxu0 0.0
  %1946 = vmatmul.mubr.f32.gmra.mrb[0].mxu0 %v1160
  %v1947 = vpop.f32.mrb[0].mxu0
  %v1948 = vadd.f32 %v1101, %v1947
  %v1949 = vpop.f32.mrb[0].mxu0
  %v1950 = vadd.f32 %v1101, %v1949
  %1951 = vmatprep.mubr.f32.mxu0 0.0
  %1952 = vmatmul.mubr.f32.gmra.mrb[0].mxu0 %v1163
  %v1953 = vpop.f32.mrb[0].mxu0
  %v1954 = vadd.f32 %v1106, %v1953
  %v1955 = vpop.f32.mrb[0].mxu0
  %v1956 = vadd.f32 %v1106, %v1955
  %1957 = vmatprep.mubr.f32.mxu0 0.0
  %1958 = vmatmul.mubr.f32.gmra.mrb[0].mxu0 %v1166
  %v1959 = vpop.f32.mrb[0].mxu0
  %v1960 = vadd.f32 %v1111, %v1959
  %v1961 = vpop.f32.mrb[0].mxu0
  %v1962 = vadd.f32 %v1111, %v1961
  %1963 = vmatprep.mubr.f32.mxu0 0.0
  %1964 = vmatmul.mubr.f32.gmra.mrb[0].mxu0 %v1169
  %v1965 = vpop.f32.mrb[0].mxu0
  %v1966 = vadd.f32 %v1116, %v1965
  %v1967 = vpop.f32.mrb[0].mxu0
  %v1968 = vadd.f32 %v1116, %v1967
  %1969 = vmatprep.mubr.f32.mxu0 0.0
  %1970 = vmatmul.mubr.f32.gmra.mrb[0].mxu0 %v1172
  %v1971 = vpop.f32.mrb[0].mxu0
  %v1972 = vadd.f32 %v1121, %v1971
  %v1973 = vpop.f32.mrb[0].mxu0
  %v1974 = vadd.f32 %v1121, %v1973
  %1975 = vmatprep.mubr.f32.mxu0 0.0
  %1976 = vmatmul.mubr.f32.gmra.mrb[0].mxu0 %v1175
  %v1977 = vpop.f32.mrb[0].mxu0
  %v1978 = vadd.f32 %v1126, %v1977
  %v1979 = vpop.f32.mrb[0].mxu0
  %v1980 = vadd.f32 %v1126, %v1979
  %1981 = vdwg.mxu0
  %1982 = vmatprep.subr.mxu0 %v715
  %1983 = vmatpush1.msra.mxu0 %v714
  %1984 = vmatprep.subr.mxu0 %v756
  %1985 = vmatpush1.msra.mxu0 %v755
  %1986 = vmatprep.subr.mxu0 %v797
  %1987 = vmatpush1.msra.mxu0 %v796
  %1988 = vmatprep.subr.mxu0 %v838
  %1989 = vmatpush1.msra.mxu0 %v837
  %1990 = vmatprep.subr.mxu0 %v879
  %1991 = vmatpush1.msra.mxu0 %v878
  %1992 = vmatprep.subr.mxu0 %v920
  %1993 = vmatpush1.msra.mxu0 %v919
  %1994 = vmatprep.subr.mxu0 %v961
  %1995 = vmatpush1.msra.mxu0 %v960
  %1996 = vmatprep.subr.mxu0 %v1002
  %1997 = vmatpush1.msra.mxu0 %v1001
  %1998 = vmatprep.subr.mxu0 0.0
  %1999 = vmatpush1.msra.mxu0 0.0
  %2000 = vmatprep.subr.mxu0 0.0
  %2001 = vmatpush1.msra.mxu0 0.0
  %2002 = vmatprep.subr.mxu0 0.0
  %2003 = vmatpush1.msra.mxu0 0.0
  %2004 = vmatprep.subr.mxu0 0.0
  %2005 = vmatpush1.msra.mxu0 0.0
  %2006 = vmatprep.subr.mxu0 0.0
  %2007 = vmatpush1.msra.mxu0 0.0
  %2008 = vmatprep.subr.mxu0 0.0
  %2009 = vmatpush1.msra.mxu0 0.0
  %2010 = vmatprep.subr.mxu0 0.0
  %2011 = vmatpush1.msra.mxu0 0.0
  %2012 = vmatprep.subr.mxu0 0.0
  %2013 = vmatpush1.msra.mxu0 0.0
  %2014 = vmatprep.subr.mxu0 0.0
  %2015 = vmatpush1.msra.mxu0 0.0
  %2016 = vmatprep.subr.mxu0 0.0
  %2017 = vmatpush1.msra.mxu0 0.0
  %2018 = vmatprep.subr.mxu0 0.0
  %2019 = vmatpush1.msra.mxu0 0.0
  %2020 = vmatprep.subr.mxu0 0.0
  %2021 = vmatpush1.msra.mxu0 0.0
  %2022 = vmatprep.subr.mxu0 0.0
  %2023 = vmatpush1.msra.mxu0 0.0
  %2024 = vmatprep.subr.mxu0 0.0
  %2025 = vmatpush1.msra.mxu0 0.0
  %2026 = vmatprep.subr.mxu0 0.0
  %2027 = vmatpush1.msra.mxu0 0.0
  %2028 = vmatprep.subr.mxu0 0.0
  %2029 = vmatpush1.msra.mxu0 0.0
  %2030 = vmatprep.subr.mxu0 0.0
  %2031 = vmatpush1.msra.mxu0 0.0
  %2032 = vmatprep.subr.mxu0 0.0
  %2033 = vmatpush1.msra.mxu0 0.0
  %2034 = vmatprep.subr.mxu0 0.0
  %2035 = vmatpush1.msra.mxu0 0.0
  %2036 = vmatprep.subr.mxu0 0.0
  %2037 = vmatpush1.msra.mxu0 0.0
  %2038 = vmatprep.subr.mxu0 0.0
  %2039 = vmatpush1.msra.mxu0 0.0
  %2040 = vmatprep.subr.mxu0 0.0
  %2041 = vmatpush1.msra.mxu0 0.0
  %2042 = vmatprep.subr.mxu0 0.0
  %2043 = vmatpush1.msra.mxu0 0.0
  %2044 = vmatprep.subr.mxu0 0.0
  %2045 = vmatpush1.msra.mxu0 0.0
  %2046 = vmatprep.mubr.f32.mxu0 0.0
  %2047 = vmatmul.mubr.f32.gmra.mrb[0].mxu0 %v1130
  %v2048 = vpop.f32.mrb[0].mxu0
  %v2049 = vadd.f32 %v1051, %v2048
  %v2050 = vpop.f32.mrb[0].mxu0
  %v2051 = vadd.f32 %v1051, %v2050
  %2052 = vmatprep.mubr.f32.mxu0 0.0
  %2053 = vmatmul.mubr.f32.gmra.mrb[0].mxu0 %v1133
  %v2054 = vpop.f32.mrb[0].mxu0
  %v2055 = vadd.f32 %v1056, %v2054
  %v2056 = vpop.f32.mrb[0].mxu0
  %v2057 = vadd.f32 %v1056, %v2056
  %2058 = vmatprep.mubr.f32.mxu0 0.0
  %2059 = vmatmul.mubr.f32.gmra.mrb[0].mxu0 %v1136
  %v2060 = vpop.f32.mrb[0].mxu0
  %v2061 = vadd.f32 %v1061, %v2060
  %v2062 = vpop.f32.mrb[0].mxu0
  %v2063 = vadd.f32 %v1061, %v2062
  %2064 = vmatprep.mubr.f32.mxu0 0.0
  %2065 = vmatmul.mubr.f32.gmra.mrb[0].mxu0 %v1139
  %v2066 = vpop.f32.mrb[0].mxu0
  %v2067 = vadd.f32 %v1066, %v2066
  %v2068 = vpop.f32.mrb[0].mxu0
  %v2069 = vadd.f32 %v1066, %v2068
  %2070 = vmatprep.mubr.f32.mxu0 0.0
  %2071 = vmatmul.mubr.f32.gmra.mrb[0].mxu0 %v1142
  %v2072 = vpop.f32.mrb[0].mxu0
  %v2073 = vadd.f32 %v1071, %v2072
  %v2074 = vpop.f32.mrb[0].mxu0
  %v2075 = vadd.f32 %v1071, %v2074
  %2076 = vmatprep.mubr.f32.mxu0 0.0
  %2077 = vmatmul.mubr.f32.gmra.mrb[0].mxu0 %v1145
  %v2078 = vpop.f32.mrb[0].mxu0
  %v2079 = vadd.f32 %v1076, %v2078
  %v2080 = vpop.f32.mrb[0].mxu0
  %v2081 = vadd.f32 %v1076, %v2080
  %2082 = vmatprep.mubr.f32.mxu0 0.0
  %2083 = vmatmul.mubr.f32.gmra.mrb[0].mxu0 %v1148
  %v2084 = vpop.f32.mrb[0].mxu0
  %v2085 = vadd.f32 %v1081, %v2084
  %v2086 = vpop.f32.mrb[0].mxu0
  %v2087 = vadd.f32 %v1081, %v2086
  %2088 = vmatprep.mubr.f32.mxu0 0.0
  %2089 = vmatmul.mubr.f32.gmra.mrb[0].mxu0 %v1151
  %v2090 = vpop.f32.mrb[0].mxu0
  %v2091 = vadd.f32 %v1086, %v2090
  %v2092 = vpop.f32.mrb[0].mxu0
  %v2093 = vadd.f32 %v1086, %v2092
  %2094 = vmatprep.mubr.f32.mxu0 0.0
  %2095 = vmatmul.mubr.f32.gmra.mrb[0].mxu0 %v1154
  %v2096 = vpop.f32.mrb[0].mxu0
  %v2097 = vadd.f32 %v1091, %v2096
  %v2098 = vpop.f32.mrb[0].mxu0
  %v2099 = vadd.f32 %v1091, %v2098
  %2100 = vmatprep.mubr.f32.mxu0 0.0
  %2101 = vmatmul.mubr.f32.gmra.mrb[0].mxu0 %v1157
  %v2102 = vpop.f32.mrb[0].mxu0
  %v2103 = vadd.f32 %v1096, %v2102
  %v2104 = vpop.f32.mrb[0].mxu0
  %v2105 = vadd.f32 %v1096, %v2104
  %2106 = vmatprep.mubr.f32.mxu0 0.0
  %2107 = vmatmul.mubr.f32.gmra.mrb[0].mxu0 %v1160
  %v2108 = vpop.f32.mrb[0].mxu0
  %v2109 = vadd.f32 %v1101, %v2108
  %v2110 = vpop.f32.mrb[0].mxu0
  %v2111 = vadd.f32 %v1101, %v2110
  %2112 = vmatprep.mubr.f32.mxu0 0.0
  %2113 = vmatmul.mubr.f32.gmra.mrb[0].mxu0 %v1163
  %v2114 = vpop.f32.mrb[0].mxu0
  %v2115 = vadd.f32 %v1106, %v2114
  %v2116 = vpop.f32.mrb[0].mxu0
  %v2117 = vadd.f32 %v1106, %v2116
  %2118 = vmatprep.mubr.f32.mxu0 0.0
  %2119 = vmatmul.mubr.f32.gmra.mrb[0].mxu0 %v1166
  %v2120 = vpop.f32.mrb[0].mxu0
  %v2121 = vadd.f32 %v1111, %v2120
  %v2122 = vpop.f32.mrb[0].mxu0
  %v2123 = vadd.f32 %v1111, %v2122
  %2124 = vmatprep.mubr.f32.mxu0 0.0
  %2125 = vmatmul.mubr.f32.gmra.mrb[0].mxu0 %v1169
  %v2126 = vpop.f32.mrb[0].mxu0
  %v2127 = vadd.f32 %v1116, %v2126
  %v2128 = vpop.f32.mrb[0].mxu0
  %v2129 = vadd.f32 %v1116, %v2128
  %2130 = vmatprep.mubr.f32.mxu0 0.0
  %2131 = vmatmul.mubr.f32.gmra.mrb[0].mxu0 %v1172
  %v2132 = vpop.f32.mrb[0].mxu0
  %v2133 = vadd.f32 %v1121, %v2132
  %v2134 = vpop.f32.mrb[0].mxu0
  %v2135 = vadd.f32 %v1121, %v2134
  %2136 = vmatprep.mubr.f32.mxu0 0.0
  %2137 = vmatmul.mubr.f32.gmra.mrb[0].mxu0 %v1175
  %v2138 = vpop.f32.mrb[0].mxu0
  %v2139 = vadd.f32 %v1126, %v2138
  %v2140 = vpop.f32.mrb[0].mxu0
  %v2141 = vadd.f32 %v1126, %v2140
  %2142 = vdwg.mxu0
  %2143 = vmatprep.subr.mxu0 %v717
  %2144 = vmatpush1.msra.mxu0 %v716
  %2145 = vmatprep.subr.mxu0 %v758
  %2146 = vmatpush1.msra.mxu0 %v757
  %2147 = vmatprep.subr.mxu0 %v799
  %2148 = vmatpush1.msra.mxu0 %v798
  %2149 = vmatprep.subr.mxu0 %v840
  %2150 = vmatpush1.msra.mxu0 %v839
  %2151 = vmatprep.subr.mxu0 %v881
  %2152 = vmatpush1.msra.mxu0 %v880
  %2153 = vmatprep.subr.mxu0 %v922
  %2154 = vmatpush1.msra.mxu0 %v921
  %2155 = vmatprep.subr.mxu0 %v963
  %2156 = vmatpush1.msra.mxu0 %v962
  %2157 = vmatprep.subr.mxu0 %v1004
  %2158 = vmatpush1.msra.mxu0 %v1003
  %2159 = vmatprep.subr.mxu0 0.0
  %2160 = vmatpush1.msra.mxu0 0.0
  %2161 = vmatprep.subr.mxu0 0.0
  %2162 = vmatpush1.msra.mxu0 0.0
  %2163 = vmatprep.subr.mxu0 0.0
  %2164 = vmatpush1.msra.mxu0 0.0
  %2165 = vmatprep.subr.mxu0 0.0
  %2166 = vmatpush1.msra.mxu0 0.0
  %2167 = vmatprep.subr.mxu0 0.0
  %2168 = vmatpush1.msra.mxu0 0.0
  %2169 = vmatprep.subr.mxu0 0.0
  %2170 = vmatpush1.msra.mxu0 0.0
  %2171 = vmatprep.subr.mxu0 0.0
  %2172 = vmatpush1.msra.mxu0 0.0
  %2173 = vmatprep.subr.mxu0 0.0
  %2174 = vmatpush1.msra.mxu0 0.0
  %2175 = vmatprep.subr.mxu0 0.0
  %2176 = vmatpush1.msra.mxu0 0.0
  %2177 = vmatprep.subr.mxu0 0.0
  %2178 = vmatpush1.msra.mxu0 0.0
  %2179 = vmatprep.subr.mxu0 0.0
  %2180 = vmatpush1.msra.mxu0 0.0
  %2181 = vmatprep.subr.mxu0 0.0
  %2182 = vmatpush1.msra.mxu0 0.0
  %2183 = vmatprep.subr.mxu0 0.0
  %2184 = vmatpush1.msra.mxu0 0.0
  %2185 = vmatprep.subr.mxu0 0.0
  %2186 = vmatpush1.msra.mxu0 0.0
  %2187 = vmatprep.subr.mxu0 0.0
  %2188 = vmatpush1.msra.mxu0 0.0
  %2189 = vmatprep.subr.mxu0 0.0
  %2190 = vmatpush1.msra.mxu0 0.0
  %2191 = vmatprep.subr.mxu0 0.0
  %2192 = vmatpush1.msra.mxu0 0.0
  %2193 = vmatprep.subr.mxu0 0.0
  %2194 = vmatpush1.msra.mxu0 0.0
  %2195 = vmatprep.subr.mxu0 0.0
  %2196 = vmatpush1.msra.mxu0 0.0
  %2197 = vmatprep.subr.mxu0 0.0
  %2198 = vmatpush1.msra.mxu0 0.0
  %2199 = vmatprep.subr.mxu0 0.0
  %2200 = vmatpush1.msra.mxu0 0.0
  %2201 = vmatprep.subr.mxu0 0.0
  %2202 = vmatpush1.msra.mxu0 0.0
  %2203 = vmatprep.subr.mxu0 0.0
  %2204 = vmatpush1.msra.mxu0 0.0
  %2205 = vmatprep.subr.mxu0 0.0
  %2206 = vmatpush1.msra.mxu0 0.0
  %2207 = vmatprep.mubr.f32.mxu0 0.0
  %2208 = vmatmul.mubr.f32.gmra.mrb[0].mxu0 %v1130
  %v2209 = vpop.f32.mrb[0].mxu0
  %v2210 = vadd.f32 %v1051, %v2209
  %v2211 = vpop.f32.mrb[0].mxu0
  %v2212 = vadd.f32 %v1051, %v2211
  %2213 = vmatprep.mubr.f32.mxu0 0.0
  %2214 = vmatmul.mubr.f32.gmra.mrb[0].mxu0 %v1133
  %v2215 = vpop.f32.mrb[0].mxu0
  %v2216 = vadd.f32 %v1056, %v2215
  %v2217 = vpop.f32.mrb[0].mxu0
  %v2218 = vadd.f32 %v1056, %v2217
  %2219 = vmatprep.mubr.f32.mxu0 0.0
  %2220 = vmatmul.mubr.f32.gmra.mrb[0].mxu0 %v1136
  %v2221 = vpop.f32.mrb[0].mxu0
  %v2222 = vadd.f32 %v1061, %v2221
  %v2223 = vpop.f32.mrb[0].mxu0
  %v2224 = vadd.f32 %v1061, %v2223
  %2225 = vmatprep.mubr.f32.mxu0 0.0
  %2226 = vmatmul.mubr.f32.gmra.mrb[0].mxu0 %v1139
  %v2227 = vpop.f32.mrb[0].mxu0
  %v2228 = vadd.f32 %v1066, %v2227
  %v2229 = vpop.f32.mrb[0].mxu0
  %v2230 = vadd.f32 %v1066, %v2229
  %2231 = vmatprep.mubr.f32.mxu0 0.0
  %2232 = vmatmul.mubr.f32.gmra.mrb[0].mxu0 %v1142
  %v2233 = vpop.f32.mrb[0].mxu0
  %v2234 = vadd.f32 %v1071, %v2233
  %v2235 = vpop.f32.mrb[0].mxu0
  %v2236 = vadd.f32 %v1071, %v2235
  %2237 = vmatprep.mubr.f32.mxu0 0.0
  %2238 = vmatmul.mubr.f32.gmra.mrb[0].mxu0 %v1145
  %v2239 = vpop.f32.mrb[0].mxu0
  %v2240 = vadd.f32 %v1076, %v2239
  %v2241 = vpop.f32.mrb[0].mxu0
  %v2242 = vadd.f32 %v1076, %v2241
  %2243 = vmatprep.mubr.f32.mxu0 0.0
  %2244 = vmatmul.mubr.f32.gmra.mrb[0].mxu0 %v1148
  %v2245 = vpop.f32.mrb[0].mxu0
  %v2246 = vadd.f32 %v1081, %v2245
  %v2247 = vpop.f32.mrb[0].mxu0
  %v2248 = vadd.f32 %v1081, %v2247
  %2249 = vmatprep.mubr.f32.mxu0 0.0
  %2250 = vmatmul.mubr.f32.gmra.mrb[0].mxu0 %v1151
  %v2251 = vpop.f32.mrb[0].mxu0
  %v2252 = vadd.f32 %v1086, %v2251
  %v2253 = vpop.f32.mrb[0].mxu0
  %v2254 = vadd.f32 %v1086, %v2253
  %2255 = vmatprep.mubr.f32.mxu0 0.0
  %2256 = vmatmul.mubr.f32.gmra.mrb[0].mxu0 %v1154
  %v2257 = vpop.f32.mrb[0].mxu0
  %v2258 = vadd.f32 %v1091, %v2257
  %v2259 = vpop.f32.mrb[0].mxu0
  %v2260 = vadd.f32 %v1091, %v2259
  %2261 = vmatprep.mubr.f32.mxu0 0.0
  %2262 = vmatmul.mubr.f32.gmra.mrb[0].mxu0 %v1157
  %v2263 = vpop.f32.mrb[0].mxu0
  %v2264 = vadd.f32 %v1096, %v2263
  %v2265 = vpop.f32.mrb[0].mxu0
  %v2266 = vadd.f32 %v1096, %v2265
  %2267 = vmatprep.mubr.f32.mxu0 0.0
  %2268 = vmatmul.mubr.f32.gmra.mrb[0].mxu0 %v1160
  %v2269 = vpop.f32.mrb[0].mxu0
  %v2270 = vadd.f32 %v1101, %v2269
  %v2271 = vpop.f32.mrb[0].mxu0
  %v2272 = vadd.f32 %v1101, %v2271
  %2273 = vmatprep.mubr.f32.mxu0 0.0
  %2274 = vmatmul.mubr.f32.gmra.mrb[0].mxu0 %v1163
  %v2275 = vpop.f32.mrb[0].mxu0
  %v2276 = vadd.f32 %v1106, %v2275
  %v2277 = vpop.f32.mrb[0].mxu0
  %v2278 = vadd.f32 %v1106, %v2277
  %2279 = vmatprep.mubr.f32.mxu0 0.0
  %2280 = vmatmul.mubr.f32.gmra.mrb[0].mxu0 %v1166
  %v2281 = vpop.f32.mrb[0].mxu0
  %v2282 = vadd.f32 %v1111, %v2281
  %v2283 = vpop.f32.mrb[0].mxu0
  %v2284 = vadd.f32 %v1111, %v2283
  %2285 = vmatprep.mubr.f32.mxu0 0.0
  %2286 = vmatmul.mubr.f32.gmra.mrb[0].mxu0 %v1169
  %v2287 = vpop.f32.mrb[0].mxu0
  %v2288 = vadd.f32 %v1116, %v2287
  %v2289 = vpop.f32.mrb[0].mxu0
  %v2290 = vadd.f32 %v1116, %v2289
  %2291 = vmatprep.mubr.f32.mxu0 0.0
  %2292 = vmatmul.mubr.f32.gmra.mrb[0].mxu0 %v1172
  %v2293 = vpop.f32.mrb[0].mxu0
  %v2294 = vadd.f32 %v1121, %v2293
  %v2295 = vpop.f32.mrb[0].mxu0
  %v2296 = vadd.f32 %v1121, %v2295
  %2297 = vmatprep.mubr.f32.mxu0 0.0
  %2298 = vmatmul.mubr.f32.gmra.mrb[0].mxu0 %v1175
  %v2299 = vpop.f32.mrb[0].mxu0
  %v2300 = vadd.f32 %v1126, %v2299
  %v2301 = vpop.f32.mrb[0].mxu0
  %v2302 = vadd.f32 %v1126, %v2301
  %2303 = vdwg.mxu0
  %2304 = vmatprep.subr.mxu0 %v719
  %2305 = vmatpush1.msra.mxu0 %v718
  %2306 = vmatprep.subr.mxu0 %v760
  %2307 = vmatpush1.msra.mxu0 %v759
  %2308 = vmatprep.subr.mxu0 %v801
  %2309 = vmatpush1.msra.mxu0 %v800
  %2310 = vmatprep.subr.mxu0 %v842
  %2311 = vmatpush1.msra.mxu0 %v841
  %2312 = vmatprep.subr.mxu0 %v883
  %2313 = vmatpush1.msra.mxu0 %v882
  %2314 = vmatprep.subr.mxu0 %v924
  %2315 = vmatpush1.msra.mxu0 %v923
  %2316 = vmatprep.subr.mxu0 %v965
  %2317 = vmatpush1.msra.mxu0 %v964
  %2318 = vmatprep.subr.mxu0 %v1006
  %2319 = vmatpush1.msra.mxu0 %v1005
  %2320 = vmatprep.subr.mxu0 0.0
  %2321 = vmatpush1.msra.mxu0 0.0
  %2322 = vmatprep.subr.mxu0 0.0
  %2323 = vmatpush1.msra.mxu0 0.0
  %2324 = vmatprep.subr.mxu0 0.0
  %2325 = vmatpush1.msra.mxu0 0.0
  %2326 = vmatprep.subr.mxu0 0.0
  %2327 = vmatpush1.msra.mxu0 0.0
  %2328 = vmatprep.subr.mxu0 0.0
  %2329 = vmatpush1.msra.mxu0 0.0
  %2330 = vmatprep.subr.mxu0 0.0
  %2331 = vmatpush1.msra.mxu0 0.0
  %2332 = vmatprep.subr.mxu0 0.0
  %2333 = vmatpush1.msra.mxu0 0.0
  %2334 = vmatprep.subr.mxu0 0.0
  %2335 = vmatpush1.msra.mxu0 0.0
  %2336 = vmatprep.subr.mxu0 0.0
  %2337 = vmatpush1.msra.mxu0 0.0
  %2338 = vmatprep.subr.mxu0 0.0
  %2339 = vmatpush1.msra.mxu0 0.0
  %2340 = vmatprep.subr.mxu0 0.0
  %2341 = vmatpush1.msra.mxu0 0.0
  %2342 = vmatprep.subr.mxu0 0.0
  %2343 = vmatpush1.msra.mxu0 0.0
  %2344 = vmatprep.subr.mxu0 0.0
  %2345 = vmatpush1.msra.mxu0 0.0
  %2346 = vmatprep.subr.mxu0 0.0
  %2347 = vmatpush1.msra.mxu0 0.0
  %2348 = vmatprep.subr.mxu0 0.0
  %2349 = vmatpush1.msra.mxu0 0.0
  %2350 = vmatprep.subr.mxu0 0.0
  %2351 = vmatpush1.msra.mxu0 0.0
  %2352 = vmatprep.subr.mxu0 0.0
  %2353 = vmatpush1.msra.mxu0 0.0
  %2354 = vmatprep.subr.mxu0 0.0
  %2355 = vmatpush1.msra.mxu0 0.0
  %2356 = vmatprep.subr.mxu0 0.0
  %2357 = vmatpush1.msra.mxu0 0.0
  %2358 = vmatprep.subr.mxu0 0.0
  %2359 = vmatpush1.msra.mxu0 0.0
  %2360 = vmatprep.subr.mxu0 0.0
  %2361 = vmatpush1.msra.mxu0 0.0
  %2362 = vmatprep.subr.mxu0 0.0
  %2363 = vmatpush1.msra.mxu0 0.0
  %2364 = vmatprep.subr.mxu0 0.0
  %2365 = vmatpush1.msra.mxu0 0.0
  %2366 = vmatprep.subr.mxu0 0.0
  %2367 = vmatpush1.msra.mxu0 0.0
  %2368 = vmatprep.mubr.f32.mxu0 0.0
  %2369 = vmatmul.mubr.f32.gmra.mrb[0].mxu0 %v1130
  %v2370 = vpop.f32.mrb[0].mxu0
  %v2371 = vadd.f32 %v1051, %v2370
  %v2372 = vpop.f32.mrb[0].mxu0
  %v2373 = vadd.f32 %v1051, %v2372
  %2374 = vmatprep.mubr.f32.mxu0 0.0
  %2375 = vmatmul.mubr.f32.gmra.mrb[0].mxu0 %v1133
  %v2376 = vpop.f32.mrb[0].mxu0
  %v2377 = vadd.f32 %v1056, %v2376
  %v2378 = vpop.f32.mrb[0].mxu0
  %v2379 = vadd.f32 %v1056, %v2378
  %2380 = vmatprep.mubr.f32.mxu0 0.0
  %2381 = vmatmul.mubr.f32.gmra.mrb[0].mxu0 %v1136
  %v2382 = vpop.f32.mrb[0].mxu0
  %v2383 = vadd.f32 %v1061, %v2382
  %v2384 = vpop.f32.mrb[0].mxu0
  %v2385 = vadd.f32 %v1061, %v2384
  %2386 = vmatprep.mubr.f32.mxu0 0.0
  %2387 = vmatmul.mubr.f32.gmra.mrb[0].mxu0 %v1139
  %v2388 = vpop.f32.mrb[0].mxu0
  %v2389 = vadd.f32 %v1066, %v2388
  %v2390 = vpop.f32.mrb[0].mxu0
  %v2391 = vadd.f32 %v1066, %v2390
  %2392 = vmatprep.mubr.f32.mxu0 0.0
  %2393 = vmatmul.mubr.f32.gmra.mrb[0].mxu0 %v1142
  %v2394 = vpop.f32.mrb[0].mxu0
  %v2395 = vadd.f32 %v1071, %v2394
  %v2396 = vpop.f32.mrb[0].mxu0
  %v2397 = vadd.f32 %v1071, %v2396
  %2398 = vmatprep.mubr.f32.mxu0 0.0
  %2399 = vmatmul.mubr.f32.gmra.mrb[0].mxu0 %v1145
  %v2400 = vpop.f32.mrb[0].mxu0
  %v2401 = vadd.f32 %v1076, %v2400
  %v2402 = vpop.f32.mrb[0].mxu0
  %v2403 = vadd.f32 %v1076, %v2402
  %2404 = vmatprep.mubr.f32.mxu0 0.0
  %2405 = vmatmul.mubr.f32.gmra.mrb[0].mxu0 %v1148
  %v2406 = vpop.f32.mrb[0].mxu0
  %v2407 = vadd.f32 %v1081, %v2406
  %v2408 = vpop.f32.mrb[0].mxu0
  %v2409 = vadd.f32 %v1081, %v2408
  %2410 = vmatprep.mubr.f32.mxu0 0.0
  %2411 = vmatmul.mubr.f32.gmra.mrb[0].mxu0 %v1151
  %v2412 = vpop.f32.mrb[0].mxu0
  %v2413 = vadd.f32 %v1086, %v2412
  %v2414 = vpop.f32.mrb[0].mxu0
  %v2415 = vadd.f32 %v1086, %v2414
  %2416 = vmatprep.mubr.f32.mxu0 0.0
  %2417 = vmatmul.mubr.f32.gmra.mrb[0].mxu0 %v1154
  %v2418 = vpop.f32.mrb[0].mxu0
  %v2419 = vadd.f32 %v1091, %v2418
  %v2420 = vpop.f32.mrb[0].mxu0
  %v2421 = vadd.f32 %v1091, %v2420
  %2422 = vmatprep.mubr.f32.mxu0 0.0
  %2423 = vmatmul.mubr.f32.gmra.mrb[0].mxu0 %v1157
  %v2424 = vpop.f32.mrb[0].mxu0
  %v2425 = vadd.f32 %v1096, %v2424
  %v2426 = vpop.f32.mrb[0].mxu0
  %v2427 = vadd.f32 %v1096, %v2426
  %2428 = vmatprep.mubr.f32.mxu0 0.0
  %2429 = vmatmul.mubr.f32.gmra.mrb[0].mxu0 %v1160
  %v2430 = vpop.f32.mrb[0].mxu0
  %v2431 = vadd.f32 %v1101, %v2430
  %v2432 = vpop.f32.mrb[0].mxu0
  %v2433 = vadd.f32 %v1101, %v2432
  %2434 = vmatprep.mubr.f32.mxu0 0.0
  %2435 = vmatmul.mubr.f32.gmra.mrb[0].mxu0 %v1163
  %v2436 = vpop.f32.mrb[0].mxu0
  %v2437 = vadd.f32 %v1106, %v2436
  %v2438 = vpop.f32.mrb[0].mxu0
  %v2439 = vadd.f32 %v1106, %v2438
  %2440 = vmatprep.mubr.f32.mxu0 0.0
  %2441 = vmatmul.mubr.f32.gmra.mrb[0].mxu0 %v1166
  %v2442 = vpop.f32.mrb[0].mxu0
  %v2443 = vadd.f32 %v1111, %v2442
  %v2444 = vpop.f32.mrb[0].mxu0
  %v2445 = vadd.f32 %v1111, %v2444
  %2446 = vmatprep.mubr.f32.mxu0 0.0
  %2447 = vmatmul.mubr.f32.gmra.mrb[0].mxu0 %v1169
  %v2448 = vpop.f32.mrb[0].mxu0
  %v2449 = vadd.f32 %v1116, %v2448
  %v2450 = vpop.f32.mrb[0].mxu0
  %v2451 = vadd.f32 %v1116, %v2450
  %2452 = vmatprep.mubr.f32.mxu0 0.0
  %2453 = vmatmul.mubr.f32.gmra.mrb[0].mxu0 %v1172
  %v2454 = vpop.f32.mrb[0].mxu0
  %v2455 = vadd.f32 %v1121, %v2454
  %v2456 = vpop.f32.mrb[0].mxu0
  %v2457 = vadd.f32 %v1121, %v2456
  %2458 = vmatprep.mubr.f32.mxu0 0.0
  %2459 = vmatmul.mubr.f32.gmra.mrb[0].mxu0 %v1175
  %v2460 = vpop.f32.mrb[0].mxu0
  %v2461 = vadd.f32 %v1126, %v2460
  %v2462 = vpop.f32.mrb[0].mxu0
  %v2463 = vadd.f32 %v1126, %v2462
  %2464 = vdwg.mxu0
  %2465 = vmatprep.subr.mxu0 %v721
  %2466 = vmatpush1.msra.mxu0 %v720
  %2467 = vmatprep.subr.mxu0 %v762
  %2468 = vmatpush1.msra.mxu0 %v761
  %2469 = vmatprep.subr.mxu0 %v803
  %2470 = vmatpush1.msra.mxu0 %v802
  %2471 = vmatprep.subr.mxu0 %v844
  %2472 = vmatpush1.msra.mxu0 %v843
  %2473 = vmatprep.subr.mxu0 %v885
  %2474 = vmatpush1.msra.mxu0 %v884
  %2475 = vmatprep.subr.mxu0 %v926
  %2476 = vmatpush1.msra.mxu0 %v925
  %2477 = vmatprep.subr.mxu0 %v967
  %2478 = vmatpush1.msra.mxu0 %v966
  %2479 = vmatprep.subr.mxu0 %v1008
  %2480 = vmatpush1.msra.mxu0 %v1007
  %2481 = vmatprep.subr.mxu0 0.0
  %2482 = vmatpush1.msra.mxu0 0.0
  %2483 = vmatprep.subr.mxu0 0.0
  %2484 = vmatpush1.msra.mxu0 0.0
  %2485 = vmatprep.subr.mxu0 0.0
  %2486 = vmatpush1.msra.mxu0 0.0
  %2487 = vmatprep.subr.mxu0 0.0
  %2488 = vmatpush1.msra.mxu0 0.0
  %2489 = vmatprep.subr.mxu0 0.0
  %2490 = vmatpush1.msra.mxu0 0.0
  %2491 = vmatprep.subr.mxu0 0.0
  %2492 = vmatpush1.msra.mxu0 0.0
  %2493 = vmatprep.subr.mxu0 0.0
  %2494 = vmatpush1.msra.mxu0 0.0
  %2495 = vmatprep.subr.mxu0 0.0
  %2496 = vmatpush1.msra.mxu0 0.0
  %2497 = vmatprep.subr.mxu0 0.0
  %2498 = vmatpush1.msra.mxu0 0.0
  %2499 = vmatprep.subr.mxu0 0.0
  %2500 = vmatpush1.msra.mxu0 0.0
  %2501 = vmatprep.subr.mxu0 0.0
  %2502 = vmatpush1.msra.mxu0 0.0
  %2503 = vmatprep.subr.mxu0 0.0
  %2504 = vmatpush1.msra.mxu0 0.0
  %2505 = vmatprep.subr.mxu0 0.0
  %2506 = vmatpush1.msra.mxu0 0.0
  %2507 = vmatprep.subr.mxu0 0.0
  %2508 = vmatpush1.msra.mxu0 0.0
  %2509 = vmatprep.subr.mxu0 0.0
  %2510 = vmatpush1.msra.mxu0 0.0
  %2511 = vmatprep.subr.mxu0 0.0
  %2512 = vmatpush1.msra.mxu0 0.0
  %2513 = vmatprep.subr.mxu0 0.0
  %2514 = vmatpush1.msra.mxu0 0.0
  %2515 = vmatprep.subr.mxu0 0.0
  %2516 = vmatpush1.msra.mxu0 0.0
  %2517 = vmatprep.subr.mxu0 0.0
  %2518 = vmatpush1.msra.mxu0 0.0
  %2519 = vmatprep.subr.mxu0 0.0
  %2520 = vmatpush1.msra.mxu0 0.0
  %2521 = vmatprep.subr.mxu0 0.0
  %2522 = vmatpush1.msra.mxu0 0.0
  %2523 = vmatprep.subr.mxu0 0.0
  %2524 = vmatpush1.msra.mxu0 0.0
  %2525 = vmatprep.subr.mxu0 0.0
  %2526 = vmatpush1.msra.mxu0 0.0
  %2527 = vmatprep.subr.mxu0 0.0
  %2528 = vmatpush1.msra.mxu0 0.0
  %2529 = vmatprep.mubr.f32.mxu0 0.0
  %2530 = vmatmul.mubr.f32.gmra.mrb[0].mxu0 %v1130
  %v2531 = vpop.f32.mrb[0].mxu0
  %v2532 = vadd.f32 %v1051, %v2531
  %v2533 = vpop.f32.mrb[0].mxu0
  %v2534 = vadd.f32 %v1051, %v2533
  %2535 = vmatprep.mubr.f32.mxu0 0.0
  %2536 = vmatmul.mubr.f32.gmra.mrb[0].mxu0 %v1133
  %v2537 = vpop.f32.mrb[0].mxu0
  %v2538 = vadd.f32 %v1056, %v2537
  %v2539 = vpop.f32.mrb[0].mxu0
  %v2540 = vadd.f32 %v1056, %v2539
  %2541 = vmatprep.mubr.f32.mxu0 0.0
  %2542 = vmatmul.mubr.f32.gmra.mrb[0].mxu0 %v1136
  %v2543 = vpop.f32.mrb[0].mxu0
  %v2544 = vadd.f32 %v1061, %v2543
  %v2545 = vpop.f32.mrb[0].mxu0
  %v2546 = vadd.f32 %v1061, %v2545
  %2547 = vmatprep.mubr.f32.mxu0 0.0
  %2548 = vmatmul.mubr.f32.gmra.mrb[0].mxu0 %v1139
  %v2549 = vpop.f32.mrb[0].mxu0
  %v2550 = vadd.f32 %v1066, %v2549
  %v2551 = vpop.f32.mrb[0].mxu0
  %v2552 = vadd.f32 %v1066, %v2551
  %2553 = vmatprep.mubr.f32.mxu0 0.0
  %2554 = vmatmul.mubr.f32.gmra.mrb[0].mxu0 %v1142
  %v2555 = vpop.f32.mrb[0].mxu0
  %v2556 = vadd.f32 %v1071, %v2555
  %v2557 = vpop.f32.mrb[0].mxu0
  %v2558 = vadd.f32 %v1071, %v2557
  %2559 = vmatprep.mubr.f32.mxu0 0.0
  %2560 = vmatmul.mubr.f32.gmra.mrb[0].mxu0 %v1145
  %v2561 = vpop.f32.mrb[0].mxu0
  %v2562 = vadd.f32 %v1076, %v2561
  %v2563 = vpop.f32.mrb[0].mxu0
  %v2564 = vadd.f32 %v1076, %v2563
  %2565 = vmatprep.mubr.f32.mxu0 0.0
  %2566 = vmatmul.mubr.f32.gmra.mrb[0].mxu0 %v1148
  %v2567 = vpop.f32.mrb[0].mxu0
  %v2568 = vadd.f32 %v1081, %v2567
  %v2569 = vpop.f32.mrb[0].mxu0
  %v2570 = vadd.f32 %v1081, %v2569
  %2571 = vmatprep.mubr.f32.mxu0 0.0
  %2572 = vmatmul.mubr.f32.gmra.mrb[0].mxu0 %v1151
  %v2573 = vpop.f32.mrb[0].mxu0
  %v2574 = vadd.f32 %v1086, %v2573
  %v2575 = vpop.f32.mrb[0].mxu0
  %v2576 = vadd.f32 %v1086, %v2575
  %2577 = vmatprep.mubr.f32.mxu0 0.0
  %2578 = vmatmul.mubr.f32.gmra.mrb[0].mxu0 %v1154
  %v2579 = vpop.f32.mrb[0].mxu0
  %v2580 = vadd.f32 %v1091, %v2579
  %v2581 = vpop.f32.mrb[0].mxu0
  %v2582 = vadd.f32 %v1091, %v2581
  %2583 = vmatprep.mubr.f32.mxu0 0.0
  %2584 = vmatmul.mubr.f32.gmra.mrb[0].mxu0 %v1157
  %v2585 = vpop.f32.mrb[0].mxu0
  %v2586 = vadd.f32 %v1096, %v2585
  %v2587 = vpop.f32.mrb[0].mxu0
  %v2588 = vadd.f32 %v1096, %v2587
  %2589 = vmatprep.mubr.f32.mxu0 0.0
  %2590 = vmatmul.mubr.f32.gmra.mrb[0].mxu0 %v1160
  %v2591 = vpop.f32.mrb[0].mxu0
  %v2592 = vadd.f32 %v1101, %v2591
  %v2593 = vpop.f32.mrb[0].mxu0
  %v2594 = vadd.f32 %v1101, %v2593
  %2595 = vmatprep.mubr.f32.mxu0 0.0
  %2596 = vmatmul.mubr.f32.gmra.mrb[0].mxu0 %v1163
  %v2597 = vpop.f32.mrb[0].mxu0
  %v2598 = vadd.f32 %v1106, %v2597
  %v2599 = vpop.f32.mrb[0].mxu0
  %v2600 = vadd.f32 %v1106, %v2599
  %2601 = vmatprep.mubr.f32.mxu0 0.0
  %2602 = vmatmul.mubr.f32.gmra.mrb[0].mxu0 %v1166
  %v2603 = vpop.f32.mrb[0].mxu0
  %v2604 = vadd.f32 %v1111, %v2603
  %v2605 = vpop.f32.mrb[0].mxu0
  %v2606 = vadd.f32 %v1111, %v2605
  %2607 = vmatprep.mubr.f32.mxu0 0.0
  %2608 = vmatmul.mubr.f32.gmra.mrb[0].mxu0 %v1169
  %v2609 = vpop.f32.mrb[0].mxu0
  %v2610 = vadd.f32 %v1116, %v2609
  %v2611 = vpop.f32.mrb[0].mxu0
  %v2612 = vadd.f32 %v1116, %v2611
  %2613 = vmatprep.mubr.f32.mxu0 0.0
  %2614 = vmatmul.mubr.f32.gmra.mrb[0].mxu0 %v1172
  %v2615 = vpop.f32.mrb[0].mxu0
  %v2616 = vadd.f32 %v1121, %v2615
  %v2617 = vpop.f32.mrb[0].mxu0
  %v2618 = vadd.f32 %v1121, %v2617
  %2619 = vmatprep.mubr.f32.mxu0 0.0
  %2620 = vmatmul.mubr.f32.gmra.mrb[0].mxu0 %v1175
  %v2621 = vpop.f32.mrb[0].mxu0
  %v2622 = vadd.f32 %v1126, %v2621
  %v2623 = vpop.f32.mrb[0].mxu0
  %v2624 = vadd.f32 %v1126, %v2623
  %2625 = vdwg.mxu0
  %2626 = vmatprep.subr.mxu0 %v723
  %2627 = vmatpush1.msra.mxu0 %v722
  %2628 = vmatprep.subr.mxu0 %v764
  %2629 = vmatpush1.msra.mxu0 %v763
  %2630 = vmatprep.subr.mxu0 %v805
  %2631 = vmatpush1.msra.mxu0 %v804
  %2632 = vmatprep.subr.mxu0 %v846
  %2633 = vmatpush1.msra.mxu0 %v845
  %2634 = vmatprep.subr.mxu0 %v887
  %2635 = vmatpush1.msra.mxu0 %v886
  %2636 = vmatprep.subr.mxu0 %v928
  %2637 = vmatpush1.msra.mxu0 %v927
  %2638 = vmatprep.subr.mxu0 %v969
  %2639 = vmatpush1.msra.mxu0 %v968
  %2640 = vmatprep.subr.mxu0 %v1010
  %2641 = vmatpush1.msra.mxu0 %v1009
  %2642 = vmatprep.subr.mxu0 0.0
  %2643 = vmatpush1.msra.mxu0 0.0
  %2644 = vmatprep.subr.mxu0 0.0
  %2645 = vmatpush1.msra.mxu0 0.0
  %2646 = vmatprep.subr.mxu0 0.0
  %2647 = vmatpush1.msra.mxu0 0.0
  %2648 = vmatprep.subr.mxu0 0.0
  %2649 = vmatpush1.msra.mxu0 0.0
  %2650 = vmatprep.subr.mxu0 0.0
  %2651 = vmatpush1.msra.mxu0 0.0
  %2652 = vmatprep.subr.mxu0 0.0
  %2653 = vmatpush1.msra.mxu0 0.0
  %2654 = vmatprep.subr.mxu0 0.0
  %2655 = vmatpush1.msra.mxu0 0.0
  %2656 = vmatprep.subr.mxu0 0.0
  %2657 = vmatpush1.msra.mxu0 0.0
  %2658 = vmatprep.subr.mxu0 0.0
  %2659 = vmatpush1.msra.mxu0 0.0
  %2660 = vmatprep.subr.mxu0 0.0
  %2661 = vmatpush1.msra.mxu0 0.0
  %2662 = vmatprep.subr.mxu0 0.0
  %2663 = vmatpush1.msra.mxu0 0.0
  %2664 = vmatprep.subr.mxu0 0.0
  %2665 = vmatpush1.msra.mxu0 0.0
  %2666 = vmatprep.subr.mxu0 0.0
  %2667 = vmatpush1.msra.mxu0 0.0
  %2668 = vmatprep.subr.mxu0 0.0
  %2669 = vmatpush1.msra.mxu0 0.0
  %2670 = vmatprep.subr.mxu0 0.0
  %2671 = vmatpush1.msra.mxu0 0.0
  %2672 = vmatprep.subr.mxu0 0.0
  %2673 = vmatpush1.msra.mxu0 0.0
  %2674 = vmatprep.subr.mxu0 0.0
  %2675 = vmatpush1.msra.mxu0 0.0
  %2676 = vmatprep.subr.mxu0 0.0
  %2677 = vmatpush1.msra.mxu0 0.0
  %2678 = vmatprep.subr.mxu0 0.0
  %2679 = vmatpush1.msra.mxu0 0.0
  %2680 = vmatprep.subr.mxu0 0.0
  %2681 = vmatpush1.msra.mxu0 0.0
  %2682 = vmatprep.subr.mxu0 0.0
  %2683 = vmatpush1.msra.mxu0 0.0
  %2684 = vmatprep.subr.mxu0 0.0
  %2685 = vmatpush1.msra.mxu0 0.0
  %2686 = vmatprep.subr.mxu0 0.0
  %2687 = vmatpush1.msra.mxu0 0.0
  %2688 = vmatprep.subr.mxu0 0.0
  %2689 = vmatpush1.msra.mxu0 0.0
  %2690 = vmatprep.mubr.f32.mxu0 0.0
  %2691 = vmatmul.mubr.f32.gmra.mrb[0].mxu0 %v1130
  %v2692 = vpop.f32.mrb[0].mxu0
  %v2693 = vadd.f32 %v1051, %v2692
  %v2694 = vpop.f32.mrb[0].mxu0
  %v2695 = vadd.f32 %v1051, %v2694
  %2696 = vmatprep.mubr.f32.mxu0 0.0
  %2697 = vmatmul.mubr.f32.gmra.mrb[0].mxu0 %v1133
  %v2698 = vpop.f32.mrb[0].mxu0
  %v2699 = vadd.f32 %v1056, %v2698
  %v2700 = vpop.f32.mrb[0].mxu0
  %v2701 = vadd.f32 %v1056, %v2700
  %2702 = vmatprep.mubr.f32.mxu0 0.0
  %2703 = vmatmul.mubr.f32.gmra.mrb[0].mxu0 %v1136
  %v2704 = vpop.f32.mrb[0].mxu0
  %v2705 = vadd.f32 %v1061, %v2704
  %v2706 = vpop.f32.mrb[0].mxu0
  %v2707 = vadd.f32 %v1061, %v2706
  %2708 = vmatprep.mubr.f32.mxu0 0.0
  %2709 = vmatmul.mubr.f32.gmra.mrb[0].mxu0 %v1139
  %v2710 = vpop.f32.mrb[0].mxu0
  %v2711 = vadd.f32 %v1066, %v2710
  %v2712 = vpop.f32.mrb[0].mxu0
  %v2713 = vadd.f32 %v1066, %v2712
  %2714 = vmatprep.mubr.f32.mxu0 0.0
  %2715 = vmatmul.mubr.f32.gmra.mrb[0].mxu0 %v1142
  %v2716 = vpop.f32.mrb[0].mxu0
  %v2717 = vadd.f32 %v1071, %v2716
  %v2718 = vpop.f32.mrb[0].mxu0
  %v2719 = vadd.f32 %v1071, %v2718
  %2720 = vmatprep.mubr.f32.mxu0 0.0
  %2721 = vmatmul.mubr.f32.gmra.mrb[0].mxu0 %v1145
  %v2722 = vpop.f32.mrb[0].mxu0
  %v2723 = vadd.f32 %v1076, %v2722
  %v2724 = vpop.f32.mrb[0].mxu0
  %v2725 = vadd.f32 %v1076, %v2724
  %2726 = vmatprep.mubr.f32.mxu0 0.0
  %2727 = vmatmul.mubr.f32.gmra.mrb[0].mxu0 %v1148
  %v2728 = vpop.f32.mrb[0].mxu0
  %v2729 = vadd.f32 %v1081, %v2728
  %v2730 = vpop.f32.mrb[0].mxu0
  %v2731 = vadd.f32 %v1081, %v2730
  %2732 = vmatprep.mubr.f32.mxu0 0.0
  %2733 = vmatmul.mubr.f32.gmra.mrb[0].mxu0 %v1151
  %v2734 = vpop.f32.mrb[0].mxu0
  %v2735 = vadd.f32 %v1086, %v2734
  %v2736 = vpop.f32.mrb[0].mxu0
  %v2737 = vadd.f32 %v1086, %v2736
  %2738 = vmatprep.mubr.f32.mxu0 0.0
  %2739 = vmatmul.mubr.f32.gmra.mrb[0].mxu0 %v1154
  %v2740 = vpop.f32.mrb[0].mxu0
  %v2741 = vadd.f32 %v1091, %v2740
  %v2742 = vpop.f32.mrb[0].mxu0
  %v2743 = vadd.f32 %v1091, %v2742
  %2744 = vmatprep.mubr.f32.mxu0 0.0
  %2745 = vmatmul.mubr.f32.gmra.mrb[0].mxu0 %v1157
  %v2746 = vpop.f32.mrb[0].mxu0
  %v2747 = vadd.f32 %v1096, %v2746
  %v2748 = vpop.f32.mrb[0].mxu0
  %v2749 = vadd.f32 %v1096, %v2748
  %2750 = vmatprep.mubr.f32.mxu0 0.0
  %2751 = vmatmul.mubr.f32.gmra.mrb[0].mxu0 %v1160
  %v2752 = vpop.f32.mrb[0].mxu0
  %v2753 = vadd.f32 %v1101, %v2752
  %v2754 = vpop.f32.mrb[0].mxu0
  %v2755 = vadd.f32 %v1101, %v2754
  %2756 = vmatprep.mubr.f32.mxu0 0.0
  %2757 = vmatmul.mubr.f32.gmra.mrb[0].mxu0 %v1163
  %v2758 = vpop.f32.mrb[0].mxu0
  %v2759 = vadd.f32 %v1106, %v2758
  %v2760 = vpop.f32.mrb[0].mxu0
  %v2761 = vadd.f32 %v1106, %v2760
  %2762 = vmatprep.mubr.f32.mxu0 0.0
  %2763 = vmatmul.mubr.f32.gmra.mrb[0].mxu0 %v1166
  %v2764 = vpop.f32.mrb[0].mxu0
  %v2765 = vadd.f32 %v1111, %v2764
  %v2766 = vpop.f32.mrb[0].mxu0
  %v2767 = vadd.f32 %v1111, %v2766
  %2768 = vmatprep.mubr.f32.mxu0 0.0
  %2769 = vmatmul.mubr.f32.gmra.mrb[0].mxu0 %v1169
  %v2770 = vpop.f32.mrb[0].mxu0
  %v2771 = vadd.f32 %v1116, %v2770
  %v2772 = vpop.f32.mrb[0].mxu0
  %v2773 = vadd.f32 %v1116, %v2772
  %2774 = vmatprep.mubr.f32.mxu0 0.0
  %2775 = vmatmul.mubr.f32.gmra.mrb[0].mxu0 %v1172
  %v2776 = vpop.f32.mrb[0].mxu0
  %v2777 = vadd.f32 %v1121, %v2776
  %v2778 = vpop.f32.mrb[0].mxu0
  %v2779 = vadd.f32 %v1121, %v2778
  %2780 = vmatprep.mubr.f32.mxu0 0.0
  %2781 = vmatmul.mubr.f32.gmra.mrb[0].mxu0 %v1175
  %v2782 = vpop.f32.mrb[0].mxu0
  %v2783 = vadd.f32 %v1126, %v2782
  %v2784 = vpop.f32.mrb[0].mxu0
  %v2785 = vadd.f32 %v1126, %v2784
  %2786 = vdwg.mxu0
  %2787 = vmatprep.subr.mxu0 %v725
  %2788 = vmatpush1.msra.mxu0 %v724
  %2789 = vmatprep.subr.mxu0 %v766
  %2790 = vmatpush1.msra.mxu0 %v765
  %2791 = vmatprep.subr.mxu0 %v807
  %2792 = vmatpush1.msra.mxu0 %v806
  %2793 = vmatprep.subr.mxu0 %v848
  %2794 = vmatpush1.msra.mxu0 %v847
  %2795 = vmatprep.subr.mxu0 %v889
  %2796 = vmatpush1.msra.mxu0 %v888
  %2797 = vmatprep.subr.mxu0 %v930
  %2798 = vmatpush1.msra.mxu0 %v929
  %2799 = vmatprep.subr.mxu0 %v971
  %2800 = vmatpush1.msra.mxu0 %v970
  %2801 = vmatprep.subr.mxu0 %v1012
  %2802 = vmatpush1.msra.mxu0 %v1011
  %2803 = vmatprep.subr.mxu0 0.0
  %2804 = vmatpush1.msra.mxu0 0.0
  %2805 = vmatprep.subr.mxu0 0.0
  %2806 = vmatpush1.msra.mxu0 0.0
  %2807 = vmatprep.subr.mxu0 0.0
  %2808 = vmatpush1.msra.mxu0 0.0
  %2809 = vmatprep.subr.mxu0 0.0
  %2810 = vmatpush1.msra.mxu0 0.0
  %2811 = vmatprep.subr.mxu0 0.0
  %2812 = vmatpush1.msra.mxu0 0.0
  %2813 = vmatprep.subr.mxu0 0.0
  %2814 = vmatpush1.msra.mxu0 0.0
  %2815 = vmatprep.subr.mxu0 0.0
  %2816 = vmatpush1.msra.mxu0 0.0
  %2817 = vmatprep.subr.mxu0 0.0
  %2818 = vmatpush1.msra.mxu0 0.0
  %2819 = vmatprep.subr.mxu0 0.0
  %2820 = vmatpush1.msra.mxu0 0.0
  %2821 = vmatprep.subr.mxu0 0.0
  %2822 = vmatpush1.msra.mxu0 0.0
  %2823 = vmatprep.subr.mxu0 0.0
  %2824 = vmatpush1.msra.mxu0 0.0
  %2825 = vmatprep.subr.mxu0 0.0
  %2826 = vmatpush1.msra.mxu0 0.0
  %2827 = vmatprep.subr.mxu0 0.0
  %2828 = vmatpush1.msra.mxu0 0.0
  %2829 = vmatprep.subr.mxu0 0.0
  %2830 = vmatpush1.msra.mxu0 0.0
  %2831 = vmatprep.subr.mxu0 0.0
  %2832 = vmatpush1.msra.mxu0 0.0
  %2833 = vmatprep.subr.mxu0 0.0
  %2834 = vmatpush1.msra.mxu0 0.0
  %2835 = vmatprep.subr.mxu0 0.0
  %2836 = vmatpush1.msra.mxu0 0.0
  %2837 = vmatprep.subr.mxu0 0.0
  %2838 = vmatpush1.msra.mxu0 0.0
  %2839 = vmatprep.subr.mxu0 0.0
  %2840 = vmatpush1.msra.mxu0 0.0
  %2841 = vmatprep.subr.mxu0 0.0
  %2842 = vmatpush1.msra.mxu0 0.0
  %2843 = vmatprep.subr.mxu0 0.0
  %2844 = vmatpush1.msra.mxu0 0.0
  %2845 = vmatprep.subr.mxu0 0.0
  %2846 = vmatpush1.msra.mxu0 0.0
  %2847 = vmatprep.subr.mxu0 0.0
  %2848 = vmatpush1.msra.mxu0 0.0
  %2849 = vmatprep.subr.mxu0 0.0
  %2850 = vmatpush1.msra.mxu0 0.0
  %2851 = vmatprep.mubr.f32.mxu0 0.0
  %2852 = vmatmul.mubr.f32.gmra.mrb[0].mxu0 %v1130
  %v2853 = vpop.f32.mrb[0].mxu0
  %v2854 = vadd.f32 %v1051, %v2853
  %v2855 = vpop.f32.mrb[0].mxu0
  %v2856 = vadd.f32 %v1051, %v2855
  %2857 = vmatprep.mubr.f32.mxu0 0.0
  %2858 = vmatmul.mubr.f32.gmra.mrb[0].mxu0 %v1133
  %v2859 = vpop.f32.mrb[0].mxu0
  %v2860 = vadd.f32 %v1056, %v2859
  %v2861 = vpop.f32.mrb[0].mxu0
  %v2862 = vadd.f32 %v1056, %v2861
  %2863 = vmatprep.mubr.f32.mxu0 0.0
  %2864 = vmatmul.mubr.f32.gmra.mrb[0].mxu0 %v1136
  %v2865 = vpop.f32.mrb[0].mxu0
  %v2866 = vadd.f32 %v1061, %v2865
  %v2867 = vpop.f32.mrb[0].mxu0
  %v2868 = vadd.f32 %v1061, %v2867
  %2869 = vmatprep.mubr.f32.mxu0 0.0
  %2870 = vmatmul.mubr.f32.gmra.mrb[0].mxu0 %v1139
  %v2871 = vpop.f32.mrb[0].mxu0
  %v2872 = vadd.f32 %v1066, %v2871
  %v2873 = vpop.f32.mrb[0].mxu0
  %v2874 = vadd.f32 %v1066, %v2873
  %2875 = vmatprep.mubr.f32.mxu0 0.0
  %2876 = vmatmul.mubr.f32.gmra.mrb[0].mxu0 %v1142
  %v2877 = vpop.f32.mrb[0].mxu0
  %v2878 = vadd.f32 %v1071, %v2877
  %v2879 = vpop.f32.mrb[0].mxu0
  %v2880 = vadd.f32 %v1071, %v2879
  %2881 = vmatprep.mubr.f32.mxu0 0.0
  %2882 = vmatmul.mubr.f32.gmra.mrb[0].mxu0 %v1145
  %v2883 = vpop.f32.mrb[0].mxu0
  %v2884 = vadd.f32 %v1076, %v2883
  %v2885 = vpop.f32.mrb[0].mxu0
  %v2886 = vadd.f32 %v1076, %v2885
  %2887 = vmatprep.mubr.f32.mxu0 0.0
  %2888 = vmatmul.mubr.f32.gmra.mrb[0].mxu0 %v1148
  %v2889 = vpop.f32.mrb[0].mxu0
  %v2890 = vadd.f32 %v1081, %v2889
  %v2891 = vpop.f32.mrb[0].mxu0
  %v2892 = vadd.f32 %v1081, %v2891
  %2893 = vmatprep.mubr.f32.mxu0 0.0
  %2894 = vmatmul.mubr.f32.gmra.mrb[0].mxu0 %v1151
  %v2895 = vpop.f32.mrb[0].mxu0
  %v2896 = vadd.f32 %v1086, %v2895
  %v2897 = vpop.f32.mrb[0].mxu0
  %v2898 = vadd.f32 %v1086, %v2897
  %2899 = vmatprep.mubr.f32.mxu0 0.0
  %2900 = vmatmul.mubr.f32.gmra.mrb[0].mxu0 %v1154
  %v2901 = vpop.f32.mrb[0].mxu0
  %v2902 = vadd.f32 %v1091, %v2901
  %v2903 = vpop.f32.mrb[0].mxu0
  %v2904 = vadd.f32 %v1091, %v2903
  %2905 = vmatprep.mubr.f32.mxu0 0.0
  %2906 = vmatmul.mubr.f32.gmra.mrb[0].mxu0 %v1157
  %v2907 = vpop.f32.mrb[0].mxu0
  %v2908 = vadd.f32 %v1096, %v2907
  %v2909 = vpop.f32.mrb[0].mxu0
  %v2910 = vadd.f32 %v1096, %v2909
  %2911 = vmatprep.mubr.f32.mxu0 0.0
  %2912 = vmatmul.mubr.f32.gmra.mrb[0].mxu0 %v1160
  %v2913 = vpop.f32.mrb[0].mxu0
  %v2914 = vadd.f32 %v1101, %v2913
  %v2915 = vpop.f32.mrb[0].mxu0
  %v2916 = vadd.f32 %v1101, %v2915
  %2917 = vmatprep.mubr.f32.mxu0 0.0
  %2918 = vmatmul.mubr.f32.gmra.mrb[0].mxu0 %v1163
  %v2919 = vpop.f32.mrb[0].mxu0
  %v2920 = vadd.f32 %v1106, %v2919
  %v2921 = vpop.f32.mrb[0].mxu0
  %v2922 = vadd.f32 %v1106, %v2921
  %2923 = vmatprep.mubr.f32.mxu0 0.0
  %2924 = vmatmul.mubr.f32.gmra.mrb[0].mxu0 %v1166
  %v2925 = vpop.f32.mrb[0].mxu0
  %v2926 = vadd.f32 %v1111, %v2925
  %v2927 = vpop.f32.mrb[0].mxu0
  %v2928 = vadd.f32 %v1111, %v2927
  %2929 = vmatprep.mubr.f32.mxu0 0.0
  %2930 = vmatmul.mubr.f32.gmra.mrb[0].mxu0 %v1169
  %v2931 = vpop.f32.mrb[0].mxu0
  %v2932 = vadd.f32 %v1116, %v2931
  %v2933 = vpop.f32.mrb[0].mxu0
  %v2934 = vadd.f32 %v1116, %v2933
  %2935 = vmatprep.mubr.f32.mxu0 0.0
  %2936 = vmatmul.mubr.f32.gmra.mrb[0].mxu0 %v1172
  %v2937 = vpop.f32.mrb[0].mxu0
  %v2938 = vadd.f32 %v1121, %v2937
  %v2939 = vpop.f32.mrb[0].mxu0
  %v2940 = vadd.f32 %v1121, %v2939
  %2941 = vmatprep.mubr.f32.mxu0 0.0
  %2942 = vmatmul.mubr.f32.gmra.mrb[0].mxu0 %v1175
  %v2943 = vpop.f32.mrb[0].mxu0
  %v2944 = vadd.f32 %v1126, %v2943
  %v2945 = vpop.f32.mrb[0].mxu0
  %v2946 = vadd.f32 %v1126, %v2945
  %2947 = vdwg.mxu0
  %2948 = vmatprep.subr.mxu0 %v727
  %2949 = vmatpush1.msra.mxu0 %v726
  %2950 = vmatprep.subr.mxu0 %v768
  %2951 = vmatpush1.msra.mxu0 %v767
  %2952 = vmatprep.subr.mxu0 %v809
  %2953 = vmatpush1.msra.mxu0 %v808
  %2954 = vmatprep.subr.mxu0 %v850
  %2955 = vmatpush1.msra.mxu0 %v849
  %2956 = vmatprep.subr.mxu0 %v891
  %2957 = vmatpush1.msra.mxu0 %v890
  %2958 = vmatprep.subr.mxu0 %v932
  %2959 = vmatpush1.msra.mxu0 %v931
  %2960 = vmatprep.subr.mxu0 %v973
  %2961 = vmatpush1.msra.mxu0 %v972
  %2962 = vmatprep.subr.mxu0 %v1014
  %2963 = vmatpush1.msra.mxu0 %v1013
  %2964 = vmatprep.subr.mxu0 0.0
  %2965 = vmatpush1.msra.mxu0 0.0
  %2966 = vmatprep.subr.mxu0 0.0
  %2967 = vmatpush1.msra.mxu0 0.0
  %2968 = vmatprep.subr.mxu0 0.0
  %2969 = vmatpush1.msra.mxu0 0.0
  %2970 = vmatprep.subr.mxu0 0.0
  %2971 = vmatpush1.msra.mxu0 0.0
  %2972 = vmatprep.subr.mxu0 0.0
  %2973 = vmatpush1.msra.mxu0 0.0
  %2974 = vmatprep.subr.mxu0 0.0
  %2975 = vmatpush1.msra.mxu0 0.0
  %2976 = vmatprep.subr.mxu0 0.0
  %2977 = vmatpush1.msra.mxu0 0.0
  %2978 = vmatprep.subr.mxu0 0.0
  %2979 = vmatpush1.msra.mxu0 0.0
  %2980 = vmatprep.subr.mxu0 0.0
  %2981 = vmatpush1.msra.mxu0 0.0
  %2982 = vmatprep.subr.mxu0 0.0
  %2983 = vmatpush1.msra.mxu0 0.0
  %2984 = vmatprep.subr.mxu0 0.0
  %2985 = vmatpush1.msra.mxu0 0.0
  %2986 = vmatprep.subr.mxu0 0.0
  %2987 = vmatpush1.msra.mxu0 0.0
  %2988 = vmatprep.subr.mxu0 0.0
  %2989 = vmatpush1.msra.mxu0 0.0
  %2990 = vmatprep.subr.mxu0 0.0
  %2991 = vmatpush1.msra.mxu0 0.0
  %2992 = vmatprep.subr.mxu0 0.0
  %2993 = vmatpush1.msra.mxu0 0.0
  %2994 = vmatprep.subr.mxu0 0.0
  %2995 = vmatpush1.msra.mxu0 0.0
  %2996 = vmatprep.subr.mxu0 0.0
  %2997 = vmatpush1.msra.mxu0 0.0
  %2998 = vmatprep.subr.mxu0 0.0
  %2999 = vmatpush1.msra.mxu0 0.0
  %3000 = vmatprep.subr.mxu0 0.0
  %3001 = vmatpush1.msra.mxu0 0.0
  %3002 = vmatprep.subr.mxu0 0.0
  %3003 = vmatpush1.msra.mxu0 0.0
  %3004 = vmatprep.subr.mxu0 0.0
  %3005 = vmatpush1.msra.mxu0 0.0
  %3006 = vmatprep.subr.mxu0 0.0
  %3007 = vmatpush1.msra.mxu0 0.0
  %3008 = vmatprep.subr.mxu0 0.0
  %3009 = vmatpush1.msra.mxu0 0.0
  %3010 = vmatprep.subr.mxu0 0.0
  %3011 = vmatpush1.msra.mxu0 0.0
  %3012 = vmatprep.mubr.f32.mxu0 0.0
  %3013 = vmatmul.mubr.f32.gmra.mrb[0].mxu0 %v1130
  %v3014 = vpop.f32.mrb[0].mxu0
  %v3015 = vadd.f32 %v1051, %v3014
  %v3016 = vpop.f32.mrb[0].mxu0
  %v3017 = vadd.f32 %v1051, %v3016
  %3018 = vmatprep.mubr.f32.mxu0 0.0
  %3019 = vmatmul.mubr.f32.gmra.mrb[0].mxu0 %v1133
  %v3020 = vpop.f32.mrb[0].mxu0
  %v3021 = vadd.f32 %v1056, %v3020
  %v3022 = vpop.f32.mrb[0].mxu0
  %v3023 = vadd.f32 %v1056, %v3022
  %3024 = vmatprep.mubr.f32.mxu0 0.0
  %3025 = vmatmul.mubr.f32.gmra.mrb[0].mxu0 %v1136
  %v3026 = vpop.f32.mrb[0].mxu0
  %v3027 = vadd.f32 %v1061, %v3026
  %v3028 = vpop.f32.mrb[0].mxu0
  %v3029 = vadd.f32 %v1061, %v3028
  %3030 = vmatprep.mubr.f32.mxu0 0.0
  %3031 = vmatmul.mubr.f32.gmra.mrb[0].mxu0 %v1139
  %v3032 = vpop.f32.mrb[0].mxu0
  %v3033 = vadd.f32 %v1066, %v3032
  %v3034 = vpop.f32.mrb[0].mxu0
  %v3035 = vadd.f32 %v1066, %v3034
  %3036 = vmatprep.mubr.f32.mxu0 0.0
  %3037 = vmatmul.mubr.f32.gmra.mrb[0].mxu0 %v1142
  %v3038 = vpop.f32.mrb[0].mxu0
  %v3039 = vadd.f32 %v1071, %v3038
  %v3040 = vpop.f32.mrb[0].mxu0
  %v3041 = vadd.f32 %v1071, %v3040
  %3042 = vmatprep.mubr.f32.mxu0 0.0
  %3043 = vmatmul.mubr.f32.gmra.mrb[0].mxu0 %v1145
  %v3044 = vpop.f32.mrb[0].mxu0
  %v3045 = vadd.f32 %v1076, %v3044
  %v3046 = vpop.f32.mrb[0].mxu0
  %v3047 = vadd.f32 %v1076, %v3046
  %3048 = vmatprep.mubr.f32.mxu0 0.0
  %3049 = vmatmul.mubr.f32.gmra.mrb[0].mxu0 %v1148
  %v3050 = vpop.f32.mrb[0].mxu0
  %v3051 = vadd.f32 %v1081, %v3050
  %v3052 = vpop.f32.mrb[0].mxu0
  %v3053 = vadd.f32 %v1081, %v3052
  %3054 = vmatprep.mubr.f32.mxu0 0.0
  %3055 = vmatmul.mubr.f32.gmra.mrb[0].mxu0 %v1151
  %v3056 = vpop.f32.mrb[0].mxu0
  %v3057 = vadd.f32 %v1086, %v3056
  %v3058 = vpop.f32.mrb[0].mxu0
  %v3059 = vadd.f32 %v1086, %v3058
  %3060 = vmatprep.mubr.f32.mxu0 0.0
  %3061 = vmatmul.mubr.f32.gmra.mrb[0].mxu0 %v1154
  %v3062 = vpop.f32.mrb[0].mxu0
  %v3063 = vadd.f32 %v1091, %v3062
  %v3064 = vpop.f32.mrb[0].mxu0
  %v3065 = vadd.f32 %v1091, %v3064
  %3066 = vmatprep.mubr.f32.mxu0 0.0
  %3067 = vmatmul.mubr.f32.gmra.mrb[0].mxu0 %v1157
  %v3068 = vpop.f32.mrb[0].mxu0
  %v3069 = vadd.f32 %v1096, %v3068
  %v3070 = vpop.f32.mrb[0].mxu0
  %v3071 = vadd.f32 %v1096, %v3070
  %3072 = vmatprep.mubr.f32.mxu0 0.0
  %3073 = vmatmul.mubr.f32.gmra.mrb[0].mxu0 %v1160
  %v3074 = vpop.f32.mrb[0].mxu0
  %v3075 = vadd.f32 %v1101, %v3074
  %v3076 = vpop.f32.mrb[0].mxu0
  %v3077 = vadd.f32 %v1101, %v3076
  %3078 = vmatprep.mubr.f32.mxu0 0.0
  %3079 = vmatmul.mubr.f32.gmra.mrb[0].mxu0 %v1163
  %v3080 = vpop.f32.mrb[0].mxu0
  %v3081 = vadd.f32 %v1106, %v3080
  %v3082 = vpop.f32.mrb[0].mxu0
  %v3083 = vadd.f32 %v1106, %v3082
  %3084 = vmatprep.mubr.f32.mxu0 0.0
  %3085 = vmatmul.mubr.f32.gmra.mrb[0].mxu0 %v1166
  %v3086 = vpop.f32.mrb[0].mxu0
  %v3087 = vadd.f32 %v1111, %v3086
  %v3088 = vpop.f32.mrb[0].mxu0
  %v3089 = vadd.f32 %v1111, %v3088
  %3090 = vmatprep.mubr.f32.mxu0 0.0
  %3091 = vmatmul.mubr.f32.gmra.mrb[0].mxu0 %v1169
  %v3092 = vpop.f32.mrb[0].mxu0
  %v3093 = vadd.f32 %v1116, %v3092
  %v3094 = vpop.f32.mrb[0].mxu0
  %v3095 = vadd.f32 %v1116, %v3094
  %3096 = vmatprep.mubr.f32.mxu0 0.0
  %3097 = vmatmul.mubr.f32.gmra.mrb[0].mxu0 %v1172
  %v3098 = vpop.f32.mrb[0].mxu0
  %v3099 = vadd.f32 %v1121, %v3098
  %v3100 = vpop.f32.mrb[0].mxu0
  %v3101 = vadd.f32 %v1121, %v3100
  %3102 = vmatprep.mubr.f32.mxu0 0.0
  %3103 = vmatmul.mubr.f32.gmra.mrb[0].mxu0 %v1175
  %v3104 = vpop.f32.mrb[0].mxu0
  %v3105 = vadd.f32 %v1126, %v3104
  %v3106 = vpop.f32.mrb[0].mxu0
  %v3107 = vadd.f32 %v1126, %v3106
  %3108 = vdwg.mxu0
  %3109 = vmatprep.subr.mxu0 %v729
  %3110 = vmatpush1.msra.mxu0 %v728
  %3111 = vmatprep.subr.mxu0 %v770
  %3112 = vmatpush1.msra.mxu0 %v769
  %3113 = vmatprep.subr.mxu0 %v811
  %3114 = vmatpush1.msra.mxu0 %v810
  %3115 = vmatprep.subr.mxu0 %v852
  %3116 = vmatpush1.msra.mxu0 %v851
  %3117 = vmatprep.subr.mxu0 %v893
  %3118 = vmatpush1.msra.mxu0 %v892
  %3119 = vmatprep.subr.mxu0 %v934
  %3120 = vmatpush1.msra.mxu0 %v933
  %3121 = vmatprep.subr.mxu0 %v975
  %3122 = vmatpush1.msra.mxu0 %v974
  %3123 = vmatprep.subr.mxu0 %v1016
  %3124 = vmatpush1.msra.mxu0 %v1015
  %3125 = vmatprep.subr.mxu0 0.0
  %3126 = vmatpush1.msra.mxu0 0.0
  %3127 = vmatprep.subr.mxu0 0.0
  %3128 = vmatpush1.msra.mxu0 0.0
  %3129 = vmatprep.subr.mxu0 0.0
  %3130 = vmatpush1.msra.mxu0 0.0
  %3131 = vmatprep.subr.mxu0 0.0
  %3132 = vmatpush1.msra.mxu0 0.0
  %3133 = vmatprep.subr.mxu0 0.0
  %3134 = vmatpush1.msra.mxu0 0.0
  %3135 = vmatprep.subr.mxu0 0.0
  %3136 = vmatpush1.msra.mxu0 0.0
  %3137 = vmatprep.subr.mxu0 0.0
  %3138 = vmatpush1.msra.mxu0 0.0
  %3139 = vmatprep.subr.mxu0 0.0
  %3140 = vmatpush1.msra.mxu0 0.0
  %3141 = vmatprep.subr.mxu0 0.0
  %3142 = vmatpush1.msra.mxu0 0.0
  %3143 = vmatprep.subr.mxu0 0.0
  %3144 = vmatpush1.msra.mxu0 0.0
  %3145 = vmatprep.subr.mxu0 0.0
  %3146 = vmatpush1.msra.mxu0 0.0
  %3147 = vmatprep.subr.mxu0 0.0
  %3148 = vmatpush1.msra.mxu0 0.0
  %3149 = vmatprep.subr.mxu0 0.0
  %3150 = vmatpush1.msra.mxu0 0.0
  %3151 = vmatprep.subr.mxu0 0.0
  %3152 = vmatpush1.msra.mxu0 0.0
  %3153 = vmatprep.subr.mxu0 0.0
  %3154 = vmatpush1.msra.mxu0 0.0
  %3155 = vmatprep.subr.mxu0 0.0
  %3156 = vmatpush1.msra.mxu0 0.0
  %3157 = vmatprep.subr.mxu0 0.0
  %3158 = vmatpush1.msra.mxu0 0.0
  %3159 = vmatprep.subr.mxu0 0.0
  %3160 = vmatpush1.msra.mxu0 0.0
  %3161 = vmatprep.subr.mxu0 0.0
  %3162 = vmatpush1.msra.mxu0 0.0
  %3163 = vmatprep.subr.mxu0 0.0
  %3164 = vmatpush1.msra.mxu0 0.0
  %3165 = vmatprep.subr.mxu0 0.0
  %3166 = vmatpush1.msra.mxu0 0.0
  %3167 = vmatprep.subr.mxu0 0.0
  %3168 = vmatpush1.msra.mxu0 0.0
  %3169 = vmatprep.subr.mxu0 0.0
  %3170 = vmatpush1.msra.mxu0 0.0
  %3171 = vmatprep.subr.mxu0 0.0
  %3172 = vmatpush1.msra.mxu0 0.0
  %3173 = vmatprep.mubr.f32.mxu0 0.0
  %3174 = vmatmul.mubr.f32.gmra.mrb[0].mxu0 %v1130
  %v3175 = vpop.f32.mrb[0].mxu0
  %v3176 = vadd.f32 %v1051, %v3175
  %v3177 = vpop.f32.mrb[0].mxu0
  %v3178 = vadd.f32 %v1051, %v3177
  %3179 = vmatprep.mubr.f32.mxu0 0.0
  %3180 = vmatmul.mubr.f32.gmra.mrb[0].mxu0 %v1133
  %v3181 = vpop.f32.mrb[0].mxu0
  %v3182 = vadd.f32 %v1056, %v3181
  %v3183 = vpop.f32.mrb[0].mxu0
  %v3184 = vadd.f32 %v1056, %v3183
  %3185 = vmatprep.mubr.f32.mxu0 0.0
  %3186 = vmatmul.mubr.f32.gmra.mrb[0].mxu0 %v1136
  %v3187 = vpop.f32.mrb[0].mxu0
  %v3188 = vadd.f32 %v1061, %v3187
  %v3189 = vpop.f32.mrb[0].mxu0
  %v3190 = vadd.f32 %v1061, %v3189
  %3191 = vmatprep.mubr.f32.mxu0 0.0
  %3192 = vmatmul.mubr.f32.gmra.mrb[0].mxu0 %v1139
  %v3193 = vpop.f32.mrb[0].mxu0
  %v3194 = vadd.f32 %v1066, %v3193
  %v3195 = vpop.f32.mrb[0].mxu0
  %v3196 = vadd.f32 %v1066, %v3195
  %3197 = vmatprep.mubr.f32.mxu0 0.0
  %3198 = vmatmul.mubr.f32.gmra.mrb[0].mxu0 %v1142
  %v3199 = vpop.f32.mrb[0].mxu0
  %v3200 = vadd.f32 %v1071, %v3199
  %v3201 = vpop.f32.mrb[0].mxu0
  %v3202 = vadd.f32 %v1071, %v3201
  %3203 = vmatprep.mubr.f32.mxu0 0.0
  %3204 = vmatmul.mubr.f32.gmra.mrb[0].mxu0 %v1145
  %v3205 = vpop.f32.mrb[0].mxu0
  %v3206 = vadd.f32 %v1076, %v3205
  %v3207 = vpop.f32.mrb[0].mxu0
  %v3208 = vadd.f32 %v1076, %v3207
  %3209 = vmatprep.mubr.f32.mxu0 0.0
  %3210 = vmatmul.mubr.f32.gmra.mrb[0].mxu0 %v1148
  %v3211 = vpop.f32.mrb[0].mxu0
  %v3212 = vadd.f32 %v1081, %v3211
  %v3213 = vpop.f32.mrb[0].mxu0
  %v3214 = vadd.f32 %v1081, %v3213
  %3215 = vmatprep.mubr.f32.mxu0 0.0
  %3216 = vmatmul.mubr.f32.gmra.mrb[0].mxu0 %v1151
  %v3217 = vpop.f32.mrb[0].mxu0
  %v3218 = vadd.f32 %v1086, %v3217
  %v3219 = vpop.f32.mrb[0].mxu0
  %v3220 = vadd.f32 %v1086, %v3219
  %3221 = vmatprep.mubr.f32.mxu0 0.0
  %3222 = vmatmul.mubr.f32.gmra.mrb[0].mxu0 %v1154
  %v3223 = vpop.f32.mrb[0].mxu0
  %v3224 = vadd.f32 %v1091, %v3223
  %v3225 = vpop.f32.mrb[0].mxu0
  %v3226 = vadd.f32 %v1091, %v3225
  %3227 = vmatprep.mubr.f32.mxu0 0.0
  %3228 = vmatmul.mubr.f32.gmra.mrb[0].mxu0 %v1157
  %v3229 = vpop.f32.mrb[0].mxu0
  %v3230 = vadd.f32 %v1096, %v3229
  %v3231 = vpop.f32.mrb[0].mxu0
  %v3232 = vadd.f32 %v1096, %v3231
  %3233 = vmatprep.mubr.f32.mxu0 0.0
  %3234 = vmatmul.mubr.f32.gmra.mrb[0].mxu0 %v1160
  %v3235 = vpop.f32.mrb[0].mxu0
  %v3236 = vadd.f32 %v1101, %v3235
  %v3237 = vpop.f32.mrb[0].mxu0
  %v3238 = vadd.f32 %v1101, %v3237
  %3239 = vmatprep.mubr.f32.mxu0 0.0
  %3240 = vmatmul.mubr.f32.gmra.mrb[0].mxu0 %v1163
  %v3241 = vpop.f32.mrb[0].mxu0
  %v3242 = vadd.f32 %v1106, %v3241
  %v3243 = vpop.f32.mrb[0].mxu0
  %v3244 = vadd.f32 %v1106, %v3243
  %3245 = vmatprep.mubr.f32.mxu0 0.0
  %3246 = vmatmul.mubr.f32.gmra.mrb[0].mxu0 %v1166
  %v3247 = vpop.f32.mrb[0].mxu0
  %v3248 = vadd.f32 %v1111, %v3247
  %v3249 = vpop.f32.mrb[0].mxu0
  %v3250 = vadd.f32 %v1111, %v3249
  %3251 = vmatprep.mubr.f32.mxu0 0.0
  %3252 = vmatmul.mubr.f32.gmra.mrb[0].mxu0 %v1169
  %v3253 = vpop.f32.mrb[0].mxu0
  %v3254 = vadd.f32 %v1116, %v3253
  %v3255 = vpop.f32.mrb[0].mxu0
  %v3256 = vadd.f32 %v1116, %v3255
  %3257 = vmatprep.mubr.f32.mxu0 0.0
  %3258 = vmatmul.mubr.f32.gmra.mrb[0].mxu0 %v1172
  %v3259 = vpop.f32.mrb[0].mxu0
  %v3260 = vadd.f32 %v1121, %v3259
  %v3261 = vpop.f32.mrb[0].mxu0
  %v3262 = vadd.f32 %v1121, %v3261
  %3263 = vmatprep.mubr.f32.mxu0 0.0
  %3264 = vmatmul.mubr.f32.gmra.mrb[0].mxu0 %v1175
  %v3265 = vpop.f32.mrb[0].mxu0
  %v3266 = vadd.f32 %v1126, %v3265
  %v3267 = vpop.f32.mrb[0].mxu0
  %v3268 = vadd.f32 %v1126, %v3267
  %3269 = vdwg.mxu0
  %3270 = vmatprep.subr.mxu0 %v731
  %3271 = vmatpush1.msra.mxu0 %v730
  %3272 = vmatprep.subr.mxu0 %v772
  %3273 = vmatpush1.msra.mxu0 %v771
  %3274 = vmatprep.subr.mxu0 %v813
  %3275 = vmatpush1.msra.mxu0 %v812
  %3276 = vmatprep.subr.mxu0 %v854
  %3277 = vmatpush1.msra.mxu0 %v853
  %3278 = vmatprep.subr.mxu0 %v895
  %3279 = vmatpush1.msra.mxu0 %v894
  %3280 = vmatprep.subr.mxu0 %v936
  %3281 = vmatpush1.msra.mxu0 %v935
  %3282 = vmatprep.subr.mxu0 %v977
  %3283 = vmatpush1.msra.mxu0 %v976
  %3284 = vmatprep.subr.mxu0 %v1018
  %3285 = vmatpush1.msra.mxu0 %v1017
  %3286 = vmatprep.subr.mxu0 0.0
  %3287 = vmatpush1.msra.mxu0 0.0
  %3288 = vmatprep.subr.mxu0 0.0
  %3289 = vmatpush1.msra.mxu0 0.0
  %3290 = vmatprep.subr.mxu0 0.0
  %3291 = vmatpush1.msra.mxu0 0.0
  %3292 = vmatprep.subr.mxu0 0.0
  %3293 = vmatpush1.msra.mxu0 0.0
  %3294 = vmatprep.subr.mxu0 0.0
  %3295 = vmatpush1.msra.mxu0 0.0
  %3296 = vmatprep.subr.mxu0 0.0
  %3297 = vmatpush1.msra.mxu0 0.0
  %3298 = vmatprep.subr.mxu0 0.0
  %3299 = vmatpush1.msra.mxu0 0.0
  %3300 = vmatprep.subr.mxu0 0.0
  %3301 = vmatpush1.msra.mxu0 0.0
  %3302 = vmatprep.subr.mxu0 0.0
  %3303 = vmatpush1.msra.mxu0 0.0
  %3304 = vmatprep.subr.mxu0 0.0
  %3305 = vmatpush1.msra.mxu0 0.0
  %3306 = vmatprep.subr.mxu0 0.0
  %3307 = vmatpush1.msra.mxu0 0.0
  %3308 = vmatprep.subr.mxu0 0.0
  %3309 = vmatpush1.msra.mxu0 0.0
  %3310 = vmatprep.subr.mxu0 0.0
  %3311 = vmatpush1.msra.mxu0 0.0
  %3312 = vmatprep.subr.mxu0 0.0
  %3313 = vmatpush1.msra.mxu0 0.0
  %3314 = vmatprep.subr.mxu0 0.0
  %3315 = vmatpush1.msra.mxu0 0.0
  %3316 = vmatprep.subr.mxu0 0.0
  %3317 = vmatpush1.msra.mxu0 0.0
  %3318 = vmatprep.subr.mxu0 0.0
  %3319 = vmatpush1.msra.mxu0 0.0
  %3320 = vmatprep.subr.mxu0 0.0
  %3321 = vmatpush1.msra.mxu0 0.0
  %3322 = vmatprep.subr.mxu0 0.0
  %3323 = vmatpush1.msra.mxu0 0.0
  %3324 = vmatprep.subr.mxu0 0.0
  %3325 = vmatpush1.msra.mxu0 0.0
  %3326 = vmatprep.subr.mxu0 0.0
  %3327 = vmatpush1.msra.mxu0 0.0
  %3328 = vmatprep.subr.mxu0 0.0
  %3329 = vmatpush1.msra.mxu0 0.0
  %3330 = vmatprep.subr.mxu0 0.0
  %3331 = vmatpush1.msra.mxu0 0.0
  %3332 = vmatprep.subr.mxu0 0.0
  %3333 = vmatpush1.msra.mxu0 0.0
  %3334 = vmatprep.mubr.f32.mxu0 0.0
  %3335 = vmatmul.mubr.f32.gmra.mrb[0].mxu0 %v1130
  %v3336 = vpop.f32.mrb[0].mxu0
  %v3337 = vadd.f32 %v1051, %v3336
  %v3338 = vpop.f32.mrb[0].mxu0
  %v3339 = vadd.f32 %v1051, %v3338
  %3340 = vmatprep.mubr.f32.mxu0 0.0
  %3341 = vmatmul.mubr.f32.gmra.mrb[0].mxu0 %v1133
  %v3342 = vpop.f32.mrb[0].mxu0
  %v3343 = vadd.f32 %v1056, %v3342
  %v3344 = vpop.f32.mrb[0].mxu0
  %v3345 = vadd.f32 %v1056, %v3344
  %3346 = vmatprep.mubr.f32.mxu0 0.0
  %3347 = vmatmul.mubr.f32.gmra.mrb[0].mxu0 %v1136
  %v3348 = vpop.f32.mrb[0].mxu0
  %v3349 = vadd.f32 %v1061, %v3348
  %v3350 = vpop.f32.mrb[0].mxu0
  %v3351 = vadd.f32 %v1061, %v3350
  %3352 = vmatprep.mubr.f32.mxu0 0.0
  %3353 = vmatmul.mubr.f32.gmra.mrb[0].mxu0 %v1139
  %v3354 = vpop.f32.mrb[0].mxu0
  %v3355 = vadd.f32 %v1066, %v3354
  %v3356 = vpop.f32.mrb[0].mxu0
  %v3357 = vadd.f32 %v1066, %v3356
  %3358 = vmatprep.mubr.f32.mxu0 0.0
  %3359 = vmatmul.mubr.f32.gmra.mrb[0].mxu0 %v1142
  %v3360 = vpop.f32.mrb[0].mxu0
  %v3361 = vadd.f32 %v1071, %v3360
  %v3362 = vpop.f32.mrb[0].mxu0
  %v3363 = vadd.f32 %v1071, %v3362
  %3364 = vmatprep.mubr.f32.mxu0 0.0
  %3365 = vmatmul.mubr.f32.gmra.mrb[0].mxu0 %v1145
  %v3366 = vpop.f32.mrb[0].mxu0
  %v3367 = vadd.f32 %v1076, %v3366
  %v3368 = vpop.f32.mrb[0].mxu0
  %v3369 = vadd.f32 %v1076, %v3368
  %3370 = vmatprep.mubr.f32.mxu0 0.0
  %3371 = vmatmul.mubr.f32.gmra.mrb[0].mxu0 %v1148
  %v3372 = vpop.f32.mrb[0].mxu0
  %v3373 = vadd.f32 %v1081, %v3372
  %v3374 = vpop.f32.mrb[0].mxu0
  %v3375 = vadd.f32 %v1081, %v3374
  %3376 = vmatprep.mubr.f32.mxu0 0.0
  %3377 = vmatmul.mubr.f32.gmra.mrb[0].mxu0 %v1151
  %v3378 = vpop.f32.mrb[0].mxu0
  %v3379 = vadd.f32 %v1086, %v3378
  %v3380 = vpop.f32.mrb[0].mxu0
  %v3381 = vadd.f32 %v1086, %v3380
  %3382 = vmatprep.mubr.f32.mxu0 0.0
  %3383 = vmatmul.mubr.f32.gmra.mrb[0].mxu0 %v1154
  %v3384 = vpop.f32.mrb[0].mxu0
  %v3385 = vadd.f32 %v1091, %v3384
  %v3386 = vpop.f32.mrb[0].mxu0
  %v3387 = vadd.f32 %v1091, %v3386
  %3388 = vmatprep.mubr.f32.mxu0 0.0
  %3389 = vmatmul.mubr.f32.gmra.mrb[0].mxu0 %v1157
  %v3390 = vpop.f32.mrb[0].mxu0
  %v3391 = vadd.f32 %v1096, %v3390
  %v3392 = vpop.f32.mrb[0].mxu0
  %v3393 = vadd.f32 %v1096, %v3392
  %3394 = vmatprep.mubr.f32.mxu0 0.0
  %3395 = vmatmul.mubr.f32.gmra.mrb[0].mxu0 %v1160
  %v3396 = vpop.f32.mrb[0].mxu0
  %v3397 = vadd.f32 %v1101, %v3396
  %v3398 = vpop.f32.mrb[0].mxu0
  %v3399 = vadd.f32 %v1101, %v3398
  %3400 = vmatprep.mubr.f32.mxu0 0.0
  %3401 = vmatmul.mubr.f32.gmra.mrb[0].mxu0 %v1163
  %v3402 = vpop.f32.mrb[0].mxu0
  %v3403 = vadd.f32 %v1106, %v3402
  %v3404 = vpop.f32.mrb[0].mxu0
  %v3405 = vadd.f32 %v1106, %v3404
  %3406 = vmatprep.mubr.f32.mxu0 0.0
  %3407 = vmatmul.mubr.f32.gmra.mrb[0].mxu0 %v1166
  %v3408 = vpop.f32.mrb[0].mxu0
  %v3409 = vadd.f32 %v1111, %v3408
  %v3410 = vpop.f32.mrb[0].mxu0
  %v3411 = vadd.f32 %v1111, %v3410
  %3412 = vmatprep.mubr.f32.mxu0 0.0
  %3413 = vmatmul.mubr.f32.gmra.mrb[0].mxu0 %v1169
  %v3414 = vpop.f32.mrb[0].mxu0
  %v3415 = vadd.f32 %v1116, %v3414
  %v3416 = vpop.f32.mrb[0].mxu0
  %v3417 = vadd.f32 %v1116, %v3416
  %3418 = vmatprep.mubr.f32.mxu0 0.0
  %3419 = vmatmul.mubr.f32.gmra.mrb[0].mxu0 %v1172
  %v3420 = vpop.f32.mrb[0].mxu0
  %v3421 = vadd.f32 %v1121, %v3420
  %v3422 = vpop.f32.mrb[0].mxu0
  %v3423 = vadd.f32 %v1121, %v3422
  %3424 = vmatprep.mubr.f32.mxu0 0.0
  %3425 = vmatmul.mubr.f32.gmra.mrb[0].mxu0 %v1175
  %v3426 = vpop.f32.mrb[0].mxu0
  %v3427 = vadd.f32 %v1126, %v3426
  %v3428 = vpop.f32.mrb[0].mxu0
  %v3429 = vadd.f32 %v1126, %v3428
  %3430 = vdwg.mxu0
  %3431 = vmatprep.subr.mxu0 %v733
  %3432 = vmatpush1.msra.mxu0 %v732
  %3433 = vmatprep.subr.mxu0 %v774
  %3434 = vmatpush1.msra.mxu0 %v773
  %3435 = vmatprep.subr.mxu0 %v815
  %3436 = vmatpush1.msra.mxu0 %v814
  %3437 = vmatprep.subr.mxu0 %v856
  %3438 = vmatpush1.msra.mxu0 %v855
  %3439 = vmatprep.subr.mxu0 %v897
  %3440 = vmatpush1.msra.mxu0 %v896
  %3441 = vmatprep.subr.mxu0 %v938
  %3442 = vmatpush1.msra.mxu0 %v937
  %3443 = vmatprep.subr.mxu0 %v979
  %3444 = vmatpush1.msra.mxu0 %v978
  %3445 = vmatprep.subr.mxu0 %v1020
  %3446 = vmatpush1.msra.mxu0 %v1019
  %3447 = vmatprep.subr.mxu0 0.0
  %3448 = vmatpush1.msra.mxu0 0.0
  %3449 = vmatprep.subr.mxu0 0.0
  %3450 = vmatpush1.msra.mxu0 0.0
  %3451 = vmatprep.subr.mxu0 0.0
  %3452 = vmatpush1.msra.mxu0 0.0
  %3453 = vmatprep.subr.mxu0 0.0
  %3454 = vmatpush1.msra.mxu0 0.0
  %3455 = vmatprep.subr.mxu0 0.0
  %3456 = vmatpush1.msra.mxu0 0.0
  %3457 = vmatprep.subr.mxu0 0.0
  %3458 = vmatpush1.msra.mxu0 0.0
  %3459 = vmatprep.subr.mxu0 0.0
  %3460 = vmatpush1.msra.mxu0 0.0
  %3461 = vmatprep.subr.mxu0 0.0
  %3462 = vmatpush1.msra.mxu0 0.0
  %3463 = vmatprep.subr.mxu0 0.0
  %3464 = vmatpush1.msra.mxu0 0.0
  %3465 = vmatprep.subr.mxu0 0.0
  %3466 = vmatpush1.msra.mxu0 0.0
  %3467 = vmatprep.subr.mxu0 0.0
  %3468 = vmatpush1.msra.mxu0 0.0
  %3469 = vmatprep.subr.mxu0 0.0
  %3470 = vmatpush1.msra.mxu0 0.0
  %3471 = vmatprep.subr.mxu0 0.0
  %3472 = vmatpush1.msra.mxu0 0.0
  %3473 = vmatprep.subr.mxu0 0.0
  %3474 = vmatpush1.msra.mxu0 0.0
  %3475 = vmatprep.subr.mxu0 0.0
  %3476 = vmatpush1.msra.mxu0 0.0
  %3477 = vmatprep.subr.mxu0 0.0
  %3478 = vmatpush1.msra.mxu0 0.0
  %3479 = vmatprep.subr.mxu0 0.0
  %3480 = vmatpush1.msra.mxu0 0.0
  %3481 = vmatprep.subr.mxu0 0.0
  %3482 = vmatpush1.msra.mxu0 0.0
  %3483 = vmatprep.subr.mxu0 0.0
  %3484 = vmatpush1.msra.mxu0 0.0
  %3485 = vmatprep.subr.mxu0 0.0
  %3486 = vmatpush1.msra.mxu0 0.0
  %3487 = vmatprep.subr.mxu0 0.0
  %3488 = vmatpush1.msra.mxu0 0.0
  %3489 = vmatprep.subr.mxu0 0.0
  %3490 = vmatpush1.msra.mxu0 0.0
  %3491 = vmatprep.subr.mxu0 0.0
  %3492 = vmatpush1.msra.mxu0 0.0
  %3493 = vmatprep.subr.mxu0 0.0
  %3494 = vmatpush1.msra.mxu0 0.0
  %3495 = vmatprep.mubr.f32.mxu0 0.0
  %3496 = vmatmul.mubr.f32.gmra.mrb[0].mxu0 %v1130
  %v3497 = vpop.f32.mrb[0].mxu0
  %v3498 = vadd.f32 %v1051, %v3497
  %v3499 = vpop.f32.mrb[0].mxu0
  %v3500 = vadd.f32 %v1051, %v3499
  %3501 = vmatprep.mubr.f32.mxu0 0.0
  %3502 = vmatmul.mubr.f32.gmra.mrb[0].mxu0 %v1133
  %v3503 = vpop.f32.mrb[0].mxu0
  %v3504 = vadd.f32 %v1056, %v3503
  %v3505 = vpop.f32.mrb[0].mxu0
  %v3506 = vadd.f32 %v1056, %v3505
  %3507 = vmatprep.mubr.f32.mxu0 0.0
  %3508 = vmatmul.mubr.f32.gmra.mrb[0].mxu0 %v1136
  %v3509 = vpop.f32.mrb[0].mxu0
  %v3510 = vadd.f32 %v1061, %v3509
  %v3511 = vpop.f32.mrb[0].mxu0
  %v3512 = vadd.f32 %v1061, %v3511
  %3513 = vmatprep.mubr.f32.mxu0 0.0
  %3514 = vmatmul.mubr.f32.gmra.mrb[0].mxu0 %v1139
  %v3515 = vpop.f32.mrb[0].mxu0
  %v3516 = vadd.f32 %v1066, %v3515
  %v3517 = vpop.f32.mrb[0].mxu0
  %v3518 = vadd.f32 %v1066, %v3517
  %3519 = vmatprep.mubr.f32.mxu0 0.0
  %3520 = vmatmul.mubr.f32.gmra.mrb[0].mxu0 %v1142
  %v3521 = vpop.f32.mrb[0].mxu0
  %v3522 = vadd.f32 %v1071, %v3521
  %v3523 = vpop.f32.mrb[0].mxu0
  %v3524 = vadd.f32 %v1071, %v3523
  %3525 = vmatprep.mubr.f32.mxu0 0.0
  %3526 = vmatmul.mubr.f32.gmra.mrb[0].mxu0 %v1145
  %v3527 = vpop.f32.mrb[0].mxu0
  %v3528 = vadd.f32 %v1076, %v3527
  %v3529 = vpop.f32.mrb[0].mxu0
  %v3530 = vadd.f32 %v1076, %v3529
  %3531 = vmatprep.mubr.f32.mxu0 0.0
  %3532 = vmatmul.mubr.f32.gmra.mrb[0].mxu0 %v1148
  %v3533 = vpop.f32.mrb[0].mxu0
  %v3534 = vadd.f32 %v1081, %v3533
  %v3535 = vpop.f32.mrb[0].mxu0
  %v3536 = vadd.f32 %v1081, %v3535
  %3537 = vmatprep.mubr.f32.mxu0 0.0
  %3538 = vmatmul.mubr.f32.gmra.mrb[0].mxu0 %v1151
  %v3539 = vpop.f32.mrb[0].mxu0
  %v3540 = vadd.f32 %v1086, %v3539
  %v3541 = vpop.f32.mrb[0].mxu0
  %v3542 = vadd.f32 %v1086, %v3541
  %3543 = vmatprep.mubr.f32.mxu0 0.0
  %3544 = vmatmul.mubr.f32.gmra.mrb[0].mxu0 %v1154
  %v3545 = vpop.f32.mrb[0].mxu0
  %v3546 = vadd.f32 %v1091, %v3545
  %v3547 = vpop.f32.mrb[0].mxu0
  %v3548 = vadd.f32 %v1091, %v3547
  %3549 = vmatprep.mubr.f32.mxu0 0.0
  %3550 = vmatmul.mubr.f32.gmra.mrb[0].mxu0 %v1157
  %v3551 = vpop.f32.mrb[0].mxu0
  %v3552 = vadd.f32 %v1096, %v3551
  %v3553 = vpop.f32.mrb[0].mxu0
  %v3554 = vadd.f32 %v1096, %v3553
  %3555 = vmatprep.mubr.f32.mxu0 0.0
  %3556 = vmatmul.mubr.f32.gmra.mrb[0].mxu0 %v1160
  %v3557 = vpop.f32.mrb[0].mxu0
  %v3558 = vadd.f32 %v1101, %v3557
  %v3559 = vpop.f32.mrb[0].mxu0
  %v3560 = vadd.f32 %v1101, %v3559
  %3561 = vmatprep.mubr.f32.mxu0 0.0
  %3562 = vmatmul.mubr.f32.gmra.mrb[0].mxu0 %v1163
  %v3563 = vpop.f32.mrb[0].mxu0
  %v3564 = vadd.f32 %v1106, %v3563
  %v3565 = vpop.f32.mrb[0].mxu0
  %v3566 = vadd.f32 %v1106, %v3565
  %3567 = vmatprep.mubr.f32.mxu0 0.0
  %3568 = vmatmul.mubr.f32.gmra.mrb[0].mxu0 %v1166
  %v3569 = vpop.f32.mrb[0].mxu0
  %v3570 = vadd.f32 %v1111, %v3569
  %v3571 = vpop.f32.mrb[0].mxu0
  %v3572 = vadd.f32 %v1111, %v3571
  %3573 = vmatprep.mubr.f32.mxu0 0.0
  %3574 = vmatmul.mubr.f32.gmra.mrb[0].mxu0 %v1169
  %v3575 = vpop.f32.mrb[0].mxu0
  %v3576 = vadd.f32 %v1116, %v3575
  %v3577 = vpop.f32.mrb[0].mxu0
  %v3578 = vadd.f32 %v1116, %v3577
  %3579 = vmatprep.mubr.f32.mxu0 0.0
  %3580 = vmatmul.mubr.f32.gmra.mrb[0].mxu0 %v1172
  %v3581 = vpop.f32.mrb[0].mxu0
  %v3582 = vadd.f32 %v1121, %v3581
  %v3583 = vpop.f32.mrb[0].mxu0
  %v3584 = vadd.f32 %v1121, %v3583
  %3585 = vmatprep.mubr.f32.mxu0 0.0
  %3586 = vmatmul.mubr.f32.gmra.mrb[0].mxu0 %v1175
  %v3587 = vpop.f32.mrb[0].mxu0
  %v3588 = vadd.f32 %v1126, %v3587
  %v3589 = vpop.f32.mrb[0].mxu0
  %v3590 = vadd.f32 %v1126, %v3589
  %3591 = vdwg.mxu0
  %3592 = vmatprep.subr.mxu0 %v735
  %3593 = vmatpush1.msra.mxu0 %v734
  %3594 = vmatprep.subr.mxu0 %v776
  %3595 = vmatpush1.msra.mxu0 %v775
  %3596 = vmatprep.subr.mxu0 %v817
  %3597 = vmatpush1.msra.mxu0 %v816
  %3598 = vmatprep.subr.mxu0 %v858
  %3599 = vmatpush1.msra.mxu0 %v857
  %3600 = vmatprep.subr.mxu0 %v899
  %3601 = vmatpush1.msra.mxu0 %v898
  %3602 = vmatprep.subr.mxu0 %v940
  %3603 = vmatpush1.msra.mxu0 %v939
  %3604 = vmatprep.subr.mxu0 %v981
  %3605 = vmatpush1.msra.mxu0 %v980
  %3606 = vmatprep.subr.mxu0 %v1022
  %3607 = vmatpush1.msra.mxu0 %v1021
  %3608 = vmatprep.subr.mxu0 0.0
  %3609 = vmatpush1.msra.mxu0 0.0
  %3610 = vmatprep.subr.mxu0 0.0
  %3611 = vmatpush1.msra.mxu0 0.0
  %3612 = vmatprep.subr.mxu0 0.0
  %3613 = vmatpush1.msra.mxu0 0.0
  %3614 = vmatprep.subr.mxu0 0.0
  %3615 = vmatpush1.msra.mxu0 0.0
  %3616 = vmatprep.subr.mxu0 0.0
  %3617 = vmatpush1.msra.mxu0 0.0
  %3618 = vmatprep.subr.mxu0 0.0
  %3619 = vmatpush1.msra.mxu0 0.0
  %3620 = vmatprep.subr.mxu0 0.0
  %3621 = vmatpush1.msra.mxu0 0.0
  %3622 = vmatprep.subr.mxu0 0.0
  %3623 = vmatpush1.msra.mxu0 0.0
  %3624 = vmatprep.subr.mxu0 0.0
  %3625 = vmatpush1.msra.mxu0 0.0
  %3626 = vmatprep.subr.mxu0 0.0
  %3627 = vmatpush1.msra.mxu0 0.0
  %3628 = vmatprep.subr.mxu0 0.0
  %3629 = vmatpush1.msra.mxu0 0.0
  %3630 = vmatprep.subr.mxu0 0.0
  %3631 = vmatpush1.msra.mxu0 0.0
  %3632 = vmatprep.subr.mxu0 0.0
  %3633 = vmatpush1.msra.mxu0 0.0
  %3634 = vmatprep.subr.mxu0 0.0
  %3635 = vmatpush1.msra.mxu0 0.0
  %3636 = vmatprep.subr.mxu0 0.0
  %3637 = vmatpush1.msra.mxu0 0.0
  %3638 = vmatprep.subr.mxu0 0.0
  %3639 = vmatpush1.msra.mxu0 0.0
  %3640 = vmatprep.subr.mxu0 0.0
  %3641 = vmatpush1.msra.mxu0 0.0
  %3642 = vmatprep.subr.mxu0 0.0
  %3643 = vmatpush1.msra.mxu0 0.0
  %3644 = vmatprep.subr.mxu0 0.0
  %3645 = vmatpush1.msra.mxu0 0.0
  %3646 = vmatprep.subr.mxu0 0.0
  %3647 = vmatpush1.msra.mxu0 0.0
  %3648 = vmatprep.subr.mxu0 0.0
  %3649 = vmatpush1.msra.mxu0 0.0
  %3650 = vmatprep.subr.mxu0 0.0
  %3651 = vmatpush1.msra.mxu0 0.0
  %3652 = vmatprep.subr.mxu0 0.0
  %3653 = vmatpush1.msra.mxu0 0.0
  %3654 = vmatprep.subr.mxu0 0.0
  %3655 = vmatpush1.msra.mxu0 0.0
  %3656 = vmatprep.mubr.f32.mxu0 0.0
  %3657 = vmatmul.mubr.f32.gmra.mrb[0].mxu0 %v1130
  %v3658 = vpop.f32.mrb[0].mxu0
  %v3659 = vadd.f32 %v1051, %v3658
  %v3660 = vpop.f32.mrb[0].mxu0
  %v3661 = vadd.f32 %v1051, %v3660
  %3662 = vmatprep.mubr.f32.mxu0 0.0
  %3663 = vmatmul.mubr.f32.gmra.mrb[0].mxu0 %v1133
  %v3664 = vpop.f32.mrb[0].mxu0
  %v3665 = vadd.f32 %v1056, %v3664
  %v3666 = vpop.f32.mrb[0].mxu0
  %v3667 = vadd.f32 %v1056, %v3666
  %3668 = vmatprep.mubr.f32.mxu0 0.0
  %3669 = vmatmul.mubr.f32.gmra.mrb[0].mxu0 %v1136
  %v3670 = vpop.f32.mrb[0].mxu0
  %v3671 = vadd.f32 %v1061, %v3670
  %v3672 = vpop.f32.mrb[0].mxu0
  %v3673 = vadd.f32 %v1061, %v3672
  %3674 = vmatprep.mubr.f32.mxu0 0.0
  %3675 = vmatmul.mubr.f32.gmra.mrb[0].mxu0 %v1139
  %v3676 = vpop.f32.mrb[0].mxu0
  %v3677 = vadd.f32 %v1066, %v3676
  %v3678 = vpop.f32.mrb[0].mxu0
  %v3679 = vadd.f32 %v1066, %v3678
  %3680 = vmatprep.mubr.f32.mxu0 0.0
  %3681 = vmatmul.mubr.f32.gmra.mrb[0].mxu0 %v1142
  %v3682 = vpop.f32.mrb[0].mxu0
  %v3683 = vadd.f32 %v1071, %v3682
  %v3684 = vpop.f32.mrb[0].mxu0
  %v3685 = vadd.f32 %v1071, %v3684
  %3686 = vmatprep.mubr.f32.mxu0 0.0
  %3687 = vmatmul.mubr.f32.gmra.mrb[0].mxu0 %v1145
  %v3688 = vpop.f32.mrb[0].mxu0
  %v3689 = vadd.f32 %v1076, %v3688
  %v3690 = vpop.f32.mrb[0].mxu0
  %v3691 = vadd.f32 %v1076, %v3690
  %3692 = vmatprep.mubr.f32.mxu0 0.0
  %3693 = vmatmul.mubr.f32.gmra.mrb[0].mxu0 %v1148
  %v3694 = vpop.f32.mrb[0].mxu0
  %v3695 = vadd.f32 %v1081, %v3694
  %v3696 = vpop.f32.mrb[0].mxu0
  %v3697 = vadd.f32 %v1081, %v3696
  %3698 = vmatprep.mubr.f32.mxu0 0.0
  %3699 = vmatmul.mubr.f32.gmra.mrb[0].mxu0 %v1151
  %v3700 = vpop.f32.mrb[0].mxu0
  %v3701 = vadd.f32 %v1086, %v3700
  %v3702 = vpop.f32.mrb[0].mxu0
  %v3703 = vadd.f32 %v1086, %v3702
  %3704 = vmatprep.mubr.f32.mxu0 0.0
  %3705 = vmatmul.mubr.f32.gmra.mrb[0].mxu0 %v1154
  %v3706 = vpop.f32.mrb[0].mxu0
  %v3707 = vadd.f32 %v1091, %v3706
  %v3708 = vpop.f32.mrb[0].mxu0
  %v3709 = vadd.f32 %v1091, %v3708
  %3710 = vmatprep.mubr.f32.mxu0 0.0
  %3711 = vmatmul.mubr.f32.gmra.mrb[0].mxu0 %v1157
  %v3712 = vpop.f32.mrb[0].mxu0
  %v3713 = vadd.f32 %v1096, %v3712
  %v3714 = vpop.f32.mrb[0].mxu0
  %v3715 = vadd.f32 %v1096, %v3714
  %3716 = vmatprep.mubr.f32.mxu0 0.0
  %3717 = vmatmul.mubr.f32.gmra.mrb[0].mxu0 %v1160
  %v3718 = vpop.f32.mrb[0].mxu0
  %v3719 = vadd.f32 %v1101, %v3718
  %v3720 = vpop.f32.mrb[0].mxu0
  %v3721 = vadd.f32 %v1101, %v3720
  %3722 = vmatprep.mubr.f32.mxu0 0.0
  %3723 = vmatmul.mubr.f32.gmra.mrb[0].mxu0 %v1163
  %v3724 = vpop.f32.mrb[0].mxu0
  %v3725 = vadd.f32 %v1106, %v3724
  %v3726 = vpop.f32.mrb[0].mxu0
  %v3727 = vadd.f32 %v1106, %v3726
  %3728 = vmatprep.mubr.f32.mxu0 0.0
  %3729 = vmatmul.mubr.f32.gmra.mrb[0].mxu0 %v1166
  %v3730 = vpop.f32.mrb[0].mxu0
  %v3731 = vadd.f32 %v1111, %v3730
  %v3732 = vpop.f32.mrb[0].mxu0
  %v3733 = vadd.f32 %v1111, %v3732
  %3734 = vmatprep.mubr.f32.mxu0 0.0
  %3735 = vmatmul.mubr.f32.gmra.mrb[0].mxu0 %v1169
  %v3736 = vpop.f32.mrb[0].mxu0
  %v3737 = vadd.f32 %v1116, %v3736
  %v3738 = vpop.f32.mrb[0].mxu0
  %v3739 = vadd.f32 %v1116, %v3738
  %3740 = vmatprep.mubr.f32.mxu0 0.0
  %3741 = vmatmul.mubr.f32.gmra.mrb[0].mxu0 %v1172
  %v3742 = vpop.f32.mrb[0].mxu0
  %v3743 = vadd.f32 %v1121, %v3742
  %v3744 = vpop.f32.mrb[0].mxu0
  %v3745 = vadd.f32 %v1121, %v3744
  %3746 = vmatprep.mubr.f32.mxu0 0.0
  %3747 = vmatmul.mubr.f32.gmra.mrb[0].mxu0 %v1175
  %v3748 = vpop.f32.mrb[0].mxu0
  %v3749 = vadd.f32 %v1126, %v3748
  %v3750 = vpop.f32.mrb[0].mxu0
  %v3751 = vadd.f32 %v1126, %v3750
  %3752 = vdwg.mxu0
  %3753 = vmatprep.subr.mxu0 %v737
  %3754 = vmatpush1.msra.mxu0 %v736
  %3755 = vmatprep.subr.mxu0 %v778
  %3756 = vmatpush1.msra.mxu0 %v777
  %3757 = vmatprep.subr.mxu0 %v819
  %3758 = vmatpush1.msra.mxu0 %v818
  %3759 = vmatprep.subr.mxu0 %v860
  %3760 = vmatpush1.msra.mxu0 %v859
  %3761 = vmatprep.subr.mxu0 %v901
  %3762 = vmatpush1.msra.mxu0 %v900
  %3763 = vmatprep.subr.mxu0 %v942
  %3764 = vmatpush1.msra.mxu0 %v941
  %3765 = vmatprep.subr.mxu0 %v983
  %3766 = vmatpush1.msra.mxu0 %v982
  %3767 = vmatprep.subr.mxu0 %v1024
  %3768 = vmatpush1.msra.mxu0 %v1023
  %3769 = vmatprep.subr.mxu0 0.0
  %3770 = vmatpush1.msra.mxu0 0.0
  %3771 = vmatprep.subr.mxu0 0.0
  %3772 = vmatpush1.msra.mxu0 0.0
  %3773 = vmatprep.subr.mxu0 0.0
  %3774 = vmatpush1.msra.mxu0 0.0
  %3775 = vmatprep.subr.mxu0 0.0
  %3776 = vmatpush1.msra.mxu0 0.0
  %3777 = vmatprep.subr.mxu0 0.0
  %3778 = vmatpush1.msra.mxu0 0.0
  %3779 = vmatprep.subr.mxu0 0.0
  %3780 = vmatpush1.msra.mxu0 0.0
  %3781 = vmatprep.subr.mxu0 0.0
  %3782 = vmatpush1.msra.mxu0 0.0
  %3783 = vmatprep.subr.mxu0 0.0
  %3784 = vmatpush1.msra.mxu0 0.0
  %3785 = vmatprep.subr.mxu0 0.0
  %3786 = vmatpush1.msra.mxu0 0.0
  %3787 = vmatprep.subr.mxu0 0.0
  %3788 = vmatpush1.msra.mxu0 0.0
  %3789 = vmatprep.subr.mxu0 0.0
  %3790 = vmatpush1.msra.mxu0 0.0
  %3791 = vmatprep.subr.mxu0 0.0
  %3792 = vmatpush1.msra.mxu0 0.0
  %3793 = vmatprep.subr.mxu0 0.0
  %3794 = vmatpush1.msra.mxu0 0.0
  %3795 = vmatprep.subr.mxu0 0.0
  %3796 = vmatpush1.msra.mxu0 0.0
  %3797 = vmatprep.subr.mxu0 0.0
  %3798 = vmatpush1.msra.mxu0 0.0
  %3799 = vmatprep.subr.mxu0 0.0
  %3800 = vmatpush1.msra.mxu0 0.0
  %3801 = vmatprep.subr.mxu0 0.0
  %3802 = vmatpush1.msra.mxu0 0.0
  %3803 = vmatprep.subr.mxu0 0.0
  %3804 = vmatpush1.msra.mxu0 0.0
  %3805 = vmatprep.subr.mxu0 0.0
  %3806 = vmatpush1.msra.mxu0 0.0
  %3807 = vmatprep.subr.mxu0 0.0
  %3808 = vmatpush1.msra.mxu0 0.0
  %3809 = vmatprep.subr.mxu0 0.0
  %3810 = vmatpush1.msra.mxu0 0.0
  %3811 = vmatprep.subr.mxu0 0.0
  %3812 = vmatpush1.msra.mxu0 0.0
  %3813 = vmatprep.subr.mxu0 0.0
  %3814 = vmatpush1.msra.mxu0 0.0
  %3815 = vmatprep.subr.mxu0 0.0
  %3816 = vmatpush1.msra.mxu0 0.0
  %3817 = vmatprep.mubr.f32.mxu0 0.0
  %3818 = vmatmul.mubr.f32.gmra.mrb[0].mxu0 %v1130
  %v3819 = vpop.f32.mrb[0].mxu0
  %v3820 = vadd.f32 %v1051, %v3819
  %v3821 = vpop.f32.mrb[0].mxu0
  %v3822 = vadd.f32 %v1051, %v3821
  %3823 = vmatprep.mubr.f32.mxu0 0.0
  %3824 = vmatmul.mubr.f32.gmra.mrb[0].mxu0 %v1133
  %v3825 = vpop.f32.mrb[0].mxu0
  %v3826 = vadd.f32 %v1056, %v3825
  %v3827 = vpop.f32.mrb[0].mxu0
  %v3828 = vadd.f32 %v1056, %v3827
  %3829 = vmatprep.mubr.f32.mxu0 0.0
  %3830 = vmatmul.mubr.f32.gmra.mrb[0].mxu0 %v1136
  %v3831 = vpop.f32.mrb[0].mxu0
  %v3832 = vadd.f32 %v1061, %v3831
  %v3833 = vpop.f32.mrb[0].mxu0
  %v3834 = vadd.f32 %v1061, %v3833
  %3835 = vmatprep.mubr.f32.mxu0 0.0
  %3836 = vmatmul.mubr.f32.gmra.mrb[0].mxu0 %v1139
  %v3837 = vpop.f32.mrb[0].mxu0
  %v3838 = vadd.f32 %v1066, %v3837
  %v3839 = vpop.f32.mrb[0].mxu0
  %v3840 = vadd.f32 %v1066, %v3839
  %3841 = vmatprep.mubr.f32.mxu0 0.0
  %3842 = vmatmul.mubr.f32.gmra.mrb[0].mxu0 %v1142
  %v3843 = vpop.f32.mrb[0].mxu0
  %v3844 = vadd.f32 %v1071, %v3843
  %v3845 = vpop.f32.mrb[0].mxu0
  %v3846 = vadd.f32 %v1071, %v3845
  %3847 = vmatprep.mubr.f32.mxu0 0.0
  %3848 = vmatmul.mubr.f32.gmra.mrb[0].mxu0 %v1145
  %v3849 = vpop.f32.mrb[0].mxu0
  %v3850 = vadd.f32 %v1076, %v3849
  %v3851 = vpop.f32.mrb[0].mxu0
  %v3852 = vadd.f32 %v1076, %v3851
  %3853 = vmatprep.mubr.f32.mxu0 0.0
  %3854 = vmatmul.mubr.f32.gmra.mrb[0].mxu0 %v1148
  %v3855 = vpop.f32.mrb[0].mxu0
  %v3856 = vadd.f32 %v1081, %v3855
  %v3857 = vpop.f32.mrb[0].mxu0
  %v3858 = vadd.f32 %v1081, %v3857
  %3859 = vmatprep.mubr.f32.mxu0 0.0
  %3860 = vmatmul.mubr.f32.gmra.mrb[0].mxu0 %v1151
  %v3861 = vpop.f32.mrb[0].mxu0
  %v3862 = vadd.f32 %v1086, %v3861
  %v3863 = vpop.f32.mrb[0].mxu0
  %v3864 = vadd.f32 %v1086, %v3863
  %3865 = vmatprep.mubr.f32.mxu0 0.0
  %3866 = vmatmul.mubr.f32.gmra.mrb[0].mxu0 %v1154
  %v3867 = vpop.f32.mrb[0].mxu0
  %v3868 = vadd.f32 %v1091, %v3867
  %v3869 = vpop.f32.mrb[0].mxu0
  %v3870 = vadd.f32 %v1091, %v3869
  %3871 = vmatprep.mubr.f32.mxu0 0.0
  %3872 = vmatmul.mubr.f32.gmra.mrb[0].mxu0 %v1157
  %v3873 = vpop.f32.mrb[0].mxu0
  %v3874 = vadd.f32 %v1096, %v3873
  %v3875 = vpop.f32.mrb[0].mxu0
  %v3876 = vadd.f32 %v1096, %v3875
  %3877 = vmatprep.mubr.f32.mxu0 0.0
  %3878 = vmatmul.mubr.f32.gmra.mrb[0].mxu0 %v1160
  %v3879 = vpop.f32.mrb[0].mxu0
  %v3880 = vadd.f32 %v1101, %v3879
  %v3881 = vpop.f32.mrb[0].mxu0
  %v3882 = vadd.f32 %v1101, %v3881
  %3883 = vmatprep.mubr.f32.mxu0 0.0
  %3884 = vmatmul.mubr.f32.gmra.mrb[0].mxu0 %v1163
  %v3885 = vpop.f32.mrb[0].mxu0
  %v3886 = vadd.f32 %v1106, %v3885
  %v3887 = vpop.f32.mrb[0].mxu0
  %v3888 = vadd.f32 %v1106, %v3887
  %3889 = vmatprep.mubr.f32.mxu0 0.0
  %3890 = vmatmul.mubr.f32.gmra.mrb[0].mxu0 %v1166
  %v3891 = vpop.f32.mrb[0].mxu0
  %v3892 = vadd.f32 %v1111, %v3891
  %v3893 = vpop.f32.mrb[0].mxu0
  %v3894 = vadd.f32 %v1111, %v3893
  %3895 = vmatprep.mubr.f32.mxu0 0.0
  %3896 = vmatmul.mubr.f32.gmra.mrb[0].mxu0 %v1169
  %v3897 = vpop.f32.mrb[0].mxu0
  %v3898 = vadd.f32 %v1116, %v3897
  %v3899 = vpop.f32.mrb[0].mxu0
  %v3900 = vadd.f32 %v1116, %v3899
  %3901 = vmatprep.mubr.f32.mxu0 0.0
  %3902 = vmatmul.mubr.f32.gmra.mrb[0].mxu0 %v1172
  %v3903 = vpop.f32.mrb[0].mxu0
  %v3904 = vadd.f32 %v1121, %v3903
  %v3905 = vpop.f32.mrb[0].mxu0
  %v3906 = vadd.f32 %v1121, %v3905
  %3907 = vmatprep.mubr.f32.mxu0 0.0
  %3908 = vmatmul.mubr.f32.gmra.mrb[0].mxu0 %v1175
  %v3909 = vpop.f32.mrb[0].mxu0
  %v3910 = vadd.f32 %v1126, %v3909
  %v3911 = vpop.f32.mrb[0].mxu0
  %v3912 = vadd.f32 %v1126, %v3911
  %3913 = vdwg.mxu0
  %3914 = vmatprep.subr.mxu0 %v739
  %3915 = vmatpush1.msra.mxu0 %v738
  %3916 = vmatprep.subr.mxu0 %v780
  %3917 = vmatpush1.msra.mxu0 %v779
  %3918 = vmatprep.subr.mxu0 %v821
  %3919 = vmatpush1.msra.mxu0 %v820
  %3920 = vmatprep.subr.mxu0 %v862
  %3921 = vmatpush1.msra.mxu0 %v861
  %3922 = vmatprep.subr.mxu0 %v903
  %3923 = vmatpush1.msra.mxu0 %v902
  %3924 = vmatprep.subr.mxu0 %v944
  %3925 = vmatpush1.msra.mxu0 %v943
  %3926 = vmatprep.subr.mxu0 %v985
  %3927 = vmatpush1.msra.mxu0 %v984
  %3928 = vmatprep.subr.mxu0 %v1026
  %3929 = vmatpush1.msra.mxu0 %v1025
  %3930 = vmatprep.subr.mxu0 0.0
  %3931 = vmatpush1.msra.mxu0 0.0
  %3932 = vmatprep.subr.mxu0 0.0
  %3933 = vmatpush1.msra.mxu0 0.0
  %3934 = vmatprep.subr.mxu0 0.0
  %3935 = vmatpush1.msra.mxu0 0.0
  %3936 = vmatprep.subr.mxu0 0.0
  %3937 = vmatpush1.msra.mxu0 0.0
  %3938 = vmatprep.subr.mxu0 0.0
  %3939 = vmatpush1.msra.mxu0 0.0
  %3940 = vmatprep.subr.mxu0 0.0
  %3941 = vmatpush1.msra.mxu0 0.0
  %3942 = vmatprep.subr.mxu0 0.0
  %3943 = vmatpush1.msra.mxu0 0.0
  %3944 = vmatprep.subr.mxu0 0.0
  %3945 = vmatpush1.msra.mxu0 0.0
  %3946 = vmatprep.subr.mxu0 0.0
  %3947 = vmatpush1.msra.mxu0 0.0
  %3948 = vmatprep.subr.mxu0 0.0
  %3949 = vmatpush1.msra.mxu0 0.0
  %3950 = vmatprep.subr.mxu0 0.0
  %3951 = vmatpush1.msra.mxu0 0.0
  %3952 = vmatprep.subr.mxu0 0.0
  %3953 = vmatpush1.msra.mxu0 0.0
  %3954 = vmatprep.subr.mxu0 0.0
  %3955 = vmatpush1.msra.mxu0 0.0
  %3956 = vmatprep.subr.mxu0 0.0
  %3957 = vmatpush1.msra.mxu0 0.0
  %3958 = vmatprep.subr.mxu0 0.0
  %3959 = vmatpush1.msra.mxu0 0.0
  %3960 = vmatprep.subr.mxu0 0.0
  %3961 = vmatpush1.msra.mxu0 0.0
  %3962 = vmatprep.subr.mxu0 0.0
  %3963 = vmatpush1.msra.mxu0 0.0
  %3964 = vmatprep.subr.mxu0 0.0
  %3965 = vmatpush1.msra.mxu0 0.0
  %3966 = vmatprep.subr.mxu0 0.0
  %3967 = vmatpush1.msra.mxu0 0.0
  %3968 = vmatprep.subr.mxu0 0.0
  %3969 = vmatpush1.msra.mxu0 0.0
  %3970 = vmatprep.subr.mxu0 0.0
  %3971 = vmatpush1.msra.mxu0 0.0
  %3972 = vmatprep.subr.mxu0 0.0
  %3973 = vmatpush1.msra.mxu0 0.0
  %3974 = vmatprep.subr.mxu0 0.0
  %3975 = vmatpush1.msra.mxu0 0.0
  %3976 = vmatprep.subr.mxu0 0.0
  %3977 = vmatpush1.msra.mxu0 0.0
  %3978 = vmatprep.mubr.f32.mxu0 0.0
  %3979 = vmatmul.mubr.f32.gmra.mrb[0].mxu0 %v1130
  %v3980 = vpop.f32.mrb[0].mxu0
  %v3981 = vadd.f32 %v1051, %v3980
  %v3982 = vpop.f32.mrb[0].mxu0
  %v3983 = vadd.f32 %v1051, %v3982
  %3984 = vmatprep.mubr.f32.mxu0 0.0
  %3985 = vmatmul.mubr.f32.gmra.mrb[0].mxu0 %v1133
  %v3986 = vpop.f32.mrb[0].mxu0
  %v3987 = vadd.f32 %v1056, %v3986
  %v3988 = vpop.f32.mrb[0].mxu0
  %v3989 = vadd.f32 %v1056, %v3988
  %3990 = vmatprep.mubr.f32.mxu0 0.0
  %3991 = vmatmul.mubr.f32.gmra.mrb[0].mxu0 %v1136
  %v3992 = vpop.f32.mrb[0].mxu0
  %v3993 = vadd.f32 %v1061, %v3992
  %v3994 = vpop.f32.mrb[0].mxu0
  %v3995 = vadd.f32 %v1061, %v3994
  %3996 = vmatprep.mubr.f32.mxu0 0.0
  %3997 = vmatmul.mubr.f32.gmra.mrb[0].mxu0 %v1139
  %v3998 = vpop.f32.mrb[0].mxu0
  %v3999 = vadd.f32 %v1066, %v3998
  %v4000 = vpop.f32.mrb[0].mxu0
  %v4001 = vadd.f32 %v1066, %v4000
  %4002 = vmatprep.mubr.f32.mxu0 0.0
  %4003 = vmatmul.mubr.f32.gmra.mrb[0].mxu0 %v1142
  %v4004 = vpop.f32.mrb[0].mxu0
  %v4005 = vadd.f32 %v1071, %v4004
  %v4006 = vpop.f32.mrb[0].mxu0
  %v4007 = vadd.f32 %v1071, %v4006
  %4008 = vmatprep.mubr.f32.mxu0 0.0
  %4009 = vmatmul.mubr.f32.gmra.mrb[0].mxu0 %v1145
  %v4010 = vpop.f32.mrb[0].mxu0
  %v4011 = vadd.f32 %v1076, %v4010
  %v4012 = vpop.f32.mrb[0].mxu0
  %v4013 = vadd.f32 %v1076, %v4012
  %4014 = vmatprep.mubr.f32.mxu0 0.0
  %4015 = vmatmul.mubr.f32.gmra.mrb[0].mxu0 %v1148
  %v4016 = vpop.f32.mrb[0].mxu0
  %v4017 = vadd.f32 %v1081, %v4016
  %v4018 = vpop.f32.mrb[0].mxu0
  %v4019 = vadd.f32 %v1081, %v4018
  %4020 = vmatprep.mubr.f32.mxu0 0.0
  %4021 = vmatmul.mubr.f32.gmra.mrb[0].mxu0 %v1151
  %v4022 = vpop.f32.mrb[0].mxu0
  %v4023 = vadd.f32 %v1086, %v4022
  %v4024 = vpop.f32.mrb[0].mxu0
  %v4025 = vadd.f32 %v1086, %v4024
  %4026 = vmatprep.mubr.f32.mxu0 0.0
  %4027 = vmatmul.mubr.f32.gmra.mrb[0].mxu0 %v1154
  %v4028 = vpop.f32.mrb[0].mxu0
  %v4029 = vadd.f32 %v1091, %v4028
  %v4030 = vpop.f32.mrb[0].mxu0
  %v4031 = vadd.f32 %v1091, %v4030
  %4032 = vmatprep.mubr.f32.mxu0 0.0
  %4033 = vmatmul.mubr.f32.gmra.mrb[0].mxu0 %v1157
  %v4034 = vpop.f32.mrb[0].mxu0
  %v4035 = vadd.f32 %v1096, %v4034
  %v4036 = vpop.f32.mrb[0].mxu0
  %v4037 = vadd.f32 %v1096, %v4036
  %4038 = vmatprep.mubr.f32.mxu0 0.0
  %4039 = vmatmul.mubr.f32.gmra.mrb[0].mxu0 %v1160
  %v4040 = vpop.f32.mrb[0].mxu0
  %v4041 = vadd.f32 %v1101, %v4040
  %v4042 = vpop.f32.mrb[0].mxu0
  %v4043 = vadd.f32 %v1101, %v4042
  %4044 = vmatprep.mubr.f32.mxu0 0.0
  %4045 = vmatmul.mubr.f32.gmra.mrb[0].mxu0 %v1163
  %v4046 = vpop.f32.mrb[0].mxu0
  %v4047 = vadd.f32 %v1106, %v4046
  %v4048 = vpop.f32.mrb[0].mxu0
  %v4049 = vadd.f32 %v1106, %v4048
  %4050 = vmatprep.mubr.f32.mxu0 0.0
  %4051 = vmatmul.mubr.f32.gmra.mrb[0].mxu0 %v1166
  %v4052 = vpop.f32.mrb[0].mxu0
  %v4053 = vadd.f32 %v1111, %v4052
  %v4054 = vpop.f32.mrb[0].mxu0
  %v4055 = vadd.f32 %v1111, %v4054
  %4056 = vmatprep.mubr.f32.mxu0 0.0
  %4057 = vmatmul.mubr.f32.gmra.mrb[0].mxu0 %v1169
  %v4058 = vpop.f32.mrb[0].mxu0
  %v4059 = vadd.f32 %v1116, %v4058
  %v4060 = vpop.f32.mrb[0].mxu0
  %v4061 = vadd.f32 %v1116, %v4060
  %4062 = vmatprep.mubr.f32.mxu0 0.0
  %4063 = vmatmul.mubr.f32.gmra.mrb[0].mxu0 %v1172
  %v4064 = vpop.f32.mrb[0].mxu0
  %v4065 = vadd.f32 %v1121, %v4064
  %v4066 = vpop.f32.mrb[0].mxu0
  %v4067 = vadd.f32 %v1121, %v4066
  %4068 = vmatprep.mubr.f32.mxu0 0.0
  %4069 = vmatmul.mubr.f32.gmra.mrb[0].mxu0 %v1175
  %v4070 = vpop.f32.mrb[0].mxu0
  %v4071 = vadd.f32 %v1126, %v4070
  %v4072 = vpop.f32.mrb[0].mxu0
  %v4073 = vadd.f32 %v1126, %v4072
  %4074 = vdwg.mxu0
  %4075 = vmatprep.subr.mxu0 %v741
  %4076 = vmatpush1.msra.mxu0 %v740
  %4077 = vmatprep.subr.mxu0 %v782
  %4078 = vmatpush1.msra.mxu0 %v781
  %4079 = vmatprep.subr.mxu0 %v823
  %4080 = vmatpush1.msra.mxu0 %v822
  %4081 = vmatprep.subr.mxu0 %v864
  %4082 = vmatpush1.msra.mxu0 %v863
  %4083 = vmatprep.subr.mxu0 %v905
  %4084 = vmatpush1.msra.mxu0 %v904
  %4085 = vmatprep.subr.mxu0 %v946
  %4086 = vmatpush1.msra.mxu0 %v945
  %4087 = vmatprep.subr.mxu0 %v987
  %4088 = vmatpush1.msra.mxu0 %v986
  %4089 = vmatprep.subr.mxu0 %v1028
  %4090 = vmatpush1.msra.mxu0 %v1027
  %4091 = vmatprep.subr.mxu0 0.0
  %4092 = vmatpush1.msra.mxu0 0.0
  %4093 = vmatprep.subr.mxu0 0.0
  %4094 = vmatpush1.msra.mxu0 0.0
  %4095 = vmatprep.subr.mxu0 0.0
  %4096 = vmatpush1.msra.mxu0 0.0
  %4097 = vmatprep.subr.mxu0 0.0
  %4098 = vmatpush1.msra.mxu0 0.0
  %4099 = vmatprep.subr.mxu0 0.0
  %4100 = vmatpush1.msra.mxu0 0.0
  %4101 = vmatprep.subr.mxu0 0.0
  %4102 = vmatpush1.msra.mxu0 0.0
  %4103 = vmatprep.subr.mxu0 0.0
  %4104 = vmatpush1.msra.mxu0 0.0
  %4105 = vmatprep.subr.mxu0 0.0
  %4106 = vmatpush1.msra.mxu0 0.0
  %4107 = vmatprep.subr.mxu0 0.0
  %4108 = vmatpush1.msra.mxu0 0.0
  %4109 = vmatprep.subr.mxu0 0.0
  %4110 = vmatpush1.msra.mxu0 0.0
  %4111 = vmatprep.subr.mxu0 0.0
  %4112 = vmatpush1.msra.mxu0 0.0
  %4113 = vmatprep.subr.mxu0 0.0
  %4114 = vmatpush1.msra.mxu0 0.0
  %4115 = vmatprep.subr.mxu0 0.0
  %4116 = vmatpush1.msra.mxu0 0.0
  %4117 = vmatprep.subr.mxu0 0.0
  %4118 = vmatpush1.msra.mxu0 0.0
  %4119 = vmatprep.subr.mxu0 0.0
  %4120 = vmatpush1.msra.mxu0 0.0
  %4121 = vmatprep.subr.mxu0 0.0
  %4122 = vmatpush1.msra.mxu0 0.0
  %4123 = vmatprep.subr.mxu0 0.0
  %4124 = vmatpush1.msra.mxu0 0.0
  %4125 = vmatprep.subr.mxu0 0.0
  %4126 = vmatpush1.msra.mxu0 0.0
  %4127 = vmatprep.subr.mxu0 0.0
  %4128 = vmatpush1.msra.mxu0 0.0
  %4129 = vmatprep.subr.mxu0 0.0
  %4130 = vmatpush1.msra.mxu0 0.0
  %4131 = vmatprep.subr.mxu0 0.0
  %4132 = vmatpush1.msra.mxu0 0.0
  %4133 = vmatprep.subr.mxu0 0.0
  %4134 = vmatpush1.msra.mxu0 0.0
  %4135 = vmatprep.subr.mxu0 0.0
  %4136 = vmatpush1.msra.mxu0 0.0
  %4137 = vmatprep.subr.mxu0 0.0
  %4138 = vmatpush1.msra.mxu0 0.0
  %4139 = vmatprep.mubr.f32.mxu0 0.0
  %4140 = vmatmul.mubr.f32.gmra.mrb[0].mxu0 %v1130
  %v4141 = vpop.f32.mrb[0].mxu0
  %v4142 = vadd.f32 %v1051, %v4141
  %v4143 = vpop.f32.mrb[0].mxu0
  %v4144 = vadd.f32 %v1051, %v4143
  %4145 = vmatprep.mubr.f32.mxu0 0.0
  %4146 = vmatmul.mubr.f32.gmra.mrb[0].mxu0 %v1133
  %v4147 = vpop.f32.mrb[0].mxu0
  %v4148 = vadd.f32 %v1056, %v4147
  %v4149 = vpop.f32.mrb[0].mxu0
  %v4150 = vadd.f32 %v1056, %v4149
  %4151 = vmatprep.mubr.f32.mxu0 0.0
  %4152 = vmatmul.mubr.f32.gmra.mrb[0].mxu0 %v1136
  %v4153 = vpop.f32.mrb[0].mxu0
  %v4154 = vadd.f32 %v1061, %v4153
  %v4155 = vpop.f32.mrb[0].mxu0
  %v4156 = vadd.f32 %v1061, %v4155
  %4157 = vmatprep.mubr.f32.mxu0 0.0
  %4158 = vmatmul.mubr.f32.gmra.mrb[0].mxu0 %v1139
  %v4159 = vpop.f32.mrb[0].mxu0
  %v4160 = vadd.f32 %v1066, %v4159
  %v4161 = vpop.f32.mrb[0].mxu0
  %v4162 = vadd.f32 %v1066, %v4161
  %4163 = vmatprep.mubr.f32.mxu0 0.0
  %4164 = vmatmul.mubr.f32.gmra.mrb[0].mxu0 %v1142
  %v4165 = vpop.f32.mrb[0].mxu0
  %v4166 = vadd.f32 %v1071, %v4165
  %v4167 = vpop.f32.mrb[0].mxu0
  %v4168 = vadd.f32 %v1071, %v4167
  %4169 = vmatprep.mubr.f32.mxu0 0.0
  %4170 = vmatmul.mubr.f32.gmra.mrb[0].mxu0 %v1145
  %v4171 = vpop.f32.mrb[0].mxu0
  %v4172 = vadd.f32 %v1076, %v4171
  %v4173 = vpop.f32.mrb[0].mxu0
  %v4174 = vadd.f32 %v1076, %v4173
  %4175 = vmatprep.mubr.f32.mxu0 0.0
  %4176 = vmatmul.mubr.f32.gmra.mrb[0].mxu0 %v1148
  %v4177 = vpop.f32.mrb[0].mxu0
  %v4178 = vadd.f32 %v1081, %v4177
  %v4179 = vpop.f32.mrb[0].mxu0
  %v4180 = vadd.f32 %v1081, %v4179
  %4181 = vmatprep.mubr.f32.mxu0 0.0
  %4182 = vmatmul.mubr.f32.gmra.mrb[0].mxu0 %v1151
  %v4183 = vpop.f32.mrb[0].mxu0
  %v4184 = vadd.f32 %v1086, %v4183
  %v4185 = vpop.f32.mrb[0].mxu0
  %v4186 = vadd.f32 %v1086, %v4185
  %4187 = vmatprep.mubr.f32.mxu0 0.0
  %4188 = vmatmul.mubr.f32.gmra.mrb[0].mxu0 %v1154
  %v4189 = vpop.f32.mrb[0].mxu0
  %v4190 = vadd.f32 %v1091, %v4189
  %v4191 = vpop.f32.mrb[0].mxu0
  %v4192 = vadd.f32 %v1091, %v4191
  %4193 = vmatprep.mubr.f32.mxu0 0.0
  %4194 = vmatmul.mubr.f32.gmra.mrb[0].mxu0 %v1157
  %v4195 = vpop.f32.mrb[0].mxu0
  %v4196 = vadd.f32 %v1096, %v4195
  %v4197 = vpop.f32.mrb[0].mxu0
  %v4198 = vadd.f32 %v1096, %v4197
  %4199 = vmatprep.mubr.f32.mxu0 0.0
  %4200 = vmatmul.mubr.f32.gmra.mrb[0].mxu0 %v1160
  %v4201 = vpop.f32.mrb[0].mxu0
  %v4202 = vadd.f32 %v1101, %v4201
  %v4203 = vpop.f32.mrb[0].mxu0
  %v4204 = vadd.f32 %v1101, %v4203
  %4205 = vmatprep.mubr.f32.mxu0 0.0
  %4206 = vmatmul.mubr.f32.gmra.mrb[0].mxu0 %v1163
  %v4207 = vpop.f32.mrb[0].mxu0
  %v4208 = vadd.f32 %v1106, %v4207
  %v4209 = vpop.f32.mrb[0].mxu0
  %v4210 = vadd.f32 %v1106, %v4209
  %4211 = vmatprep.mubr.f32.mxu0 0.0
  %4212 = vmatmul.mubr.f32.gmra.mrb[0].mxu0 %v1166
  %v4213 = vpop.f32.mrb[0].mxu0
  %v4214 = vadd.f32 %v1111, %v4213
  %v4215 = vpop.f32.mrb[0].mxu0
  %v4216 = vadd.f32 %v1111, %v4215
  %4217 = vmatprep.mubr.f32.mxu0 0.0
  %4218 = vmatmul.mubr.f32.gmra.mrb[0].mxu0 %v1169
  %v4219 = vpop.f32.mrb[0].mxu0
  %v4220 = vadd.f32 %v1116, %v4219
  %v4221 = vpop.f32.mrb[0].mxu0
  %v4222 = vadd.f32 %v1116, %v4221
  %4223 = vmatprep.mubr.f32.mxu0 0.0
  %4224 = vmatmul.mubr.f32.gmra.mrb[0].mxu0 %v1172
  %v4225 = vpop.f32.mrb[0].mxu0
  %v4226 = vadd.f32 %v1121, %v4225
  %v4227 = vpop.f32.mrb[0].mxu0
  %v4228 = vadd.f32 %v1121, %v4227
  %4229 = vmatprep.mubr.f32.mxu0 0.0
  %4230 = vmatmul.mubr.f32.gmra.mrb[0].mxu0 %v1175
  %v4231 = vpop.f32.mrb[0].mxu0
  %v4232 = vadd.f32 %v1126, %v4231
  %v4233 = vpop.f32.mrb[0].mxu0
  %v4234 = vadd.f32 %v1126, %v4233
  %4235 = vdwg.mxu0
  %4236 = vmatprep.subr.mxu0 %v743
  %4237 = vmatpush1.msra.mxu0 %v742
  %4238 = vmatprep.subr.mxu0 %v784
  %4239 = vmatpush1.msra.mxu0 %v783
  %4240 = vmatprep.subr.mxu0 %v825
  %4241 = vmatpush1.msra.mxu0 %v824
  %4242 = vmatprep.subr.mxu0 %v866
  %4243 = vmatpush1.msra.mxu0 %v865
  %4244 = vmatprep.subr.mxu0 %v907
  %4245 = vmatpush1.msra.mxu0 %v906
  %4246 = vmatprep.subr.mxu0 %v948
  %4247 = vmatpush1.msra.mxu0 %v947
  %4248 = vmatprep.subr.mxu0 %v989
  %4249 = vmatpush1.msra.mxu0 %v988
  %4250 = vmatprep.subr.mxu0 %v1030
  %4251 = vmatpush1.msra.mxu0 %v1029
  %4252 = vmatprep.subr.mxu0 0.0
  %4253 = vmatpush1.msra.mxu0 0.0
  %4254 = vmatprep.subr.mxu0 0.0
  %4255 = vmatpush1.msra.mxu0 0.0
  %4256 = vmatprep.subr.mxu0 0.0
  %4257 = vmatpush1.msra.mxu0 0.0
  %4258 = vmatprep.subr.mxu0 0.0
  %4259 = vmatpush1.msra.mxu0 0.0
  %4260 = vmatprep.subr.mxu0 0.0
  %4261 = vmatpush1.msra.mxu0 0.0
  %4262 = vmatprep.subr.mxu0 0.0
  %4263 = vmatpush1.msra.mxu0 0.0
  %4264 = vmatprep.subr.mxu0 0.0
  %4265 = vmatpush1.msra.mxu0 0.0
  %4266 = vmatprep.subr.mxu0 0.0
  %4267 = vmatpush1.msra.mxu0 0.0
  %4268 = vmatprep.subr.mxu0 0.0
  %4269 = vmatpush1.msra.mxu0 0.0
  %4270 = vmatprep.subr.mxu0 0.0
  %4271 = vmatpush1.msra.mxu0 0.0
  %4272 = vmatprep.subr.mxu0 0.0
  %4273 = vmatpush1.msra.mxu0 0.0
  %4274 = vmatprep.subr.mxu0 0.0
  %4275 = vmatpush1.msra.mxu0 0.0
  %4276 = vmatprep.subr.mxu0 0.0
  %4277 = vmatpush1.msra.mxu0 0.0
  %4278 = vmatprep.subr.mxu0 0.0
  %4279 = vmatpush1.msra.mxu0 0.0
  %4280 = vmatprep.subr.mxu0 0.0
  %4281 = vmatpush1.msra.mxu0 0.0
  %4282 = vmatprep.subr.mxu0 0.0
  %4283 = vmatpush1.msra.mxu0 0.0
  %4284 = vmatprep.subr.mxu0 0.0
  %4285 = vmatpush1.msra.mxu0 0.0
  %4286 = vmatprep.subr.mxu0 0.0
  %4287 = vmatpush1.msra.mxu0 0.0
  %4288 = vmatprep.subr.mxu0 0.0
  %4289 = vmatpush1.msra.mxu0 0.0
  %4290 = vmatprep.subr.mxu0 0.0
  %4291 = vmatpush1.msra.mxu0 0.0
  %4292 = vmatprep.subr.mxu0 0.0
  %4293 = vmatpush1.msra.mxu0 0.0
  %4294 = vmatprep.subr.mxu0 0.0
  %4295 = vmatpush1.msra.mxu0 0.0
  %4296 = vmatprep.subr.mxu0 0.0
  %4297 = vmatpush1.msra.mxu0 0.0
  %4298 = vmatprep.subr.mxu0 0.0
  %4299 = vmatpush1.msra.mxu0 0.0
  %4300 = vmatprep.mubr.f32.mxu0 0.0
  %4301 = vmatmul.mubr.f32.gmra.mrb[0].mxu0 %v1130
  %v4302 = vpop.f32.mrb[0].mxu0
  %v4303 = vadd.f32 %v1051, %v4302
  %v4304 = vpop.f32.mrb[0].mxu0
  %v4305 = vadd.f32 %v1051, %v4304
  %4306 = vmatprep.mubr.f32.mxu0 0.0
  %4307 = vmatmul.mubr.f32.gmra.mrb[0].mxu0 %v1133
  %v4308 = vpop.f32.mrb[0].mxu0
  %v4309 = vadd.f32 %v1056, %v4308
  %v4310 = vpop.f32.mrb[0].mxu0
  %v4311 = vadd.f32 %v1056, %v4310
  %4312 = vmatprep.mubr.f32.mxu0 0.0
  %4313 = vmatmul.mubr.f32.gmra.mrb[0].mxu0 %v1136
  %v4314 = vpop.f32.mrb[0].mxu0
  %v4315 = vadd.f32 %v1061, %v4314
  %v4316 = vpop.f32.mrb[0].mxu0
  %v4317 = vadd.f32 %v1061, %v4316
  %4318 = vmatprep.mubr.f32.mxu0 0.0
  %4319 = vmatmul.mubr.f32.gmra.mrb[0].mxu0 %v1139
  %v4320 = vpop.f32.mrb[0].mxu0
  %v4321 = vadd.f32 %v1066, %v4320
  %v4322 = vpop.f32.mrb[0].mxu0
  %v4323 = vadd.f32 %v1066, %v4322
  %4324 = vmatprep.mubr.f32.mxu0 0.0
  %4325 = vmatmul.mubr.f32.gmra.mrb[0].mxu0 %v1142
  %v4326 = vpop.f32.mrb[0].mxu0
  %v4327 = vadd.f32 %v1071, %v4326
  %v4328 = vpop.f32.mrb[0].mxu0
  %v4329 = vadd.f32 %v1071, %v4328
  %4330 = vmatprep.mubr.f32.mxu0 0.0
  %4331 = vmatmul.mubr.f32.gmra.mrb[0].mxu0 %v1145
  %v4332 = vpop.f32.mrb[0].mxu0
  %v4333 = vadd.f32 %v1076, %v4332
  %v4334 = vpop.f32.mrb[0].mxu0
  %v4335 = vadd.f32 %v1076, %v4334
  %4336 = vmatprep.mubr.f32.mxu0 0.0
  %4337 = vmatmul.mubr.f32.gmra.mrb[0].mxu0 %v1148
  %v4338 = vpop.f32.mrb[0].mxu0
  %v4339 = vadd.f32 %v1081, %v4338
  %v4340 = vpop.f32.mrb[0].mxu0
  %v4341 = vadd.f32 %v1081, %v4340
  %4342 = vmatprep.mubr.f32.mxu0 0.0
  %4343 = vmatmul.mubr.f32.gmra.mrb[0].mxu0 %v1151
  %v4344 = vpop.f32.mrb[0].mxu0
  %v4345 = vadd.f32 %v1086, %v4344
  %v4346 = vpop.f32.mrb[0].mxu0
  %v4347 = vadd.f32 %v1086, %v4346
  %4348 = vmatprep.mubr.f32.mxu0 0.0
  %4349 = vmatmul.mubr.f32.gmra.mrb[0].mxu0 %v1154
  %v4350 = vpop.f32.mrb[0].mxu0
  %v4351 = vadd.f32 %v1091, %v4350
  %v4352 = vpop.f32.mrb[0].mxu0
  %v4353 = vadd.f32 %v1091, %v4352
  %4354 = vmatprep.mubr.f32.mxu0 0.0
  %4355 = vmatmul.mubr.f32.gmra.mrb[0].mxu0 %v1157
  %v4356 = vpop.f32.mrb[0].mxu0
  %v4357 = vadd.f32 %v1096, %v4356
  %v4358 = vpop.f32.mrb[0].mxu0
  %v4359 = vadd.f32 %v1096, %v4358
  %4360 = vmatprep.mubr.f32.mxu0 0.0
  %4361 = vmatmul.mubr.f32.gmra.mrb[0].mxu0 %v1160
  %v4362 = vpop.f32.mrb[0].mxu0
  %v4363 = vadd.f32 %v1101, %v4362
  %v4364 = vpop.f32.mrb[0].mxu0
  %v4365 = vadd.f32 %v1101, %v4364
  %4366 = vmatprep.mubr.f32.mxu0 0.0
  %4367 = vmatmul.mubr.f32.gmra.mrb[0].mxu0 %v1163
  %v4368 = vpop.f32.mrb[0].mxu0
  %v4369 = vadd.f32 %v1106, %v4368
  %v4370 = vpop.f32.mrb[0].mxu0
  %v4371 = vadd.f32 %v1106, %v4370
  %4372 = vmatprep.mubr.f32.mxu0 0.0
  %4373 = vmatmul.mubr.f32.gmra.mrb[0].mxu0 %v1166
  %v4374 = vpop.f32.mrb[0].mxu0
  %v4375 = vadd.f32 %v1111, %v4374
  %v4376 = vpop.f32.mrb[0].mxu0
  %v4377 = vadd.f32 %v1111, %v4376
  %4378 = vmatprep.mubr.f32.mxu0 0.0
  %4379 = vmatmul.mubr.f32.gmra.mrb[0].mxu0 %v1169
  %v4380 = vpop.f32.mrb[0].mxu0
  %v4381 = vadd.f32 %v1116, %v4380
  %v4382 = vpop.f32.mrb[0].mxu0
  %v4383 = vadd.f32 %v1116, %v4382
  %4384 = vmatprep.mubr.f32.mxu0 0.0
  %4385 = vmatmul.mubr.f32.gmra.mrb[0].mxu0 %v1172
  %v4386 = vpop.f32.mrb[0].mxu0
  %v4387 = vadd.f32 %v1121, %v4386
  %v4388 = vpop.f32.mrb[0].mxu0
  %v4389 = vadd.f32 %v1121, %v4388
  %4390 = vmatprep.mubr.f32.mxu0 0.0
  %4391 = vmatmul.mubr.f32.gmra.mrb[0].mxu0 %v1175
  %v4392 = vpop.f32.mrb[0].mxu0
  %v4393 = vadd.f32 %v1126, %v4392
  %v4394 = vpop.f32.mrb[0].mxu0
  %v4395 = vadd.f32 %v1126, %v4394
  %4396 = vdwg.mxu0
  %4397 = vmatprep.subr.mxu0 0.0
  %4398 = vmatpush1.msra.mxu0 %v744
  %4399 = vmatprep.subr.mxu0 0.0
  %4400 = vmatpush1.msra.mxu0 %v785
  %4401 = vmatprep.subr.mxu0 0.0
  %4402 = vmatpush1.msra.mxu0 %v826
  %4403 = vmatprep.subr.mxu0 0.0
  %4404 = vmatpush1.msra.mxu0 %v867
  %4405 = vmatprep.subr.mxu0 0.0
  %4406 = vmatpush1.msra.mxu0 %v908
  %4407 = vmatprep.subr.mxu0 0.0
  %4408 = vmatpush1.msra.mxu0 %v949
  %4409 = vmatprep.subr.mxu0 0.0
  %4410 = vmatpush1.msra.mxu0 %v990
  %4411 = vmatprep.subr.mxu0 0.0
  %4412 = vmatpush1.msra.mxu0 %v1031
  %4413 = vmatprep.subr.mxu0 0.0
  %4414 = vmatpush1.msra.mxu0 0.0
  %4415 = vmatprep.subr.mxu0 0.0
  %4416 = vmatpush1.msra.mxu0 0.0
  %4417 = vmatprep.subr.mxu0 0.0
  %4418 = vmatpush1.msra.mxu0 0.0
  %4419 = vmatprep.subr.mxu0 0.0
  %4420 = vmatpush1.msra.mxu0 0.0
  %4421 = vmatprep.subr.mxu0 0.0
  %4422 = vmatpush1.msra.mxu0 0.0
  %4423 = vmatprep.subr.mxu0 0.0
  %4424 = vmatpush1.msra.mxu0 0.0
  %4425 = vmatprep.subr.mxu0 0.0
  %4426 = vmatpush1.msra.mxu0 0.0
  %4427 = vmatprep.subr.mxu0 0.0
  %4428 = vmatpush1.msra.mxu0 0.0
  %4429 = vmatprep.subr.mxu0 0.0
  %4430 = vmatpush1.msra.mxu0 0.0
  %4431 = vmatprep.subr.mxu0 0.0
  %4432 = vmatpush1.msra.mxu0 0.0
  %4433 = vmatprep.subr.mxu0 0.0
  %4434 = vmatpush1.msra.mxu0 0.0
  %4435 = vmatprep.subr.mxu0 0.0
  %4436 = vmatpush1.msra.mxu0 0.0
  %4437 = vmatprep.subr.mxu0 0.0
  %4438 = vmatpush1.msra.mxu0 0.0
  %4439 = vmatprep.subr.mxu0 0.0
  %4440 = vmatpush1.msra.mxu0 0.0
  %4441 = vmatprep.subr.mxu0 0.0
  %4442 = vmatpush1.msra.mxu0 0.0
  %4443 = vmatprep.subr.mxu0 0.0
  %4444 = vmatpush1.msra.mxu0 0.0
  %4445 = vmatprep.subr.mxu0 0.0
  %4446 = vmatpush1.msra.mxu0 0.0
  %4447 = vmatprep.subr.mxu0 0.0
  %4448 = vmatpush1.msra.mxu0 0.0
  %4449 = vmatprep.subr.mxu0 0.0
  %4450 = vmatpush1.msra.mxu0 0.0
  %4451 = vmatprep.subr.mxu0 0.0
  %4452 = vmatpush1.msra.mxu0 0.0
  %4453 = vmatprep.subr.mxu0 0.0
  %4454 = vmatpush1.msra.mxu0 0.0
  %4455 = vmatprep.subr.mxu0 0.0
  %4456 = vmatpush1.msra.mxu0 0.0
  %4457 = vmatprep.subr.mxu0 0.0
  %4458 = vmatpush1.msra.mxu0 0.0
  %4459 = vmatprep.subr.mxu0 0.0
  %4460 = vmatpush1.msra.mxu0 0.0
  %4461 = vmatprep.mubr.f32.mxu0 0.0
  %4462 = vmatmul.mubr.f32.gmra.mrb[0].mxu0 %v1130
  %v4463 = vpop.f32.mrb[0].mxu0
  %v4464 = vadd.f32 %v1051, %v4463
  %v4465 = vpop.f32.mrb[0].mxu0
  %4466 = vmatprep.mubr.f32.mxu0 0.0
  %4467 = vmatmul.mubr.f32.gmra.mrb[0].mxu0 %v1133
  %v4468 = vpop.f32.mrb[0].mxu0
  %v4469 = vadd.f32 %v1056, %v4468
  %v4470 = vpop.f32.mrb[0].mxu0
  %4471 = vmatprep.mubr.f32.mxu0 0.0
  %4472 = vmatmul.mubr.f32.gmra.mrb[0].mxu0 %v1136
  %v4473 = vpop.f32.mrb[0].mxu0
  %v4474 = vadd.f32 %v1061, %v4473
  %v4475 = vpop.f32.mrb[0].mxu0
  %4476 = vmatprep.mubr.f32.mxu0 0.0
  %4477 = vmatmul.mubr.f32.gmra.mrb[0].mxu0 %v1139
  %v4478 = vpop.f32.mrb[0].mxu0
  %v4479 = vadd.f32 %v1066, %v4478
  %v4480 = vpop.f32.mrb[0].mxu0
  %4481 = vmatprep.mubr.f32.mxu0 0.0
  %4482 = vmatmul.mubr.f32.gmra.mrb[0].mxu0 %v1142
  %v4483 = vpop.f32.mrb[0].mxu0
  %v4484 = vadd.f32 %v1071, %v4483
  %v4485 = vpop.f32.mrb[0].mxu0
  %4486 = vmatprep.mubr.f32.mxu0 0.0
  %4487 = vmatmul.mubr.f32.gmra.mrb[0].mxu0 %v1145
  %v4488 = vpop.f32.mrb[0].mxu0
  %v4489 = vadd.f32 %v1076, %v4488
  %v4490 = vpop.f32.mrb[0].mxu0
  %4491 = vmatprep.mubr.f32.mxu0 0.0
  %4492 = vmatmul.mubr.f32.gmra.mrb[0].mxu0 %v1148
  %v4493 = vpop.f32.mrb[0].mxu0
  %v4494 = vadd.f32 %v1081, %v4493
  %v4495 = vpop.f32.mrb[0].mxu0
  %4496 = vmatprep.mubr.f32.mxu0 0.0
  %4497 = vmatmul.mubr.f32.gmra.mrb[0].mxu0 %v1151
  %v4498 = vpop.f32.mrb[0].mxu0
  %v4499 = vadd.f32 %v1086, %v4498
  %v4500 = vpop.f32.mrb[0].mxu0
  %4501 = vmatprep.mubr.f32.mxu0 0.0
  %4502 = vmatmul.mubr.f32.gmra.mrb[0].mxu0 %v1154
  %v4503 = vpop.f32.mrb[0].mxu0
  %v4504 = vadd.f32 %v1091, %v4503
  %v4505 = vpop.f32.mrb[0].mxu0
  %4506 = vmatprep.mubr.f32.mxu0 0.0
  %4507 = vmatmul.mubr.f32.gmra.mrb[0].mxu0 %v1157
  %v4508 = vpop.f32.mrb[0].mxu0
  %v4509 = vadd.f32 %v1096, %v4508
  %v4510 = vpop.f32.mrb[0].mxu0
  %4511 = vmatprep.mubr.f32.mxu0 0.0
  %4512 = vmatmul.mubr.f32.gmra.mrb[0].mxu0 %v1160
  %v4513 = vpop.f32.mrb[0].mxu0
  %v4514 = vadd.f32 %v1101, %v4513
  %v4515 = vpop.f32.mrb[0].mxu0
  %4516 = vmatprep.mubr.f32.mxu0 0.0
  %4517 = vmatmul.mubr.f32.gmra.mrb[0].mxu0 %v1163
  %v4518 = vpop.f32.mrb[0].mxu0
  %v4519 = vadd.f32 %v1106, %v4518
  %v4520 = vpop.f32.mrb[0].mxu0
  %4521 = vmatprep.mubr.f32.mxu0 0.0
  %4522 = vmatmul.mubr.f32.gmra.mrb[0].mxu0 %v1166
  %v4523 = vpop.f32.mrb[0].mxu0
  %v4524 = vadd.f32 %v1111, %v4523
  %v4525 = vpop.f32.mrb[0].mxu0
  %4526 = vmatprep.mubr.f32.mxu0 0.0
  %4527 = vmatmul.mubr.f32.gmra.mrb[0].mxu0 %v1169
  %v4528 = vpop.f32.mrb[0].mxu0
  %v4529 = vadd.f32 %v1116, %v4528
  %v4530 = vpop.f32.mrb[0].mxu0
  %4531 = vmatprep.mubr.f32.mxu0 0.0
  %4532 = vmatmul.mubr.f32.gmra.mrb[0].mxu0 %v1172
  %v4533 = vpop.f32.mrb[0].mxu0
  %v4534 = vadd.f32 %v1121, %v4533
  %v4535 = vpop.f32.mrb[0].mxu0
  %4536 = vmatprep.mubr.f32.mxu0 0.0
  %4537 = vmatmul.mubr.f32.gmra.mrb[0].mxu0 %v1175
  %v4538 = vpop.f32.mrb[0].mxu0
  %v4539 = vadd.f32 %v1126, %v4538
  %v4540 = vpop.f32.mrb[0].mxu0
  %4541 = vdwg.mxu0
  %v4542 = vmax.f32 %v1244, 0.0
  %v4543 = vmax.f32 %v1246, 0.0
  %v4544 = vmax.f32 %v1405, 0.0
  %v4545 = vmax.f32 %v1407, 0.0
  %v4546 = vmax.f32 %v1566, 0.0
  %v4547 = vmax.f32 %v1568, 0.0
  %v4548 = vmax.f32 %v1727, 0.0
  %v4549 = vmax.f32 %v1729, 0.0
  %v4550 = vmax.f32 %v1888, 0.0
  %v4551 = vmax.f32 %v1890, 0.0
  %v4552 = vmax.f32 %v2049, 0.0
  %v4553 = vmax.f32 %v2051, 0.0
  %v4554 = vmax.f32 %v2210, 0.0
  %v4555 = vmax.f32 %v2212, 0.0
  %v4556 = vmax.f32 %v2371, 0.0
  %v4557 = vmax.f32 %v2373, 0.0
  %v4558 = vmax.f32 %v2532, 0.0
  %v4559 = vmax.f32 %v2534, 0.0
  %v4560 = vmax.f32 %v2693, 0.0
  %v4561 = vmax.f32 %v2695, 0.0
  %v4562 = vmax.f32 %v2854, 0.0
  %v4563 = vmax.f32 %v2856, 0.0
  %v4564 = vmax.f32 %v3015, 0.0
  %v4565 = vmax.f32 %v3017, 0.0
  %v4566 = vmax.f32 %v3176, 0.0
  %v4567 = vmax.f32 %v3178, 0.0
  %v4568 = vmax.f32 %v3337, 0.0
  %v4569 = vmax.f32 %v3339, 0.0
  %v4570 = vmax.f32 %v3498, 0.0
  %v4571 = vmax.f32 %v3500, 0.0
  %v4572 = vmax.f32 %v3659, 0.0
  %v4573 = vmax.f32 %v3661, 0.0
  %v4574 = vmax.f32 %v3820, 0.0
  %v4575 = vmax.f32 %v3822, 0.0
  %v4576 = vmax.f32 %v3981, 0.0
  %v4577 = vmax.f32 %v3983, 0.0
  %v4578 = vmax.f32 %v4142, 0.0
  %v4579 = vmax.f32 %v4144, 0.0
  %v4580 = vmax.f32 %v4303, 0.0
  %v4581 = vmax.f32 %v4305, 0.0
  %v4582 = vmax.f32 %v4464, 0.0
  %v4583 = vmax.f32 %v1250, 0.0
  %v4584 = vmax.f32 %v1252, 0.0
  %v4585 = vmax.f32 %v1411, 0.0
  %v4586 = vmax.f32 %v1413, 0.0
  %v4587 = vmax.f32 %v1572, 0.0
  %v4588 = vmax.f32 %v1574, 0.0
  %v4589 = vmax.f32 %v1733, 0.0
  %v4590 = vmax.f32 %v1735, 0.0
  %v4591 = vmax.f32 %v1894, 0.0
  %v4592 = vmax.f32 %v1896, 0.0
  %v4593 = vmax.f32 %v2055, 0.0
  %v4594 = vmax.f32 %v2057, 0.0
  %v4595 = vmax.f32 %v2216, 0.0
  %v4596 = vmax.f32 %v2218, 0.0
  %v4597 = vmax.f32 %v2377, 0.0
  %v4598 = vmax.f32 %v2379, 0.0
  %v4599 = vmax.f32 %v2538, 0.0
  %v4600 = vmax.f32 %v2540, 0.0
  %v4601 = vmax.f32 %v2699, 0.0
  %v4602 = vmax.f32 %v2701, 0.0
  %v4603 = vmax.f32 %v2860, 0.0
  %v4604 = vmax.f32 %v2862, 0.0
  %v4605 = vmax.f32 %v3021, 0.0
  %v4606 = vmax.f32 %v3023, 0.0
  %v4607 = vmax.f32 %v3182, 0.0
  %v4608 = vmax.f32 %v3184, 0.0
  %v4609 = vmax.f32 %v3343, 0.0
  %v4610 = vmax.f32 %v3345, 0.0
  %v4611 = vmax.f32 %v3504, 0.0
  %v4612 = vmax.f32 %v3506, 0.0
  %v4613 = vmax.f32 %v3665, 0.0
  %v4614 = vmax.f32 %v3667, 0.0
  %v4615 = vmax.f32 %v3826, 0.0
  %v4616 = vmax.f32 %v3828, 0.0
  %v4617 = vmax.f32 %v3987, 0.0
  %v4618 = vmax.f32 %v3989, 0.0
  %v4619 = vmax.f32 %v4148, 0.0
  %v4620 = vmax.f32 %v4150, 0.0
  %v4621 = vmax.f32 %v4309, 0.0
  %v4622 = vmax.f32 %v4311, 0.0
  %v4623 = vmax.f32 %v4469, 0.0
  %v4624 = vmax.f32 %v1256, 0.0
  %v4625 = vmax.f32 %v1258, 0.0
  %v4626 = vmax.f32 %v1417, 0.0
  %v4627 = vmax.f32 %v1419, 0.0
  %v4628 = vmax.f32 %v1578, 0.0
  %v4629 = vmax.f32 %v1580, 0.0
  %v4630 = vmax.f32 %v1739, 0.0
  %v4631 = vmax.f32 %v1741, 0.0
  %v4632 = vmax.f32 %v1900, 0.0
  %v4633 = vmax.f32 %v1902, 0.0
  %v4634 = vmax.f32 %v2061, 0.0
  %v4635 = vmax.f32 %v2063, 0.0
  %v4636 = vmax.f32 %v2222, 0.0
  %v4637 = vmax.f32 %v2224, 0.0
  %v4638 = vmax.f32 %v2383, 0.0
  %v4639 = vmax.f32 %v2385, 0.0
  %v4640 = vmax.f32 %v2544, 0.0
  %v4641 = vmax.f32 %v2546, 0.0
  %v4642 = vmax.f32 %v2705, 0.0
  %v4643 = vmax.f32 %v2707, 0.0
  %v4644 = vmax.f32 %v2866, 0.0
  %v4645 = vmax.f32 %v2868, 0.0
  %v4646 = vmax.f32 %v3027, 0.0
  %v4647 = vmax.f32 %v3029, 0.0
  %v4648 = vmax.f32 %v3188, 0.0
  %v4649 = vmax.f32 %v3190, 0.0
  %v4650 = vmax.f32 %v3349, 0.0
  %v4651 = vmax.f32 %v3351, 0.0
  %v4652 = vmax.f32 %v3510, 0.0
  %v4653 = vmax.f32 %v3512, 0.0
  %v4654 = vmax.f32 %v3671, 0.0
  %v4655 = vmax.f32 %v3673, 0.0
  %v4656 = vmax.f32 %v3832, 0.0
  %v4657 = vmax.f32 %v3834, 0.0
  %v4658 = vmax.f32 %v3993, 0.0
  %v4659 = vmax.f32 %v3995, 0.0
  %v4660 = vmax.f32 %v4154, 0.0
  %v4661 = vmax.f32 %v4156, 0.0
  %v4662 = vmax.f32 %v4315, 0.0
  %v4663 = vmax.f32 %v4317, 0.0
  %v4664 = vmax.f32 %v4474, 0.0
  %v4665 = vmax.f32 %v1262, 0.0
  %v4666 = vmax.f32 %v1264, 0.0
  %v4667 = vmax.f32 %v1423, 0.0
  %v4668 = vmax.f32 %v1425, 0.0
  %v4669 = vmax.f32 %v1584, 0.0
  %v4670 = vmax.f32 %v1586, 0.0
  %v4671 = vmax.f32 %v1745, 0.0
  %v4672 = vmax.f32 %v1747, 0.0
  %v4673 = vmax.f32 %v1906, 0.0
  %v4674 = vmax.f32 %v1908, 0.0
  %v4675 = vmax.f32 %v2067, 0.0
  %v4676 = vmax.f32 %v2069, 0.0
  %v4677 = vmax.f32 %v2228, 0.0
  %v4678 = vmax.f32 %v2230, 0.0
  %v4679 = vmax.f32 %v2389, 0.0
  %v4680 = vmax.f32 %v2391, 0.0
  %v4681 = vmax.f32 %v2550, 0.0
  %v4682 = vmax.f32 %v2552, 0.0
  %v4683 = vmax.f32 %v2711, 0.0
  %v4684 = vmax.f32 %v2713, 0.0
  %v4685 = vmax.f32 %v2872, 0.0
  %v4686 = vmax.f32 %v2874, 0.0
  %v4687 = vmax.f32 %v3033, 0.0
  %v4688 = vmax.f32 %v3035, 0.0
  %v4689 = vmax.f32 %v3194, 0.0
  %v4690 = vmax.f32 %v3196, 0.0
  %v4691 = vmax.f32 %v3355, 0.0
  %v4692 = vmax.f32 %v3357, 0.0
  %v4693 = vmax.f32 %v3516, 0.0
  %v4694 = vmax.f32 %v3518, 0.0
  %v4695 = vmax.f32 %v3677, 0.0
  %v4696 = vmax.f32 %v3679, 0.0
  %v4697 = vmax.f32 %v3838, 0.0
  %v4698 = vmax.f32 %v3840, 0.0
  %v4699 = vmax.f32 %v3999, 0.0
  %v4700 = vmax.f32 %v4001, 0.0
  %v4701 = vmax.f32 %v4160, 0.0
  %v4702 = vmax.f32 %v4162, 0.0
  %v4703 = vmax.f32 %v4321, 0.0
  %v4704 = vmax.f32 %v4323, 0.0
  %v4705 = vmax.f32 %v4479, 0.0
  %v4706 = vmax.f32 %v1268, 0.0
  %v4707 = vmax.f32 %v1270, 0.0
  %v4708 = vmax.f32 %v1429, 0.0
  %v4709 = vmax.f32 %v1431, 0.0
  %v4710 = vmax.f32 %v1590, 0.0
  %v4711 = vmax.f32 %v1592, 0.0
  %v4712 = vmax.f32 %v1751, 0.0
  %v4713 = vmax.f32 %v1753, 0.0
  %v4714 = vmax.f32 %v1912, 0.0
  %v4715 = vmax.f32 %v1914, 0.0
  %v4716 = vmax.f32 %v2073, 0.0
  %v4717 = vmax.f32 %v2075, 0.0
  %v4718 = vmax.f32 %v2234, 0.0
  %v4719 = vmax.f32 %v2236, 0.0
  %v4720 = vmax.f32 %v2395, 0.0
  %v4721 = vmax.f32 %v2397, 0.0
  %v4722 = vmax.f32 %v2556, 0.0
  %v4723 = vmax.f32 %v2558, 0.0
  %v4724 = vmax.f32 %v2717, 0.0
  %v4725 = vmax.f32 %v2719, 0.0
  %v4726 = vmax.f32 %v2878, 0.0
  %v4727 = vmax.f32 %v2880, 0.0
  %v4728 = vmax.f32 %v3039, 0.0
  %v4729 = vmax.f32 %v3041, 0.0
  %v4730 = vmax.f32 %v3200, 0.0
  %v4731 = vmax.f32 %v3202, 0.0
  %v4732 = vmax.f32 %v3361, 0.0
  %v4733 = vmax.f32 %v3363, 0.0
  %v4734 = vmax.f32 %v3522, 0.0
  %v4735 = vmax.f32 %v3524, 0.0
  %v4736 = vmax.f32 %v3683, 0.0
  %v4737 = vmax.f32 %v3685, 0.0
  %v4738 = vmax.f32 %v3844, 0.0
  %v4739 = vmax.f32 %v3846, 0.0
  %v4740 = vmax.f32 %v4005, 0.0
  %v4741 = vmax.f32 %v4007, 0.0
  %v4742 = vmax.f32 %v4166, 0.0
  %v4743 = vmax.f32 %v4168, 0.0
  %v4744 = vmax.f32 %v4327, 0.0
  %v4745 = vmax.f32 %v4329, 0.0
  %v4746 = vmax.f32 %v4484, 0.0
  %v4747 = vmax.f32 %v1274, 0.0
  %v4748 = vmax.f32 %v1276, 0.0
  %v4749 = vmax.f32 %v1435, 0.0
  %v4750 = vmax.f32 %v1437, 0.0
  %v4751 = vmax.f32 %v1596, 0.0
  %v4752 = vmax.f32 %v1598, 0.0
  %v4753 = vmax.f32 %v1757, 0.0
  %v4754 = vmax.f32 %v1759, 0.0
  %v4755 = vmax.f32 %v1918, 0.0
  %v4756 = vmax.f32 %v1920, 0.0
  %v4757 = vmax.f32 %v2079, 0.0
  %v4758 = vmax.f32 %v2081, 0.0
  %v4759 = vmax.f32 %v2240, 0.0
  %v4760 = vmax.f32 %v2242, 0.0
  %v4761 = vmax.f32 %v2401, 0.0
  %v4762 = vmax.f32 %v2403, 0.0
  %v4763 = vmax.f32 %v2562, 0.0
  %v4764 = vmax.f32 %v2564, 0.0
  %v4765 = vmax.f32 %v2723, 0.0
  %v4766 = vmax.f32 %v2725, 0.0
  %v4767 = vmax.f32 %v2884, 0.0
  %v4768 = vmax.f32 %v2886, 0.0
  %v4769 = vmax.f32 %v3045, 0.0
  %v4770 = vmax.f32 %v3047, 0.0
  %v4771 = vmax.f32 %v3206, 0.0
  %v4772 = vmax.f32 %v3208, 0.0
  %v4773 = vmax.f32 %v3367, 0.0
  %v4774 = vmax.f32 %v3369, 0.0
  %v4775 = vmax.f32 %v3528, 0.0
  %v4776 = vmax.f32 %v3530, 0.0
  %v4777 = vmax.f32 %v3689, 0.0
  %v4778 = vmax.f32 %v3691, 0.0
  %v4779 = vmax.f32 %v3850, 0.0
  %v4780 = vmax.f32 %v3852, 0.0
  %v4781 = vmax.f32 %v4011, 0.0
  %v4782 = vmax.f32 %v4013, 0.0
  %v4783 = vmax.f32 %v4172, 0.0
  %v4784 = vmax.f32 %v4174, 0.0
  %v4785 = vmax.f32 %v4333, 0.0
  %v4786 = vmax.f32 %v4335, 0.0
  %v4787 = vmax.f32 %v4489, 0.0
  %v4788 = vmax.f32 %v1280, 0.0
  %v4789 = vmax.f32 %v1282, 0.0
  %v4790 = vmax.f32 %v1441, 0.0
  %v4791 = vmax.f32 %v1443, 0.0
  %v4792 = vmax.f32 %v1602, 0.0
  %v4793 = vmax.f32 %v1604, 0.0
  %v4794 = vmax.f32 %v1763, 0.0
  %v4795 = vmax.f32 %v1765, 0.0
  %v4796 = vmax.f32 %v1924, 0.0
  %v4797 = vmax.f32 %v1926, 0.0
  %v4798 = vmax.f32 %v2085, 0.0
  %v4799 = vmax.f32 %v2087, 0.0
  %v4800 = vmax.f32 %v2246, 0.0
  %v4801 = vmax.f32 %v2248, 0.0
  %v4802 = vmax.f32 %v2407, 0.0
  %v4803 = vmax.f32 %v2409, 0.0
  %v4804 = vmax.f32 %v2568, 0.0
  %v4805 = vmax.f32 %v2570, 0.0
  %v4806 = vmax.f32 %v2729, 0.0
  %v4807 = vmax.f32 %v2731, 0.0
  %v4808 = vmax.f32 %v2890, 0.0
  %v4809 = vmax.f32 %v2892, 0.0
  %v4810 = vmax.f32 %v3051, 0.0
  %v4811 = vmax.f32 %v3053, 0.0
  %v4812 = vmax.f32 %v3212, 0.0
  %v4813 = vmax.f32 %v3214, 0.0
  %v4814 = vmax.f32 %v3373, 0.0
  %v4815 = vmax.f32 %v3375, 0.0
  %v4816 = vmax.f32 %v3534, 0.0
  %v4817 = vmax.f32 %v3536, 0.0
  %v4818 = vmax.f32 %v3695, 0.0
  %v4819 = vmax.f32 %v3697, 0.0
  %v4820 = vmax.f32 %v3856, 0.0
  %v4821 = vmax.f32 %v3858, 0.0
  %v4822 = vmax.f32 %v4017, 0.0
  %v4823 = vmax.f32 %v4019, 0.0
  %v4824 = vmax.f32 %v4178, 0.0
  %v4825 = vmax.f32 %v4180, 0.0
  %v4826 = vmax.f32 %v4339, 0.0
  %v4827 = vmax.f32 %v4341, 0.0
  %v4828 = vmax.f32 %v4494, 0.0
  %v4829 = vmax.f32 %v1286, 0.0
  %v4830 = vmax.f32 %v1288, 0.0
  %v4831 = vmax.f32 %v1447, 0.0
  %v4832 = vmax.f32 %v1449, 0.0
  %v4833 = vmax.f32 %v1608, 0.0
  %v4834 = vmax.f32 %v1610, 0.0
  %v4835 = vmax.f32 %v1769, 0.0
  %v4836 = vmax.f32 %v1771, 0.0
  %v4837 = vmax.f32 %v1930, 0.0
  %v4838 = vmax.f32 %v1932, 0.0
  %v4839 = vmax.f32 %v2091, 0.0
  %v4840 = vmax.f32 %v2093, 0.0
  %v4841 = vmax.f32 %v2252, 0.0
  %v4842 = vmax.f32 %v2254, 0.0
  %v4843 = vmax.f32 %v2413, 0.0
  %v4844 = vmax.f32 %v2415, 0.0
  %v4845 = vmax.f32 %v2574, 0.0
  %v4846 = vmax.f32 %v2576, 0.0
  %v4847 = vmax.f32 %v2735, 0.0
  %v4848 = vmax.f32 %v2737, 0.0
  %v4849 = vmax.f32 %v2896, 0.0
  %v4850 = vmax.f32 %v2898, 0.0
  %v4851 = vmax.f32 %v3057, 0.0
  %v4852 = vmax.f32 %v3059, 0.0
  %v4853 = vmax.f32 %v3218, 0.0
  %v4854 = vmax.f32 %v3220, 0.0
  %v4855 = vmax.f32 %v3379, 0.0
  %v4856 = vmax.f32 %v3381, 0.0
  %v4857 = vmax.f32 %v3540, 0.0
  %v4858 = vmax.f32 %v3542, 0.0
  %v4859 = vmax.f32 %v3701, 0.0
  %v4860 = vmax.f32 %v3703, 0.0
  %v4861 = vmax.f32 %v3862, 0.0
  %v4862 = vmax.f32 %v3864, 0.0
  %v4863 = vmax.f32 %v4023, 0.0
  %v4864 = vmax.f32 %v4025, 0.0
  %v4865 = vmax.f32 %v4184, 0.0
  %v4866 = vmax.f32 %v4186, 0.0
  %v4867 = vmax.f32 %v4345, 0.0
  %v4868 = vmax.f32 %v4347, 0.0
  %v4869 = vmax.f32 %v4499, 0.0
  %v4870 = vmax.f32 %v1292, 0.0
  %v4871 = vmax.f32 %v1294, 0.0
  %v4872 = vmax.f32 %v1453, 0.0
  %v4873 = vmax.f32 %v1455, 0.0
  %v4874 = vmax.f32 %v1614, 0.0
  %v4875 = vmax.f32 %v1616, 0.0
  %v4876 = vmax.f32 %v1775, 0.0
  %v4877 = vmax.f32 %v1777, 0.0
  %v4878 = vmax.f32 %v1936, 0.0
  %v4879 = vmax.f32 %v1938, 0.0
  %v4880 = vmax.f32 %v2097, 0.0
  %v4881 = vmax.f32 %v2099, 0.0
  %v4882 = vmax.f32 %v2258, 0.0
  %v4883 = vmax.f32 %v2260, 0.0
  %v4884 = vmax.f32 %v2419, 0.0
  %v4885 = vmax.f32 %v2421, 0.0
  %v4886 = vmax.f32 %v2580, 0.0
  %v4887 = vmax.f32 %v2582, 0.0
  %v4888 = vmax.f32 %v2741, 0.0
  %v4889 = vmax.f32 %v2743, 0.0
  %v4890 = vmax.f32 %v2902, 0.0
  %v4891 = vmax.f32 %v2904, 0.0
  %v4892 = vmax.f32 %v3063, 0.0
  %v4893 = vmax.f32 %v3065, 0.0
  %v4894 = vmax.f32 %v3224, 0.0
  %v4895 = vmax.f32 %v3226, 0.0
  %v4896 = vmax.f32 %v3385, 0.0
  %v4897 = vmax.f32 %v3387, 0.0
  %v4898 = vmax.f32 %v3546, 0.0
  %v4899 = vmax.f32 %v3548, 0.0
  %v4900 = vmax.f32 %v3707, 0.0
  %v4901 = vmax.f32 %v3709, 0.0
  %v4902 = vmax.f32 %v3868, 0.0
  %v4903 = vmax.f32 %v3870, 0.0
  %v4904 = vmax.f32 %v4029, 0.0
  %v4905 = vmax.f32 %v4031, 0.0
  %v4906 = vmax.f32 %v4190, 0.0
  %v4907 = vmax.f32 %v4192, 0.0
  %v4908 = vmax.f32 %v4351, 0.0
  %v4909 = vmax.f32 %v4353, 0.0
  %v4910 = vmax.f32 %v4504, 0.0
  %v4911 = vmax.f32 %v1298, 0.0
  %v4912 = vmax.f32 %v1300, 0.0
  %v4913 = vmax.f32 %v1459, 0.0
  %v4914 = vmax.f32 %v1461, 0.0
  %v4915 = vmax.f32 %v1620, 0.0
  %v4916 = vmax.f32 %v1622, 0.0
  %v4917 = vmax.f32 %v1781, 0.0
  %v4918 = vmax.f32 %v1783, 0.0
  %v4919 = vmax.f32 %v1942, 0.0
  %v4920 = vmax.f32 %v1944, 0.0
  %v4921 = vmax.f32 %v2103, 0.0
  %v4922 = vmax.f32 %v2105, 0.0
  %v4923 = vmax.f32 %v2264, 0.0
  %v4924 = vmax.f32 %v2266, 0.0
  %v4925 = vmax.f32 %v2425, 0.0
  %v4926 = vmax.f32 %v2427, 0.0
  %v4927 = vmax.f32 %v2586, 0.0
  %v4928 = vmax.f32 %v2588, 0.0
  %v4929 = vmax.f32 %v2747, 0.0
  %v4930 = vmax.f32 %v2749, 0.0
  %v4931 = vmax.f32 %v2908, 0.0
  %v4932 = vmax.f32 %v2910, 0.0
  %v4933 = vmax.f32 %v3069, 0.0
  %v4934 = vmax.f32 %v3071, 0.0
  %v4935 = vmax.f32 %v3230, 0.0
  %v4936 = vmax.f32 %v3232, 0.0
  %v4937 = vmax.f32 %v3391, 0.0
  %v4938 = vmax.f32 %v3393, 0.0
  %v4939 = vmax.f32 %v3552, 0.0
  %v4940 = vmax.f32 %v3554, 0.0
  %v4941 = vmax.f32 %v3713, 0.0
  %v4942 = vmax.f32 %v3715, 0.0
  %v4943 = vmax.f32 %v3874, 0.0
  %v4944 = vmax.f32 %v3876, 0.0
  %v4945 = vmax.f32 %v4035, 0.0
  %v4946 = vmax.f32 %v4037, 0.0
  %v4947 = vmax.f32 %v4196, 0.0
  %v4948 = vmax.f32 %v4198, 0.0
  %v4949 = vmax.f32 %v4357, 0.0
  %v4950 = vmax.f32 %v4359, 0.0
  %v4951 = vmax.f32 %v4509, 0.0
  %v4952 = vmax.f32 %v1304, 0.0
  %v4953 = vmax.f32 %v1306, 0.0
  %v4954 = vmax.f32 %v1465, 0.0
  %v4955 = vmax.f32 %v1467, 0.0
  %v4956 = vmax.f32 %v1626, 0.0
  %v4957 = vmax.f32 %v1628, 0.0
  %v4958 = vmax.f32 %v1787, 0.0
  %v4959 = vmax.f32 %v1789, 0.0
  %v4960 = vmax.f32 %v1948, 0.0
  %v4961 = vmax.f32 %v1950, 0.0
  %v4962 = vmax.f32 %v2109, 0.0
  %v4963 = vmax.f32 %v2111, 0.0
  %v4964 = vmax.f32 %v2270, 0.0
  %v4965 = vmax.f32 %v2272, 0.0
  %v4966 = vmax.f32 %v2431, 0.0
  %v4967 = vmax.f32 %v2433, 0.0
  %v4968 = vmax.f32 %v2592, 0.0
  %v4969 = vmax.f32 %v2594, 0.0
  %v4970 = vmax.f32 %v2753, 0.0
  %v4971 = vmax.f32 %v2755, 0.0
  %v4972 = vmax.f32 %v2914, 0.0
  %v4973 = vmax.f32 %v2916, 0.0
  %v4974 = vmax.f32 %v3075, 0.0
  %v4975 = vmax.f32 %v3077, 0.0
  %v4976 = vmax.f32 %v3236, 0.0
  %v4977 = vmax.f32 %v3238, 0.0
  %v4978 = vmax.f32 %v3397, 0.0
  %v4979 = vmax.f32 %v3399, 0.0
  %v4980 = vmax.f32 %v3558, 0.0
  %v4981 = vmax.f32 %v3560, 0.0
  %v4982 = vmax.f32 %v3719, 0.0
  %v4983 = vmax.f32 %v3721, 0.0
  %v4984 = vmax.f32 %v3880, 0.0
  %v4985 = vmax.f32 %v3882, 0.0
  %v4986 = vmax.f32 %v4041, 0.0
  %v4987 = vmax.f32 %v4043, 0.0
  %v4988 = vmax.f32 %v4202, 0.0
  %v4989 = vmax.f32 %v4204, 0.0
  %v4990 = vmax.f32 %v4363, 0.0
  %v4991 = vmax.f32 %v4365, 0.0
  %v4992 = vmax.f32 %v4514, 0.0
  %v4993 = vmax.f32 %v1310, 0.0
  %v4994 = vmax.f32 %v1312, 0.0
  %v4995 = vmax.f32 %v1471, 0.0
  %v4996 = vmax.f32 %v1473, 0.0
  %v4997 = vmax.f32 %v1632, 0.0
  %v4998 = vmax.f32 %v1634, 0.0
  %v4999 = vmax.f32 %v1793, 0.0
  %v5000 = vmax.f32 %v1795, 0.0
  %v5001 = vmax.f32 %v1954, 0.0
  %v5002 = vmax.f32 %v1956, 0.0
  %v5003 = vmax.f32 %v2115, 0.0
  %v5004 = vmax.f32 %v2117, 0.0
  %v5005 = vmax.f32 %v2276, 0.0
  %v5006 = vmax.f32 %v2278, 0.0
  %v5007 = vmax.f32 %v2437, 0.0
  %v5008 = vmax.f32 %v2439, 0.0
  %v5009 = vmax.f32 %v2598, 0.0
  %v5010 = vmax.f32 %v2600, 0.0
  %v5011 = vmax.f32 %v2759, 0.0
  %v5012 = vmax.f32 %v2761, 0.0
  %v5013 = vmax.f32 %v2920, 0.0
  %v5014 = vmax.f32 %v2922, 0.0
  %v5015 = vmax.f32 %v3081, 0.0
  %v5016 = vmax.f32 %v3083, 0.0
  %v5017 = vmax.f32 %v3242, 0.0
  %v5018 = vmax.f32 %v3244, 0.0
  %v5019 = vmax.f32 %v3403, 0.0
  %v5020 = vmax.f32 %v3405, 0.0
  %v5021 = vmax.f32 %v3564, 0.0
  %v5022 = vmax.f32 %v3566, 0.0
  %v5023 = vmax.f32 %v3725, 0.0
  %v5024 = vmax.f32 %v3727, 0.0
  %v5025 = vmax.f32 %v3886, 0.0
  %v5026 = vmax.f32 %v3888, 0.0
  %v5027 = vmax.f32 %v4047, 0.0
  %v5028 = vmax.f32 %v4049, 0.0
  %v5029 = vmax.f32 %v4208, 0.0
  %v5030 = vmax.f32 %v4210, 0.0
  %v5031 = vmax.f32 %v4369, 0.0
  %v5032 = vmax.f32 %v4371, 0.0
  %v5033 = vmax.f32 %v4519, 0.0
  %v5034 = vmax.f32 %v1316, 0.0
  %v5035 = vmax.f32 %v1318, 0.0
  %v5036 = vmax.f32 %v1477, 0.0
  %v5037 = vmax.f32 %v1479, 0.0
  %v5038 = vmax.f32 %v1638, 0.0
  %v5039 = vmax.f32 %v1640, 0.0
  %v5040 = vmax.f32 %v1799, 0.0
  %v5041 = vmax.f32 %v1801, 0.0
  %v5042 = vmax.f32 %v1960, 0.0
  %v5043 = vmax.f32 %v1962, 0.0
  %v5044 = vmax.f32 %v2121, 0.0
  %v5045 = vmax.f32 %v2123, 0.0
  %v5046 = vmax.f32 %v2282, 0.0
  %v5047 = vmax.f32 %v2284, 0.0
  %v5048 = vmax.f32 %v2443, 0.0
  %v5049 = vmax.f32 %v2445, 0.0
  %v5050 = vmax.f32 %v2604, 0.0
  %v5051 = vmax.f32 %v2606, 0.0
  %v5052 = vmax.f32 %v2765, 0.0
  %v5053 = vmax.f32 %v2767, 0.0
  %v5054 = vmax.f32 %v2926, 0.0
  %v5055 = vmax.f32 %v2928, 0.0
  %v5056 = vmax.f32 %v3087, 0.0
  %v5057 = vmax.f32 %v3089, 0.0
  %v5058 = vmax.f32 %v3248, 0.0
  %v5059 = vmax.f32 %v3250, 0.0
  %v5060 = vmax.f32 %v3409, 0.0
  %v5061 = vmax.f32 %v3411, 0.0
  %v5062 = vmax.f32 %v3570, 0.0
  %v5063 = vmax.f32 %v3572, 0.0
  %v5064 = vmax.f32 %v3731, 0.0
  %v5065 = vmax.f32 %v3733, 0.0
  %v5066 = vmax.f32 %v3892, 0.0
  %v5067 = vmax.f32 %v3894, 0.0
  %v5068 = vmax.f32 %v4053, 0.0
  %v5069 = vmax.f32 %v4055, 0.0
  %v5070 = vmax.f32 %v4214, 0.0
  %v5071 = vmax.f32 %v4216, 0.0
  %v5072 = vmax.f32 %v4375, 0.0
  %v5073 = vmax.f32 %v4377, 0.0
  %v5074 = vmax.f32 %v4524, 0.0
  %v5075 = vmax.f32 %v1322, 0.0
  %v5076 = vmax.f32 %v1324, 0.0
  %v5077 = vmax.f32 %v1483, 0.0
  %v5078 = vmax.f32 %v1485, 0.0
  %v5079 = vmax.f32 %v1644, 0.0
  %v5080 = vmax.f32 %v1646, 0.0
  %v5081 = vmax.f32 %v1805, 0.0
  %v5082 = vmax.f32 %v1807, 0.0
  %v5083 = vmax.f32 %v1966, 0.0
  %v5084 = vmax.f32 %v1968, 0.0
  %v5085 = vmax.f32 %v2127, 0.0
  %v5086 = vmax.f32 %v2129, 0.0
  %v5087 = vmax.f32 %v2288, 0.0
  %v5088 = vmax.f32 %v2290, 0.0
  %v5089 = vmax.f32 %v2449, 0.0
  %v5090 = vmax.f32 %v2451, 0.0
  %v5091 = vmax.f32 %v2610, 0.0
  %v5092 = vmax.f32 %v2612, 0.0
  %v5093 = vmax.f32 %v2771, 0.0
  %v5094 = vmax.f32 %v2773, 0.0
  %v5095 = vmax.f32 %v2932, 0.0
  %v5096 = vmax.f32 %v2934, 0.0
  %v5097 = vmax.f32 %v3093, 0.0
  %v5098 = vmax.f32 %v3095, 0.0
  %v5099 = vmax.f32 %v3254, 0.0
  %v5100 = vmax.f32 %v3256, 0.0
  %v5101 = vmax.f32 %v3415, 0.0
  %v5102 = vmax.f32 %v3417, 0.0
  %v5103 = vmax.f32 %v3576, 0.0
  %v5104 = vmax.f32 %v3578, 0.0
  %v5105 = vmax.f32 %v3737, 0.0
  %v5106 = vmax.f32 %v3739, 0.0
  %v5107 = vmax.f32 %v3898, 0.0
  %v5108 = vmax.f32 %v3900, 0.0
  %v5109 = vmax.f32 %v4059, 0.0
  %v5110 = vmax.f32 %v4061, 0.0
  %v5111 = vmax.f32 %v4220, 0.0
  %v5112 = vmax.f32 %v4222, 0.0
  %v5113 = vmax.f32 %v4381, 0.0
  %v5114 = vmax.f32 %v4383, 0.0
  %v5115 = vmax.f32 %v4529, 0.0
  %v5116 = vmax.f32 %v1328, 0.0
  %v5117 = vmax.f32 %v1330, 0.0
  %v5118 = vmax.f32 %v1489, 0.0
  %v5119 = vmax.f32 %v1491, 0.0
  %v5120 = vmax.f32 %v1650, 0.0
  %v5121 = vmax.f32 %v1652, 0.0
  %v5122 = vmax.f32 %v1811, 0.0
  %v5123 = vmax.f32 %v1813, 0.0
  %v5124 = vmax.f32 %v1972, 0.0
  %v5125 = vmax.f32 %v1974, 0.0
  %v5126 = vmax.f32 %v2133, 0.0
  %v5127 = vmax.f32 %v2135, 0.0
  %v5128 = vmax.f32 %v2294, 0.0
  %v5129 = vmax.f32 %v2296, 0.0
  %v5130 = vmax.f32 %v2455, 0.0
  %v5131 = vmax.f32 %v2457, 0.0
  %v5132 = vmax.f32 %v2616, 0.0
  %v5133 = vmax.f32 %v2618, 0.0
  %v5134 = vmax.f32 %v2777, 0.0
  %v5135 = vmax.f32 %v2779, 0.0
  %v5136 = vmax.f32 %v2938, 0.0
  %v5137 = vmax.f32 %v2940, 0.0
  %v5138 = vmax.f32 %v3099, 0.0
  %v5139 = vmax.f32 %v3101, 0.0
  %v5140 = vmax.f32 %v3260, 0.0
  %v5141 = vmax.f32 %v3262, 0.0
  %v5142 = vmax.f32 %v3421, 0.0
  %v5143 = vmax.f32 %v3423, 0.0
  %v5144 = vmax.f32 %v3582, 0.0
  %v5145 = vmax.f32 %v3584, 0.0
  %v5146 = vmax.f32 %v3743, 0.0
  %v5147 = vmax.f32 %v3745, 0.0
  %v5148 = vmax.f32 %v3904, 0.0
  %v5149 = vmax.f32 %v3906, 0.0
  %v5150 = vmax.f32 %v4065, 0.0
  %v5151 = vmax.f32 %v4067, 0.0
  %v5152 = vmax.f32 %v4226, 0.0
  %v5153 = vmax.f32 %v4228, 0.0
  %v5154 = vmax.f32 %v4387, 0.0
  %v5155 = vmax.f32 %v4389, 0.0
  %v5156 = vmax.f32 %v4534, 0.0
  %v5157 = vmax.f32 %v1334, 0.0
  %v5158 = vmax.f32 %v1336, 0.0
  %v5159 = vmax.f32 %v1495, 0.0
  %v5160 = vmax.f32 %v1497, 0.0
  %v5161 = vmax.f32 %v1656, 0.0
  %v5162 = vmax.f32 %v1658, 0.0
  %v5163 = vmax.f32 %v1817, 0.0
  %v5164 = vmax.f32 %v1819, 0.0
  %v5165 = vmax.f32 %v1978, 0.0
  %v5166 = vmax.f32 %v1980, 0.0
  %v5167 = vmax.f32 %v2139, 0.0
  %v5168 = vmax.f32 %v2141, 0.0
  %v5169 = vmax.f32 %v2300, 0.0
  %v5170 = vmax.f32 %v2302, 0.0
  %v5171 = vmax.f32 %v2461, 0.0
  %v5172 = vmax.f32 %v2463, 0.0
  %v5173 = vmax.f32 %v2622, 0.0
  %v5174 = vmax.f32 %v2624, 0.0
  %v5175 = vmax.f32 %v2783, 0.0
  %v5176 = vmax.f32 %v2785, 0.0
  %v5177 = vmax.f32 %v2944, 0.0
  %v5178 = vmax.f32 %v2946, 0.0
  %v5179 = vmax.f32 %v3105, 0.0
  %v5180 = vmax.f32 %v3107, 0.0
  %v5181 = vmax.f32 %v3266, 0.0
  %v5182 = vmax.f32 %v3268, 0.0
  %v5183 = vmax.f32 %v3427, 0.0
  %v5184 = vmax.f32 %v3429, 0.0
  %v5185 = vmax.f32 %v3588, 0.0
  %v5186 = vmax.f32 %v3590, 0.0
  %v5187 = vmax.f32 %v3749, 0.0
  %v5188 = vmax.f32 %v3751, 0.0
  %v5189 = vmax.f32 %v3910, 0.0
  %v5190 = vmax.f32 %v3912, 0.0
  %v5191 = vmax.f32 %v4071, 0.0
  %v5192 = vmax.f32 %v4073, 0.0
  %v5193 = vmax.f32 %v4232, 0.0
  %v5194 = vmax.f32 %v4234, 0.0
  %v5195 = vmax.f32 %v4393, 0.0
  %v5196 = vmax.f32 %v4395, 0.0
  %v5197 = vmax.f32 %v4539, 0.0
  %v5198 = vmax.f32 %v4542, %v4583
  %v5199 = vmax.f32 %v4543, %v4584
  %v5200 = vmax.f32 %v4544, %v4585
  %v5201 = vmax.f32 %v4545, %v4586
  %v5202 = vmax.f32 %v4546, %v4587
  %v5203 = vmax.f32 %v4547, %v4588
  %v5204 = vmax.f32 %v4548, %v4589
  %v5205 = vmax.f32 %v4549, %v4590
  %v5206 = vmax.f32 %v4550, %v4591
  %v5207 = vmax.f32 %v4551, %v4592
  %v5208 = vmax.f32 %v4552, %v4593
  %v5209 = vmax.f32 %v4553, %v4594
  %v5210 = vmax.f32 %v4554, %v4595
  %v5211 = vmax.f32 %v4555, %v4596
  %v5212 = vmax.f32 %v4556, %v4597
  %v5213 = vmax.f32 %v4557, %v4598
  %v5214 = vmax.f32 %v4558, %v4599
  %v5215 = vmax.f32 %v4559, %v4600
  %v5216 = vmax.f32 %v4560, %v4601
  %v5217 = vmax.f32 %v4561, %v4602
  %v5218 = vmax.f32 %v4562, %v4603
  %v5219 = vmax.f32 %v4563, %v4604
  %v5220 = vmax.f32 %v4564, %v4605
  %v5221 = vmax.f32 %v4565, %v4606
  %v5222 = vmax.f32 %v4566, %v4607
  %v5223 = vmax.f32 %v4567, %v4608
  %v5224 = vmax.f32 %v4568, %v4609
  %v5225 = vmax.f32 %v4569, %v4610
  %v5226 = vmax.f32 %v4570, %v4611
  %v5227 = vmax.f32 %v4571, %v4612
  %v5228 = vmax.f32 %v4572, %v4613
  %v5229 = vmax.f32 %v4573, %v4614
  %v5230 = vmax.f32 %v4574, %v4615
  %v5231 = vmax.f32 %v4575, %v4616
  %v5232 = vmax.f32 %v4576, %v4617
  %v5233 = vmax.f32 %v4577, %v4618
  %v5234 = vmax.f32 %v4578, %v4619
  %v5235 = vmax.f32 %v4579, %v4620
  %v5236 = vmax.f32 %v4580, %v4621
  %v5237 = vmax.f32 %v4581, %v4622
  %v5238 = vmax.f32 %v4582, %v4623
  %v5239 = vmax.f32 %v4706, %v4747
  %v5240 = vmax.f32 %v4707, %v4748
  %v5241 = vmax.f32 %v4708, %v4749
  %v5242 = vmax.f32 %v4709, %v4750
  %v5243 = vmax.f32 %v4710, %v4751
  %v5244 = vmax.f32 %v4711, %v4752
  %v5245 = vmax.f32 %v4712, %v4753
  %v5246 = vmax.f32 %v4713, %v4754
  %v5247 = vmax.f32 %v4714, %v4755
  %v5248 = vmax.f32 %v4715, %v4756
  %v5249 = vmax.f32 %v4716, %v4757
  %v5250 = vmax.f32 %v4717, %v4758
  %v5251 = vmax.f32 %v4718, %v4759
  %v5252 = vmax.f32 %v4719, %v4760
  %v5253 = vmax.f32 %v4720, %v4761
  %v5254 = vmax.f32 %v4721, %v4762
  %v5255 = vmax.f32 %v4722, %v4763
  %v5256 = vmax.f32 %v4723, %v4764
  %v5257 = vmax.f32 %v4724, %v4765
  %v5258 = vmax.f32 %v4725, %v4766
  %v5259 = vmax.f32 %v4726, %v4767
  %v5260 = vmax.f32 %v4727, %v4768
  %v5261 = vmax.f32 %v4728, %v4769
  %v5262 = vmax.f32 %v4729, %v4770
  %v5263 = vmax.f32 %v4730, %v4771
  %v5264 = vmax.f32 %v4731, %v4772
  %v5265 = vmax.f32 %v4732, %v4773
  %v5266 = vmax.f32 %v4733, %v4774
  %v5267 = vmax.f32 %v4734, %v4775
  %v5268 = vmax.f32 %v4735, %v4776
  %v5269 = vmax.f32 %v4736, %v4777
  %v5270 = vmax.f32 %v4737, %v4778
  %v5271 = vmax.f32 %v4738, %v4779
  %v5272 = vmax.f32 %v4739, %v4780
  %v5273 = vmax.f32 %v4740, %v4781
  %v5274 = vmax.f32 %v4741, %v4782
  %v5275 = vmax.f32 %v4742, %v4783
  %v5276 = vmax.f32 %v4743, %v4784
  %v5277 = vmax.f32 %v4744, %v4785
  %v5278 = vmax.f32 %v4745, %v4786
  %v5279 = vmax.f32 %v4746, %v4787
  %v5280 = vmax.f32 %v5198, %v5239
  %v5281 = vmax.f32 %v5199, %v5240
  %v5282 = vmax.f32 %v5200, %v5241
  %v5283 = vmax.f32 %v5201, %v5242
  %v5284 = vmax.f32 %v5202, %v5243
  %v5285 = vmax.f32 %v5203, %v5244
  %v5286 = vmax.f32 %v5204, %v5245
  %v5287 = vmax.f32 %v5205, %v5246
  %v5288 = vmax.f32 %v5206, %v5247
  %v5289 = vmax.f32 %v5207, %v5248
  %v5290 = vmax.f32 %v5208, %v5249
  %v5291 = vmax.f32 %v5209, %v5250
  %v5292 = vmax.f32 %v5210, %v5251
  %v5293 = vmax.f32 %v5211, %v5252
  %v5294 = vmax.f32 %v5212, %v5253
  %v5295 = vmax.f32 %v5213, %v5254
  %v5296 = vmax.f32 %v5214, %v5255
  %v5297 = vmax.f32 %v5215, %v5256
  %v5298 = vmax.f32 %v5216, %v5257
  %v5299 = vmax.f32 %v5217, %v5258
  %v5300 = vmax.f32 %v5218, %v5259
  %v5301 = vmax.f32 %v5219, %v5260
  %v5302 = vmax.f32 %v5220, %v5261
  %v5303 = vmax.f32 %v5221, %v5262
  %v5304 = vmax.f32 %v5222, %v5263
  %v5305 = vmax.f32 %v5223, %v5264
  %v5306 = vmax.f32 %v5224, %v5265
  %v5307 = vmax.f32 %v5225, %v5266
  %v5308 = vmax.f32 %v5226, %v5267
  %v5309 = vmax.f32 %v5227, %v5268
  %v5310 = vmax.f32 %v5228, %v5269
  %v5311 = vmax.f32 %v5229, %v5270
  %v5312 = vmax.f32 %v5230, %v5271
  %v5313 = vmax.f32 %v5231, %v5272
  %v5314 = vmax.f32 %v5232, %v5273
  %v5315 = vmax.f32 %v5233, %v5274
  %v5316 = vmax.f32 %v5234, %v5275
  %v5317 = vmax.f32 %v5235, %v5276
  %v5318 = vmax.f32 %v5236, %v5277
  %v5319 = vmax.f32 %v5237, %v5278
  %v5320 = vmax.f32 %v5238, %v5279
  %v5321 = vmax.f32 %v4624, %v4665
  %v5322 = vmax.f32 %v4625, %v4666
  %v5323 = vmax.f32 %v4626, %v4667
  %v5324 = vmax.f32 %v4627, %v4668
  %v5325 = vmax.f32 %v4628, %v4669
  %v5326 = vmax.f32 %v4629, %v4670
  %v5327 = vmax.f32 %v4630, %v4671
  %v5328 = vmax.f32 %v4631, %v4672
  %v5329 = vmax.f32 %v4632, %v4673
  %v5330 = vmax.f32 %v4633, %v4674
  %v5331 = vmax.f32 %v4634, %v4675
  %v5332 = vmax.f32 %v4635, %v4676
  %v5333 = vmax.f32 %v4636, %v4677
  %v5334 = vmax.f32 %v4637, %v4678
  %v5335 = vmax.f32 %v4638, %v4679
  %v5336 = vmax.f32 %v4639, %v4680
  %v5337 = vmax.f32 %v4640, %v4681
  %v5338 = vmax.f32 %v4641, %v4682
  %v5339 = vmax.f32 %v4642, %v4683
  %v5340 = vmax.f32 %v4643, %v4684
  %v5341 = vmax.f32 %v4644, %v4685
  %v5342 = vmax.f32 %v4645, %v4686
  %v5343 = vmax.f32 %v4646, %v4687
  %v5344 = vmax.f32 %v4647, %v4688
  %v5345 = vmax.f32 %v4648, %v4689
  %v5346 = vmax.f32 %v4649, %v4690
  %v5347 = vmax.f32 %v4650, %v4691
  %v5348 = vmax.f32 %v4651, %v4692
  %v5349 = vmax.f32 %v4652, %v4693
  %v5350 = vmax.f32 %v4653, %v4694
  %v5351 = vmax.f32 %v4654, %v4695
  %v5352 = vmax.f32 %v4655, %v4696
  %v5353 = vmax.f32 %v4656, %v4697
  %v5354 = vmax.f32 %v4657, %v4698
  %v5355 = vmax.f32 %v4658, %v4699
  %v5356 = vmax.f32 %v4659, %v4700
  %v5357 = vmax.f32 %v4660, %v4701
  %v5358 = vmax.f32 %v4661, %v4702
  %v5359 = vmax.f32 %v4662, %v4703
  %v5360 = vmax.f32 %v4663, %v4704
  %v5361 = vmax.f32 %v4664, %v4705
  %v5362 = vmax.f32 %v4788, %v4829
  %v5363 = vmax.f32 %v4789, %v4830
  %v5364 = vmax.f32 %v4790, %v4831
  %v5365 = vmax.f32 %v4791, %v4832
  %v5366 = vmax.f32 %v4792, %v4833
  %v5367 = vmax.f32 %v4793, %v4834
  %v5368 = vmax.f32 %v4794, %v4835
  %v5369 = vmax.f32 %v4795, %v4836
  %v5370 = vmax.f32 %v4796, %v4837
  %v5371 = vmax.f32 %v4797, %v4838
  %v5372 = vmax.f32 %v4798, %v4839
  %v5373 = vmax.f32 %v4799, %v4840
  %v5374 = vmax.f32 %v4800, %v4841
  %v5375 = vmax.f32 %v4801, %v4842
  %v5376 = vmax.f32 %v4802, %v4843
  %v5377 = vmax.f32 %v4803, %v4844
  %v5378 = vmax.f32 %v4804, %v4845
  %v5379 = vmax.f32 %v4805, %v4846
  %v5380 = vmax.f32 %v4806, %v4847
  %v5381 = vmax.f32 %v4807, %v4848
  %v5382 = vmax.f32 %v4808, %v4849
  %v5383 = vmax.f32 %v4809, %v4850
  %v5384 = vmax.f32 %v4810, %v4851
  %v5385 = vmax.f32 %v4811, %v4852
  %v5386 = vmax.f32 %v4812, %v4853
  %v5387 = vmax.f32 %v4813, %v4854
  %v5388 = vmax.f32 %v4814, %v4855
  %v5389 = vmax.f32 %v4815, %v4856
  %v5390 = vmax.f32 %v4816, %v4857
  %v5391 = vmax.f32 %v4817, %v4858
  %v5392 = vmax.f32 %v4818, %v4859
  %v5393 = vmax.f32 %v4819, %v4860
  %v5394 = vmax.f32 %v4820, %v4861
  %v5395 = vmax.f32 %v4821, %v4862
  %v5396 = vmax.f32 %v4822, %v4863
  %v5397 = vmax.f32 %v4823, %v4864
  %v5398 = vmax.f32 %v4824, %v4865
  %v5399 = vmax.f32 %v4825, %v4866
  %v5400 = vmax.f32 %v4826, %v4867
  %v5401 = vmax.f32 %v4827, %v4868
  %v5402 = vmax.f32 %v4828, %v4869
  %v5403 = vmax.f32 %v5321, %v5362
  %v5404 = vmax.f32 %v5322, %v5363
  %v5405 = vmax.f32 %v5323, %v5364
  %v5406 = vmax.f32 %v5324, %v5365
  %v5407 = vmax.f32 %v5325, %v5366
  %v5408 = vmax.f32 %v5326, %v5367
  %v5409 = vmax.f32 %v5327, %v5368
  %v5410 = vmax.f32 %v5328, %v5369
  %v5411 = vmax.f32 %v5329, %v5370
  %v5412 = vmax.f32 %v5330, %v5371
  %v5413 = vmax.f32 %v5331, %v5372
  %v5414 = vmax.f32 %v5332, %v5373
  %v5415 = vmax.f32 %v5333, %v5374
  %v5416 = vmax.f32 %v5334, %v5375
  %v5417 = vmax.f32 %v5335, %v5376
  %v5418 = vmax.f32 %v5336, %v5377
  %v5419 = vmax.f32 %v5337, %v5378
  %v5420 = vmax.f32 %v5338, %v5379
  %v5421 = vmax.f32 %v5339, %v5380
  %v5422 = vmax.f32 %v5340, %v5381
  %v5423 = vmax.f32 %v5341, %v5382
  %v5424 = vmax.f32 %v5342, %v5383
  %v5425 = vmax.f32 %v5343, %v5384
  %v5426 = vmax.f32 %v5344, %v5385
  %v5427 = vmax.f32 %v5345, %v5386
  %v5428 = vmax.f32 %v5346, %v5387
  %v5429 = vmax.f32 %v5347, %v5388
  %v5430 = vmax.f32 %v5348, %v5389
  %v5431 = vmax.f32 %v5349, %v5390
  %v5432 = vmax.f32 %v5350, %v5391
  %v5433 = vmax.f32 %v5351, %v5392
  %v5434 = vmax.f32 %v5352, %v5393
  %v5435 = vmax.f32 %v5353, %v5394
  %v5436 = vmax.f32 %v5354, %v5395
  %v5437 = vmax.f32 %v5355, %v5396
  %v5438 = vmax.f32 %v5356, %v5397
  %v5439 = vmax.f32 %v5357, %v5398
  %v5440 = vmax.f32 %v5358, %v5399
  %v5441 = vmax.f32 %v5359, %v5400
  %v5442 = vmax.f32 %v5360, %v5401
  %v5443 = vmax.f32 %v5361, %v5402
  %v5444 = vmax.f32 %v4870, %v4911
  %v5445 = vmax.f32 %v4871, %v4912
  %v5446 = vmax.f32 %v4872, %v4913
  %v5447 = vmax.f32 %v4873, %v4914
  %v5448 = vmax.f32 %v4874, %v4915
  %v5449 = vmax.f32 %v4875, %v4916
  %v5450 = vmax.f32 %v4876, %v4917
  %v5451 = vmax.f32 %v4877, %v4918
  %v5452 = vmax.f32 %v4878, %v4919
  %v5453 = vmax.f32 %v4879, %v4920
  %v5454 = vmax.f32 %v4880, %v4921
  %v5455 = vmax.f32 %v4881, %v4922
  %v5456 = vmax.f32 %v4882, %v4923
  %v5457 = vmax.f32 %v4883, %v4924
  %v5458 = vmax.f32 %v4884, %v4925
  %v5459 = vmax.f32 %v4885, %v4926
  %v5460 = vmax.f32 %v4886, %v4927
  %v5461 = vmax.f32 %v4887, %v4928
  %v5462 = vmax.f32 %v4888, %v4929
  %v5463 = vmax.f32 %v4889, %v4930
  %v5464 = vmax.f32 %v4890, %v4931
  %v5465 = vmax.f32 %v4891, %v4932
  %v5466 = vmax.f32 %v4892, %v4933
  %v5467 = vmax.f32 %v4893, %v4934
  %v5468 = vmax.f32 %v4894, %v4935
  %v5469 = vmax.f32 %v4895, %v4936
  %v5470 = vmax.f32 %v4896, %v4937
  %v5471 = vmax.f32 %v4897, %v4938
  %v5472 = vmax.f32 %v4898, %v4939
  %v5473 = vmax.f32 %v4899, %v4940
  %v5474 = vmax.f32 %v4900, %v4941
  %v5475 = vmax.f32 %v4901, %v4942
  %v5476 = vmax.f32 %v4902, %v4943
  %v5477 = vmax.f32 %v4903, %v4944
  %v5478 = vmax.f32 %v4904, %v4945
  %v5479 = vmax.f32 %v4905, %v4946
  %v5480 = vmax.f32 %v4906, %v4947
  %v5481 = vmax.f32 %v4907, %v4948
  %v5482 = vmax.f32 %v4908, %v4949
  %v5483 = vmax.f32 %v4909, %v4950
  %v5484 = vmax.f32 %v4910, %v4951
  %v5485 = vmax.f32 %v5034, %v5075
  %v5486 = vmax.f32 %v5035, %v5076
  %v5487 = vmax.f32 %v5036, %v5077
  %v5488 = vmax.f32 %v5037, %v5078
  %v5489 = vmax.f32 %v5038, %v5079
  %v5490 = vmax.f32 %v5039, %v5080
  %v5491 = vmax.f32 %v5040, %v5081
  %v5492 = vmax.f32 %v5041, %v5082
  %v5493 = vmax.f32 %v5042, %v5083
  %v5494 = vmax.f32 %v5043, %v5084
  %v5495 = vmax.f32 %v5044, %v5085
  %v5496 = vmax.f32 %v5045, %v5086
  %v5497 = vmax.f32 %v5046, %v5087
  %v5498 = vmax.f32 %v5047, %v5088
  %v5499 = vmax.f32 %v5048, %v5089
  %v5500 = vmax.f32 %v5049, %v5090
  %v5501 = vmax.f32 %v5050, %v5091
  %v5502 = vmax.f32 %v5051, %v5092
  %v5503 = vmax.f32 %v5052, %v5093
  %v5504 = vmax.f32 %v5053, %v5094
  %v5505 = vmax.f32 %v5054, %v5095
  %v5506 = vmax.f32 %v5055, %v5096
  %v5507 = vmax.f32 %v5056, %v5097
  %v5508 = vmax.f32 %v5057, %v5098
  %v5509 = vmax.f32 %v5058, %v5099
  %v5510 = vmax.f32 %v5059, %v5100
  %v5511 = vmax.f32 %v5060, %v5101
  %v5512 = vmax.f32 %v5061, %v5102
  %v5513 = vmax.f32 %v5062, %v5103
  %v5514 = vmax.f32 %v5063, %v5104
  %v5515 = vmax.f32 %v5064, %v5105
  %v5516 = vmax.f32 %v5065, %v5106
  %v5517 = vmax.f32 %v5066, %v5107
  %v5518 = vmax.f32 %v5067, %v5108
  %v5519 = vmax.f32 %v5068, %v5109
  %v5520 = vmax.f32 %v5069, %v5110
  %v5521 = vmax.f32 %v5070, %v5111
  %v5522 = vmax.f32 %v5071, %v5112
  %v5523 = vmax.f32 %v5072, %v5113
  %v5524 = vmax.f32 %v5073, %v5114
  %v5525 = vmax.f32 %v5074, %v5115
  %v5526 = vmax.f32 %v5444, %v5485
  %v5527 = vmax.f32 %v5445, %v5486
  %v5528 = vmax.f32 %v5446, %v5487
  %v5529 = vmax.f32 %v5447, %v5488
  %v5530 = vmax.f32 %v5448, %v5489
  %v5531 = vmax.f32 %v5449, %v5490
  %v5532 = vmax.f32 %v5450, %v5491
  %v5533 = vmax.f32 %v5451, %v5492
  %v5534 = vmax.f32 %v5452, %v5493
  %v5535 = vmax.f32 %v5453, %v5494
  %v5536 = vmax.f32 %v5454, %v5495
  %v5537 = vmax.f32 %v5455, %v5496
  %v5538 = vmax.f32 %v5456, %v5497
  %v5539 = vmax.f32 %v5457, %v5498
  %v5540 = vmax.f32 %v5458, %v5499
  %v5541 = vmax.f32 %v5459, %v5500
  %v5542 = vmax.f32 %v5460, %v5501
  %v5543 = vmax.f32 %v5461, %v5502
  %v5544 = vmax.f32 %v5462, %v5503
  %v5545 = vmax.f32 %v5463, %v5504
  %v5546 = vmax.f32 %v5464, %v5505
  %v5547 = vmax.f32 %v5465, %v5506
  %v5548 = vmax.f32 %v5466, %v5507
  %v5549 = vmax.f32 %v5467, %v5508
  %v5550 = vmax.f32 %v5468, %v5509
  %v5551 = vmax.f32 %v5469, %v5510
  %v5552 = vmax.f32 %v5470, %v5511
  %v5553 = vmax.f32 %v5471, %v5512
  %v5554 = vmax.f32 %v5472, %v5513
  %v5555 = vmax.f32 %v5473, %v5514
  %v5556 = vmax.f32 %v5474, %v5515
  %v5557 = vmax.f32 %v5475, %v5516
  %v5558 = vmax.f32 %v5476, %v5517
  %v5559 = vmax.f32 %v5477, %v5518
  %v5560 = vmax.f32 %v5478, %v5519
  %v5561 = vmax.f32 %v5479, %v5520
  %v5562 = vmax.f32 %v5480, %v5521
  %v5563 = vmax.f32 %v5481, %v5522
  %v5564 = vmax.f32 %v5482, %v5523
  %v5565 = vmax.f32 %v5483, %v5524
  %v5566 = vmax.f32 %v5484, %v5525
  %v5567 = vmax.f32 %v4952, %v4993
  %v5568 = vmax.f32 %v4953, %v4994
  %v5569 = vmax.f32 %v4954, %v4995
  %v5570 = vmax.f32 %v4955, %v4996
  %v5571 = vmax.f32 %v4956, %v4997
  %v5572 = vmax.f32 %v4957, %v4998
  %v5573 = vmax.f32 %v4958, %v4999
  %v5574 = vmax.f32 %v4959, %v5000
  %v5575 = vmax.f32 %v4960, %v5001
  %v5576 = vmax.f32 %v4961, %v5002
  %v5577 = vmax.f32 %v4962, %v5003
  %v5578 = vmax.f32 %v4963, %v5004
  %v5579 = vmax.f32 %v4964, %v5005
  %v5580 = vmax.f32 %v4965, %v5006
  %v5581 = vmax.f32 %v4966, %v5007
  %v5582 = vmax.f32 %v4967, %v5008
  %v5583 = vmax.f32 %v4968, %v5009
  %v5584 = vmax.f32 %v4969, %v5010
  %v5585 = vmax.f32 %v4970, %v5011
  %v5586 = vmax.f32 %v4971, %v5012
  %v5587 = vmax.f32 %v4972, %v5013
  %v5588 = vmax.f32 %v4973, %v5014
  %v5589 = vmax.f32 %v4974, %v5015
  %v5590 = vmax.f32 %v4975, %v5016
  %v5591 = vmax.f32 %v4976, %v5017
  %v5592 = vmax.f32 %v4977, %v5018
  %v5593 = vmax.f32 %v4978, %v5019
  %v5594 = vmax.f32 %v4979, %v5020
  %v5595 = vmax.f32 %v4980, %v5021
  %v5596 = vmax.f32 %v4981, %v5022
  %v5597 = vmax.f32 %v4982, %v5023
  %v5598 = vmax.f32 %v4983, %v5024
  %v5599 = vmax.f32 %v4984, %v5025
  %v5600 = vmax.f32 %v4985, %v5026
  %v5601 = vmax.f32 %v4986, %v5027
  %v5602 = vmax.f32 %v4987, %v5028
  %v5603 = vmax.f32 %v4988, %v5029
  %v5604 = vmax.f32 %v4989, %v5030
  %v5605 = vmax.f32 %v4990, %v5031
  %v5606 = vmax.f32 %v4991, %v5032
  %v5607 = vmax.f32 %v4992, %v5033
  %v5608 = vmax.f32 %v5116, %v5157
  %v5609 = vmax.f32 %v5117, %v5158
  %v5610 = vmax.f32 %v5118, %v5159
  %v5611 = vmax.f32 %v5119, %v5160
  %v5612 = vmax.f32 %v5120, %v5161
  %v5613 = vmax.f32 %v5121, %v5162
  %v5614 = vmax.f32 %v5122, %v5163
  %v5615 = vmax.f32 %v5123, %v5164
  %v5616 = vmax.f32 %v5124, %v5165
  %v5617 = vmax.f32 %v5125, %v5166
  %v5618 = vmax.f32 %v5126, %v5167
  %v5619 = vmax.f32 %v5127, %v5168
  %v5620 = vmax.f32 %v5128, %v5169
  %v5621 = vmax.f32 %v5129, %v5170
  %v5622 = vmax.f32 %v5130, %v5171
  %v5623 = vmax.f32 %v5131, %v5172
  %v5624 = vmax.f32 %v5132, %v5173
  %v5625 = vmax.f32 %v5133, %v5174
  %v5626 = vmax.f32 %v5134, %v5175
  %v5627 = vmax.f32 %v5135, %v5176
  %v5628 = vmax.f32 %v5136, %v5177
  %v5629 = vmax.f32 %v5137, %v5178
  %v5630 = vmax.f32 %v5138, %v5179
  %v5631 = vmax.f32 %v5139, %v5180
  %v5632 = vmax.f32 %v5140, %v5181
  %v5633 = vmax.f32 %v5141, %v5182
  %v5634 = vmax.f32 %v5142, %v5183
  %v5635 = vmax.f32 %v5143, %v5184
  %v5636 = vmax.f32 %v5144, %v5185
  %v5637 = vmax.f32 %v5145, %v5186
  %v5638 = vmax.f32 %v5146, %v5187
  %v5639 = vmax.f32 %v5147, %v5188
  %v5640 = vmax.f32 %v5148, %v5189
  %v5641 = vmax.f32 %v5149, %v5190
  %v5642 = vmax.f32 %v5150, %v5191
  %v5643 = vmax.f32 %v5151, %v5192
  %v5644 = vmax.f32 %v5152, %v5193
  %v5645 = vmax.f32 %v5153, %v5194
  %v5646 = vmax.f32 %v5154, %v5195
  %v5647 = vmax.f32 %v5155, %v5196
  %v5648 = vmax.f32 %v5156, %v5197
  %v5649 = vmax.f32 %v5567, %v5608
  %v5650 = vmax.f32 %v5568, %v5609
  %v5651 = vmax.f32 %v5569, %v5610
  %v5652 = vmax.f32 %v5570, %v5611
  %v5653 = vmax.f32 %v5571, %v5612
  %v5654 = vmax.f32 %v5572, %v5613
  %v5655 = vmax.f32 %v5573, %v5614
  %v5656 = vmax.f32 %v5574, %v5615
  %v5657 = vmax.f32 %v5575, %v5616
  %v5658 = vmax.f32 %v5576, %v5617
  %v5659 = vmax.f32 %v5577, %v5618
  %v5660 = vmax.f32 %v5578, %v5619
  %v5661 = vmax.f32 %v5579, %v5620
  %v5662 = vmax.f32 %v5580, %v5621
  %v5663 = vmax.f32 %v5581, %v5622
  %v5664 = vmax.f32 %v5582, %v5623
  %v5665 = vmax.f32 %v5583, %v5624
  %v5666 = vmax.f32 %v5584, %v5625
  %v5667 = vmax.f32 %v5585, %v5626
  %v5668 = vmax.f32 %v5586, %v5627
  %v5669 = vmax.f32 %v5587, %v5628
  %v5670 = vmax.f32 %v5588, %v5629
  %v5671 = vmax.f32 %v5589, %v5630
  %v5672 = vmax.f32 %v5590, %v5631
  %v5673 = vmax.f32 %v5591, %v5632
  %v5674 = vmax.f32 %v5592, %v5633
  %v5675 = vmax.f32 %v5593, %v5634
  %v5676 = vmax.f32 %v5594, %v5635
  %v5677 = vmax.f32 %v5595, %v5636
  %v5678 = vmax.f32 %v5596, %v5637
  %v5679 = vmax.f32 %v5597, %v5638
  %v5680 = vmax.f32 %v5598, %v5639
  %v5681 = vmax.f32 %v5599, %v5640
  %v5682 = vmax.f32 %v5600, %v5641
  %v5683 = vmax.f32 %v5601, %v5642
  %v5684 = vmax.f32 %v5602, %v5643
  %v5685 = vmax.f32 %v5603, %v5644
  %v5686 = vmax.f32 %v5604, %v5645
  %v5687 = vmax.f32 %v5605, %v5646
  %v5688 = vmax.f32 %v5606, %v5647
  %v5689 = vmax.f32 %v5607, %v5648
  %5690 = vst [vmem:[#allocation3] sm:$0xff] %v5280
  %5691 = vst [vmem:[#allocation3 + $0x8] sm:$0xff] %v5281
  %5692 = vst [vmem:[#allocation3 + $0x10] sm:$0xff] %v5282
  %5693 = vst [vmem:[#allocation3 + $0x18] sm:$0xff] %v5283
  %5694 = vst [vmem:[#allocation3 + $0x20] sm:$0xff] %v5284
  %5695 = vst [vmem:[#allocation3 + $0x28] sm:$0xff] %v5285
  %5696 = vst [vmem:[#allocation3 + $0x30] sm:$0xff] %v5286
  %5697 = vst [vmem:[#allocation3 + $0x38] sm:$0xff] %v5287
  %5698 = vst [vmem:[#allocation3 + $0x40] sm:$0xff] %v5288
  %5699 = vst [vmem:[#allocation3 + $0x48] sm:$0xff] %v5289
  %5700 = vst [vmem:[#allocation3 + $0x50] sm:$0xff] %v5290
  %5701 = vst [vmem:[#allocation3 + $0x58] sm:$0xff] %v5291
  %5702 = vst [vmem:[#allocation3 + $0x60] sm:$0xff] %v5292
  %5703 = vst [vmem:[#allocation3 + $0x68] sm:$0xff] %v5293
  %5704 = vst [vmem:[#allocation3 + $0x70] sm:$0xff] %v5294
  %5705 = vst [vmem:[#allocation3 + $0x78] sm:$0xff] %v5295
  %5706 = vst [vmem:[#allocation3 + $0x80] sm:$0xff] %v5296
  %5707 = vst [vmem:[#allocation3 + $0x88] sm:$0xff] %v5297
  %5708 = vst [vmem:[#allocation3 + $0x90] sm:$0xff] %v5298
  %5709 = vst [vmem:[#allocation3 + $0x98] sm:$0xff] %v5299
  %5710 = vst [vmem:[#allocation3 + $0xa0] sm:$0xff] %v5300
  %5711 = vst [vmem:[#allocation3 + $0xa8] sm:$0xff] %v5301
  %5712 = vst [vmem:[#allocation3 + $0xb0] sm:$0xff] %v5302
  %5713 = vst [vmem:[#allocation3 + $0xb8] sm:$0xff] %v5303
  %5714 = vst [vmem:[#allocation3 + $0xc0] sm:$0xff] %v5304
  %5715 = vst [vmem:[#allocation3 + $0xc8] sm:$0xff] %v5403
  %5716 = vst [vmem:[#allocation3 + $0xd0] sm:$0xff] %v5404
  %5717 = vst [vmem:[#allocation3 + $0xd8] sm:$0xff] %v5405
  %5718 = vst [vmem:[#allocation3 + $0xe0] sm:$0xff] %v5406
  %5719 = vst [vmem:[#allocation3 + $0xe8] sm:$0xff] %v5407
  %5720 = vst [vmem:[#allocation3 + $0xf0] sm:$0xff] %v5408
  %5721 = vst [vmem:[#allocation3 + $0xf8] sm:$0xff] %v5409
  %5722 = vst [vmem:[#allocation3 + $0x100] sm:$0xff] %v5410
  %5723 = vst [vmem:[#allocation3 + $0x108] sm:$0xff] %v5411
  %5724 = vst [vmem:[#allocation3 + $0x110] sm:$0xff] %v5412
  %5725 = vst [vmem:[#allocation3 + $0x118] sm:$0xff] %v5413
  %5726 = vst [vmem:[#allocation3 + $0x120] sm:$0xff] %v5414
  %5727 = vst [vmem:[#allocation3 + $0x128] sm:$0xff] %v5415
  %5728 = vst [vmem:[#allocation3 + $0x130] sm:$0xff] %v5416
  %5729 = vst [vmem:[#allocation3 + $0x138] sm:$0xff] %v5417
  %5730 = vst [vmem:[#allocation3 + $0x140] sm:$0xff] %v5418
  %5731 = vst [vmem:[#allocation3 + $0x148] sm:$0xff] %v5419
  %5732 = vst [vmem:[#allocation3 + $0x150] sm:$0xff] %v5420
  %5733 = vst [vmem:[#allocation3 + $0x158] sm:$0xff] %v5421
  %5734 = vst [vmem:[#allocation3 + $0x160] sm:$0xff] %v5422
  %5735 = vst [vmem:[#allocation3 + $0x168] sm:$0xff] %v5423
  %5736 = vst [vmem:[#allocation3 + $0x170] sm:$0xff] %v5424
  %5737 = vst [vmem:[#allocation3 + $0x178] sm:$0xff] %v5425
  %5738 = vst [vmem:[#allocation3 + $0x180] sm:$0xff] %v5426
  %5739 = vst [vmem:[#allocation3 + $0x188] sm:$0xff] %v5427
  %5740 = vst [vmem:[#allocation3 + $0x190] sm:$0xff] %v5526
  %5741 = vst [vmem:[#allocation3 + $0x198] sm:$0xff] %v5527
  %5742 = vst [vmem:[#allocation3 + $0x1a0] sm:$0xff] %v5528
  %5743 = vst [vmem:[#allocation3 + $0x1a8] sm:$0xff] %v5529
  %5744 = vst [vmem:[#allocation3 + $0x1b0] sm:$0xff] %v5530
  %5745 = vst [vmem:[#allocation3 + $0x1b8] sm:$0xff] %v5531
  %5746 = vst [vmem:[#allocation3 + $0x1c0] sm:$0xff] %v5532
  %5747 = vst [vmem:[#allocation3 + $0x1c8] sm:$0xff] %v5533
  %5748 = vst [vmem:[#allocation3 + $0x1d0] sm:$0xff] %v5534
  %5749 = vst [vmem:[#allocation3 + $0x1d8] sm:$0xff] %v5535
  %5750 = vst [vmem:[#allocation3 + $0x1e0] sm:$0xff] %v5536
  %5751 = vst [vmem:[#allocation3 + $0x1e8] sm:$0xff] %v5537
  %5752 = vst [vmem:[#allocation3 + $0x1f0] sm:$0xff] %v5538
  %5753 = vst [vmem:[#allocation3 + $0x1f8] sm:$0xff] %v5539
  %5754 = vst [vmem:[#allocation3 + $0x200] sm:$0xff] %v5540
  %5755 = vst [vmem:[#allocation3 + $0x208] sm:$0xff] %v5541
  %5756 = vst [vmem:[#allocation3 + $0x210] sm:$0xff] %v5542
  %5757 = vst [vmem:[#allocation3 + $0x218] sm:$0xff] %v5543
  %5758 = vst [vmem:[#allocation3 + $0x220] sm:$0xff] %v5544
  %5759 = vst [vmem:[#allocation3 + $0x228] sm:$0xff] %v5545
  %5760 = vst [vmem:[#allocation3 + $0x230] sm:$0xff] %v5546
  %5761 = vst [vmem:[#allocation3 + $0x238] sm:$0xff] %v5547
  %5762 = vst [vmem:[#allocation3 + $0x240] sm:$0xff] %v5548
  %5763 = vst [vmem:[#allocation3 + $0x248] sm:$0xff] %v5549
  %5764 = vst [vmem:[#allocation3 + $0x250] sm:$0xff] %v5550
  %5765 = vst [vmem:[#allocation3 + $0x258] sm:$0xff] %v5649
  %5766 = vst [vmem:[#allocation3 + $0x260] sm:$0xff] %v5650
  %5767 = vst [vmem:[#allocation3 + $0x268] sm:$0xff] %v5651
  %5768 = vst [vmem:[#allocation3 + $0x270] sm:$0xff] %v5652
  %5769 = vst [vmem:[#allocation3 + $0x278] sm:$0xff] %v5653
  %5770 = vst [vmem:[#allocation3 + $0x280] sm:$0xff] %v5654
  %5771 = vst [vmem:[#allocation3 + $0x288] sm:$0xff] %v5655
  %5772 = vst [vmem:[#allocation3 + $0x290] sm:$0xff] %v5656
  %5773 = vst [vmem:[#allocation3 + $0x298] sm:$0xff] %v5657
  %5774 = vst [vmem:[#allocation3 + $0x2a0] sm:$0xff] %v5658
  %5775 = vst [vmem:[#allocation3 + $0x2a8] sm:$0xff] %v5659
  %5776 = vst [vmem:[#allocation3 + $0x2b0] sm:$0xff] %v5660
  %5777 = vst [vmem:[#allocation3 + $0x2b8] sm:$0xff] %v5661
  %5778 = vst [vmem:[#allocation3 + $0x2c0] sm:$0xff] %v5662
  %5779 = vst [vmem:[#allocation3 + $0x2c8] sm:$0xff] %v5663
  %5780 = vst [vmem:[#allocation3 + $0x2d0] sm:$0xff] %v5664
  %5781 = vst [vmem:[#allocation3 + $0x2d8] sm:$0xff] %v5665
  %5782 = vst [vmem:[#allocation3 + $0x2e0] sm:$0xff] %v5666
  %5783 = vst [vmem:[#allocation3 + $0x2e8] sm:$0xff] %v5667
  %5784 = vst [vmem:[#allocation3 + $0x2f0] sm:$0xff] %v5668
  %5785 = vst [vmem:[#allocation3 + $0x2f8] sm:$0xff] %v5669
  %5786 = vst [vmem:[#allocation3 + $0x300] sm:$0xff] %v5670
  %5787 = vst [vmem:[#allocation3 + $0x308] sm:$0xff] %v5671
  %5788 = vst [vmem:[#allocation3 + $0x310] sm:$0xff] %v5672
  %5789 = vst [vmem:[#allocation3 + $0x318] sm:$0xff] %v5673
  %5790 = vst [vmem:[#allocation3 + $0x320] sm:$0xff] %v5281
  %5791 = vst [vmem:[#allocation3 + $0x328] sm:$0xff] %v5282
  %5792 = vst [vmem:[#allocation3 + $0x330] sm:$0xff] %v5283
  %5793 = vst [vmem:[#allocation3 + $0x338] sm:$0xff] %v5284
  %5794 = vst [vmem:[#allocation3 + $0x340] sm:$0xff] %v5285
  %5795 = vst [vmem:[#allocation3 + $0x348] sm:$0xff] %v5286
  %5796 = vst [vmem:[#allocation3 + $0x350] sm:$0xff] %v5287
  %5797 = vst [vmem:[#allocation3 + $0x358] sm:$0xff] %v5288
  %5798 = vst [vmem:[#allocation3 + $0x360] sm:$0xff] %v5289
  %5799 = vst [vmem:[#allocation3 + $0x368] sm:$0xff] %v5290
  %5800 = vst [vmem:[#allocation3 + $0x370] sm:$0xff] %v5291
  %5801 = vst [vmem:[#allocation3 + $0x378] sm:$0xff] %v5292
  %5802 = vst [vmem:[#allocation3 + $0x380] sm:$0xff] %v5293
  %5803 = vst [vmem:[#allocation3 + $0x388] sm:$0xff] %v5294
  %5804 = vst [vmem:[#allocation3 + $0x390] sm:$0xff] %v5295
  %5805 = vst [vmem:[#allocation3 + $0x398] sm:$0xff] %v5296
  %5806 = vst [vmem:[#allocation3 + $0x3a0] sm:$0xff] %v5297
  %5807 = vst [vmem:[#allocation3 + $0x3a8] sm:$0xff] %v5298
  %5808 = vst [vmem:[#allocation3 + $0x3b0] sm:$0xff] %v5299
  %5809 = vst [vmem:[#allocation3 + $0x3b8] sm:$0xff] %v5300
  %5810 = vst [vmem:[#allocation3 + $0x3c0] sm:$0xff] %v5301
  %5811 = vst [vmem:[#allocation3 + $0x3c8] sm:$0xff] %v5302
  %5812 = vst [vmem:[#allocation3 + $0x3d0] sm:$0xff] %v5303
  %5813 = vst [vmem:[#allocation3 + $0x3d8] sm:$0xff] %v5304
  %5814 = vst [vmem:[#allocation3 + $0x3e0] sm:$0xff] %v5305
  %5815 = vst [vmem:[#allocation3 + $0x3e8] sm:$0xff] %v5404
  %5816 = vst [vmem:[#allocation3 + $0x3f0] sm:$0xff] %v5405
  %5817 = vst [vmem:[#allocation3 + $0x3f8] sm:$0xff] %v5406
  %5818 = vst [vmem:[#allocation3 + $0x400] sm:$0xff] %v5407
  %5819 = vst [vmem:[#allocation3 + $0x408] sm:$0xff] %v5408
  %5820 = vst [vmem:[#allocation3 + $0x410] sm:$0xff] %v5409
  %5821 = vst [vmem:[#allocation3 + $0x418] sm:$0xff] %v5410
  %5822 = vst [vmem:[#allocation3 + $0x420] sm:$0xff] %v5411
  %5823 = vst [vmem:[#allocation3 + $0x428] sm:$0xff] %v5412
  %5824 = vst [vmem:[#allocation3 + $0x430] sm:$0xff] %v5413
  %5825 = vst [vmem:[#allocation3 + $0x438] sm:$0xff] %v5414
  %5826 = vst [vmem:[#allocation3 + $0x440] sm:$0xff] %v5415
  %5827 = vst [vmem:[#allocation3 + $0x448] sm:$0xff] %v5416
  %5828 = vst [vmem:[#allocation3 + $0x450] sm:$0xff] %v5417
  %5829 = vst [vmem:[#allocation3 + $0x458] sm:$0xff] %v5418
  %5830 = vst [vmem:[#allocation3 + $0x460] sm:$0xff] %v5419
  %5831 = vst [vmem:[#allocation3 + $0x468] sm:$0xff] %v5420
  %5832 = vst [vmem:[#allocation3 + $0x470] sm:$0xff] %v5421
  %5833 = vst [vmem:[#allocation3 + $0x478] sm:$0xff] %v5422
  %5834 = vst [vmem:[#allocation3 + $0x480] sm:$0xff] %v5423
  %5835 = vst [vmem:[#allocation3 + $0x488] sm:$0xff] %v5424
  %5836 = vst [vmem:[#allocation3 + $0x490] sm:$0xff] %v5425
  %5837 = vst [vmem:[#allocation3 + $0x498] sm:$0xff] %v5426
  %5838 = vst [vmem:[#allocation3 + $0x4a0] sm:$0xff] %v5427
  %5839 = vst [vmem:[#allocation3 + $0x4a8] sm:$0xff] %v5428
  %5840 = vst [vmem:[#allocation3 + $0x4b0] sm:$0xff] %v5527
  %5841 = vst [vmem:[#allocation3 + $0x4b8] sm:$0xff] %v5528
  %5842 = vst [vmem:[#allocation3 + $0x4c0] sm:$0xff] %v5529
  %5843 = vst [vmem:[#allocation3 + $0x4c8] sm:$0xff] %v5530
  %5844 = vst [vmem:[#allocation3 + $0x4d0] sm:$0xff] %v5531
  %5845 = vst [vmem:[#allocation3 + $0x4d8] sm:$0xff] %v5532
  %5846 = vst [vmem:[#allocation3 + $0x4e0] sm:$0xff] %v5533
  %5847 = vst [vmem:[#allocation3 + $0x4e8] sm:$0xff] %v5534
  %5848 = vst [vmem:[#allocation3 + $0x4f0] sm:$0xff] %v5535
  %5849 = vst [vmem:[#allocation3 + $0x4f8] sm:$0xff] %v5536
  %5850 = vst [vmem:[#allocation3 + $0x500] sm:$0xff] %v5537
  %5851 = vst [vmem:[#allocation3 + $0x508] sm:$0xff] %v5538
  %5852 = vst [vmem:[#allocation3 + $0x510] sm:$0xff] %v5539
  %5853 = vst [vmem:[#allocation3 + $0x518] sm:$0xff] %v5540
  %5854 = vst [vmem:[#allocation3 + $0x520] sm:$0xff] %v5541
  %5855 = vst [vmem:[#allocation3 + $0x528] sm:$0xff] %v5542
  %5856 = vst [vmem:[#allocation3 + $0x530] sm:$0xff] %v5543
  %5857 = vst [vmem:[#allocation3 + $0x538] sm:$0xff] %v5544
  %5858 = vst [vmem:[#allocation3 + $0x540] sm:$0xff] %v5545
  %5859 = vst [vmem:[#allocation3 + $0x548] sm:$0xff] %v5546
  %5860 = vst [vmem:[#allocation3 + $0x550] sm:$0xff] %v5547
  %5861 = vst [vmem:[#allocation3 + $0x558] sm:$0xff] %v5548
  %5862 = vst [vmem:[#allocation3 + $0x560] sm:$0xff] %v5549
  %5863 = vst [vmem:[#allocation3 + $0x568] sm:$0xff] %v5550
  %5864 = vst [vmem:[#allocation3 + $0x570] sm:$0xff] %v5551
  %5865 = vst [vmem:[#allocation3 + $0x578] sm:$0xff] %v5650
  %5866 = vst [vmem:[#allocation3 + $0x580] sm:$0xff] %v5651
  %5867 = vst [vmem:[#allocation3 + $0x588] sm:$0xff] %v5652
  %5868 = vst [vmem:[#allocation3 + $0x590] sm:$0xff] %v5653
  %5869 = vst [vmem:[#allocation3 + $0x598] sm:$0xff] %v5654
  %5870 = vst [vmem:[#allocation3 + $0x5a0] sm:$0xff] %v5655
  %5871 = vst [vmem:[#allocation3 + $0x5a8] sm:$0xff] %v5656
  %5872 = vst [vmem:[#allocation3 + $0x5b0] sm:$0xff] %v5657
  %5873 = vst [vmem:[#allocation3 + $0x5b8] sm:$0xff] %v5658
  %5874 = vst [vmem:[#allocation3 + $0x5c0] sm:$0xff] %v5659
  %5875 = vst [vmem:[#allocation3 + $0x5c8] sm:$0xff] %v5660
  %5876 = vst [vmem:[#allocation3 + $0x5d0] sm:$0xff] %v5661
  %5877 = vst [vmem:[#allocation3 + $0x5d8] sm:$0xff] %v5662
  %5878 = vst [vmem:[#allocation3 + $0x5e0] sm:$0xff] %v5663
  %5879 = vst [vmem:[#allocation3 + $0x5e8] sm:$0xff] %v5664
  %5880 = vst [vmem:[#allocation3 + $0x5f0] sm:$0xff] %v5665
  %5881 = vst [vmem:[#allocation3 + $0x5f8] sm:$0xff] %v5666
  %5882 = vst [vmem:[#allocation3 + $0x600] sm:$0xff] %v5667
  %5883 = vst [vmem:[#allocation3 + $0x608] sm:$0xff] %v5668
  %5884 = vst [vmem:[#allocation3 + $0x610] sm:$0xff] %v5669
  %5885 = vst [vmem:[#allocation3 + $0x618] sm:$0xff] %v5670
  %5886 = vst [vmem:[#allocation3 + $0x620] sm:$0xff] %v5671
  %5887 = vst [vmem:[#allocation3 + $0x628] sm:$0xff] %v5672
  %5888 = vst [vmem:[#allocation3 + $0x630] sm:$0xff] %v5673
  %5889 = vst [vmem:[#allocation3 + $0x638] sm:$0xff] %v5674
  %5890 = vst [vmem:[#allocation3 + $0x640] sm:$0xff] %v5282
  %5891 = vst [vmem:[#allocation3 + $0x648] sm:$0xff] %v5283
  %5892 = vst [vmem:[#allocation3 + $0x650] sm:$0xff] %v5284
  %5893 = vst [vmem:[#allocation3 + $0x658] sm:$0xff] %v5285
  %5894 = vst [vmem:[#allocation3 + $0x660] sm:$0xff] %v5286
  %5895 = vst [vmem:[#allocation3 + $0x668] sm:$0xff] %v5287
  %5896 = vst [vmem:[#allocation3 + $0x670] sm:$0xff] %v5288
  %5897 = vst [vmem:[#allocation3 + $0x678] sm:$0xff] %v5289
  %5898 = vst [vmem:[#allocation3 + $0x680] sm:$0xff] %v5290
  %5899 = vst [vmem:[#allocation3 + $0x688] sm:$0xff] %v5291
  %5900 = vst [vmem:[#allocation3 + $0x690] sm:$0xff] %v5292
  %5901 = vst [vmem:[#allocation3 + $0x698] sm:$0xff] %v5293
  %5902 = vst [vmem:[#allocation3 + $0x6a0] sm:$0xff] %v5294
  %5903 = vst [vmem:[#allocation3 + $0x6a8] sm:$0xff] %v5295
  %5904 = vst [vmem:[#allocation3 + $0x6b0] sm:$0xff] %v5296
  %5905 = vst [vmem:[#allocation3 + $0x6b8] sm:$0xff] %v5297
  %5906 = vst [vmem:[#allocation3 + $0x6c0] sm:$0xff] %v5298
  %5907 = vst [vmem:[#allocation3 + $0x6c8] sm:$0xff] %v5299
  %5908 = vst [vmem:[#allocation3 + $0x6d0] sm:$0xff] %v5300
  %5909 = vst [vmem:[#allocation3 + $0x6d8] sm:$0xff] %v5301
  %5910 = vst [vmem:[#allocation3 + $0x6e0] sm:$0xff] %v5302
  %5911 = vst [vmem:[#allocation3 + $0x6e8] sm:$0xff] %v5303
  %5912 = vst [vmem:[#allocation3 + $0x6f0] sm:$0xff] %v5304
  %5913 = vst [vmem:[#allocation3 + $0x6f8] sm:$0xff] %v5305
  %5914 = vst [vmem:[#allocation3 + $0x700] sm:$0xff] %v5306
  %5915 = vst [vmem:[#allocation3 + $0x708] sm:$0xff] %v5405
  %5916 = vst [vmem:[#allocation3 + $0x710] sm:$0xff] %v5406
  %5917 = vst [vmem:[#allocation3 + $0x718] sm:$0xff] %v5407
  %5918 = vst [vmem:[#allocation3 + $0x720] sm:$0xff] %v5408
  %5919 = vst [vmem:[#allocation3 + $0x728] sm:$0xff] %v5409
  %5920 = vst [vmem:[#allocation3 + $0x730] sm:$0xff] %v5410
  %5921 = vst [vmem:[#allocation3 + $0x738] sm:$0xff] %v5411
  %5922 = vst [vmem:[#allocation3 + $0x740] sm:$0xff] %v5412
  %5923 = vst [vmem:[#allocation3 + $0x748] sm:$0xff] %v5413
  %5924 = vst [vmem:[#allocation3 + $0x750] sm:$0xff] %v5414
  %5925 = vst [vmem:[#allocation3 + $0x758] sm:$0xff] %v5415
  %5926 = vst [vmem:[#allocation3 + $0x760] sm:$0xff] %v5416
  %5927 = vst [vmem:[#allocation3 + $0x768] sm:$0xff] %v5417
  %5928 = vst [vmem:[#allocation3 + $0x770] sm:$0xff] %v5418
  %5929 = vst [vmem:[#allocation3 + $0x778] sm:$0xff] %v5419
  %5930 = vst [vmem:[#allocation3 + $0x780] sm:$0xff] %v5420
  %5931 = vst [vmem:[#allocation3 + $0x788] sm:$0xff] %v5421
  %5932 = vst [vmem:[#allocation3 + $0x790] sm:$0xff] %v5422
  %5933 = vst [vmem:[#allocation3 + $0x798] sm:$0xff] %v5423
  %5934 = vst [vmem:[#allocation3 + $0x7a0] sm:$0xff] %v5424
  %5935 = vst [vmem:[#allocation3 + $0x7a8] sm:$0xff] %v5425
  %5936 = vst [vmem:[#allocation3 + $0x7b0] sm:$0xff] %v5426
  %5937 = vst [vmem:[#allocation3 + $0x7b8] sm:$0xff] %v5427
  %5938 = vst [vmem:[#allocation3 + $0x7c0] sm:$0xff] %v5428
  %5939 = vst [vmem:[#allocation3 + $0x7c8] sm:$0xff] %v5429
  %5940 = vst [vmem:[#allocation3 + $0x7d0] sm:$0xff] %v5528
  %5941 = vst [vmem:[#allocation3 + $0x7d8] sm:$0xff] %v5529
  %5942 = vst [vmem:[#allocation3 + $0x7e0] sm:$0xff] %v5530
  %5943 = vst [vmem:[#allocation3 + $0x7e8] sm:$0xff] %v5531
  %5944 = vst [vmem:[#allocation3 + $0x7f0] sm:$0xff] %v5532
  %5945 = vst [vmem:[#allocation3 + $0x7f8] sm:$0xff] %v5533
  %5946 = vst [vmem:[#allocation3 + $0x800] sm:$0xff] %v5534
  %5947 = vst [vmem:[#allocation3 + $0x808] sm:$0xff] %v5535
  %5948 = vst [vmem:[#allocation3 + $0x810] sm:$0xff] %v5536
  %5949 = vst [vmem:[#allocation3 + $0x818] sm:$0xff] %v5537
  %5950 = vst [vmem:[#allocation3 + $0x820] sm:$0xff] %v5538
  %5951 = vst [vmem:[#allocation3 + $0x828] sm:$0xff] %v5539
  %5952 = vst [vmem:[#allocation3 + $0x830] sm:$0xff] %v5540
  %5953 = vst [vmem:[#allocation3 + $0x838] sm:$0xff] %v5541
  %5954 = vst [vmem:[#allocation3 + $0x840] sm:$0xff] %v5542
  %5955 = vst [vmem:[#allocation3 + $0x848] sm:$0xff] %v5543
  %5956 = vst [vmem:[#allocation3 + $0x850] sm:$0xff] %v5544
  %5957 = vst [vmem:[#allocation3 + $0x858] sm:$0xff] %v5545
  %5958 = vst [vmem:[#allocation3 + $0x860] sm:$0xff] %v5546
  %5959 = vst [vmem:[#allocation3 + $0x868] sm:$0xff] %v5547
  %5960 = vst [vmem:[#allocation3 + $0x870] sm:$0xff] %v5548
  %5961 = vst [vmem:[#allocation3 + $0x878] sm:$0xff] %v5549
  %5962 = vst [vmem:[#allocation3 + $0x880] sm:$0xff] %v5550
  %5963 = vst [vmem:[#allocation3 + $0x888] sm:$0xff] %v5551
  %5964 = vst [vmem:[#allocation3 + $0x890] sm:$0xff] %v5552
  %5965 = vst [vmem:[#allocation3 + $0x898] sm:$0xff] %v5651
  %5966 = vst [vmem:[#allocation3 + $0x8a0] sm:$0xff] %v5652
  %5967 = vst [vmem:[#allocation3 + $0x8a8] sm:$0xff] %v5653
  %5968 = vst [vmem:[#allocation3 + $0x8b0] sm:$0xff] %v5654
  %5969 = vst [vmem:[#allocation3 + $0x8b8] sm:$0xff] %v5655
  %5970 = vst [vmem:[#allocation3 + $0x8c0] sm:$0xff] %v5656
  %5971 = vst [vmem:[#allocation3 + $0x8c8] sm:$0xff] %v5657
  %5972 = vst [vmem:[#allocation3 + $0x8d0] sm:$0xff] %v5658
  %5973 = vst [vmem:[#allocation3 + $0x8d8] sm:$0xff] %v5659
  %5974 = vst [vmem:[#allocation3 + $0x8e0] sm:$0xff] %v5660
  %5975 = vst [vmem:[#allocation3 + $0x8e8] sm:$0xff] %v5661
  %5976 = vst [vmem:[#allocation3 + $0x8f0] sm:$0xff] %v5662
  %5977 = vst [vmem:[#allocation3 + $0x8f8] sm:$0xff] %v5663
  %5978 = vst [vmem:[#allocation3 + $0x900] sm:$0xff] %v5664
  %5979 = vst [vmem:[#allocation3 + $0x908] sm:$0xff] %v5665
  %5980 = vst [vmem:[#allocation3 + $0x910] sm:$0xff] %v5666
  %5981 = vst [vmem:[#allocation3 + $0x918] sm:$0xff] %v5667
  %5982 = vst [vmem:[#allocation3 + $0x920] sm:$0xff] %v5668
  %5983 = vst [vmem:[#allocation3 + $0x928] sm:$0xff] %v5669
  %5984 = vst [vmem:[#allocation3 + $0x930] sm:$0xff] %v5670
  %5985 = vst [vmem:[#allocation3 + $0x938] sm:$0xff] %v5671
  %5986 = vst [vmem:[#allocation3 + $0x940] sm:$0xff] %v5672
  %5987 = vst [vmem:[#allocation3 + $0x948] sm:$0xff] %v5673
  %5988 = vst [vmem:[#allocation3 + $0x950] sm:$0xff] %v5674
  %5989 = vst [vmem:[#allocation3 + $0x958] sm:$0xff] %v5675
  %5990 = vst [vmem:[#allocation3 + $0x960] sm:$0xff] %v5287
  %5991 = vst [vmem:[#allocation3 + $0x968] sm:$0xff] %v5288
  %5992 = vst [vmem:[#allocation3 + $0x970] sm:$0xff] %v5289
  %5993 = vst [vmem:[#allocation3 + $0x978] sm:$0xff] %v5290
  %5994 = vst [vmem:[#allocation3 + $0x980] sm:$0xff] %v5291
  %5995 = vst [vmem:[#allocation3 + $0x988] sm:$0xff] %v5292
  %5996 = vst [vmem:[#allocation3 + $0x990] sm:$0xff] %v5293
  %5997 = vst [vmem:[#allocation3 + $0x998] sm:$0xff] %v5294
  %5998 = vst [vmem:[#allocation3 + $0x9a0] sm:$0xff] %v5295
  %5999 = vst [vmem:[#allocation3 + $0x9a8] sm:$0xff] %v5296
  %6000 = vst [vmem:[#allocation3 + $0x9b0] sm:$0xff] %v5297
  %6001 = vst [vmem:[#allocation3 + $0x9b8] sm:$0xff] %v5298
  %6002 = vst [vmem:[#allocation3 + $0x9c0] sm:$0xff] %v5299
  %6003 = vst [vmem:[#allocation3 + $0x9c8] sm:$0xff] %v5300
  %6004 = vst [vmem:[#allocation3 + $0x9d0] sm:$0xff] %v5301
  %6005 = vst [vmem:[#allocation3 + $0x9d8] sm:$0xff] %v5302
  %6006 = vst [vmem:[#allocation3 + $0x9e0] sm:$0xff] %v5303
  %6007 = vst [vmem:[#allocation3 + $0x9e8] sm:$0xff] %v5304
  %6008 = vst [vmem:[#allocation3 + $0x9f0] sm:$0xff] %v5305
  %6009 = vst [vmem:[#allocation3 + $0x9f8] sm:$0xff] %v5306
  %6010 = vst [vmem:[#allocation3 + $0xa00] sm:$0xff] %v5307
  %6011 = vst [vmem:[#allocation3 + $0xa08] sm:$0xff] %v5308
  %6012 = vst [vmem:[#allocation3 + $0xa10] sm:$0xff] %v5309
  %6013 = vst [vmem:[#allocation3 + $0xa18] sm:$0xff] %v5310
  %6014 = vst [vmem:[#allocation3 + $0xa20] sm:$0xff] %v5311
  %6015 = vst [vmem:[#allocation3 + $0xa28] sm:$0xff] %v5410
  %6016 = vst [vmem:[#allocation3 + $0xa30] sm:$0xff] %v5411
  %6017 = vst [vmem:[#allocation3 + $0xa38] sm:$0xff] %v5412
  %6018 = vst [vmem:[#allocation3 + $0xa40] sm:$0xff] %v5413
  %6019 = vst [vmem:[#allocation3 + $0xa48] sm:$0xff] %v5414
  %6020 = vst [vmem:[#allocation3 + $0xa50] sm:$0xff] %v5415
  %6021 = vst [vmem:[#allocation3 + $0xa58] sm:$0xff] %v5416
  %6022 = vst [vmem:[#allocation3 + $0xa60] sm:$0xff] %v5417
  %6023 = vst [vmem:[#allocation3 + $0xa68] sm:$0xff] %v5418
  %6024 = vst [vmem:[#allocation3 + $0xa70] sm:$0xff] %v5419
  %6025 = vst [vmem:[#allocation3 + $0xa78] sm:$0xff] %v5420
  %6026 = vst [vmem:[#allocation3 + $0xa80] sm:$0xff] %v5421
  %6027 = vst [vmem:[#allocation3 + $0xa88] sm:$0xff] %v5422
  %6028 = vst [vmem:[#allocation3 + $0xa90] sm:$0xff] %v5423
  %6029 = vst [vmem:[#allocation3 + $0xa98] sm:$0xff] %v5424
  %6030 = vst [vmem:[#allocation3 + $0xaa0] sm:$0xff] %v5425
  %6031 = vst [vmem:[#allocation3 + $0xaa8] sm:$0xff] %v5426
  %6032 = vst [vmem:[#allocation3 + $0xab0] sm:$0xff] %v5427
  %6033 = vst [vmem:[#allocation3 + $0xab8] sm:$0xff] %v5428
  %6034 = vst [vmem:[#allocation3 + $0xac0] sm:$0xff] %v5429
  %6035 = vst [vmem:[#allocation3 + $0xac8] sm:$0xff] %v5430
  %6036 = vst [vmem:[#allocation3 + $0xad0] sm:$0xff] %v5431
  %6037 = vst [vmem:[#allocation3 + $0xad8] sm:$0xff] %v5432
  %6038 = vst [vmem:[#allocation3 + $0xae0] sm:$0xff] %v5433
  %6039 = vst [vmem:[#allocation3 + $0xae8] sm:$0xff] %v5434
  %6040 = vst [vmem:[#allocation3 + $0xaf0] sm:$0xff] %v5533
  %6041 = vst [vmem:[#allocation3 + $0xaf8] sm:$0xff] %v5534
  %6042 = vst [vmem:[#allocation3 + $0xb00] sm:$0xff] %v5535
  %6043 = vst [vmem:[#allocation3 + $0xb08] sm:$0xff] %v5536
  %6044 = vst [vmem:[#allocation3 + $0xb10] sm:$0xff] %v5537
  %6045 = vst [vmem:[#allocation3 + $0xb18] sm:$0xff] %v5538
  %6046 = vst [vmem:[#allocation3 + $0xb20] sm:$0xff] %v5539
  %6047 = vst [vmem:[#allocation3 + $0xb28] sm:$0xff] %v5540
  %6048 = vst [vmem:[#allocation3 + $0xb30] sm:$0xff] %v5541
  %6049 = vst [vmem:[#allocation3 + $0xb38] sm:$0xff] %v5542
  %6050 = vst [vmem:[#allocation3 + $0xb40] sm:$0xff] %v5543
  %6051 = vst [vmem:[#allocation3 + $0xb48] sm:$0xff] %v5544
  %6052 = vst [vmem:[#allocation3 + $0xb50] sm:$0xff] %v5545
  %6053 = vst [vmem:[#allocation3 + $0xb58] sm:$0xff] %v5546
  %6054 = vst [vmem:[#allocation3 + $0xb60] sm:$0xff] %v5547
  %6055 = vst [vmem:[#allocation3 + $0xb68] sm:$0xff] %v5548
  %6056 = vst [vmem:[#allocation3 + $0xb70] sm:$0xff] %v5549
  %6057 = vst [vmem:[#allocation3 + $0xb78] sm:$0xff] %v5550
  %6058 = vst [vmem:[#allocation3 + $0xb80] sm:$0xff] %v5551
  %6059 = vst [vmem:[#allocation3 + $0xb88] sm:$0xff] %v5552
  %6060 = vst [vmem:[#allocation3 + $0xb90] sm:$0xff] %v5553
  %6061 = vst [vmem:[#allocation3 + $0xb98] sm:$0xff] %v5554
  %6062 = vst [vmem:[#allocation3 + $0xba0] sm:$0xff] %v5555
  %6063 = vst [vmem:[#allocation3 + $0xba8] sm:$0xff] %v5556
  %6064 = vst [vmem:[#allocation3 + $0xbb0] sm:$0xff] %v5557
  %6065 = vst [vmem:[#allocation3 + $0xbb8] sm:$0xff] %v5656
  %6066 = vst [vmem:[#allocation3 + $0xbc0] sm:$0xff] %v5657
  %6067 = vst [vmem:[#allocation3 + $0xbc8] sm:$0xff] %v5658
  %6068 = vst [vmem:[#allocation3 + $0xbd0] sm:$0xff] %v5659
  %6069 = vst [vmem:[#allocation3 + $0xbd8] sm:$0xff] %v5660
  %6070 = vst [vmem:[#allocation3 + $0xbe0] sm:$0xff] %v5661
  %6071 = vst [vmem:[#allocation3 + $0xbe8] sm:$0xff] %v5662
  %6072 = vst [vmem:[#allocation3 + $0xbf0] sm:$0xff] %v5663
  %6073 = vst [vmem:[#allocation3 + $0xbf8] sm:$0xff] %v5664
  %6074 = vst [vmem:[#allocation3 + $0xc00] sm:$0xff] %v5665
  %6075 = vst [vmem:[#allocation3 + $0xc08] sm:$0xff] %v5666
  %6076 = vst [vmem:[#allocation3 + $0xc10] sm:$0xff] %v5667
  %6077 = vst [vmem:[#allocation3 + $0xc18] sm:$0xff] %v5668
  %6078 = vst [vmem:[#allocation3 + $0xc20] sm:$0xff] %v5669
  %6079 = vst [vmem:[#allocation3 + $0xc28] sm:$0xff] %v5670
  %6080 = vst [vmem:[#allocation3 + $0xc30] sm:$0xff] %v5671
  %6081 = vst [vmem:[#allocation3 + $0xc38] sm:$0xff] %v5672
  %6082 = vst [vmem:[#allocation3 + $0xc40] sm:$0xff] %v5673
  %6083 = vst [vmem:[#allocation3 + $0xc48] sm:$0xff] %v5674
  %6084 = vst [vmem:[#allocation3 + $0xc50] sm:$0xff] %v5675
  %6085 = vst [vmem:[#allocation3 + $0xc58] sm:$0xff] %v5676
  %6086 = vst [vmem:[#allocation3 + $0xc60] sm:$0xff] %v5677
  %6087 = vst [vmem:[#allocation3 + $0xc68] sm:$0xff] %v5678
  %6088 = vst [vmem:[#allocation3 + $0xc70] sm:$0xff] %v5679
  %6089 = vst [vmem:[#allocation3 + $0xc78] sm:$0xff] %v5680
  %6090 = vst [vmem:[#allocation3 + $0xc80] sm:$0xff] %v5288
  %6091 = vst [vmem:[#allocation3 + $0xc88] sm:$0xff] %v5289
  %6092 = vst [vmem:[#allocation3 + $0xc90] sm:$0xff] %v5290
  %6093 = vst [vmem:[#allocation3 + $0xc98] sm:$0xff] %v5291
  %6094 = vst [vmem:[#allocation3 + $0xca0] sm:$0xff] %v5292
  %6095 = vst [vmem:[#allocation3 + $0xca8] sm:$0xff] %v5293
  %6096 = vst [vmem:[#allocation3 + $0xcb0] sm:$0xff] %v5294
  %6097 = vst [vmem:[#allocation3 + $0xcb8] sm:$0xff] %v5295
  %6098 = vst [vmem:[#allocation3 + $0xcc0] sm:$0xff] %v5296
  %6099 = vst [vmem:[#allocation3 + $0xcc8] sm:$0xff] %v5297
  %6100 = vst [vmem:[#allocation3 + $0xcd0] sm:$0xff] %v5298
  %6101 = vst [vmem:[#allocation3 + $0xcd8] sm:$0xff] %v5299
  %6102 = vst [vmem:[#allocation3 + $0xce0] sm:$0xff] %v5300
  %6103 = vst [vmem:[#allocation3 + $0xce8] sm:$0xff] %v5301
  %6104 = vst [vmem:[#allocation3 + $0xcf0] sm:$0xff] %v5302
  %6105 = vst [vmem:[#allocation3 + $0xcf8] sm:$0xff] %v5303
  %6106 = vst [vmem:[#allocation3 + $0xd00] sm:$0xff] %v5304
  %6107 = vst [vmem:[#allocation3 + $0xd08] sm:$0xff] %v5305
  %6108 = vst [vmem:[#allocation3 + $0xd10] sm:$0xff] %v5306
  %6109 = vst [vmem:[#allocation3 + $0xd18] sm:$0xff] %v5307
  %6110 = vst [vmem:[#allocation3 + $0xd20] sm:$0xff] %v5308
  %6111 = vst [vmem:[#allocation3 + $0xd28] sm:$0xff] %v5309
  %6112 = vst [vmem:[#allocation3 + $0xd30] sm:$0xff] %v5310
  %6113 = vst [vmem:[#allocation3 + $0xd38] sm:$0xff] %v5311
  %6114 = vst [vmem:[#allocation3 + $0xd40] sm:$0xff] %v5312
  %6115 = vst [vmem:[#allocation3 + $0xd48] sm:$0xff] %v5411
  %6116 = vst [vmem:[#allocation3 + $0xd50] sm:$0xff] %v5412
  %6117 = vst [vmem:[#allocation3 + $0xd58] sm:$0xff] %v5413
  %6118 = vst [vmem:[#allocation3 + $0xd60] sm:$0xff] %v5414
  %6119 = vst [vmem:[#allocation3 + $0xd68] sm:$0xff] %v5415
  %6120 = vst [vmem:[#allocation3 + $0xd70] sm:$0xff] %v5416
  %6121 = vst [vmem:[#allocation3 + $0xd78] sm:$0xff] %v5417
  %6122 = vst [vmem:[#allocation3 + $0xd80] sm:$0xff] %v5418
  %6123 = vst [vmem:[#allocation3 + $0xd88] sm:$0xff] %v5419
  %6124 = vst [vmem:[#allocation3 + $0xd90] sm:$0xff] %v5420
  %6125 = vst [vmem:[#allocation3 + $0xd98] sm:$0xff] %v5421
  %6126 = vst [vmem:[#allocation3 + $0xda0] sm:$0xff] %v5422
  %6127 = vst [vmem:[#allocation3 + $0xda8] sm:$0xff] %v5423
  %6128 = vst [vmem:[#allocation3 + $0xdb0] sm:$0xff] %v5424
  %6129 = vst [vmem:[#allocation3 + $0xdb8] sm:$0xff] %v5425
  %6130 = vst [vmem:[#allocation3 + $0xdc0] sm:$0xff] %v5426
  %6131 = vst [vmem:[#allocation3 + $0xdc8] sm:$0xff] %v5427
  %6132 = vst [vmem:[#allocation3 + $0xdd0] sm:$0xff] %v5428
  %6133 = vst [vmem:[#allocation3 + $0xdd8] sm:$0xff] %v5429
  %6134 = vst [vmem:[#allocation3 + $0xde0] sm:$0xff] %v5430
  %6135 = vst [vmem:[#allocation3 + $0xde8] sm:$0xff] %v5431
  %6136 = vst [vmem:[#allocation3 + $0xdf0] sm:$0xff] %v5432
  %6137 = vst [vmem:[#allocation3 + $0xdf8] sm:$0xff] %v5433
  %6138 = vst [vmem:[#allocation3 + $0xe00] sm:$0xff] %v5434
  %6139 = vst [vmem:[#allocation3 + $0xe08] sm:$0xff] %v5435
  %6140 = vst [vmem:[#allocation3 + $0xe10] sm:$0xff] %v5534
  %6141 = vst [vmem:[#allocation3 + $0xe18] sm:$0xff] %v5535
  %6142 = vst [vmem:[#allocation3 + $0xe20] sm:$0xff] %v5536
  %6143 = vst [vmem:[#allocation3 + $0xe28] sm:$0xff] %v5537
  %6144 = vst [vmem:[#allocation3 + $0xe30] sm:$0xff] %v5538
  %6145 = vst [vmem:[#allocation3 + $0xe38] sm:$0xff] %v5539
  %6146 = vst [vmem:[#allocation3 + $0xe40] sm:$0xff] %v5540
  %6147 = vst [vmem:[#allocation3 + $0xe48] sm:$0xff] %v5541
  %6148 = vst [vmem:[#allocation3 + $0xe50] sm:$0xff] %v5542
  %6149 = vst [vmem:[#allocation3 + $0xe58] sm:$0xff] %v5543
  %6150 = vst [vmem:[#allocation3 + $0xe60] sm:$0xff] %v5544
  %6151 = vst [vmem:[#allocation3 + $0xe68] sm:$0xff] %v5545
  %6152 = vst [vmem:[#allocation3 + $0xe70] sm:$0xff] %v5546
  %6153 = vst [vmem:[#allocation3 + $0xe78] sm:$0xff] %v5547
  %6154 = vst [vmem:[#allocation3 + $0xe80] sm:$0xff] %v5548
  %6155 = vst [vmem:[#allocation3 + $0xe88] sm:$0xff] %v5549
  %6156 = vst [vmem:[#allocation3 + $0xe90] sm:$0xff] %v5550
  %6157 = vst [vmem:[#allocation3 + $0xe98] sm:$0xff] %v5551
  %6158 = vst [vmem:[#allocation3 + $0xea0] sm:$0xff] %v5552
  %6159 = vst [vmem:[#allocation3 + $0xea8] sm:$0xff] %v5553
  %6160 = vst [vmem:[#allocation3 + $0xeb0] sm:$0xff] %v5554
  %6161 = vst [vmem:[#allocation3 + $0xeb8] sm:$0xff] %v5555
  %6162 = vst [vmem:[#allocation3 + $0xec0] sm:$0xff] %v5556
  %6163 = vst [vmem:[#allocation3 + $0xec8] sm:$0xff] %v5557
  %6164 = vst [vmem:[#allocation3 + $0xed0] sm:$0xff] %v5558
  %6165 = vst [vmem:[#allocation3 + $0xed8] sm:$0xff] %v5657
  %6166 = vst [vmem:[#allocation3 + $0xee0] sm:$0xff] %v5658
  %6167 = vst [vmem:[#allocation3 + $0xee8] sm:$0xff] %v5659
  %6168 = vst [vmem:[#allocation3 + $0xef0] sm:$0xff] %v5660
  %6169 = vst [vmem:[#allocation3 + $0xef8] sm:$0xff] %v5661
  %6170 = vst [vmem:[#allocation3 + $0xf00] sm:$0xff] %v5662
  %6171 = vst [vmem:[#allocation3 + $0xf08] sm:$0xff] %v5663
  %6172 = vst [vmem:[#allocation3 + $0xf10] sm:$0xff] %v5664
  %6173 = vst [vmem:[#allocation3 + $0xf18] sm:$0xff] %v5665
  %6174 = vst [vmem:[#allocation3 + $0xf20] sm:$0xff] %v5666
  %6175 = vst [vmem:[#allocation3 + $0xf28] sm:$0xff] %v5667
  %6176 = vst [vmem:[#allocation3 + $0xf30] sm:$0xff] %v5668
  %6177 = vst [vmem:[#allocation3 + $0xf38] sm:$0xff] %v5669
  %6178 = vst [vmem:[#allocation3 + $0xf40] sm:$0xff] %v5670
  %6179 = vst [vmem:[#allocation3 + $0xf48] sm:$0xff] %v5671
  %6180 = vst [vmem:[#allocation3 + $0xf50] sm:$0xff] %v5672
  %6181 = vst [vmem:[#allocation3 + $0xf58] sm:$0xff] %v5673
  %6182 = vst [vmem:[#allocation3 + $0xf60] sm:$0xff] %v5674
  %6183 = vst [vmem:[#allocation3 + $0xf68] sm:$0xff] %v5675
  %6184 = vst [vmem:[#allocation3 + $0xf70] sm:$0xff] %v5676
  %6185 = vst [vmem:[#allocation3 + $0xf78] sm:$0xff] %v5677
  %6186 = vst [vmem:[#allocation3 + $0xf80] sm:$0xff] %v5678
  %6187 = vst [vmem:[#allocation3 + $0xf88] sm:$0xff] %v5679
  %6188 = vst [vmem:[#allocation3 + $0xf90] sm:$0xff] %v5680
  %6189 = vst [vmem:[#allocation3 + $0xf98] sm:$0xff] %v5681
  %6190 = vst [vmem:[#allocation3 + $0xfa0] sm:$0xff] %v5289
  %6191 = vst [vmem:[#allocation3 + $0xfa8] sm:$0xff] %v5290
  %6192 = vst [vmem:[#allocation3 + $0xfb0] sm:$0xff] %v5291
  %6193 = vst [vmem:[#allocation3 + $0xfb8] sm:$0xff] %v5292
  %6194 = vst [vmem:[#allocation3 + $0xfc0] sm:$0xff] %v5293
  %6195 = vst [vmem:[#allocation3 + $0xfc8] sm:$0xff] %v5294
  %6196 = vst [vmem:[#allocation3 + $0xfd0] sm:$0xff] %v5295
  %6197 = vst [vmem:[#allocation3 + $0xfd8] sm:$0xff] %v5296
  %6198 = vst [vmem:[#allocation3 + $0xfe0] sm:$0xff] %v5297
  %6199 = vst [vmem:[#allocation3 + $0xfe8] sm:$0xff] %v5298
  %6200 = vst [vmem:[#allocation3 + $0xff0] sm:$0xff] %v5299
  %6201 = vst [vmem:[#allocation3 + $0xff8] sm:$0xff] %v5300
  %6202 = vst [vmem:[#allocation3 + $0x1000] sm:$0xff] %v5301
  %6203 = vst [vmem:[#allocation3 + $0x1008] sm:$0xff] %v5302
  %6204 = vst [vmem:[#allocation3 + $0x1010] sm:$0xff] %v5303
  %6205 = vst [vmem:[#allocation3 + $0x1018] sm:$0xff] %v5304
  %6206 = vst [vmem:[#allocation3 + $0x1020] sm:$0xff] %v5305
  %6207 = vst [vmem:[#allocation3 + $0x1028] sm:$0xff] %v5306
  %6208 = vst [vmem:[#allocation3 + $0x1030] sm:$0xff] %v5307
  %6209 = vst [vmem:[#allocation3 + $0x1038] sm:$0xff] %v5308
  %6210 = vst [vmem:[#allocation3 + $0x1040] sm:$0xff] %v5309
  %6211 = vst [vmem:[#allocation3 + $0x1048] sm:$0xff] %v5310
  %6212 = vst [vmem:[#allocation3 + $0x1050] sm:$0xff] %v5311
  %6213 = vst [vmem:[#allocation3 + $0x1058] sm:$0xff] %v5312
  %6214 = vst [vmem:[#allocation3 + $0x1060] sm:$0xff] %v5313
  %6215 = vst [vmem:[#allocation3 + $0x1068] sm:$0xff] %v5412
  %6216 = vst [vmem:[#allocation3 + $0x1070] sm:$0xff] %v5413
  %6217 = vst [vmem:[#allocation3 + $0x1078] sm:$0xff] %v5414
  %6218 = vst [vmem:[#allocation3 + $0x1080] sm:$0xff] %v5415
  %6219 = vst [vmem:[#allocation3 + $0x1088] sm:$0xff] %v5416
  %6220 = vst [vmem:[#allocation3 + $0x1090] sm:$0xff] %v5417
  %6221 = vst [vmem:[#allocation3 + $0x1098] sm:$0xff] %v5418
  %6222 = vst [vmem:[#allocation3 + $0x10a0] sm:$0xff] %v5419
  %6223 = vst [vmem:[#allocation3 + $0x10a8] sm:$0xff] %v5420
  %6224 = vst [vmem:[#allocation3 + $0x10b0] sm:$0xff] %v5421
  %6225 = vst [vmem:[#allocation3 + $0x10b8] sm:$0xff] %v5422
  %6226 = vst [vmem:[#allocation3 + $0x10c0] sm:$0xff] %v5423
  %6227 = vst [vmem:[#allocation3 + $0x10c8] sm:$0xff] %v5424
  %6228 = vst [vmem:[#allocation3 + $0x10d0] sm:$0xff] %v5425
  %6229 = vst [vmem:[#allocation3 + $0x10d8] sm:$0xff] %v5426
  %6230 = vst [vmem:[#allocation3 + $0x10e0] sm:$0xff] %v5427
  %6231 = vst [vmem:[#allocation3 + $0x10e8] sm:$0xff] %v5428
  %6232 = vst [vmem:[#allocation3 + $0x10f0] sm:$0xff] %v5429
  %6233 = vst [vmem:[#allocation3 + $0x10f8] sm:$0xff] %v5430
  %6234 = vst [vmem:[#allocation3 + $0x1100] sm:$0xff] %v5431
  %6235 = vst [vmem:[#allocation3 + $0x1108] sm:$0xff] %v5432
  %6236 = vst [vmem:[#allocation3 + $0x1110] sm:$0xff] %v5433
  %6237 = vst [vmem:[#allocation3 + $0x1118] sm:$0xff] %v5434
  %6238 = vst [vmem:[#allocation3 + $0x1120] sm:$0xff] %v5435
  %6239 = vst [vmem:[#allocation3 + $0x1128] sm:$0xff] %v5436
  %6240 = vst [vmem:[#allocation3 + $0x1130] sm:$0xff] %v5535
  %6241 = vst [vmem:[#allocation3 + $0x1138] sm:$0xff] %v5536
  %6242 = vst [vmem:[#allocation3 + $0x1140] sm:$0xff] %v5537
  %6243 = vst [vmem:[#allocation3 + $0x1148] sm:$0xff] %v5538
  %6244 = vst [vmem:[#allocation3 + $0x1150] sm:$0xff] %v5539
  %6245 = vst [vmem:[#allocation3 + $0x1158] sm:$0xff] %v5540
  %6246 = vst [vmem:[#allocation3 + $0x1160] sm:$0xff] %v5541
  %6247 = vst [vmem:[#allocation3 + $0x1168] sm:$0xff] %v5542
  %6248 = vst [vmem:[#allocation3 + $0x1170] sm:$0xff] %v5543
  %6249 = vst [vmem:[#allocation3 + $0x1178] sm:$0xff] %v5544
  %6250 = vst [vmem:[#allocation3 + $0x1180] sm:$0xff] %v5545
  %6251 = vst [vmem:[#allocation3 + $0x1188] sm:$0xff] %v5546
  %6252 = vst [vmem:[#allocation3 + $0x1190] sm:$0xff] %v5547
  %6253 = vst [vmem:[#allocation3 + $0x1198] sm:$0xff] %v5548
  %6254 = vst [vmem:[#allocation3 + $0x11a0] sm:$0xff] %v5549
  %6255 = vst [vmem:[#allocation3 + $0x11a8] sm:$0xff] %v5550
  %6256 = vst [vmem:[#allocation3 + $0x11b0] sm:$0xff] %v5551
  %6257 = vst [vmem:[#allocation3 + $0x11b8] sm:$0xff] %v5552
  %6258 = vst [vmem:[#allocation3 + $0x11c0] sm:$0xff] %v5553
  %6259 = vst [vmem:[#allocation3 + $0x11c8] sm:$0xff] %v5554
  %6260 = vst [vmem:[#allocation3 + $0x11d0] sm:$0xff] %v5555
  %6261 = vst [vmem:[#allocation3 + $0x11d8] sm:$0xff] %v5556
  %6262 = vst [vmem:[#allocation3 + $0x11e0] sm:$0xff] %v5557
  %6263 = vst [vmem:[#allocation3 + $0x11e8] sm:$0xff] %v5558
  %6264 = vst [vmem:[#allocation3 + $0x11f0] sm:$0xff] %v5559
  %6265 = vst [vmem:[#allocation3 + $0x11f8] sm:$0xff] %v5658
  %6266 = vst [vmem:[#allocation3 + $0x1200] sm:$0xff] %v5659
  %6267 = vst [vmem:[#allocation3 + $0x1208] sm:$0xff] %v5660
  %6268 = vst [vmem:[#allocation3 + $0x1210] sm:$0xff] %v5661
  %6269 = vst [vmem:[#allocation3 + $0x1218] sm:$0xff] %v5662
  %6270 = vst [vmem:[#allocation3 + $0x1220] sm:$0xff] %v5663
  %6271 = vst [vmem:[#allocation3 + $0x1228] sm:$0xff] %v5664
  %6272 = vst [vmem:[#allocation3 + $0x1230] sm:$0xff] %v5665
  %6273 = vst [vmem:[#allocation3 + $0x1238] sm:$0xff] %v5666
  %6274 = vst [vmem:[#allocation3 + $0x1240] sm:$0xff] %v5667
  %6275 = vst [vmem:[#allocation3 + $0x1248] sm:$0xff] %v5668
  %6276 = vst [vmem:[#allocation3 + $0x1250] sm:$0xff] %v5669
  %6277 = vst [vmem:[#allocation3 + $0x1258] sm:$0xff] %v5670
  %6278 = vst [vmem:[#allocation3 + $0x1260] sm:$0xff] %v5671
  %6279 = vst [vmem:[#allocation3 + $0x1268] sm:$0xff] %v5672
  %6280 = vst [vmem:[#allocation3 + $0x1270] sm:$0xff] %v5673
  %6281 = vst [vmem:[#allocation3 + $0x1278] sm:$0xff] %v5674
  %6282 = vst [vmem:[#allocation3 + $0x1280] sm:$0xff] %v5675
  %6283 = vst [vmem:[#allocation3 + $0x1288] sm:$0xff] %v5676
  %6284 = vst [vmem:[#allocation3 + $0x1290] sm:$0xff] %v5677
  %6285 = vst [vmem:[#allocation3 + $0x1298] sm:$0xff] %v5678
  %6286 = vst [vmem:[#allocation3 + $0x12a0] sm:$0xff] %v5679
  %6287 = vst [vmem:[#allocation3 + $0x12a8] sm:$0xff] %v5680
  %6288 = vst [vmem:[#allocation3 + $0x12b0] sm:$0xff] %v5681
  %6289 = vst [vmem:[#allocation3 + $0x12b8] sm:$0xff] %v5682
  %6290 = vst [vmem:[#allocation3 + $0x12c0] sm:$0xff] %v5294
  %6291 = vst [vmem:[#allocation3 + $0x12c8] sm:$0xff] %v5295
  %6292 = vst [vmem:[#allocation3 + $0x12d0] sm:$0xff] %v5296
  %6293 = vst [vmem:[#allocation3 + $0x12d8] sm:$0xff] %v5297
  %6294 = vst [vmem:[#allocation3 + $0x12e0] sm:$0xff] %v5298
  %6295 = vst [vmem:[#allocation3 + $0x12e8] sm:$0xff] %v5299
  %6296 = vst [vmem:[#allocation3 + $0x12f0] sm:$0xff] %v5300
  %6297 = vst [vmem:[#allocation3 + $0x12f8] sm:$0xff] %v5301
  %6298 = vst [vmem:[#allocation3 + $0x1300] sm:$0xff] %v5302
  %6299 = vst [vmem:[#allocation3 + $0x1308] sm:$0xff] %v5303
  %6300 = vst [vmem:[#allocation3 + $0x1310] sm:$0xff] %v5304
  %6301 = vst [vmem:[#allocation3 + $0x1318] sm:$0xff] %v5305
  %6302 = vst [vmem:[#allocation3 + $0x1320] sm:$0xff] %v5306
  %6303 = vst [vmem:[#allocation3 + $0x1328] sm:$0xff] %v5307
  %6304 = vst [vmem:[#allocation3 + $0x1330] sm:$0xff] %v5308
  %6305 = vst [vmem:[#allocation3 + $0x1338] sm:$0xff] %v5309
  %6306 = vst [vmem:[#allocation3 + $0x1340] sm:$0xff] %v5310
  %6307 = vst [vmem:[#allocation3 + $0x1348] sm:$0xff] %v5311
  %6308 = vst [vmem:[#allocation3 + $0x1350] sm:$0xff] %v5312
  %6309 = vst [vmem:[#allocation3 + $0x1358] sm:$0xff] %v5313
  %6310 = vst [vmem:[#allocation3 + $0x1360] sm:$0xff] %v5314
  %6311 = vst [vmem:[#allocation3 + $0x1368] sm:$0xff] %v5315
  %6312 = vst [vmem:[#allocation3 + $0x1370] sm:$0xff] %v5316
  %6313 = vst [vmem:[#allocation3 + $0x1378] sm:$0xff] %v5317
  %6314 = vst [vmem:[#allocation3 + $0x1380] sm:$0xff] %v5318
  %6315 = vst [vmem:[#allocation3 + $0x1388] sm:$0xff] %v5417
  %6316 = vst [vmem:[#allocation3 + $0x1390] sm:$0xff] %v5418
  %6317 = vst [vmem:[#allocation3 + $0x1398] sm:$0xff] %v5419
  %6318 = vst [vmem:[#allocation3 + $0x13a0] sm:$0xff] %v5420
  %6319 = vst [vmem:[#allocation3 + $0x13a8] sm:$0xff] %v5421
  %6320 = vst [vmem:[#allocation3 + $0x13b0] sm:$0xff] %v5422
  %6321 = vst [vmem:[#allocation3 + $0x13b8] sm:$0xff] %v5423
  %6322 = vst [vmem:[#allocation3 + $0x13c0] sm:$0xff] %v5424
  %6323 = vst [vmem:[#allocation3 + $0x13c8] sm:$0xff] %v5425
  %6324 = vst [vmem:[#allocation3 + $0x13d0] sm:$0xff] %v5426
  %6325 = vst [vmem:[#allocation3 + $0x13d8] sm:$0xff] %v5427
  %6326 = vst [vmem:[#allocation3 + $0x13e0] sm:$0xff] %v5428
  %6327 = vst [vmem:[#allocation3 + $0x13e8] sm:$0xff] %v5429
  %6328 = vst [vmem:[#allocation3 + $0x13f0] sm:$0xff] %v5430
  %6329 = vst [vmem:[#allocation3 + $0x13f8] sm:$0xff] %v5431
  %6330 = vst [vmem:[#allocation3 + $0x1400] sm:$0xff] %v5432
  %6331 = vst [vmem:[#allocation3 + $0x1408] sm:$0xff] %v5433
  %6332 = vst [vmem:[#allocation3 + $0x1410] sm:$0xff] %v5434
  %6333 = vst [vmem:[#allocation3 + $0x1418] sm:$0xff] %v5435
  %6334 = vst [vmem:[#allocation3 + $0x1420] sm:$0xff] %v5436
  %6335 = vst [vmem:[#allocation3 + $0x1428] sm:$0xff] %v5437
  %6336 = vst [vmem:[#allocation3 + $0x1430] sm:$0xff] %v5438
  %6337 = vst [vmem:[#allocation3 + $0x1438] sm:$0xff] %v5439
  %6338 = vst [vmem:[#allocation3 + $0x1440] sm:$0xff] %v5440
  %6339 = vst [vmem:[#allocation3 + $0x1448] sm:$0xff] %v5441
  %6340 = vst [vmem:[#allocation3 + $0x1450] sm:$0xff] %v5540
  %6341 = vst [vmem:[#allocation3 + $0x1458] sm:$0xff] %v5541
  %6342 = vst [vmem:[#allocation3 + $0x1460] sm:$0xff] %v5542
  %6343 = vst [vmem:[#allocation3 + $0x1468] sm:$0xff] %v5543
  %6344 = vst [vmem:[#allocation3 + $0x1470] sm:$0xff] %v5544
  %6345 = vst [vmem:[#allocation3 + $0x1478] sm:$0xff] %v5545
  %6346 = vst [vmem:[#allocation3 + $0x1480] sm:$0xff] %v5546
  %6347 = vst [vmem:[#allocation3 + $0x1488] sm:$0xff] %v5547
  %6348 = vst [vmem:[#allocation3 + $0x1490] sm:$0xff] %v5548
  %6349 = vst [vmem:[#allocation3 + $0x1498] sm:$0xff] %v5549
  %6350 = vst [vmem:[#allocation3 + $0x14a0] sm:$0xff] %v5550
  %6351 = vst [vmem:[#allocation3 + $0x14a8] sm:$0xff] %v5551
  %6352 = vst [vmem:[#allocation3 + $0x14b0] sm:$0xff] %v5552
  %6353 = vst [vmem:[#allocation3 + $0x14b8] sm:$0xff] %v5553
  %6354 = vst [vmem:[#allocation3 + $0x14c0] sm:$0xff] %v5554
  %6355 = vst [vmem:[#allocation3 + $0x14c8] sm:$0xff] %v5555
  %6356 = vst [vmem:[#allocation3 + $0x14d0] sm:$0xff] %v5556
  %6357 = vst [vmem:[#allocation3 + $0x14d8] sm:$0xff] %v5557
  %6358 = vst [vmem:[#allocation3 + $0x14e0] sm:$0xff] %v5558
  %6359 = vst [vmem:[#allocation3 + $0x14e8] sm:$0xff] %v5559
  %6360 = vst [vmem:[#allocation3 + $0x14f0] sm:$0xff] %v5560
  %6361 = vst [vmem:[#allocation3 + $0x14f8] sm:$0xff] %v5561
  %6362 = vst [vmem:[#allocation3 + $0x1500] sm:$0xff] %v5562
  %6363 = vst [vmem:[#allocation3 + $0x1508] sm:$0xff] %v5563
  %6364 = vst [vmem:[#allocation3 + $0x1510] sm:$0xff] %v5564
  %6365 = vst [vmem:[#allocation3 + $0x1518] sm:$0xff] %v5663
  %6366 = vst [vmem:[#allocation3 + $0x1520] sm:$0xff] %v5664
  %6367 = vst [vmem:[#allocation3 + $0x1528] sm:$0xff] %v5665
  %6368 = vst [vmem:[#allocation3 + $0x1530] sm:$0xff] %v5666
  %6369 = vst [vmem:[#allocation3 + $0x1538] sm:$0xff] %v5667
  %6370 = vst [vmem:[#allocation3 + $0x1540] sm:$0xff] %v5668
  %6371 = vst [vmem:[#allocation3 + $0x1548] sm:$0xff] %v5669
  %6372 = vst [vmem:[#allocation3 + $0x1550] sm:$0xff] %v5670
  %6373 = vst [vmem:[#allocation3 + $0x1558] sm:$0xff] %v5671
  %6374 = vst [vmem:[#allocation3 + $0x1560] sm:$0xff] %v5672
  %6375 = vst [vmem:[#allocation3 + $0x1568] sm:$0xff] %v5673
  %6376 = vst [vmem:[#allocation3 + $0x1570] sm:$0xff] %v5674
  %6377 = vst [vmem:[#allocation3 + $0x1578] sm:$0xff] %v5675
  %6378 = vst [vmem:[#allocation3 + $0x1580] sm:$0xff] %v5676
  %6379 = vst [vmem:[#allocation3 + $0x1588] sm:$0xff] %v5677
  %6380 = vst [vmem:[#allocation3 + $0x1590] sm:$0xff] %v5678
  %6381 = vst [vmem:[#allocation3 + $0x1598] sm:$0xff] %v5679
  %6382 = vst [vmem:[#allocation3 + $0x15a0] sm:$0xff] %v5680
  %6383 = vst [vmem:[#allocation3 + $0x15a8] sm:$0xff] %v5681
  %6384 = vst [vmem:[#allocation3 + $0x15b0] sm:$0xff] %v5682
  %6385 = vst [vmem:[#allocation3 + $0x15b8] sm:$0xff] %v5683
  %6386 = vst [vmem:[#allocation3 + $0x15c0] sm:$0xff] %v5684
  %6387 = vst [vmem:[#allocation3 + $0x15c8] sm:$0xff] %v5685
  %6388 = vst [vmem:[#allocation3 + $0x15d0] sm:$0xff] %v5686
  %6389 = vst [vmem:[#allocation3 + $0x15d8] sm:$0xff] %v5687
  %6390 = vst [vmem:[#allocation3 + $0x15e0] sm:$0xff] %v5295
  %6391 = vst [vmem:[#allocation3 + $0x15e8] sm:$0xff] %v5296
  %6392 = vst [vmem:[#allocation3 + $0x15f0] sm:$0xff] %v5297
  %6393 = vst [vmem:[#allocation3 + $0x15f8] sm:$0xff] %v5298
  %6394 = vst [vmem:[#allocation3 + $0x1600] sm:$0xff] %v5299
  %6395 = vst [vmem:[#allocation3 + $0x1608] sm:$0xff] %v5300
  %6396 = vst [vmem:[#allocation3 + $0x1610] sm:$0xff] %v5301
  %6397 = vst [vmem:[#allocation3 + $0x1618] sm:$0xff] %v5302
  %6398 = vst [vmem:[#allocation3 + $0x1620] sm:$0xff] %v5303
  %6399 = vst [vmem:[#allocation3 + $0x1628] sm:$0xff] %v5304
  %6400 = vst [vmem:[#allocation3 + $0x1630] sm:$0xff] %v5305
  %6401 = vst [vmem:[#allocation3 + $0x1638] sm:$0xff] %v5306
  %6402 = vst [vmem:[#allocation3 + $0x1640] sm:$0xff] %v5307
  %6403 = vst [vmem:[#allocation3 + $0x1648] sm:$0xff] %v5308
  %6404 = vst [vmem:[#allocation3 + $0x1650] sm:$0xff] %v5309
  %6405 = vst [vmem:[#allocation3 + $0x1658] sm:$0xff] %v5310
  %6406 = vst [vmem:[#allocation3 + $0x1660] sm:$0xff] %v5311
  %6407 = vst [vmem:[#allocation3 + $0x1668] sm:$0xff] %v5312
  %6408 = vst [vmem:[#allocation3 + $0x1670] sm:$0xff] %v5313
  %6409 = vst [vmem:[#allocation3 + $0x1678] sm:$0xff] %v5314
  %6410 = vst [vmem:[#allocation3 + $0x1680] sm:$0xff] %v5315
  %6411 = vst [vmem:[#allocation3 + $0x1688] sm:$0xff] %v5316
  %6412 = vst [vmem:[#allocation3 + $0x1690] sm:$0xff] %v5317
  %6413 = vst [vmem:[#allocation3 + $0x1698] sm:$0xff] %v5318
  %6414 = vst [vmem:[#allocation3 + $0x16a0] sm:$0xff] %v5319
  %6415 = vst [vmem:[#allocation3 + $0x16a8] sm:$0xff] %v5418
  %6416 = vst [vmem:[#allocation3 + $0x16b0] sm:$0xff] %v5419
  %6417 = vst [vmem:[#allocation3 + $0x16b8] sm:$0xff] %v5420
  %6418 = vst [vmem:[#allocation3 + $0x16c0] sm:$0xff] %v5421
  %6419 = vst [vmem:[#allocation3 + $0x16c8] sm:$0xff] %v5422
  %6420 = vst [vmem:[#allocation3 + $0x16d0] sm:$0xff] %v5423
  %6421 = vst [vmem:[#allocation3 + $0x16d8] sm:$0xff] %v5424
  %6422 = vst [vmem:[#allocation3 + $0x16e0] sm:$0xff] %v5425
  %6423 = vst [vmem:[#allocation3 + $0x16e8] sm:$0xff] %v5426
  %6424 = vst [vmem:[#allocation3 + $0x16f0] sm:$0xff] %v5427
  %6425 = vst [vmem:[#allocation3 + $0x16f8] sm:$0xff] %v5428
  %6426 = vst [vmem:[#allocation3 + $0x1700] sm:$0xff] %v5429
  %6427 = vst [vmem:[#allocation3 + $0x1708] sm:$0xff] %v5430
  %6428 = vst [vmem:[#allocation3 + $0x1710] sm:$0xff] %v5431
  %6429 = vst [vmem:[#allocation3 + $0x1718] sm:$0xff] %v5432
  %6430 = vst [vmem:[#allocation3 + $0x1720] sm:$0xff] %v5433
  %6431 = vst [vmem:[#allocation3 + $0x1728] sm:$0xff] %v5434
  %6432 = vst [vmem:[#allocation3 + $0x1730] sm:$0xff] %v5435
  %6433 = vst [vmem:[#allocation3 + $0x1738] sm:$0xff] %v5436
  %6434 = vst [vmem:[#allocation3 + $0x1740] sm:$0xff] %v5437
  %6435 = vst [vmem:[#allocation3 + $0x1748] sm:$0xff] %v5438
  %6436 = vst [vmem:[#allocation3 + $0x1750] sm:$0xff] %v5439
  %6437 = vst [vmem:[#allocation3 + $0x1758] sm:$0xff] %v5440
  %6438 = vst [vmem:[#allocation3 + $0x1760] sm:$0xff] %v5441
  %6439 = vst [vmem:[#allocation3 + $0x1768] sm:$0xff] %v5442
  %6440 = vst [vmem:[#allocation3 + $0x1770] sm:$0xff] %v5541
  %6441 = vst [vmem:[#allocation3 + $0x1778] sm:$0xff] %v5542
  %6442 = vst [vmem:[#allocation3 + $0x1780] sm:$0xff] %v5543
  %6443 = vst [vmem:[#allocation3 + $0x1788] sm:$0xff] %v5544
  %6444 = vst [vmem:[#allocation3 + $0x1790] sm:$0xff] %v5545
  %6445 = vst [vmem:[#allocation3 + $0x1798] sm:$0xff] %v5546
  %6446 = vst [vmem:[#allocation3 + $0x17a0] sm:$0xff] %v5547
  %6447 = vst [vmem:[#allocation3 + $0x17a8] sm:$0xff] %v5548
  %6448 = vst [vmem:[#allocation3 + $0x17b0] sm:$0xff] %v5549
  %6449 = vst [vmem:[#allocation3 + $0x17b8] sm:$0xff] %v5550
  %6450 = vst [vmem:[#allocation3 + $0x17c0] sm:$0xff] %v5551
  %6451 = vst [vmem:[#allocation3 + $0x17c8] sm:$0xff] %v5552
  %6452 = vst [vmem:[#allocation3 + $0x17d0] sm:$0xff] %v5553
  %6453 = vst [vmem:[#allocation3 + $0x17d8] sm:$0xff] %v5554
  %6454 = vst [vmem:[#allocation3 + $0x17e0] sm:$0xff] %v5555
  %6455 = vst [vmem:[#allocation3 + $0x17e8] sm:$0xff] %v5556
  %6456 = vst [vmem:[#allocation3 + $0x17f0] sm:$0xff] %v5557
  %6457 = vst [vmem:[#allocation3 + $0x17f8] sm:$0xff] %v5558
  %6458 = vst [vmem:[#allocation3 + $0x1800] sm:$0xff] %v5559
  %6459 = vst [vmem:[#allocation3 + $0x1808] sm:$0xff] %v5560
  %6460 = vst [vmem:[#allocation3 + $0x1810] sm:$0xff] %v5561
  %6461 = vst [vmem:[#allocation3 + $0x1818] sm:$0xff] %v5562
  %6462 = vst [vmem:[#allocation3 + $0x1820] sm:$0xff] %v5563
  %6463 = vst [vmem:[#allocation3 + $0x1828] sm:$0xff] %v5564
  %6464 = vst [vmem:[#allocation3 + $0x1830] sm:$0xff] %v5565
  %6465 = vst [vmem:[#allocation3 + $0x1838] sm:$0xff] %v5664
  %6466 = vst [vmem:[#allocation3 + $0x1840] sm:$0xff] %v5665
  %6467 = vst [vmem:[#allocation3 + $0x1848] sm:$0xff] %v5666
  %6468 = vst [vmem:[#allocation3 + $0x1850] sm:$0xff] %v5667
  %6469 = vst [vmem:[#allocation3 + $0x1858] sm:$0xff] %v5668
  %6470 = vst [vmem:[#allocation3 + $0x1860] sm:$0xff] %v5669
  %6471 = vst [vmem:[#allocation3 + $0x1868] sm:$0xff] %v5670
  %6472 = vst [vmem:[#allocation3 + $0x1870] sm:$0xff] %v5671
  %6473 = vst [vmem:[#allocation3 + $0x1878] sm:$0xff] %v5672
  %6474 = vst [vmem:[#allocation3 + $0x1880] sm:$0xff] %v5673
  %6475 = vst [vmem:[#allocation3 + $0x1888] sm:$0xff] %v5674
  %6476 = vst [vmem:[#allocation3 + $0x1890] sm:$0xff] %v5675
  %6477 = vst [vmem:[#allocation3 + $0x1898] sm:$0xff] %v5676
  %6478 = vst [vmem:[#allocation3 + $0x18a0] sm:$0xff] %v5677
  %6479 = vst [vmem:[#allocation3 + $0x18a8] sm:$0xff] %v5678
  %6480 = vst [vmem:[#allocation3 + $0x18b0] sm:$0xff] %v5679
  %6481 = vst [vmem:[#allocation3 + $0x18b8] sm:$0xff] %v5680
  %6482 = vst [vmem:[#allocation3 + $0x18c0] sm:$0xff] %v5681
  %6483 = vst [vmem:[#allocation3 + $0x18c8] sm:$0xff] %v5682
  %6484 = vst [vmem:[#allocation3 + $0x18d0] sm:$0xff] %v5683
  %6485 = vst [vmem:[#allocation3 + $0x18d8] sm:$0xff] %v5684
  %6486 = vst [vmem:[#allocation3 + $0x18e0] sm:$0xff] %v5685
  %6487 = vst [vmem:[#allocation3 + $0x18e8] sm:$0xff] %v5686
  %6488 = vst [vmem:[#allocation3 + $0x18f0] sm:$0xff] %v5687
  %6489 = vst [vmem:[#allocation3 + $0x18f8] sm:$0xff] %v5688
  %6490 = vst [vmem:[#allocation3 + $0x1900] sm:$0xff] %v5296
  %6491 = vst [vmem:[#allocation3 + $0x1908] sm:$0xff] %v5297
  %6492 = vst [vmem:[#allocation3 + $0x1910] sm:$0xff] %v5298
  %6493 = vst [vmem:[#allocation3 + $0x1918] sm:$0xff] %v5299
  %6494 = vst [vmem:[#allocation3 + $0x1920] sm:$0xff] %v5300
  %6495 = vst [vmem:[#allocation3 + $0x1928] sm:$0xff] %v5301
  %6496 = vst [vmem:[#allocation3 + $0x1930] sm:$0xff] %v5302
  %6497 = vst [vmem:[#allocation3 + $0x1938] sm:$0xff] %v5303
  %6498 = vst [vmem:[#allocation3 + $0x1940] sm:$0xff] %v5304
  %6499 = vst [vmem:[#allocation3 + $0x1948] sm:$0xff] %v5305
  %6500 = vst [vmem:[#allocation3 + $0x1950] sm:$0xff] %v5306
  %6501 = vst [vmem:[#allocation3 + $0x1958] sm:$0xff] %v5307
  %6502 = vst [vmem:[#allocation3 + $0x1960] sm:$0xff] %v5308
  %6503 = vst [vmem:[#allocation3 + $0x1968] sm:$0xff] %v5309
  %6504 = vst [vmem:[#allocation3 + $0x1970] sm:$0xff] %v5310
  %6505 = vst [vmem:[#allocation3 + $0x1978] sm:$0xff] %v5311
  %6506 = vst [vmem:[#allocation3 + $0x1980] sm:$0xff] %v5312
  %6507 = vst [vmem:[#allocation3 + $0x1988] sm:$0xff] %v5313
  %6508 = vst [vmem:[#allocation3 + $0x1990] sm:$0xff] %v5314
  %6509 = vst [vmem:[#allocation3 + $0x1998] sm:$0xff] %v5315
  %6510 = vst [vmem:[#allocation3 + $0x19a0] sm:$0xff] %v5316
  %6511 = vst [vmem:[#allocation3 + $0x19a8] sm:$0xff] %v5317
  %6512 = vst [vmem:[#allocation3 + $0x19b0] sm:$0xff] %v5318
  %6513 = vst [vmem:[#allocation3 + $0x19b8] sm:$0xff] %v5319
  %6514 = vst [vmem:[#allocation3 + $0x19c0] sm:$0xff] %v5320
  %6515 = vst [vmem:[#allocation3 + $0x19c8] sm:$0xff] %v5419
  %6516 = vst [vmem:[#allocation3 + $0x19d0] sm:$0xff] %v5420
  %6517 = vst [vmem:[#allocation3 + $0x19d8] sm:$0xff] %v5421
  %6518 = vst [vmem:[#allocation3 + $0x19e0] sm:$0xff] %v5422
  %6519 = vst [vmem:[#allocation3 + $0x19e8] sm:$0xff] %v5423
  %6520 = vst [vmem:[#allocation3 + $0x19f0] sm:$0xff] %v5424
  %6521 = vst [vmem:[#allocation3 + $0x19f8] sm:$0xff] %v5425
  %6522 = vst [vmem:[#allocation3 + $0x1a00] sm:$0xff] %v5426
  %6523 = vst [vmem:[#allocation3 + $0x1a08] sm:$0xff] %v5427
  %6524 = vst [vmem:[#allocation3 + $0x1a10] sm:$0xff] %v5428
  %6525 = vst [vmem:[#allocation3 + $0x1a18] sm:$0xff] %v5429
  %6526 = vst [vmem:[#allocation3 + $0x1a20] sm:$0xff] %v5430
  %6527 = vst [vmem:[#allocation3 + $0x1a28] sm:$0xff] %v5431
  %6528 = vst [vmem:[#allocation3 + $0x1a30] sm:$0xff] %v5432
  %6529 = vst [vmem:[#allocation3 + $0x1a38] sm:$0xff] %v5433
  %6530 = vst [vmem:[#allocation3 + $0x1a40] sm:$0xff] %v5434
  %6531 = vst [vmem:[#allocation3 + $0x1a48] sm:$0xff] %v5435
  %6532 = vst [vmem:[#allocation3 + $0x1a50] sm:$0xff] %v5436
  %6533 = vst [vmem:[#allocation3 + $0x1a58] sm:$0xff] %v5437
  %6534 = vst [vmem:[#allocation3 + $0x1a60] sm:$0xff] %v5438
  %6535 = vst [vmem:[#allocation3 + $0x1a68] sm:$0xff] %v5439
  %6536 = vst [vmem:[#allocation3 + $0x1a70] sm:$0xff] %v5440
  %6537 = vst [vmem:[#allocation3 + $0x1a78] sm:$0xff] %v5441
  %6538 = vst [vmem:[#allocation3 + $0x1a80] sm:$0xff] %v5442
  %6539 = vst [vmem:[#allocation3 + $0x1a88] sm:$0xff] %v5443
  %6540 = vst [vmem:[#allocation3 + $0x1a90] sm:$0xff] %v5542
  %6541 = vst [vmem:[#allocation3 + $0x1a98] sm:$0xff] %v5543
  %6542 = vst [vmem:[#allocation3 + $0x1aa0] sm:$0xff] %v5544
  %6543 = vst [vmem:[#allocation3 + $0x1aa8] sm:$0xff] %v5545
  %6544 = vst [vmem:[#allocation3 + $0x1ab0] sm:$0xff] %v5546
  %6545 = vst [vmem:[#allocation3 + $0x1ab8] sm:$0xff] %v5547
  %6546 = vst [vmem:[#allocation3 + $0x1ac0] sm:$0xff] %v5548
  %6547 = vst [vmem:[#allocation3 + $0x1ac8] sm:$0xff] %v5549
  %6548 = vst [vmem:[#allocation3 + $0x1ad0] sm:$0xff] %v5550
  %6549 = vst [vmem:[#allocation3 + $0x1ad8] sm:$0xff] %v5551
  %6550 = vst [vmem:[#allocation3 + $0x1ae0] sm:$0xff] %v5552
  %6551 = vst [vmem:[#allocation3 + $0x1ae8] sm:$0xff] %v5553
  %6552 = vst [vmem:[#allocation3 + $0x1af0] sm:$0xff] %v5554
  %6553 = vst [vmem:[#allocation3 + $0x1af8] sm:$0xff] %v5555
  %6554 = vst [vmem:[#allocation3 + $0x1b00] sm:$0xff] %v5556
  %6555 = vst [vmem:[#allocation3 + $0x1b08] sm:$0xff] %v5557
  %6556 = vst [vmem:[#allocation3 + $0x1b10] sm:$0xff] %v5558
  %6557 = vst [vmem:[#allocation3 + $0x1b18] sm:$0xff] %v5559
  %6558 = vst [vmem:[#allocation3 + $0x1b20] sm:$0xff] %v5560
  %6559 = vst [vmem:[#allocation3 + $0x1b28] sm:$0xff] %v5561
  %6560 = vst [vmem:[#allocation3 + $0x1b30] sm:$0xff] %v5562
  %6561 = vst [vmem:[#allocation3 + $0x1b38] sm:$0xff] %v5563
  %6562 = vst [vmem:[#allocation3 + $0x1b40] sm:$0xff] %v5564
  %6563 = vst [vmem:[#allocation3 + $0x1b48] sm:$0xff] %v5565
  %6564 = vst [vmem:[#allocation3 + $0x1b50] sm:$0xff] %v5566
  %6565 = vst [vmem:[#allocation3 + $0x1b58] sm:$0xff] %v5665
  %6566 = vst [vmem:[#allocation3 + $0x1b60] sm:$0xff] %v5666
  %6567 = vst [vmem:[#allocation3 + $0x1b68] sm:$0xff] %v5667
  %6568 = vst [vmem:[#allocation3 + $0x1b70] sm:$0xff] %v5668
  %6569 = vst [vmem:[#allocation3 + $0x1b78] sm:$0xff] %v5669
  %6570 = vst [vmem:[#allocation3 + $0x1b80] sm:$0xff] %v5670
  %6571 = vst [vmem:[#allocation3 + $0x1b88] sm:$0xff] %v5671
  %6572 = vst [vmem:[#allocation3 + $0x1b90] sm:$0xff] %v5672
  %6573 = vst [vmem:[#allocation3 + $0x1b98] sm:$0xff] %v5673
  %6574 = vst [vmem:[#allocation3 + $0x1ba0] sm:$0xff] %v5674
  %6575 = vst [vmem:[#allocation3 + $0x1ba8] sm:$0xff] %v5675
  %6576 = vst [vmem:[#allocation3 + $0x1bb0] sm:$0xff] %v5676
  %6577 = vst [vmem:[#allocation3 + $0x1bb8] sm:$0xff] %v5677
  %6578 = vst [vmem:[#allocation3 + $0x1bc0] sm:$0xff] %v5678
  %6579 = vst [vmem:[#allocation3 + $0x1bc8] sm:$0xff] %v5679
  %6580 = vst [vmem:[#allocation3 + $0x1bd0] sm:$0xff] %v5680
  %6581 = vst [vmem:[#allocation3 + $0x1bd8] sm:$0xff] %v5681
  %6582 = vst [vmem:[#allocation3 + $0x1be0] sm:$0xff] %v5682
  %6583 = vst [vmem:[#allocation3 + $0x1be8] sm:$0xff] %v5683
  %6584 = vst [vmem:[#allocation3 + $0x1bf0] sm:$0xff] %v5684
  %6585 = vst [vmem:[#allocation3 + $0x1bf8] sm:$0xff] %v5685
  %6586 = vst [vmem:[#allocation3 + $0x1c00] sm:$0xff] %v5686
  %6587 = vst [vmem:[#allocation3 + $0x1c08] sm:$0xff] %v5687
  %6588 = vst [vmem:[#allocation3 + $0x1c10] sm:$0xff] %v5688
  %6589 = vst [vmem:[#allocation3 + $0x1c18] sm:$0xff] %v5689
  %v6590 = vld [vmem:[%s3] sm:$0xff]
  %v6591 = vld [vmem:[%s3 + $0x8] sm:$0xff]
  %v6592 = vld [vmem:[%s3 + $0x10] sm:$0xff]
  %v6593 = vld [vmem:[%s3 + $0x18] sm:$0xff]
  %v6594 = vld [vmem:[%s3 + $0x20] sm:$0xff]
  %v6595 = vld [vmem:[%s3 + $0x28] sm:$0xff]
  %v6596 = vld [vmem:[%s3 + $0x30] sm:$0xff]
  %v6597 = vld [vmem:[%s3 + $0x38] sm:$0xff]
  %v6598 = vld [vmem:[%s3 + $0x40] sm:$0xff]
  %v6599 = vld [vmem:[%s3 + $0x48] sm:$0xff]
  %v6600 = vld [vmem:[%s3 + $0x50] sm:$0xff]
  %v6601 = vld [vmem:[%s3 + $0x58] sm:$0xff]
  %v6602 = vld [vmem:[%s3 + $0x60] sm:$0xff]
  %v6603 = vld [vmem:[%s3 + $0x68] sm:$0xff]
  %v6604 = vld [vmem:[%s3 + $0x70] sm:$0xff]
  %v6605 = vld [vmem:[%s3 + $0x78] sm:$0xff]
  %v6606 = vld [vmem:[%s3 + $0x80] sm:$0xff]
  %v6607 = vld [vmem:[%s3 + $0x88] sm:$0xff]
  %v6608 = vld [vmem:[%s3 + $0x90] sm:$0xff]
  %v6609 = vld [vmem:[%s3 + $0x98] sm:$0xff]
  %v6610 = vld [vmem:[%s3 + $0xa0] sm:$0xff]
  %v6611 = vld [vmem:[%s3 + $0xa8] sm:$0xff]
  %v6612 = vld [vmem:[%s3 + $0xb0] sm:$0xff]
  %v6613 = vld [vmem:[%s3 + $0xb8] sm:$0xff]
  %v6614 = vld [vmem:[#allocation3] sm:$0xff]
  %v6615 = vld [vmem:[#allocation3 + $0x8] sm:$0xff]
  %v6616 = vld [vmem:[#allocation3 + $0x10] sm:$0xff]
  %v6617 = vld [vmem:[#allocation3 + $0x18] sm:$0xff]
  %v6618 = vld [vmem:[#allocation3 + $0x30] sm:$0xff]
  %v6619 = vld [vmem:[#allocation3 + $0x38] sm:$0xff]
  %v6620 = vld [vmem:[#allocation3 + $0x40] sm:$0xff]
  %v6621 = vld [vmem:[#allocation3 + $0x48] sm:$0xff]
  %v6622 = vld [vmem:[#allocation3 + $0x50] sm:$0xff]
  %v6623 = vld [vmem:[#allocation3 + $0x58] sm:$0xff]
  %v6624 = vld [vmem:[#allocation3 + $0x70] sm:$0xff]
  %v6625 = vld [vmem:[#allocation3 + $0x78] sm:$0xff]
  %v6626 = vld [vmem:[#allocation3 + $0x80] sm:$0xff]
  %v6627 = vld [vmem:[#allocation3 + $0x88] sm:$0xff]
  %v6628 = vld [vmem:[#allocation3 + $0xa0] sm:$0xff]
  %v6629 = vld [vmem:[#allocation3 + $0xa8] sm:$0xff]
  %v6630 = vld [vmem:[#allocation3 + $0xb0] sm:$0xff]
  %v6631 = vld [vmem:[#allocation3 + $0xb8] sm:$0xff]
  %v6632 = vld [vmem:[#allocation3 + $0xc0] sm:$0xff]
  %v6633 = vld [vmem:[#allocation3 + $0xc8] sm:$0xff]
  %v6634 = vld [vmem:[#allocation3 + $0xd0] sm:$0xff]
  %v6635 = vld [vmem:[#allocation3 + $0xd8] sm:$0xff]
  %v6636 = vld [vmem:[#allocation3 + $0xe0] sm:$0xff]
  %v6637 = vld [vmem:[#allocation3 + $0xf8] sm:$0xff]
  %v6638 = vld [vmem:[#allocation3 + $0x100] sm:$0xff]
  %v6639 = vld [vmem:[#allocation3 + $0x108] sm:$0xff]
  %v6640 = vld [vmem:[#allocation3 + $0x110] sm:$0xff]
  %v6641 = vld [vmem:[#allocation3 + $0x118] sm:$0xff]
  %v6642 = vld [vmem:[#allocation3 + $0x120] sm:$0xff]
  %v6643 = vld [vmem:[#allocation3 + $0x138] sm:$0xff]
  %v6644 = vld [vmem:[#allocation3 + $0x140] sm:$0xff]
  %v6645 = vld [vmem:[#allocation3 + $0x148] sm:$0xff]
  %v6646 = vld [vmem:[#allocation3 + $0x150] sm:$0xff]
  %v6647 = vld [vmem:[#allocation3 + $0x168] sm:$0xff]
  %v6648 = vld [vmem:[#allocation3 + $0x170] sm:$0xff]
  %v6649 = vld [vmem:[#allocation3 + $0x178] sm:$0xff]
  %v6650 = vld [vmem:[#allocation3 + $0x180] sm:$0xff]
  %v6651 = vld [vmem:[#allocation3 + $0x188] sm:$0xff]
  %v6652 = vld [vmem:[#allocation3 + $0x190] sm:$0xff]
  %v6653 = vld [vmem:[#allocation3 + $0x198] sm:$0xff]
  %v6654 = vld [vmem:[#allocation3 + $0x1a0] sm:$0xff]
  %v6655 = vld [vmem:[#allocation3 + $0x1a8] sm:$0xff]
  %v6656 = vld [vmem:[#allocation3 + $0x1c0] sm:$0xff]
  %v6657 = vld [vmem:[#allocation3 + $0x1c8] sm:$0xff]
  %v6658 = vld [vmem:[#allocation3 + $0x1d0] sm:$0xff]
  %v6659 = vld [vmem:[#allocation3 + $0x1d8] sm:$0xff]
  %v6660 = vld [vmem:[#allocation3 + $0x1e0] sm:$0xff]
  %v6661 = vld [vmem:[#allocation3 + $0x1e8] sm:$0xff]
  %v6662 = vld [vmem:[#allocation3 + $0x200] sm:$0xff]
  %v6663 = vld [vmem:[#allocation3 + $0x208] sm:$0xff]
  %v6664 = vld [vmem:[#allocation3 + $0x210] sm:$0xff]
  %v6665 = vld [vmem:[#allocation3 + $0x218] sm:$0xff]
  %v6666 = vld [vmem:[#allocation3 + $0x230] sm:$0xff]
  %v6667 = vld [vmem:[#allocation3 + $0x238] sm:$0xff]
  %v6668 = vld [vmem:[#allocation3 + $0x240] sm:$0xff]
  %v6669 = vld [vmem:[#allocation3 + $0x248] sm:$0xff]
  %v6670 = vld [vmem:[#allocation3 + $0x250] sm:$0xff]
  %v6671 = vld [vmem:[#allocation3 + $0x258] sm:$0xff]
  %v6672 = vld [vmem:[#allocation3 + $0x260] sm:$0xff]
  %v6673 = vld [vmem:[#allocation3 + $0x268] sm:$0xff]
  %v6674 = vld [vmem:[#allocation3 + $0x270] sm:$0xff]
  %v6675 = vld [vmem:[#allocation3 + $0x288] sm:$0xff]
  %v6676 = vld [vmem:[#allocation3 + $0x290] sm:$0xff]
  %v6677 = vld [vmem:[#allocation3 + $0x298] sm:$0xff]
  %v6678 = vld [vmem:[#allocation3 + $0x2a0] sm:$0xff]
  %v6679 = vld [vmem:[#allocation3 + $0x2a8] sm:$0xff]
  %v6680 = vld [vmem:[#allocation3 + $0x2b0] sm:$0xff]
  %v6681 = vld [vmem:[#allocation3 + $0x2c8] sm:$0xff]
  %v6682 = vld [vmem:[#allocation3 + $0x2d0] sm:$0xff]
  %v6683 = vld [vmem:[#allocation3 + $0x2d8] sm:$0xff]
  %v6684 = vld [vmem:[#allocation3 + $0x2e0] sm:$0xff]
  %v6685 = vld [vmem:[#allocation3 + $0x2f8] sm:$0xff]
  %v6686 = vld [vmem:[#allocation3 + $0x300] sm:$0xff]
  %v6687 = vld [vmem:[#allocation3 + $0x308] sm:$0xff]
  %v6688 = vld [vmem:[#allocation3 + $0x310] sm:$0xff]
  %v6689 = vld [vmem:[#allocation3 + $0x318] sm:$0xff]
  %v6690 = vld [vmem:[#allocation3 + $0x320] sm:$0xff]
  %v6691 = vld [vmem:[#allocation3 + $0x328] sm:$0xff]
  %v6692 = vld [vmem:[#allocation3 + $0x330] sm:$0xff]
  %v6693 = vld [vmem:[#allocation3 + $0x338] sm:$0xff]
  %v6694 = vld [vmem:[#allocation3 + $0x350] sm:$0xff]
  %v6695 = vld [vmem:[#allocation3 + $0x358] sm:$0xff]
  %v6696 = vld [vmem:[#allocation3 + $0x360] sm:$0xff]
  %v6697 = vld [vmem:[#allocation3 + $0x368] sm:$0xff]
  %v6698 = vld [vmem:[#allocation3 + $0x370] sm:$0xff]
  %v6699 = vld [vmem:[#allocation3 + $0x378] sm:$0xff]
  %v6700 = vld [vmem:[#allocation3 + $0x390] sm:$0xff]
  %v6701 = vld [vmem:[#allocation3 + $0x398] sm:$0xff]
  %v6702 = vld [vmem:[#allocation3 + $0x3a0] sm:$0xff]
  %v6703 = vld [vmem:[#allocation3 + $0x3a8] sm:$0xff]
  %v6704 = vld [vmem:[#allocation3 + $0x3c0] sm:$0xff]
  %v6705 = vld [vmem:[#allocation3 + $0x3c8] sm:$0xff]
  %v6706 = vld [vmem:[#allocation3 + $0x3d0] sm:$0xff]
  %v6707 = vld [vmem:[#allocation3 + $0x3d8] sm:$0xff]
  %v6708 = vld [vmem:[#allocation3 + $0x3e0] sm:$0xff]
  %v6709 = vld [vmem:[#allocation3 + $0x3e8] sm:$0xff]
  %v6710 = vld [vmem:[#allocation3 + $0x3f0] sm:$0xff]
  %v6711 = vld [vmem:[#allocation3 + $0x3f8] sm:$0xff]
  %v6712 = vld [vmem:[#allocation3 + $0x400] sm:$0xff]
  %v6713 = vld [vmem:[#allocation3 + $0x418] sm:$0xff]
  %v6714 = vld [vmem:[#allocation3 + $0x420] sm:$0xff]
  %v6715 = vld [vmem:[#allocation3 + $0x428] sm:$0xff]
  %v6716 = vld [vmem:[#allocation3 + $0x430] sm:$0xff]
  %v6717 = vld [vmem:[#allocation3 + $0x438] sm:$0xff]
  %v6718 = vld [vmem:[#allocation3 + $0x440] sm:$0xff]
  %v6719 = vld [vmem:[#allocation3 + $0x458] sm:$0xff]
  %v6720 = vld [vmem:[#allocation3 + $0x460] sm:$0xff]
  %v6721 = vld [vmem:[#allocation3 + $0x468] sm:$0xff]
  %v6722 = vld [vmem:[#allocation3 + $0x470] sm:$0xff]
  %v6723 = vld [vmem:[#allocation3 + $0x488] sm:$0xff]
  %v6724 = vld [vmem:[#allocation3 + $0x490] sm:$0xff]
  %v6725 = vld [vmem:[#allocation3 + $0x498] sm:$0xff]
  %v6726 = vld [vmem:[#allocation3 + $0x4a0] sm:$0xff]
  %v6727 = vld [vmem:[#allocation3 + $0x4a8] sm:$0xff]
  %v6728 = vld [vmem:[#allocation3 + $0x4b0] sm:$0xff]
  %v6729 = vld [vmem:[#allocation3 + $0x4b8] sm:$0xff]
  %v6730 = vld [vmem:[#allocation3 + $0x4c0] sm:$0xff]
  %v6731 = vld [vmem:[#allocation3 + $0x4c8] sm:$0xff]
  %v6732 = vld [vmem:[#allocation3 + $0x4e0] sm:$0xff]
  %v6733 = vld [vmem:[#allocation3 + $0x4e8] sm:$0xff]
  %v6734 = vld [vmem:[#allocation3 + $0x4f0] sm:$0xff]
  %v6735 = vld [vmem:[#allocation3 + $0x4f8] sm:$0xff]
  %v6736 = vld [vmem:[#allocation3 + $0x500] sm:$0xff]
  %v6737 = vld [vmem:[#allocation3 + $0x508] sm:$0xff]
  %v6738 = vld [vmem:[#allocation3 + $0x520] sm:$0xff]
  %v6739 = vld [vmem:[#allocation3 + $0x528] sm:$0xff]
  %v6740 = vld [vmem:[#allocation3 + $0x530] sm:$0xff]
  %v6741 = vld [vmem:[#allocation3 + $0x538] sm:$0xff]
  %v6742 = vld [vmem:[#allocation3 + $0x550] sm:$0xff]
  %v6743 = vld [vmem:[#allocation3 + $0x558] sm:$0xff]
  %v6744 = vld [vmem:[#allocation3 + $0x560] sm:$0xff]
  %v6745 = vld [vmem:[#allocation3 + $0x568] sm:$0xff]
  %v6746 = vld [vmem:[#allocation3 + $0x570] sm:$0xff]
  %v6747 = vld [vmem:[#allocation3 + $0x578] sm:$0xff]
  %v6748 = vld [vmem:[#allocation3 + $0x580] sm:$0xff]
  %v6749 = vld [vmem:[#allocation3 + $0x588] sm:$0xff]
  %v6750 = vld [vmem:[#allocation3 + $0x590] sm:$0xff]
  %v6751 = vld [vmem:[#allocation3 + $0x5a8] sm:$0xff]
  %v6752 = vld [vmem:[#allocation3 + $0x5b0] sm:$0xff]
  %v6753 = vld [vmem:[#allocation3 + $0x5b8] sm:$0xff]
  %v6754 = vld [vmem:[#allocation3 + $0x5c0] sm:$0xff]
  %v6755 = vld [vmem:[#allocation3 + $0x5c8] sm:$0xff]
  %v6756 = vld [vmem:[#allocation3 + $0x5d0] sm:$0xff]
  %v6757 = vld [vmem:[#allocation3 + $0x5e8] sm:$0xff]
  %v6758 = vld [vmem:[#allocation3 + $0x5f0] sm:$0xff]
  %v6759 = vld [vmem:[#allocation3 + $0x5f8] sm:$0xff]
  %v6760 = vld [vmem:[#allocation3 + $0x600] sm:$0xff]
  %v6761 = vld [vmem:[#allocation3 + $0x618] sm:$0xff]
  %v6762 = vld [vmem:[#allocation3 + $0x620] sm:$0xff]
  %v6763 = vld [vmem:[#allocation3 + $0x628] sm:$0xff]
  %v6764 = vld [vmem:[#allocation3 + $0x630] sm:$0xff]
  %v6765 = vld [vmem:[#allocation3 + $0x638] sm:$0xff]
  %v6766 = vld [vmem:[#allocation3 + $0x640] sm:$0xff]
  %v6767 = vld [vmem:[#allocation3 + $0x648] sm:$0xff]
  %v6768 = vld [vmem:[#allocation3 + $0x650] sm:$0xff]
  %v6769 = vld [vmem:[#allocation3 + $0x658] sm:$0xff]
  %v6770 = vld [vmem:[#allocation3 + $0x670] sm:$0xff]
  %v6771 = vld [vmem:[#allocation3 + $0x678] sm:$0xff]
  %v6772 = vld [vmem:[#allocation3 + $0x680] sm:$0xff]
  %v6773 = vld [vmem:[#allocation3 + $0x688] sm:$0xff]
  %v6774 = vld [vmem:[#allocation3 + $0x690] sm:$0xff]
  %v6775 = vld [vmem:[#allocation3 + $0x698] sm:$0xff]
  %v6776 = vld [vmem:[#allocation3 + $0x6b0] sm:$0xff]
  %v6777 = vld [vmem:[#allocation3 + $0x6b8] sm:$0xff]
  %v6778 = vld [vmem:[#allocation3 + $0x6c0] sm:$0xff]
  %v6779 = vld [vmem:[#allocation3 + $0x6c8] sm:$0xff]
  %v6780 = vld [vmem:[#allocation3 + $0x6e0] sm:$0xff]
  %v6781 = vld [vmem:[#allocation3 + $0x6e8] sm:$0xff]
  %v6782 = vld [vmem:[#allocation3 + $0x6f0] sm:$0xff]
  %v6783 = vld [vmem:[#allocation3 + $0x6f8] sm:$0xff]
  %v6784 = vld [vmem:[#allocation3 + $0x700] sm:$0xff]
  %v6785 = vld [vmem:[#allocation3 + $0x708] sm:$0xff]
  %v6786 = vld [vmem:[#allocation3 + $0x710] sm:$0xff]
  %v6787 = vld [vmem:[#allocation3 + $0x718] sm:$0xff]
  %v6788 = vld [vmem:[#allocation3 + $0x720] sm:$0xff]
  %v6789 = vld [vmem:[#allocation3 + $0x738] sm:$0xff]
  %v6790 = vld [vmem:[#allocation3 + $0x740] sm:$0xff]
  %v6791 = vld [vmem:[#allocation3 + $0x748] sm:$0xff]
  %v6792 = vld [vmem:[#allocation3 + $0x750] sm:$0xff]
  %v6793 = vld [vmem:[#allocation3 + $0x758] sm:$0xff]
  %v6794 = vld [vmem:[#allocation3 + $0x760] sm:$0xff]
  %v6795 = vld [vmem:[#allocation3 + $0x778] sm:$0xff]
  %v6796 = vld [vmem:[#allocation3 + $0x780] sm:$0xff]
  %v6797 = vld [vmem:[#allocation3 + $0x788] sm:$0xff]
  %v6798 = vld [vmem:[#allocation3 + $0x790] sm:$0xff]
  %v6799 = vld [vmem:[#allocation3 + $0x7a8] sm:$0xff]
  %v6800 = vld [vmem:[#allocation3 + $0x7b0] sm:$0xff]
  %v6801 = vld [vmem:[#allocation3 + $0x7b8] sm:$0xff]
  %v6802 = vld [vmem:[#allocation3 + $0x7c0] sm:$0xff]
  %v6803 = vld [vmem:[#allocation3 + $0x7c8] sm:$0xff]
  %v6804 = vld [vmem:[#allocation3 + $0x7d0] sm:$0xff]
  %v6805 = vld [vmem:[#allocation3 + $0x7d8] sm:$0xff]
  %v6806 = vld [vmem:[#allocation3 + $0x7e0] sm:$0xff]
  %v6807 = vld [vmem:[#allocation3 + $0x7e8] sm:$0xff]
  %v6808 = vld [vmem:[#allocation3 + $0x800] sm:$0xff]
  %v6809 = vld [vmem:[#allocation3 + $0x808] sm:$0xff]
  %v6810 = vld [vmem:[#allocation3 + $0x810] sm:$0xff]
  %v6811 = vld [vmem:[#allocation3 + $0x818] sm:$0xff]
  %v6812 = vld [vmem:[#allocation3 + $0x820] sm:$0xff]
  %v6813 = vld [vmem:[#allocation3 + $0x828] sm:$0xff]
  %v6814 = vld [vmem:[#allocation3 + $0x840] sm:$0xff]
  %v6815 = vld [vmem:[#allocation3 + $0x848] sm:$0xff]
  %v6816 = vld [vmem:[#allocation3 + $0x850] sm:$0xff]
  %v6817 = vld [vmem:[#allocation3 + $0x858] sm:$0xff]
  %v6818 = vld [vmem:[#allocation3 + $0x870] sm:$0xff]
  %v6819 = vld [vmem:[#allocation3 + $0x878] sm:$0xff]
  %v6820 = vld [vmem:[#allocation3 + $0x880] sm:$0xff]
  %v6821 = vld [vmem:[#allocation3 + $0x888] sm:$0xff]
  %v6822 = vld [vmem:[#allocation3 + $0x890] sm:$0xff]
  %v6823 = vld [vmem:[#allocation3 + $0x898] sm:$0xff]
  %v6824 = vld [vmem:[#allocation3 + $0x8a0] sm:$0xff]
  %v6825 = vld [vmem:[#allocation3 + $0x8a8] sm:$0xff]
  %v6826 = vld [vmem:[#allocation3 + $0x8b0] sm:$0xff]
  %v6827 = vld [vmem:[#allocation3 + $0x8c8] sm:$0xff]
  %v6828 = vld [vmem:[#allocation3 + $0x8d0] sm:$0xff]
  %v6829 = vld [vmem:[#allocation3 + $0x8d8] sm:$0xff]
  %v6830 = vld [vmem:[#allocation3 + $0x8e0] sm:$0xff]
  %v6831 = vld [vmem:[#allocation3 + $0x8e8] sm:$0xff]
  %v6832 = vld [vmem:[#allocation3 + $0x8f0] sm:$0xff]
  %v6833 = vld [vmem:[#allocation3 + $0x908] sm:$0xff]
  %v6834 = vld [vmem:[#allocation3 + $0x910] sm:$0xff]
  %v6835 = vld [vmem:[#allocation3 + $0x918] sm:$0xff]
  %v6836 = vld [vmem:[#allocation3 + $0x920] sm:$0xff]
  %v6837 = vld [vmem:[#allocation3 + $0x938] sm:$0xff]
  %v6838 = vld [vmem:[#allocation3 + $0x940] sm:$0xff]
  %v6839 = vld [vmem:[#allocation3 + $0x948] sm:$0xff]
  %v6840 = vld [vmem:[#allocation3 + $0x950] sm:$0xff]
  %v6841 = vld [vmem:[#allocation3 + $0x958] sm:$0xff]
  %v6842 = vld [vmem:[#allocation3 + $0x960] sm:$0xff]
  %v6843 = vld [vmem:[#allocation3 + $0x968] sm:$0xff]
  %v6844 = vld [vmem:[#allocation3 + $0x970] sm:$0xff]
  %v6845 = vld [vmem:[#allocation3 + $0x978] sm:$0xff]
  %v6846 = vld [vmem:[#allocation3 + $0x990] sm:$0xff]
  %v6847 = vld [vmem:[#allocation3 + $0x998] sm:$0xff]
  %v6848 = vld [vmem:[#allocation3 + $0x9a0] sm:$0xff]
  %v6849 = vld [vmem:[#allocation3 + $0x9a8] sm:$0xff]
  %v6850 = vld [vmem:[#allocation3 + $0x9b0] sm:$0xff]
  %v6851 = vld [vmem:[#allocation3 + $0x9b8] sm:$0xff]
  %v6852 = vld [vmem:[#allocation3 + $0x9d0] sm:$0xff]
  %v6853 = vld [vmem:[#allocation3 + $0x9d8] sm:$0xff]
  %v6854 = vld [vmem:[#allocation3 + $0x9e0] sm:$0xff]
  %v6855 = vld [vmem:[#allocation3 + $0x9e8] sm:$0xff]
  %v6856 = vld [vmem:[#allocation3 + $0xa00] sm:$0xff]
  %v6857 = vld [vmem:[#allocation3 + $0xa08] sm:$0xff]
  %v6858 = vld [vmem:[#allocation3 + $0xa10] sm:$0xff]
  %v6859 = vld [vmem:[#allocation3 + $0xa18] sm:$0xff]
  %v6860 = vld [vmem:[#allocation3 + $0xa20] sm:$0xff]
  %v6861 = vld [vmem:[#allocation3 + $0xa28] sm:$0xff]
  %v6862 = vld [vmem:[#allocation3 + $0xa30] sm:$0xff]
  %v6863 = vld [vmem:[#allocation3 + $0xa38] sm:$0xff]
  %v6864 = vld [vmem:[#allocation3 + $0xa40] sm:$0xff]
  %v6865 = vld [vmem:[#allocation3 + $0xa58] sm:$0xff]
  %v6866 = vld [vmem:[#allocation3 + $0xa60] sm:$0xff]
  %v6867 = vld [vmem:[#allocation3 + $0xa68] sm:$0xff]
  %v6868 = vld [vmem:[#allocation3 + $0xa70] sm:$0xff]
  %v6869 = vld [vmem:[#allocation3 + $0xa78] sm:$0xff]
  %v6870 = vld [vmem:[#allocation3 + $0xa80] sm:$0xff]
  %v6871 = vld [vmem:[#allocation3 + $0xa98] sm:$0xff]
  %v6872 = vld [vmem:[#allocation3 + $0xaa0] sm:$0xff]
  %v6873 = vld [vmem:[#allocation3 + $0xaa8] sm:$0xff]
  %v6874 = vld [vmem:[#allocation3 + $0xab0] sm:$0xff]
  %v6875 = vld [vmem:[#allocation3 + $0xac8] sm:$0xff]
  %v6876 = vld [vmem:[#allocation3 + $0xad0] sm:$0xff]
  %v6877 = vld [vmem:[#allocation3 + $0xad8] sm:$0xff]
  %v6878 = vld [vmem:[#allocation3 + $0xae0] sm:$0xff]
  %v6879 = vld [vmem:[#allocation3 + $0xae8] sm:$0xff]
  %v6880 = vld [vmem:[#allocation3 + $0xaf0] sm:$0xff]
  %v6881 = vld [vmem:[#allocation3 + $0xaf8] sm:$0xff]
  %v6882 = vld [vmem:[#allocation3 + $0xb00] sm:$0xff]
  %v6883 = vld [vmem:[#allocation3 + $0xb08] sm:$0xff]
  %v6884 = vld [vmem:[#allocation3 + $0xb20] sm:$0xff]
  %v6885 = vld [vmem:[#allocation3 + $0xb28] sm:$0xff]
  %v6886 = vld [vmem:[#allocation3 + $0xb30] sm:$0xff]
  %v6887 = vld [vmem:[#allocation3 + $0xb38] sm:$0xff]
  %v6888 = vld [vmem:[#allocation3 + $0xb40] sm:$0xff]
  %v6889 = vld [vmem:[#allocation3 + $0xb48] sm:$0xff]
  %v6890 = vld [vmem:[#allocation3 + $0xb60] sm:$0xff]
  %v6891 = vld [vmem:[#allocation3 + $0xb68] sm:$0xff]
  %v6892 = vld [vmem:[#allocation3 + $0xb70] sm:$0xff]
  %v6893 = vld [vmem:[#allocation3 + $0xb78] sm:$0xff]
  %v6894 = vld [vmem:[#allocation3 + $0xb90] sm:$0xff]
  %v6895 = vld [vmem:[#allocation3 + $0xb98] sm:$0xff]
  %v6896 = vld [vmem:[#allocation3 + $0xba0] sm:$0xff]
  %v6897 = vld [vmem:[#allocation3 + $0xba8] sm:$0xff]
  %v6898 = vld [vmem:[#allocation3 + $0xbb0] sm:$0xff]
  %v6899 = vld [vmem:[#allocation3 + $0xbb8] sm:$0xff]
  %v6900 = vld [vmem:[#allocation3 + $0xbc0] sm:$0xff]
  %v6901 = vld [vmem:[#allocation3 + $0xbc8] sm:$0xff]
  %v6902 = vld [vmem:[#allocation3 + $0xbd0] sm:$0xff]
  %v6903 = vld [vmem:[#allocation3 + $0xbe8] sm:$0xff]
  %v6904 = vld [vmem:[#allocation3 + $0xbf0] sm:$0xff]
  %v6905 = vld [vmem:[#allocation3 + $0xbf8] sm:$0xff]
  %v6906 = vld [vmem:[#allocation3 + $0xc00] sm:$0xff]
  %v6907 = vld [vmem:[#allocation3 + $0xc08] sm:$0xff]
  %v6908 = vld [vmem:[#allocation3 + $0xc10] sm:$0xff]
  %v6909 = vld [vmem:[#allocation3 + $0xc28] sm:$0xff]
  %v6910 = vld [vmem:[#allocation3 + $0xc30] sm:$0xff]
  %v6911 = vld [vmem:[#allocation3 + $0xc38] sm:$0xff]
  %v6912 = vld [vmem:[#allocation3 + $0xc40] sm:$0xff]
  %v6913 = vld [vmem:[#allocation3 + $0xc58] sm:$0xff]
  %v6914 = vld [vmem:[#allocation3 + $0xc60] sm:$0xff]
  %v6915 = vld [vmem:[#allocation3 + $0xc68] sm:$0xff]
  %v6916 = vld [vmem:[#allocation3 + $0xc70] sm:$0xff]
  %v6917 = vld [vmem:[#allocation3 + $0xc78] sm:$0xff]
  %v6918 = vld [vmem:[#allocation3 + $0xc80] sm:$0xff]
  %v6919 = vld [vmem:[#allocation3 + $0xc88] sm:$0xff]
  %v6920 = vld [vmem:[#allocation3 + $0xc90] sm:$0xff]
  %v6921 = vld [vmem:[#allocation3 + $0xc98] sm:$0xff]
  %v6922 = vld [vmem:[#allocation3 + $0xcb0] sm:$0xff]
  %v6923 = vld [vmem:[#allocation3 + $0xcb8] sm:$0xff]
  %v6924 = vld [vmem:[#allocation3 + $0xcc0] sm:$0xff]
  %v6925 = vld [vmem:[#allocation3 + $0xcc8] sm:$0xff]
  %v6926 = vld [vmem:[#allocation3 + $0xcd0] sm:$0xff]
  %v6927 = vld [vmem:[#allocation3 + $0xcd8] sm:$0xff]
  %v6928 = vld [vmem:[#allocation3 + $0xcf0] sm:$0xff]
  %v6929 = vld [vmem:[#allocation3 + $0xcf8] sm:$0xff]
  %v6930 = vld [vmem:[#allocation3 + $0xd00] sm:$0xff]
  %v6931 = vld [vmem:[#allocation3 + $0xd08] sm:$0xff]
  %v6932 = vld [vmem:[#allocation3 + $0xd20] sm:$0xff]
  %v6933 = vld [vmem:[#allocation3 + $0xd28] sm:$0xff]
  %v6934 = vld [vmem:[#allocation3 + $0xd30] sm:$0xff]
  %v6935 = vld [vmem:[#allocation3 + $0xd38] sm:$0xff]
  %v6936 = vld [vmem:[#allocation3 + $0xd40] sm:$0xff]
  %v6937 = vld [vmem:[#allocation3 + $0xd48] sm:$0xff]
  %v6938 = vld [vmem:[#allocation3 + $0xd50] sm:$0xff]
  %v6939 = vld [vmem:[#allocation3 + $0xd58] sm:$0xff]
  %v6940 = vld [vmem:[#allocation3 + $0xd60] sm:$0xff]
  %v6941 = vld [vmem:[#allocation3 + $0xd78] sm:$0xff]
  %v6942 = vld [vmem:[#allocation3 + $0xd80] sm:$0xff]
  %v6943 = vld [vmem:[#allocation3 + $0xd88] sm:$0xff]
  %v6944 = vld [vmem:[#allocation3 + $0xd90] sm:$0xff]
  %v6945 = vld [vmem:[#allocation3 + $0xd98] sm:$0xff]
  %v6946 = vld [vmem:[#allocation3 + $0xda0] sm:$0xff]
  %v6947 = vld [vmem:[#allocation3 + $0xdb8] sm:$0xff]
  %v6948 = vld [vmem:[#allocation3 + $0xdc0] sm:$0xff]
  %v6949 = vld [vmem:[#allocation3 + $0xdc8] sm:$0xff]
  %v6950 = vld [vmem:[#allocation3 + $0xdd0] sm:$0xff]
  %v6951 = vld [vmem:[#allocation3 + $0xde8] sm:$0xff]
  %v6952 = vld [vmem:[#allocation3 + $0xdf0] sm:$0xff]
  %v6953 = vld [vmem:[#allocation3 + $0xdf8] sm:$0xff]
  %v6954 = vld [vmem:[#allocation3 + $0xe00] sm:$0xff]
  %v6955 = vld [vmem:[#allocation3 + $0xe08] sm:$0xff]
  %v6956 = vld [vmem:[#allocation3 + $0xe10] sm:$0xff]
  %v6957 = vld [vmem:[#allocation3 + $0xe18] sm:$0xff]
  %v6958 = vld [vmem:[#allocation3 + $0xe20] sm:$0xff]
  %v6959 = vld [vmem:[#allocation3 + $0xe28] sm:$0xff]
  %v6960 = vld [vmem:[#allocation3 + $0xe40] sm:$0xff]
  %v6961 = vld [vmem:[#allocation3 + $0xe48] sm:$0xff]
  %v6962 = vld [vmem:[#allocation3 + $0xe50] sm:$0xff]
  %v6963 = vld [vmem:[#allocation3 + $0xe58] sm:$0xff]
  %v6964 = vld [vmem:[#allocation3 + $0xe60] sm:$0xff]
  %v6965 = vld [vmem:[#allocation3 + $0xe68] sm:$0xff]
  %v6966 = vld [vmem:[#allocation3 + $0xe80] sm:$0xff]
  %v6967 = vld [vmem:[#allocation3 + $0xe88] sm:$0xff]
  %v6968 = vld [vmem:[#allocation3 + $0xe90] sm:$0xff]
  %v6969 = vld [vmem:[#allocation3 + $0xe98] sm:$0xff]
  %v6970 = vld [vmem:[#allocation3 + $0xeb0] sm:$0xff]
  %v6971 = vld [vmem:[#allocation3 + $0xeb8] sm:$0xff]
  %v6972 = vld [vmem:[#allocation3 + $0xec0] sm:$0xff]
  %v6973 = vld [vmem:[#allocation3 + $0xec8] sm:$0xff]
  %v6974 = vld [vmem:[#allocation3 + $0xed0] sm:$0xff]
  %v6975 = vld [vmem:[#allocation3 + $0xed8] sm:$0xff]
  %v6976 = vld [vmem:[#allocation3 + $0xee0] sm:$0xff]
  %v6977 = vld [vmem:[#allocation3 + $0xee8] sm:$0xff]
  %v6978 = vld [vmem:[#allocation3 + $0xef0] sm:$0xff]
  %v6979 = vld [vmem:[#allocation3 + $0xf08] sm:$0xff]
  %v6980 = vld [vmem:[#allocation3 + $0xf10] sm:$0xff]
  %v6981 = vld [vmem:[#allocation3 + $0xf18] sm:$0xff]
  %v6982 = vld [vmem:[#allocation3 + $0xf20] sm:$0xff]
  %v6983 = vld [vmem:[#allocation3 + $0xf28] sm:$0xff]
  %v6984 = vld [vmem:[#allocation3 + $0xf30] sm:$0xff]
  %v6985 = vld [vmem:[#allocation3 + $0xf48] sm:$0xff]
  %v6986 = vld [vmem:[#allocation3 + $0xf50] sm:$0xff]
  %v6987 = vld [vmem:[#allocation3 + $0xf58] sm:$0xff]
  %v6988 = vld [vmem:[#allocation3 + $0xf60] sm:$0xff]
  %v6989 = vld [vmem:[#allocation3 + $0xf78] sm:$0xff]
  %v6990 = vld [vmem:[#allocation3 + $0xf80] sm:$0xff]
  %v6991 = vld [vmem:[#allocation3 + $0xf88] sm:$0xff]
  %v6992 = vld [vmem:[#allocation3 + $0xf90] sm:$0xff]
  %v6993 = vld [vmem:[#allocation3 + $0xf98] sm:$0xff]
  %v6994 = vld [vmem:[#allocation3 + $0xfa0] sm:$0xff]
  %v6995 = vld [vmem:[#allocation3 + $0xfa8] sm:$0xff]
  %v6996 = vld [vmem:[#allocation3 + $0xfb0] sm:$0xff]
  %v6997 = vld [vmem:[#allocation3 + $0xfb8] sm:$0xff]
  %v6998 = vld [vmem:[#allocation3 + $0xfd0] sm:$0xff]
  %v6999 = vld [vmem:[#allocation3 + $0xfd8] sm:$0xff]
  %v7000 = vld [vmem:[#allocation3 + $0xfe0] sm:$0xff]
  %v7001 = vld [vmem:[#allocation3 + $0xfe8] sm:$0xff]
  %v7002 = vld [vmem:[#allocation3 + $0xff0] sm:$0xff]
  %v7003 = vld [vmem:[#allocation3 + $0xff8] sm:$0xff]
  %v7004 = vld [vmem:[#allocation3 + $0x1010] sm:$0xff]
  %v7005 = vld [vmem:[#allocation3 + $0x1018] sm:$0xff]
  %v7006 = vld [vmem:[#allocation3 + $0x1020] sm:$0xff]
  %v7007 = vld [vmem:[#allocation3 + $0x1028] sm:$0xff]
  %v7008 = vld [vmem:[#allocation3 + $0x1040] sm:$0xff]
  %v7009 = vld [vmem:[#allocation3 + $0x1048] sm:$0xff]
  %v7010 = vld [vmem:[#allocation3 + $0x1050] sm:$0xff]
  %v7011 = vld [vmem:[#allocation3 + $0x1058] sm:$0xff]
  %v7012 = vld [vmem:[#allocation3 + $0x1060] sm:$0xff]
  %v7013 = vld [vmem:[#allocation3 + $0x1068] sm:$0xff]
  %v7014 = vld [vmem:[#allocation3 + $0x1070] sm:$0xff]
  %v7015 = vld [vmem:[#allocation3 + $0x1078] sm:$0xff]
  %v7016 = vld [vmem:[#allocation3 + $0x1080] sm:$0xff]
  %v7017 = vld [vmem:[#allocation3 + $0x1098] sm:$0xff]
  %v7018 = vld [vmem:[#allocation3 + $0x10a0] sm:$0xff]
  %v7019 = vld [vmem:[#allocation3 + $0x10a8] sm:$0xff]
  %v7020 = vld [vmem:[#allocation3 + $0x10b0] sm:$0xff]
  %v7021 = vld [vmem:[#allocation3 + $0x10b8] sm:$0xff]
  %v7022 = vld [vmem:[#allocation3 + $0x10c0] sm:$0xff]
  %v7023 = vld [vmem:[#allocation3 + $0x10d8] sm:$0xff]
  %v7024 = vld [vmem:[#allocation3 + $0x10e0] sm:$0xff]
  %v7025 = vld [vmem:[#allocation3 + $0x10e8] sm:$0xff]
  %v7026 = vld [vmem:[#allocation3 + $0x10f0] sm:$0xff]
  %v7027 = vld [vmem:[#allocation3 + $0x1108] sm:$0xff]
  %v7028 = vld [vmem:[#allocation3 + $0x1110] sm:$0xff]
  %v7029 = vld [vmem:[#allocation3 + $0x1118] sm:$0xff]
  %v7030 = vld [vmem:[#allocation3 + $0x1120] sm:$0xff]
  %v7031 = vld [vmem:[#allocation3 + $0x1128] sm:$0xff]
  %v7032 = vld [vmem:[#allocation3 + $0x1130] sm:$0xff]
  %v7033 = vld [vmem:[#allocation3 + $0x1138] sm:$0xff]
  %v7034 = vld [vmem:[#allocation3 + $0x1140] sm:$0xff]
  %v7035 = vld [vmem:[#allocation3 + $0x1148] sm:$0xff]
  %v7036 = vld [vmem:[#allocation3 + $0x1160] sm:$0xff]
  %v7037 = vld [vmem:[#allocation3 + $0x1168] sm:$0xff]
  %v7038 = vld [vmem:[#allocation3 + $0x1170] sm:$0xff]
  %v7039 = vld [vmem:[#allocation3 + $0x1178] sm:$0xff]
  %v7040 = vld [vmem:[#allocation3 + $0x1180] sm:$0xff]
  %v7041 = vld [vmem:[#allocation3 + $0x1188] sm:$0xff]
  %v7042 = vld [vmem:[#allocation3 + $0x11a0] sm:$0xff]
  %v7043 = vld [vmem:[#allocation3 + $0x11a8] sm:$0xff]
  %v7044 = vld [vmem:[#allocation3 + $0x11b0] sm:$0xff]
  %v7045 = vld [vmem:[#allocation3 + $0x11b8] sm:$0xff]
  %v7046 = vld [vmem:[#allocation3 + $0x11d0] sm:$0xff]
  %v7047 = vld [vmem:[#allocation3 + $0x11d8] sm:$0xff]
  %v7048 = vld [vmem:[#allocation3 + $0x11e0] sm:$0xff]
  %v7049 = vld [vmem:[#allocation3 + $0x11e8] sm:$0xff]
  %v7050 = vld [vmem:[#allocation3 + $0x11f0] sm:$0xff]
  %v7051 = vld [vmem:[#allocation3 + $0x11f8] sm:$0xff]
  %v7052 = vld [vmem:[#allocation3 + $0x1200] sm:$0xff]
  %v7053 = vld [vmem:[#allocation3 + $0x1208] sm:$0xff]
  %v7054 = vld [vmem:[#allocation3 + $0x1210] sm:$0xff]
  %v7055 = vld [vmem:[#allocation3 + $0x1228] sm:$0xff]
  %v7056 = vld [vmem:[#allocation3 + $0x1230] sm:$0xff]
  %v7057 = vld [vmem:[#allocation3 + $0x1238] sm:$0xff]
  %v7058 = vld [vmem:[#allocation3 + $0x1240] sm:$0xff]
  %v7059 = vld [vmem:[#allocation3 + $0x1248] sm:$0xff]
  %v7060 = vld [vmem:[#allocation3 + $0x1250] sm:$0xff]
  %v7061 = vld [vmem:[#allocation3 + $0x1268] sm:$0xff]
  %v7062 = vld [vmem:[#allocation3 + $0x1270] sm:$0xff]
  %v7063 = vld [vmem:[#allocation3 + $0x1278] sm:$0xff]
  %v7064 = vld [vmem:[#allocation3 + $0x1280] sm:$0xff]
  %v7065 = vld [vmem:[#allocation3 + $0x1298] sm:$0xff]
  %v7066 = vld [vmem:[#allocation3 + $0x12a0] sm:$0xff]
  %v7067 = vld [vmem:[#allocation3 + $0x12a8] sm:$0xff]
  %v7068 = vld [vmem:[#allocation3 + $0x12b0] sm:$0xff]
  %v7069 = vld [vmem:[#allocation3 + $0x12b8] sm:$0xff]
  %v7070 = vld [vmem:[#allocation3 + $0x12c0] sm:$0xff]
  %v7071 = vld [vmem:[#allocation3 + $0x12c8] sm:$0xff]
  %v7072 = vld [vmem:[#allocation3 + $0x12d0] sm:$0xff]
  %v7073 = vld [vmem:[#allocation3 + $0x12d8] sm:$0xff]
  %v7074 = vld [vmem:[#allocation3 + $0x12f0] sm:$0xff]
  %v7075 = vld [vmem:[#allocation3 + $0x12f8] sm:$0xff]
  %v7076 = vld [vmem:[#allocation3 + $0x1300] sm:$0xff]
  %v7077 = vld [vmem:[#allocation3 + $0x1308] sm:$0xff]
  %v7078 = vld [vmem:[#allocation3 + $0x1310] sm:$0xff]
  %v7079 = vld [vmem:[#allocation3 + $0x1318] sm:$0xff]
  %v7080 = vld [vmem:[#allocation3 + $0x1330] sm:$0xff]
  %v7081 = vld [vmem:[#allocation3 + $0x1338] sm:$0xff]
  %v7082 = vld [vmem:[#allocation3 + $0x1340] sm:$0xff]
  %v7083 = vld [vmem:[#allocation3 + $0x1348] sm:$0xff]
  %v7084 = vld [vmem:[#allocation3 + $0x1360] sm:$0xff]
  %v7085 = vld [vmem:[#allocation3 + $0x1368] sm:$0xff]
  %v7086 = vld [vmem:[#allocation3 + $0x1370] sm:$0xff]
  %v7087 = vld [vmem:[#allocation3 + $0x1378] sm:$0xff]
  %v7088 = vld [vmem:[#allocation3 + $0x1380] sm:$0xff]
  %v7089 = vld [vmem:[#allocation3 + $0x1388] sm:$0xff]
  %v7090 = vld [vmem:[#allocation3 + $0x1390] sm:$0xff]
  %v7091 = vld [vmem:[#allocation3 + $0x1398] sm:$0xff]
  %v7092 = vld [vmem:[#allocation3 + $0x13a0] sm:$0xff]
  %v7093 = vld [vmem:[#allocation3 + $0x13b8] sm:$0xff]
  %v7094 = vld [vmem:[#allocation3 + $0x13c0] sm:$0xff]
  %v7095 = vld [vmem:[#allocation3 + $0x13c8] sm:$0xff]
  %v7096 = vld [vmem:[#allocation3 + $0x13d0] sm:$0xff]
  %v7097 = vld [vmem:[#allocation3 + $0x13d8] sm:$0xff]
  %v7098 = vld [vmem:[#allocation3 + $0x13e0] sm:$0xff]
  %v7099 = vld [vmem:[#allocation3 + $0x13f8] sm:$0xff]
  %v7100 = vld [vmem:[#allocation3 + $0x1400] sm:$0xff]
  %v7101 = vld [vmem:[#allocation3 + $0x1408] sm:$0xff]
  %v7102 = vld [vmem:[#allocation3 + $0x1410] sm:$0xff]
  %v7103 = vld [vmem:[#allocation3 + $0x1428] sm:$0xff]
  %v7104 = vld [vmem:[#allocation3 + $0x1430] sm:$0xff]
  %v7105 = vld [vmem:[#allocation3 + $0x1438] sm:$0xff]
  %v7106 = vld [vmem:[#allocation3 + $0x1440] sm:$0xff]
  %v7107 = vld [vmem:[#allocation3 + $0x1448] sm:$0xff]
  %v7108 = vld [vmem:[#allocation3 + $0x1450] sm:$0xff]
  %v7109 = vld [vmem:[#allocation3 + $0x1458] sm:$0xff]
  %v7110 = vld [vmem:[#allocation3 + $0x1460] sm:$0xff]
  %v7111 = vld [vmem:[#allocation3 + $0x1468] sm:$0xff]
  %v7112 = vld [vmem:[#allocation3 + $0x1480] sm:$0xff]
  %v7113 = vld [vmem:[#allocation3 + $0x1488] sm:$0xff]
  %v7114 = vld [vmem:[#allocation3 + $0x1490] sm:$0xff]
  %v7115 = vld [vmem:[#allocation3 + $0x1498] sm:$0xff]
  %v7116 = vld [vmem:[#allocation3 + $0x14a0] sm:$0xff]
  %v7117 = vld [vmem:[#allocation3 + $0x14a8] sm:$0xff]
  %v7118 = vld [vmem:[#allocation3 + $0x14c0] sm:$0xff]
  %v7119 = vld [vmem:[#allocation3 + $0x14c8] sm:$0xff]
  %v7120 = vld [vmem:[#allocation3 + $0x14d0] sm:$0xff]
  %v7121 = vld [vmem:[#allocation3 + $0x14d8] sm:$0xff]
  %v7122 = vld [vmem:[#allocation3 + $0x14f0] sm:$0xff]
  %v7123 = vld [vmem:[#allocation3 + $0x14f8] sm:$0xff]
  %v7124 = vld [vmem:[#allocation3 + $0x1500] sm:$0xff]
  %v7125 = vld [vmem:[#allocation3 + $0x1508] sm:$0xff]
  %v7126 = vld [vmem:[#allocation3 + $0x1510] sm:$0xff]
  %v7127 = vld [vmem:[#allocation3 + $0x1518] sm:$0xff]
  %v7128 = vld [vmem:[#allocation3 + $0x1520] sm:$0xff]
  %v7129 = vld [vmem:[#allocation3 + $0x1528] sm:$0xff]
  %v7130 = vld [vmem:[#allocation3 + $0x1530] sm:$0xff]
  %v7131 = vld [vmem:[#allocation3 + $0x1548] sm:$0xff]
  %v7132 = vld [vmem:[#allocation3 + $0x1550] sm:$0xff]
  %v7133 = vld [vmem:[#allocation3 + $0x1558] sm:$0xff]
  %v7134 = vld [vmem:[#allocation3 + $0x1560] sm:$0xff]
  %v7135 = vld [vmem:[#allocation3 + $0x1568] sm:$0xff]
  %v7136 = vld [vmem:[#allocation3 + $0x1570] sm:$0xff]
  %v7137 = vld [vmem:[#allocation3 + $0x1588] sm:$0xff]
  %v7138 = vld [vmem:[#allocation3 + $0x1590] sm:$0xff]
  %v7139 = vld [vmem:[#allocation3 + $0x1598] sm:$0xff]
  %v7140 = vld [vmem:[#allocation3 + $0x15a0] sm:$0xff]
  %v7141 = vld [vmem:[#allocation3 + $0x15b8] sm:$0xff]
  %v7142 = vld [vmem:[#allocation3 + $0x15c0] sm:$0xff]
  %v7143 = vld [vmem:[#allocation3 + $0x15c8] sm:$0xff]
  %v7144 = vld [vmem:[#allocation3 + $0x15d0] sm:$0xff]
  %v7145 = vld [vmem:[#allocation3 + $0x15d8] sm:$0xff]
  %v7146 = vld [vmem:[#allocation3 + $0x15e0] sm:$0xff]
  %v7147 = vld [vmem:[#allocation3 + $0x15e8] sm:$0xff]
  %v7148 = vld [vmem:[#allocation3 + $0x15f0] sm:$0xff]
  %v7149 = vld [vmem:[#allocation3 + $0x15f8] sm:$0xff]
  %v7150 = vld [vmem:[#allocation3 + $0x1610] sm:$0xff]
  %v7151 = vld [vmem:[#allocation3 + $0x1618] sm:$0xff]
  %v7152 = vld [vmem:[#allocation3 + $0x1620] sm:$0xff]
  %v7153 = vld [vmem:[#allocation3 + $0x1628] sm:$0xff]
  %v7154 = vld [vmem:[#allocation3 + $0x1630] sm:$0xff]
  %v7155 = vld [vmem:[#allocation3 + $0x1638] sm:$0xff]
  %v7156 = vld [vmem:[#allocation3 + $0x1650] sm:$0xff]
  %v7157 = vld [vmem:[#allocation3 + $0x1658] sm:$0xff]
  %v7158 = vld [vmem:[#allocation3 + $0x1660] sm:$0xff]
  %v7159 = vld [vmem:[#allocation3 + $0x1668] sm:$0xff]
  %v7160 = vld [vmem:[#allocation3 + $0x1680] sm:$0xff]
  %v7161 = vld [vmem:[#allocation3 + $0x1688] sm:$0xff]
  %v7162 = vld [vmem:[#allocation3 + $0x1690] sm:$0xff]
  %v7163 = vld [vmem:[#allocation3 + $0x1698] sm:$0xff]
  %v7164 = vld [vmem:[#allocation3 + $0x16a0] sm:$0xff]
  %v7165 = vld [vmem:[#allocation3 + $0x16a8] sm:$0xff]
  %v7166 = vld [vmem:[#allocation3 + $0x16b0] sm:$0xff]
  %v7167 = vld [vmem:[#allocation3 + $0x16b8] sm:$0xff]
  %v7168 = vld [vmem:[#allocation3 + $0x16c0] sm:$0xff]
  %v7169 = vld [vmem:[#allocation3 + $0x16d8] sm:$0xff]
  %v7170 = vld [vmem:[#allocation3 + $0x16e0] sm:$0xff]
  %v7171 = vld [vmem:[#allocation3 + $0x16e8] sm:$0xff]
  %v7172 = vld [vmem:[#allocation3 + $0x16f0] sm:$0xff]
  %v7173 = vld [vmem:[#allocation3 + $0x16f8] sm:$0xff]
  %v7174 = vld [vmem:[#allocation3 + $0x1700] sm:$0xff]
  %v7175 = vld [vmem:[#allocation3 + $0x1718] sm:$0xff]
  %v7176 = vld [vmem:[#allocation3 + $0x1720] sm:$0xff]
  %v7177 = vld [vmem:[#allocation3 + $0x1728] sm:$0xff]
  %v7178 = vld [vmem:[#allocation3 + $0x1730] sm:$0xff]
  %v7179 = vld [vmem:[#allocation3 + $0x1748] sm:$0xff]
  %v7180 = vld [vmem:[#allocation3 + $0x1750] sm:$0xff]
  %v7181 = vld [vmem:[#allocation3 + $0x1758] sm:$0xff]
  %v7182 = vld [vmem:[#allocation3 + $0x1760] sm:$0xff]
  %v7183 = vld [vmem:[#allocation3 + $0x1768] sm:$0xff]
  %v7184 = vld [vmem:[#allocation3 + $0x1770] sm:$0xff]
  %v7185 = vld [vmem:[#allocation3 + $0x1778] sm:$0xff]
  %v7186 = vld [vmem:[#allocation3 + $0x1780] sm:$0xff]
  %v7187 = vld [vmem:[#allocation3 + $0x1788] sm:$0xff]
  %v7188 = vld [vmem:[#allocation3 + $0x17a0] sm:$0xff]
  %v7189 = vld [vmem:[#allocation3 + $0x17a8] sm:$0xff]
  %v7190 = vld [vmem:[#allocation3 + $0x17b0] sm:$0xff]
  %v7191 = vld [vmem:[#allocation3 + $0x17b8] sm:$0xff]
  %v7192 = vld [vmem:[#allocation3 + $0x17c0] sm:$0xff]
  %v7193 = vld [vmem:[#allocation3 + $0x17c8] sm:$0xff]
  %v7194 = vld [vmem:[#allocation3 + $0x17e0] sm:$0xff]
  %v7195 = vld [vmem:[#allocation3 + $0x17e8] sm:$0xff]
  %v7196 = vld [vmem:[#allocation3 + $0x17f0] sm:$0xff]
  %v7197 = vld [vmem:[#allocation3 + $0x17f8] sm:$0xff]
  %v7198 = vld [vmem:[#allocation3 + $0x1810] sm:$0xff]
  %v7199 = vld [vmem:[#allocation3 + $0x1818] sm:$0xff]
  %v7200 = vld [vmem:[#allocation3 + $0x1820] sm:$0xff]
  %v7201 = vld [vmem:[#allocation3 + $0x1828] sm:$0xff]
  %v7202 = vld [vmem:[#allocation3 + $0x1830] sm:$0xff]
  %v7203 = vld [vmem:[#allocation3 + $0x1838] sm:$0xff]
  %v7204 = vld [vmem:[#allocation3 + $0x1840] sm:$0xff]
  %v7205 = vld [vmem:[#allocation3 + $0x1848] sm:$0xff]
  %v7206 = vld [vmem:[#allocation3 + $0x1850] sm:$0xff]
  %v7207 = vld [vmem:[#allocation3 + $0x1868] sm:$0xff]
  %v7208 = vld [vmem:[#allocation3 + $0x1870] sm:$0xff]
  %v7209 = vld [vmem:[#allocation3 + $0x1878] sm:$0xff]
  %v7210 = vld [vmem:[#allocation3 + $0x1880] sm:$0xff]
  %v7211 = vld [vmem:[#allocation3 + $0x1888] sm:$0xff]
  %v7212 = vld [vmem:[#allocation3 + $0x1890] sm:$0xff]
  %v7213 = vld [vmem:[#allocation3 + $0x18a8] sm:$0xff]
  %v7214 = vld [vmem:[#allocation3 + $0x18b0] sm:$0xff]
  %v7215 = vld [vmem:[#allocation3 + $0x18b8] sm:$0xff]
  %v7216 = vld [vmem:[#allocation3 + $0x18c0] sm:$0xff]
  %v7217 = vld [vmem:[#allocation3 + $0x18d8] sm:$0xff]
  %v7218 = vld [vmem:[#allocation3 + $0x18e0] sm:$0xff]
  %v7219 = vld [vmem:[#allocation3 + $0x18e8] sm:$0xff]
  %v7220 = vld [vmem:[#allocation3 + $0x18f0] sm:$0xff]
  %v7221 = vld [vmem:[#allocation3 + $0x18f8] sm:$0xff]
  %v7222 = vld [vmem:[#allocation3 + $0x1900] sm:$0xff]
  %v7223 = vld [vmem:[#allocation3 + $0x1908] sm:$0xff]
  %v7224 = vld [vmem:[#allocation3 + $0x1910] sm:$0xff]
  %v7225 = vld [vmem:[#allocation3 + $0x1918] sm:$0xff]
  %v7226 = vld [vmem:[#allocation3 + $0x1930] sm:$0xff]
  %v7227 = vld [vmem:[#allocation3 + $0x1938] sm:$0xff]
  %v7228 = vld [vmem:[#allocation3 + $0x1940] sm:$0xff]
  %v7229 = vld [vmem:[#allocation3 + $0x1948] sm:$0xff]
  %v7230 = vld [vmem:[#allocation3 + $0x1950] sm:$0xff]
  %v7231 = vld [vmem:[#allocation3 + $0x1958] sm:$0xff]
  %v7232 = vld [vmem:[#allocation3 + $0x1970] sm:$0xff]
  %v7233 = vld [vmem:[#allocation3 + $0x1978] sm:$0xff]
  %v7234 = vld [vmem:[#allocation3 + $0x1980] sm:$0xff]
  %v7235 = vld [vmem:[#allocation3 + $0x1988] sm:$0xff]
  %v7236 = vld [vmem:[#allocation3 + $0x19a0] sm:$0xff]
  %v7237 = vld [vmem:[#allocation3 + $0x19a8] sm:$0xff]
  %v7238 = vld [vmem:[#allocation3 + $0x19b0] sm:$0xff]
  %v7239 = vld [vmem:[#allocation3 + $0x19b8] sm:$0xff]
  %v7240 = vld [vmem:[#allocation3 + $0x19c0] sm:$0xff]
  %v7241 = vld [vmem:[#allocation3 + $0x19c8] sm:$0xff]
  %v7242 = vld [vmem:[#allocation3 + $0x19d0] sm:$0xff]
  %v7243 = vld [vmem:[#allocation3 + $0x19d8] sm:$0xff]
  %v7244 = vld [vmem:[#allocation3 + $0x19e0] sm:$0xff]
  %v7245 = vld [vmem:[#allocation3 + $0x19f8] sm:$0xff]
  %v7246 = vld [vmem:[#allocation3 + $0x1a00] sm:$0xff]
  %v7247 = vld [vmem:[#allocation3 + $0x1a08] sm:$0xff]
  %v7248 = vld [vmem:[#allocation3 + $0x1a10] sm:$0xff]
  %v7249 = vld [vmem:[#allocation3 + $0x1a18] sm:$0xff]
  %v7250 = vld [vmem:[#allocation3 + $0x1a20] sm:$0xff]
  %v7251 = vld [vmem:[#allocation3 + $0x1a38] sm:$0xff]
  %v7252 = vld [vmem:[#allocation3 + $0x1a40] sm:$0xff]
  %v7253 = vld [vmem:[#allocation3 + $0x1a48] sm:$0xff]
  %v7254 = vld [vmem:[#allocation3 + $0x1a50] sm:$0xff]
  %v7255 = vld [vmem:[#allocation3 + $0x1a68] sm:$0xff]
  %v7256 = vld [vmem:[#allocation3 + $0x1a70] sm:$0xff]
  %v7257 = vld [vmem:[#allocation3 + $0x1a78] sm:$0xff]
  %v7258 = vld [vmem:[#allocation3 + $0x1a80] sm:$0xff]
  %v7259 = vld [vmem:[#allocation3 + $0x1a88] sm:$0xff]
  %v7260 = vld [vmem:[#allocation3 + $0x1a90] sm:$0xff]
  %v7261 = vld [vmem:[#allocation3 + $0x1a98] sm:$0xff]
  %v7262 = vld [vmem:[#allocation3 + $0x1aa0] sm:$0xff]
  %v7263 = vld [vmem:[#allocation3 + $0x1aa8] sm:$0xff]
  %v7264 = vld [vmem:[#allocation3 + $0x1ac0] sm:$0xff]
  %v7265 = vld [vmem:[#allocation3 + $0x1ac8] sm:$0xff]
  %v7266 = vld [vmem:[#allocation3 + $0x1ad0] sm:$0xff]
  %v7267 = vld [vmem:[#allocation3 + $0x1ad8] sm:$0xff]
  %v7268 = vld [vmem:[#allocation3 + $0x1ae0] sm:$0xff]
  %v7269 = vld [vmem:[#allocation3 + $0x1ae8] sm:$0xff]
  %v7270 = vld [vmem:[#allocation3 + $0x1b00] sm:$0xff]
  %v7271 = vld [vmem:[#allocation3 + $0x1b08] sm:$0xff]
  %v7272 = vld [vmem:[#allocation3 + $0x1b10] sm:$0xff]
  %v7273 = vld [vmem:[#allocation3 + $0x1b18] sm:$0xff]
  %v7274 = vld [vmem:[#allocation3 + $0x1b30] sm:$0xff]
  %v7275 = vld [vmem:[#allocation3 + $0x1b38] sm:$0xff]
  %v7276 = vld [vmem:[#allocation3 + $0x1b40] sm:$0xff]
  %v7277 = vld [vmem:[#allocation3 + $0x1b48] sm:$0xff]
  %v7278 = vld [vmem:[#allocation3 + $0x1b50] sm:$0xff]
  %v7279 = vld [vmem:[#allocation3 + $0x1b58] sm:$0xff]
  %v7280 = vld [vmem:[#allocation3 + $0x1b60] sm:$0xff]
  %v7281 = vld [vmem:[#allocation3 + $0x1b68] sm:$0xff]
  %v7282 = vld [vmem:[#allocation3 + $0x1b70] sm:$0xff]
  %v7283 = vld [vmem:[#allocation3 + $0x1b88] sm:$0xff]
  %v7284 = vld [vmem:[#allocation3 + $0x1b90] sm:$0xff]
  %v7285 = vld [vmem:[#allocation3 + $0x1b98] sm:$0xff]
  %v7286 = vld [vmem:[#allocation3 + $0x1ba0] sm:$0xff]
  %v7287 = vld [vmem:[#allocation3 + $0x1ba8] sm:$0xff]
  %v7288 = vld [vmem:[#allocation3 + $0x1bb0] sm:$0xff]
  %v7289 = vld [vmem:[#allocation3 + $0x1bc8] sm:$0xff]
  %v7290 = vld [vmem:[#allocation3 + $0x1bd0] sm:$0xff]
  %v7291 = vld [vmem:[#allocation3 + $0x1bd8] sm:$0xff]
  %v7292 = vld [vmem:[#allocation3 + $0x1be0] sm:$0xff]
  %v7293 = vld [vmem:[#allocation3 + $0x1bf8] sm:$0xff]
  %v7294 = vld [vmem:[#allocation3 + $0x1c00] sm:$0xff]
  %v7295 = vld [vmem:[#allocation3 + $0x1c08] sm:$0xff]
  %v7296 = vld [vmem:[#allocation3 + $0x1c10] sm:$0xff]
  %v7297 = vld [vmem:[#allocation3 + $0x1c18] sm:$0xff]
  %v7298 = vld [vmem:[%s4] sm:$0xff]
  %v7299 = vld [vmem:[%s4 + $0x8] sm:$0xff]
  %v7300 = vld [vmem:[%s4 + $0x10] sm:$0xff]
  %v7301 = vld [vmem:[%s4 + $0x18] sm:$0xff]
  %v7302 = vld [vmem:[%s4 + $0x20] sm:$0xff]
  %v7303 = vld [vmem:[%s4 + $0x28] sm:$0xff]
  %v7304 = vld [vmem:[%s4 + $0x30] sm:$0xff]
  %v7305 = vld [vmem:[%s4 + $0x38] sm:$0xff]
  %7307 = vset.pattern.permute.xlu0 0
  %7308 = vperm.xlu0 %7307, %v7298
  %v7309 = vpop.permute.xlu0 %7308
  %7312 = vset.pattern.permute.xlu0 0
  %7313 = vperm.xlu0 %7312, %v7299
  %v7314 = vpop.permute.xlu0 %7313
  %7317 = vset.pattern.permute.xlu0 0
  %7318 = vperm.xlu0 %7317, %v7300
  %v7319 = vpop.permute.xlu0 %7318
  %7322 = vset.pattern.permute.xlu0 0
  %7323 = vperm.xlu0 %7322, %v7301
  %v7324 = vpop.permute.xlu0 %7323
  %7327 = vset.pattern.permute.xlu0 0
  %7328 = vperm.xlu0 %7327, %v7302
  %v7329 = vpop.permute.xlu0 %7328
  %7332 = vset.pattern.permute.xlu0 0
  %7333 = vperm.xlu0 %7332, %v7303
  %v7334 = vpop.permute.xlu0 %7333
  %7337 = vset.pattern.permute.xlu0 0
  %7338 = vperm.xlu0 %7337, %v7304
  %v7339 = vpop.permute.xlu0 %7338
  %7342 = vset.pattern.permute.xlu0 0
  %7343 = vperm.xlu0 %7342, %v7305
  %v7344 = vpop.permute.xlu0 %7343
  %vm7346 = vcmask 261120
  %v7348 = vsel %vm7346, %v6592, 0
  %v7351 = vsel %vm7346, %v6595, 0
  %v7354 = vsel %vm7346, %v6598, 0
  %v7357 = vsel %vm7346, %v6601, 0
  %v7360 = vsel %vm7346, %v6604, 0
  %v7363 = vsel %vm7346, %v6607, 0
  %v7366 = vsel %vm7346, %v6610, 0
  %v7369 = vsel %vm7346, %v6613, 0
  %7371 = vmatprep.subr.mxu0 %v6615
  %7372 = vmatpush1.msra.mxu0 %v6614
  %7373 = vmatprep.subr.mxu0 %v6634
  %7374 = vmatpush1.msra.mxu0 %v6633
  %7375 = vmatprep.subr.mxu0 %v6653
  %7376 = vmatpush1.msra.mxu0 %v6652
  %7377 = vmatprep.subr.mxu0 %v6672
  %7378 = vmatpush1.msra.mxu0 %v6671
  %7379 = vmatprep.subr.mxu0 %v6691
  %7380 = vmatpush1.msra.mxu0 %v6690
  %7381 = vmatprep.subr.mxu0 %v6710
  %7382 = vmatpush1.msra.mxu0 %v6709
  %7383 = vmatprep.subr.mxu0 %v6729
  %7384 = vmatpush1.msra.mxu0 %v6728
  %7385 = vmatprep.subr.mxu0 %v6748
  %7386 = vmatpush1.msra.mxu0 %v6747
  %7387 = vmatprep.subr.mxu0 %v6767
  %7388 = vmatpush1.msra.mxu0 %v6766
  %7389 = vmatprep.subr.mxu0 %v6786
  %7390 = vmatpush1.msra.mxu0 %v6785
  %7391 = vmatprep.subr.mxu0 %v6805
  %7392 = vmatpush1.msra.mxu0 %v6804
  %7393 = vmatprep.subr.mxu0 %v6824
  %7394 = vmatpush1.msra.mxu0 %v6823
  %7395 = vmatprep.subr.mxu0 %v6843
  %7396 = vmatpush1.msra.mxu0 %v6842
  %7397 = vmatprep.subr.mxu0 %v6862
  %7398 = vmatpush1.msra.mxu0 %v6861
  %7399 = vmatprep.subr.mxu0 %v6881
  %7400 = vmatpush1.msra.mxu0 %v6880
  %7401 = vmatprep.subr.mxu0 %v6900
  %7402 = vmatpush1.msra.mxu0 %v6899
  %7403 = vmatprep.subr.mxu0 %v6919
  %7404 = vmatpush1.msra.mxu0 %v6918
  %7405 = vmatprep.subr.mxu0 %v6938
  %7406 = vmatpush1.msra.mxu0 %v6937
  %7407 = vmatprep.subr.mxu0 %v6957
  %7408 = vmatpush1.msra.mxu0 %v6956
  %7409 = vmatprep.subr.mxu0 %v6976
  %7410 = vmatpush1.msra.mxu0 %v6975
  %7411 = vmatprep.subr.mxu0 %v6995
  %7412 = vmatpush1.msra.mxu0 %v6994
  %7413 = vmatprep.subr.mxu0 %v7014
  %7414 = vmatpush1.msra.mxu0 %v7013
  %7415 = vmatprep.subr.mxu0 %v7033
  %7416 = vmatpush1.msra.mxu0 %v7032
  %7417 = vmatprep.subr.mxu0 %v7052
  %7418 = vmatpush1.msra.mxu0 %v7051
  %7419 = vmatprep.subr.mxu0 %v7071
  %7420 = vmatpush1.msra.mxu0 %v7070
  %7421 = vmatprep.subr.mxu0 %v7090
  %7422 = vmatpush1.msra.mxu0 %v7089
  %7423 = vmatprep.subr.mxu0 %v7109
  %7424 = vmatpush1.msra.mxu0 %v7108
  %7425 = vmatprep.subr.mxu0 %v7128
  %7426 = vmatpush1.msra.mxu0 %v7127
  %7427 = vmatprep.subr.mxu0 %v7147
  %7428 = vmatpush1.msra.mxu0 %v7146
  %7429 = vmatprep.subr.mxu0 %v7166
  %7430 = vmatpush1.msra.mxu0 %v7165
  %7431 = vmatprep.subr.mxu0 %v7185
  %7432 = vmatpush1.msra.mxu0 %v7184
  %7433 = vmatprep.subr.mxu0 %v7204
  %7434 = vmatpush1.msra.mxu0 %v7203
  %7435 = vmatprep.mubr.f32.mxu0 %v6591
  %7436 = vmatmul.mubr.f32.gmra.mrb[0].mxu0 %v6590
  %v7437 = vpop.f32.mrb[0].mxu0
  %v7438 = vadd.f32 %v7309, %v7437
  %v7439 = vpop.f32.mrb[0].mxu0
  %v7440 = vadd.f32 %v7309, %v7439
  %7441 = vmatprep.mubr.f32.mxu0 %v6594
  %7442 = vmatmul.mubr.f32.gmra.mrb[0].mxu0 %v6593
  %v7443 = vpop.f32.mrb[0].mxu0
  %v7444 = vadd.f32 %v7314, %v7443
  %v7445 = vpop.f32.mrb[0].mxu0
  %v7446 = vadd.f32 %v7314, %v7445
  %7447 = vmatprep.mubr.f32.mxu0 %v6597
  %7448 = vmatmul.mubr.f32.gmra.mrb[0].mxu0 %v6596
  %v7449 = vpop.f32.mrb[0].mxu0
  %v7450 = vadd.f32 %v7319, %v7449
  %v7451 = vpop.f32.mrb[0].mxu0
  %v7452 = vadd.f32 %v7319, %v7451
  %7453 = vmatprep.mubr.f32.mxu0 %v6600
  %7454 = vmatmul.mubr.f32.gmra.mrb[0].mxu0 %v6599
  %v7455 = vpop.f32.mrb[0].mxu0
  %v7456 = vadd.f32 %v7324, %v7455
  %v7457 = vpop.f32.mrb[0].mxu0
  %v7458 = vadd.f32 %v7324, %v7457
  %7459 = vmatprep.mubr.f32.mxu0 %v6603
  %7460 = vmatmul.mubr.f32.gmra.mrb[0].mxu0 %v6602
  %v7461 = vpop.f32.mrb[0].mxu0
  %v7462 = vadd.f32 %v7329, %v7461
  %v7463 = vpop.f32.mrb[0].mxu0
  %v7464 = vadd.f32 %v7329, %v7463
  %7465 = vmatprep.mubr.f32.mxu0 %v6606
  %7466 = vmatmul.mubr.f32.gmra.mrb[0].mxu0 %v6605
  %v7467 = vpop.f32.mrb[0].mxu0
  %v7468 = vadd.f32 %v7334, %v7467
  %v7469 = vpop.f32.mrb[0].mxu0
  %v7470 = vadd.f32 %v7334, %v7469
  %7471 = vmatprep.mubr.f32.mxu0 %v6609
  %7472 = vmatmul.mubr.f32.gmra.mrb[0].mxu0 %v6608
  %v7473 = vpop.f32.mrb[0].mxu0
  %v7474 = vadd.f32 %v7339, %v7473
  %v7475 = vpop.f32.mrb[0].mxu0
  %v7476 = vadd.f32 %v7339, %v7475
  %7477 = vmatprep.mubr.f32.mxu0 %v6612
  %7478 = vmatmul.mubr.f32.gmra.mrb[0].mxu0 %v6611
  %v7479 = vpop.f32.mrb[0].mxu0
  %v7480 = vadd.f32 %v7344, %v7479
  %v7481 = vpop.f32.mrb[0].mxu0
  %v7482 = vadd.f32 %v7344, %v7481
  %7483 = vdwg.mxu0
  %7484 = vmatprep.subr.mxu0 %v7223
  %7485 = vmatpush1.msra.mxu0 %v7222
  %7486 = vmatprep.subr.mxu0 %v7242
  %7487 = vmatpush1.msra.mxu0 %v7241
  %7488 = vmatprep.subr.mxu0 %v7261
  %7489 = vmatpush1.msra.mxu0 %v7260
  %7490 = vmatprep.subr.mxu0 %v7280
  %7491 = vmatpush1.msra.mxu0 %v7279
  %7492 = vmatprep.subr.mxu0 0.0
  %7493 = vmatpush1.msra.mxu0 0.0
  %7494 = vmatprep.subr.mxu0 0.0
  %7495 = vmatpush1.msra.mxu0 0.0
  %7496 = vmatprep.subr.mxu0 0.0
  %7497 = vmatpush1.msra.mxu0 0.0
  %7498 = vmatprep.subr.mxu0 0.0
  %7499 = vmatpush1.msra.mxu0 0.0
  %7500 = vmatprep.subr.mxu0 0.0
  %7501 = vmatpush1.msra.mxu0 0.0
  %7502 = vmatprep.subr.mxu0 0.0
  %7503 = vmatpush1.msra.mxu0 0.0
  %7504 = vmatprep.subr.mxu0 0.0
  %7505 = vmatpush1.msra.mxu0 0.0
  %7506 = vmatprep.subr.mxu0 0.0
  %7507 = vmatpush1.msra.mxu0 0.0
  %7508 = vmatprep.subr.mxu0 0.0
  %7509 = vmatpush1.msra.mxu0 0.0
  %7510 = vmatprep.subr.mxu0 0.0
  %7511 = vmatpush1.msra.mxu0 0.0
  %7512 = vmatprep.subr.mxu0 0.0
  %7513 = vmatpush1.msra.mxu0 0.0
  %7514 = vmatprep.subr.mxu0 0.0
  %7515 = vmatpush1.msra.mxu0 0.0
  %7516 = vmatprep.subr.mxu0 0.0
  %7517 = vmatpush1.msra.mxu0 0.0
  %7518 = vmatprep.subr.mxu0 0.0
  %7519 = vmatpush1.msra.mxu0 0.0
  %7520 = vmatprep.subr.mxu0 0.0
  %7521 = vmatpush1.msra.mxu0 0.0
  %7522 = vmatprep.subr.mxu0 0.0
  %7523 = vmatpush1.msra.mxu0 0.0
  %7524 = vmatprep.subr.mxu0 0.0
  %7525 = vmatpush1.msra.mxu0 0.0
  %7526 = vmatprep.subr.mxu0 0.0
  %7527 = vmatpush1.msra.mxu0 0.0
  %7528 = vmatprep.subr.mxu0 0.0
  %7529 = vmatpush1.msra.mxu0 0.0
  %7530 = vmatprep.subr.mxu0 0.0
  %7531 = vmatpush1.msra.mxu0 0.0
  %7532 = vmatprep.subr.mxu0 0.0
  %7533 = vmatpush1.msra.mxu0 0.0
  %7534 = vmatprep.subr.mxu0 0.0
  %7535 = vmatpush1.msra.mxu0 0.0
  %7536 = vmatprep.subr.mxu0 0.0
  %7537 = vmatpush1.msra.mxu0 0.0
  %7538 = vmatprep.subr.mxu0 0.0
  %7539 = vmatpush1.msra.mxu0 0.0
  %7540 = vmatprep.subr.mxu0 0.0
  %7541 = vmatpush1.msra.mxu0 0.0
  %7542 = vmatprep.subr.mxu0 0.0
  %7543 = vmatpush1.msra.mxu0 0.0
  %7544 = vmatprep.subr.mxu0 0.0
  %7545 = vmatpush1.msra.mxu0 0.0
  %7546 = vmatprep.subr.mxu0 0.0
  %7547 = vmatpush1.msra.mxu0 0.0
  %7548 = vmatprep.mubr.f32.mxu0 0.0
  %7549 = vmatmul.mubr.f32.gmra.mrb[0].mxu0 %v7348
  %v7550 = vpop.f32.mrb[0].mxu0
  %v7551 = vadd.f32 %v7438, %v7550
  %v7552 = vpop.f32.mrb[0].mxu0
  %v7553 = vadd.f32 %v7440, %v7552
  %7554 = vmatprep.mubr.f32.mxu0 0.0
  %7555 = vmatmul.mubr.f32.gmra.mrb[0].mxu0 %v7351
  %v7556 = vpop.f32.mrb[0].mxu0
  %v7557 = vadd.f32 %v7444, %v7556
  %v7558 = vpop.f32.mrb[0].mxu0
  %v7559 = vadd.f32 %v7446, %v7558
  %7560 = vmatprep.mubr.f32.mxu0 0.0
  %7561 = vmatmul.mubr.f32.gmra.mrb[0].mxu0 %v7354
  %v7562 = vpop.f32.mrb[0].mxu0
  %v7563 = vadd.f32 %v7450, %v7562
  %v7564 = vpop.f32.mrb[0].mxu0
  %v7565 = vadd.f32 %v7452, %v7564
  %7566 = vmatprep.mubr.f32.mxu0 0.0
  %7567 = vmatmul.mubr.f32.gmra.mrb[0].mxu0 %v7357
  %v7568 = vpop.f32.mrb[0].mxu0
  %v7569 = vadd.f32 %v7456, %v7568
  %v7570 = vpop.f32.mrb[0].mxu0
  %v7571 = vadd.f32 %v7458, %v7570
  %7572 = vmatprep.mubr.f32.mxu0 0.0
  %7573 = vmatmul.mubr.f32.gmra.mrb[0].mxu0 %v7360
  %v7574 = vpop.f32.mrb[0].mxu0
  %v7575 = vadd.f32 %v7462, %v7574
  %v7576 = vpop.f32.mrb[0].mxu0
  %v7577 = vadd.f32 %v7464, %v7576
  %7578 = vmatprep.mubr.f32.mxu0 0.0
  %7579 = vmatmul.mubr.f32.gmra.mrb[0].mxu0 %v7363
  %v7580 = vpop.f32.mrb[0].mxu0
  %v7581 = vadd.f32 %v7468, %v7580
  %v7582 = vpop.f32.mrb[0].mxu0
  %v7583 = vadd.f32 %v7470, %v7582
  %7584 = vmatprep.mubr.f32.mxu0 0.0
  %7585 = vmatmul.mubr.f32.gmra.mrb[0].mxu0 %v7366
  %v7586 = vpop.f32.mrb[0].mxu0
  %v7587 = vadd.f32 %v7474, %v7586
  %v7588 = vpop.f32.mrb[0].mxu0
  %v7589 = vadd.f32 %v7476, %v7588
  %7590 = vmatprep.mubr.f32.mxu0 0.0
  %7591 = vmatmul.mubr.f32.gmra.mrb[0].mxu0 %v7369
  %v7592 = vpop.f32.mrb[0].mxu0
  %v7593 = vadd.f32 %v7480, %v7592
  %v7594 = vpop.f32.mrb[0].mxu0
  %v7595 = vadd.f32 %v7482, %v7594
  %7596 = vdwg.mxu0
  %7597 = vmatprep.subr.mxu0 %v6617
  %7598 = vmatpush1.msra.mxu0 %v6616
  %7599 = vmatprep.subr.mxu0 %v6636
  %7600 = vmatpush1.msra.mxu0 %v6635
  %7601 = vmatprep.subr.mxu0 %v6655
  %7602 = vmatpush1.msra.mxu0 %v6654
  %7603 = vmatprep.subr.mxu0 %v6674
  %7604 = vmatpush1.msra.mxu0 %v6673
  %7605 = vmatprep.subr.mxu0 %v6693
  %7606 = vmatpush1.msra.mxu0 %v6692
  %7607 = vmatprep.subr.mxu0 %v6712
  %7608 = vmatpush1.msra.mxu0 %v6711
  %7609 = vmatprep.subr.mxu0 %v6731
  %7610 = vmatpush1.msra.mxu0 %v6730
  %7611 = vmatprep.subr.mxu0 %v6750
  %7612 = vmatpush1.msra.mxu0 %v6749
  %7613 = vmatprep.subr.mxu0 %v6769
  %7614 = vmatpush1.msra.mxu0 %v6768
  %7615 = vmatprep.subr.mxu0 %v6788
  %7616 = vmatpush1.msra.mxu0 %v6787
  %7617 = vmatprep.subr.mxu0 %v6807
  %7618 = vmatpush1.msra.mxu0 %v6806
  %7619 = vmatprep.subr.mxu0 %v6826
  %7620 = vmatpush1.msra.mxu0 %v6825
  %7621 = vmatprep.subr.mxu0 %v6845
  %7622 = vmatpush1.msra.mxu0 %v6844
  %7623 = vmatprep.subr.mxu0 %v6864
  %7624 = vmatpush1.msra.mxu0 %v6863
  %7625 = vmatprep.subr.mxu0 %v6883
  %7626 = vmatpush1.msra.mxu0 %v6882
  %7627 = vmatprep.subr.mxu0 %v6902
  %7628 = vmatpush1.msra.mxu0 %v6901
  %7629 = vmatprep.subr.mxu0 %v6921
  %7630 = vmatpush1.msra.mxu0 %v6920
  %7631 = vmatprep.subr.mxu0 %v6940
  %7632 = vmatpush1.msra.mxu0 %v6939
  %7633 = vmatprep.subr.mxu0 %v6959
  %7634 = vmatpush1.msra.mxu0 %v6958
  %7635 = vmatprep.subr.mxu0 %v6978
  %7636 = vmatpush1.msra.mxu0 %v6977
  %7637 = vmatprep.subr.mxu0 %v6997
  %7638 = vmatpush1.msra.mxu0 %v6996
  %7639 = vmatprep.subr.mxu0 %v7016
  %7640 = vmatpush1.msra.mxu0 %v7015
  %7641 = vmatprep.subr.mxu0 %v7035
  %7642 = vmatpush1.msra.mxu0 %v7034
  %7643 = vmatprep.subr.mxu0 %v7054
  %7644 = vmatpush1.msra.mxu0 %v7053
  %7645 = vmatprep.subr.mxu0 %v7073
  %7646 = vmatpush1.msra.mxu0 %v7072
  %7647 = vmatprep.subr.mxu0 %v7092
  %7648 = vmatpush1.msra.mxu0 %v7091
  %7649 = vmatprep.subr.mxu0 %v7111
  %7650 = vmatpush1.msra.mxu0 %v7110
  %7651 = vmatprep.subr.mxu0 %v7130
  %7652 = vmatpush1.msra.mxu0 %v7129
  %7653 = vmatprep.subr.mxu0 %v7149
  %7654 = vmatpush1.msra.mxu0 %v7148
  %7655 = vmatprep.subr.mxu0 %v7168
  %7656 = vmatpush1.msra.mxu0 %v7167
  %7657 = vmatprep.subr.mxu0 %v7187
  %7658 = vmatpush1.msra.mxu0 %v7186
  %7659 = vmatprep.subr.mxu0 %v7206
  %7660 = vmatpush1.msra.mxu0 %v7205
  %7661 = vmatprep.mubr.f32.mxu0 %v6591
  %7662 = vmatmul.mubr.f32.gmra.mrb[0].mxu0 %v6590
  %v7663 = vpop.f32.mrb[0].mxu0
  %v7664 = vadd.f32 %v7309, %v7663
  %v7665 = vpop.f32.mrb[0].mxu0
  %v7666 = vadd.f32 %v7309, %v7665
  %7667 = vmatprep.mubr.f32.mxu0 %v6594
  %7668 = vmatmul.mubr.f32.gmra.mrb[0].mxu0 %v6593
  %v7669 = vpop.f32.mrb[0].mxu0
  %v7670 = vadd.f32 %v7314, %v7669
  %v7671 = vpop.f32.mrb[0].mxu0
  %v7672 = vadd.f32 %v7314, %v7671
  %7673 = vmatprep.mubr.f32.mxu0 %v6597
  %7674 = vmatmul.mubr.f32.gmra.mrb[0].mxu0 %v6596
  %v7675 = vpop.f32.mrb[0].mxu0
  %v7676 = vadd.f32 %v7319, %v7675
  %v7677 = vpop.f32.mrb[0].mxu0
  %v7678 = vadd.f32 %v7319, %v7677
  %7679 = vmatprep.mubr.f32.mxu0 %v6600
  %7680 = vmatmul.mubr.f32.gmra.mrb[0].mxu0 %v6599
  %v7681 = vpop.f32.mrb[0].mxu0
  %v7682 = vadd.f32 %v7324, %v7681
  %v7683 = vpop.f32.mrb[0].mxu0
  %v7684 = vadd.f32 %v7324, %v7683
  %7685 = vmatprep.mubr.f32.mxu0 %v6603
  %7686 = vmatmul.mubr.f32.gmra.mrb[0].mxu0 %v6602
  %v7687 = vpop.f32.mrb[0].mxu0
  %v7688 = vadd.f32 %v7329, %v7687
  %v7689 = vpop.f32.mrb[0].mxu0
  %v7690 = vadd.f32 %v7329, %v7689
  %7691 = vmatprep.mubr.f32.mxu0 %v6606
  %7692 = vmatmul.mubr.f32.gmra.mrb[0].mxu0 %v6605
  %v7693 = vpop.f32.mrb[0].mxu0
  %v7694 = vadd.f32 %v7334, %v7693
  %v7695 = vpop.f32.mrb[0].mxu0
  %v7696 = vadd.f32 %v7334, %v7695
  %7697 = vmatprep.mubr.f32.mxu0 %v6609
  %7698 = vmatmul.mubr.f32.gmra.mrb[0].mxu0 %v6608
  %v7699 = vpop.f32.mrb[0].mxu0
  %v7700 = vadd.f32 %v7339, %v7699
  %v7701 = vpop.f32.mrb[0].mxu0
  %v7702 = vadd.f32 %v7339, %v7701
  %7703 = vmatprep.mubr.f32.mxu0 %v6612
  %7704 = vmatmul.mubr.f32.gmra.mrb[0].mxu0 %v6611
  %v7705 = vpop.f32.mrb[0].mxu0
  %v7706 = vadd.f32 %v7344, %v7705
  %v7707 = vpop.f32.mrb[0].mxu0
  %v7708 = vadd.f32 %v7344, %v7707
  %7709 = vdwg.mxu0
  %7710 = vmatprep.subr.mxu0 %v7225
  %7711 = vmatpush1.msra.mxu0 %v7224
  %7712 = vmatprep.subr.mxu0 %v7244
  %7713 = vmatpush1.msra.mxu0 %v7243
  %7714 = vmatprep.subr.mxu0 %v7263
  %7715 = vmatpush1.msra.mxu0 %v7262
  %7716 = vmatprep.subr.mxu0 %v7282
  %7717 = vmatpush1.msra.mxu0 %v7281
  %7718 = vmatprep.subr.mxu0 0.0
  %7719 = vmatpush1.msra.mxu0 0.0
  %7720 = vmatprep.subr.mxu0 0.0
  %7721 = vmatpush1.msra.mxu0 0.0
  %7722 = vmatprep.subr.mxu0 0.0
  %7723 = vmatpush1.msra.mxu0 0.0
  %7724 = vmatprep.subr.mxu0 0.0
  %7725 = vmatpush1.msra.mxu0 0.0
  %7726 = vmatprep.subr.mxu0 0.0
  %7727 = vmatpush1.msra.mxu0 0.0
  %7728 = vmatprep.subr.mxu0 0.0
  %7729 = vmatpush1.msra.mxu0 0.0
  %7730 = vmatprep.subr.mxu0 0.0
  %7731 = vmatpush1.msra.mxu0 0.0
  %7732 = vmatprep.subr.mxu0 0.0
  %7733 = vmatpush1.msra.mxu0 0.0
  %7734 = vmatprep.subr.mxu0 0.0
  %7735 = vmatpush1.msra.mxu0 0.0
  %7736 = vmatprep.subr.mxu0 0.0
  %7737 = vmatpush1.msra.mxu0 0.0
  %7738 = vmatprep.subr.mxu0 0.0
  %7739 = vmatpush1.msra.mxu0 0.0
  %7740 = vmatprep.subr.mxu0 0.0
  %7741 = vmatpush1.msra.mxu0 0.0
  %7742 = vmatprep.subr.mxu0 0.0
  %7743 = vmatpush1.msra.mxu0 0.0
  %7744 = vmatprep.subr.mxu0 0.0
  %7745 = vmatpush1.msra.mxu0 0.0
  %7746 = vmatprep.subr.mxu0 0.0
  %7747 = vmatpush1.msra.mxu0 0.0
  %7748 = vmatprep.subr.mxu0 0.0
  %7749 = vmatpush1.msra.mxu0 0.0
  %7750 = vmatprep.subr.mxu0 0.0
  %7751 = vmatpush1.msra.mxu0 0.0
  %7752 = vmatprep.subr.mxu0 0.0
  %7753 = vmatpush1.msra.mxu0 0.0
  %7754 = vmatprep.subr.mxu0 0.0
  %7755 = vmatpush1.msra.mxu0 0.0
  %7756 = vmatprep.subr.mxu0 0.0
  %7757 = vmatpush1.msra.mxu0 0.0
  %7758 = vmatprep.subr.mxu0 0.0
  %7759 = vmatpush1.msra.mxu0 0.0
  %7760 = vmatprep.subr.mxu0 0.0
  %7761 = vmatpush1.msra.mxu0 0.0
  %7762 = vmatprep.subr.mxu0 0.0
  %7763 = vmatpush1.msra.mxu0 0.0
  %7764 = vmatprep.subr.mxu0 0.0
  %7765 = vmatpush1.msra.mxu0 0.0
  %7766 = vmatprep.subr.mxu0 0.0
  %7767 = vmatpush1.msra.mxu0 0.0
  %7768 = vmatprep.subr.mxu0 0.0
  %7769 = vmatpush1.msra.mxu0 0.0
  %7770 = vmatprep.subr.mxu0 0.0
  %7771 = vmatpush1.msra.mxu0 0.0
  %7772 = vmatprep.subr.mxu0 0.0
  %7773 = vmatpush1.msra.mxu0 0.0
  %7774 = vmatprep.mubr.f32.mxu0 0.0
  %7775 = vmatmul.mubr.f32.gmra.mrb[0].mxu0 %v7348
  %v7776 = vpop.f32.mrb[0].mxu0
  %v7777 = vadd.f32 %v7664, %v7776
  %v7778 = vpop.f32.mrb[0].mxu0
  %v7779 = vadd.f32 %v7666, %v7778
  %7780 = vmatprep.mubr.f32.mxu0 0.0
  %7781 = vmatmul.mubr.f32.gmra.mrb[0].mxu0 %v7351
  %v7782 = vpop.f32.mrb[0].mxu0
  %v7783 = vadd.f32 %v7670, %v7782
  %v7784 = vpop.f32.mrb[0].mxu0
  %v7785 = vadd.f32 %v7672, %v7784
  %7786 = vmatprep.mubr.f32.mxu0 0.0
  %7787 = vmatmul.mubr.f32.gmra.mrb[0].mxu0 %v7354
  %v7788 = vpop.f32.mrb[0].mxu0
  %v7789 = vadd.f32 %v7676, %v7788
  %v7790 = vpop.f32.mrb[0].mxu0
  %v7791 = vadd.f32 %v7678, %v7790
  %7792 = vmatprep.mubr.f32.mxu0 0.0
  %7793 = vmatmul.mubr.f32.gmra.mrb[0].mxu0 %v7357
  %v7794 = vpop.f32.mrb[0].mxu0
  %v7795 = vadd.f32 %v7682, %v7794
  %v7796 = vpop.f32.mrb[0].mxu0
  %v7797 = vadd.f32 %v7684, %v7796
  %7798 = vmatprep.mubr.f32.mxu0 0.0
  %7799 = vmatmul.mubr.f32.gmra.mrb[0].mxu0 %v7360
  %v7800 = vpop.f32.mrb[0].mxu0
  %v7801 = vadd.f32 %v7688, %v7800
  %v7802 = vpop.f32.mrb[0].mxu0
  %v7803 = vadd.f32 %v7690, %v7802
  %7804 = vmatprep.mubr.f32.mxu0 0.0
  %7805 = vmatmul.mubr.f32.gmra.mrb[0].mxu0 %v7363
  %v7806 = vpop.f32.mrb[0].mxu0
  %v7807 = vadd.f32 %v7694, %v7806
  %v7808 = vpop.f32.mrb[0].mxu0
  %v7809 = vadd.f32 %v7696, %v7808
  %7810 = vmatprep.mubr.f32.mxu0 0.0
  %7811 = vmatmul.mubr.f32.gmra.mrb[0].mxu0 %v7366
  %v7812 = vpop.f32.mrb[0].mxu0
  %v7813 = vadd.f32 %v7700, %v7812
  %v7814 = vpop.f32.mrb[0].mxu0
  %v7815 = vadd.f32 %v7702, %v7814
  %7816 = vmatprep.mubr.f32.mxu0 0.0
  %7817 = vmatmul.mubr.f32.gmra.mrb[0].mxu0 %v7369
  %v7818 = vpop.f32.mrb[0].mxu0
  %v7819 = vadd.f32 %v7706, %v7818
  %v7820 = vpop.f32.mrb[0].mxu0
  %v7821 = vadd.f32 %v7708, %v7820
  %7822 = vdwg.mxu0
  %7823 = vmatprep.subr.mxu0 %v6619
  %7824 = vmatpush1.msra.mxu0 %v6618
  %7825 = vmatprep.subr.mxu0 %v6638
  %7826 = vmatpush1.msra.mxu0 %v6637
  %7827 = vmatprep.subr.mxu0 %v6657
  %7828 = vmatpush1.msra.mxu0 %v6656
  %7829 = vmatprep.subr.mxu0 %v6676
  %7830 = vmatpush1.msra.mxu0 %v6675
  %7831 = vmatprep.subr.mxu0 %v6695
  %7832 = vmatpush1.msra.mxu0 %v6694
  %7833 = vmatprep.subr.mxu0 %v6714
  %7834 = vmatpush1.msra.mxu0 %v6713
  %7835 = vmatprep.subr.mxu0 %v6733
  %7836 = vmatpush1.msra.mxu0 %v6732
  %7837 = vmatprep.subr.mxu0 %v6752
  %7838 = vmatpush1.msra.mxu0 %v6751
  %7839 = vmatprep.subr.mxu0 %v6771
  %7840 = vmatpush1.msra.mxu0 %v6770
  %7841 = vmatprep.subr.mxu0 %v6790
  %7842 = vmatpush1.msra.mxu0 %v6789
  %7843 = vmatprep.subr.mxu0 %v6809
  %7844 = vmatpush1.msra.mxu0 %v6808
  %7845 = vmatprep.subr.mxu0 %v6828
  %7846 = vmatpush1.msra.mxu0 %v6827
  %7847 = vmatprep.subr.mxu0 %v6847
  %7848 = vmatpush1.msra.mxu0 %v6846
  %7849 = vmatprep.subr.mxu0 %v6866
  %7850 = vmatpush1.msra.mxu0 %v6865
  %7851 = vmatprep.subr.mxu0 %v6885
  %7852 = vmatpush1.msra.mxu0 %v6884
  %7853 = vmatprep.subr.mxu0 %v6904
  %7854 = vmatpush1.msra.mxu0 %v6903
  %7855 = vmatprep.subr.mxu0 %v6923
  %7856 = vmatpush1.msra.mxu0 %v6922
  %7857 = vmatprep.subr.mxu0 %v6942
  %7858 = vmatpush1.msra.mxu0 %v6941
  %7859 = vmatprep.subr.mxu0 %v6961
  %7860 = vmatpush1.msra.mxu0 %v6960
  %7861 = vmatprep.subr.mxu0 %v6980
  %7862 = vmatpush1.msra.mxu0 %v6979
  %7863 = vmatprep.subr.mxu0 %v6999
  %7864 = vmatpush1.msra.mxu0 %v6998
  %7865 = vmatprep.subr.mxu0 %v7018
  %7866 = vmatpush1.msra.mxu0 %v7017
  %7867 = vmatprep.subr.mxu0 %v7037
  %7868 = vmatpush1.msra.mxu0 %v7036
  %7869 = vmatprep.subr.mxu0 %v7056
  %7870 = vmatpush1.msra.mxu0 %v7055
  %7871 = vmatprep.subr.mxu0 %v7075
  %7872 = vmatpush1.msra.mxu0 %v7074
  %7873 = vmatprep.subr.mxu0 %v7094
  %7874 = vmatpush1.msra.mxu0 %v7093
  %7875 = vmatprep.subr.mxu0 %v7113
  %7876 = vmatpush1.msra.mxu0 %v7112
  %7877 = vmatprep.subr.mxu0 %v7132
  %7878 = vmatpush1.msra.mxu0 %v7131
  %7879 = vmatprep.subr.mxu0 %v7151
  %7880 = vmatpush1.msra.mxu0 %v7150
  %7881 = vmatprep.subr.mxu0 %v7170
  %7882 = vmatpush1.msra.mxu0 %v7169
  %7883 = vmatprep.subr.mxu0 %v7189
  %7884 = vmatpush1.msra.mxu0 %v7188
  %7885 = vmatprep.subr.mxu0 %v7208
  %7886 = vmatpush1.msra.mxu0 %v7207
  %7887 = vmatprep.mubr.f32.mxu0 %v6591
  %7888 = vmatmul.mubr.f32.gmra.mrb[0].mxu0 %v6590
  %v7889 = vpop.f32.mrb[0].mxu0
  %v7890 = vpop.f32.mrb[0].mxu0
  %v7891 = vadd.f32 %v7309, %v7890
  %7892 = vmatprep.mubr.f32.mxu0 %v6594
  %7893 = vmatmul.mubr.f32.gmra.mrb[0].mxu0 %v6593
  %v7894 = vpop.f32.mrb[0].mxu0
  %v7895 = vpop.f32.mrb[0].mxu0
  %v7896 = vadd.f32 %v7314, %v7895
  %7897 = vmatprep.mubr.f32.mxu0 %v6597
  %7898 = vmatmul.mubr.f32.gmra.mrb[0].mxu0 %v6596
  %v7899 = vpop.f32.mrb[0].mxu0
  %v7900 = vpop.f32.mrb[0].mxu0
  %v7901 = vadd.f32 %v7319, %v7900
  %7902 = vmatprep.mubr.f32.mxu0 %v6600
  %7903 = vmatmul.mubr.f32.gmra.mrb[0].mxu0 %v6599
  %v7904 = vpop.f32.mrb[0].mxu0
  %v7905 = vpop.f32.mrb[0].mxu0
  %v7906 = vadd.f32 %v7324, %v7905
  %7907 = vmatprep.mubr.f32.mxu0 %v6603
  %7908 = vmatmul.mubr.f32.gmra.mrb[0].mxu0 %v6602
  %v7909 = vpop.f32.mrb[0].mxu0
  %v7910 = vpop.f32.mrb[0].mxu0
  %v7911 = vadd.f32 %v7329, %v7910
  %7912 = vmatprep.mubr.f32.mxu0 %v6606
  %7913 = vmatmul.mubr.f32.gmra.mrb[0].mxu0 %v6605
  %v7914 = vpop.f32.mrb[0].mxu0
  %v7915 = vpop.f32.mrb[0].mxu0
  %v7916 = vadd.f32 %v7334, %v7915
  %7917 = vmatprep.mubr.f32.mxu0 %v6609
  %7918 = vmatmul.mubr.f32.gmra.mrb[0].mxu0 %v6608
  %v7919 = vpop.f32.mrb[0].mxu0
  %v7920 = vpop.f32.mrb[0].mxu0
  %v7921 = vadd.f32 %v7339, %v7920
  %7922 = vmatprep.mubr.f32.mxu0 %v6612
  %7923 = vmatmul.mubr.f32.gmra.mrb[0].mxu0 %v6611
  %v7924 = vpop.f32.mrb[0].mxu0
  %v7925 = vpop.f32.mrb[0].mxu0
  %v7926 = vadd.f32 %v7344, %v7925
  %7927 = vdwg.mxu0
  %7928 = vmatprep.subr.mxu0 %v7227
  %7929 = vmatpush1.msra.mxu0 %v7226
  %7930 = vmatprep.subr.mxu0 %v7246
  %7931 = vmatpush1.msra.mxu0 %v7245
  %7932 = vmatprep.subr.mxu0 %v7265
  %7933 = vmatpush1.msra.mxu0 %v7264
  %7934 = vmatprep.subr.mxu0 %v7284
  %7935 = vmatpush1.msra.mxu0 %v7283
  %7936 = vmatprep.subr.mxu0 0.0
  %7937 = vmatpush1.msra.mxu0 0.0
  %7938 = vmatprep.subr.mxu0 0.0
  %7939 = vmatpush1.msra.mxu0 0.0
  %7940 = vmatprep.subr.mxu0 0.0
  %7941 = vmatpush1.msra.mxu0 0.0
  %7942 = vmatprep.subr.mxu0 0.0
  %7943 = vmatpush1.msra.mxu0 0.0
  %7944 = vmatprep.subr.mxu0 0.0
  %7945 = vmatpush1.msra.mxu0 0.0
  %7946 = vmatprep.subr.mxu0 0.0
  %7947 = vmatpush1.msra.mxu0 0.0
  %7948 = vmatprep.subr.mxu0 0.0
  %7949 = vmatpush1.msra.mxu0 0.0
  %7950 = vmatprep.subr.mxu0 0.0
  %7951 = vmatpush1.msra.mxu0 0.0
  %7952 = vmatprep.subr.mxu0 0.0
  %7953 = vmatpush1.msra.mxu0 0.0
  %7954 = vmatprep.subr.mxu0 0.0
  %7955 = vmatpush1.msra.mxu0 0.0
  %7956 = vmatprep.subr.mxu0 0.0
  %7957 = vmatpush1.msra.mxu0 0.0
  %7958 = vmatprep.subr.mxu0 0.0
  %7959 = vmatpush1.msra.mxu0 0.0
  %7960 = vmatprep.subr.mxu0 0.0
  %7961 = vmatpush1.msra.mxu0 0.0
  %7962 = vmatprep.subr.mxu0 0.0
  %7963 = vmatpush1.msra.mxu0 0.0
  %7964 = vmatprep.subr.mxu0 0.0
  %7965 = vmatpush1.msra.mxu0 0.0
  %7966 = vmatprep.subr.mxu0 0.0
  %7967 = vmatpush1.msra.mxu0 0.0
  %7968 = vmatprep.subr.mxu0 0.0
  %7969 = vmatpush1.msra.mxu0 0.0
  %7970 = vmatprep.subr.mxu0 0.0
  %7971 = vmatpush1.msra.mxu0 0.0
  %7972 = vmatprep.subr.mxu0 0.0
  %7973 = vmatpush1.msra.mxu0 0.0
  %7974 = vmatprep.subr.mxu0 0.0
  %7975 = vmatpush1.msra.mxu0 0.0
  %7976 = vmatprep.subr.mxu0 0.0
  %7977 = vmatpush1.msra.mxu0 0.0
  %7978 = vmatprep.subr.mxu0 0.0
  %7979 = vmatpush1.msra.mxu0 0.0
  %7980 = vmatprep.subr.mxu0 0.0
  %7981 = vmatpush1.msra.mxu0 0.0
  %7982 = vmatprep.subr.mxu0 0.0
  %7983 = vmatpush1.msra.mxu0 0.0
  %7984 = vmatprep.subr.mxu0 0.0
  %7985 = vmatpush1.msra.mxu0 0.0
  %7986 = vmatprep.subr.mxu0 0.0
  %7987 = vmatpush1.msra.mxu0 0.0
  %7988 = vmatprep.subr.mxu0 0.0
  %7989 = vmatpush1.msra.mxu0 0.0
  %7990 = vmatprep.subr.mxu0 0.0
  %7991 = vmatpush1.msra.mxu0 0.0
  %7992 = vmatprep.mubr.f32.mxu0 0.0
  %7993 = vmatmul.mubr.f32.gmra.mrb[0].mxu0 %v7348
  %v7994 = vpop.f32.mrb[0].mxu0
  %v7995 = vpop.f32.mrb[0].mxu0
  %v7996 = vadd.f32 %v7891, %v7995
  %7997 = vmatprep.mubr.f32.mxu0 0.0
  %7998 = vmatmul.mubr.f32.gmra.mrb[0].mxu0 %v7351
  %v7999 = vpop.f32.mrb[0].mxu0
  %v8000 = vpop.f32.mrb[0].mxu0
  %v8001 = vadd.f32 %v7896, %v8000
  %8002 = vmatprep.mubr.f32.mxu0 0.0
  %8003 = vmatmul.mubr.f32.gmra.mrb[0].mxu0 %v7354
  %v8004 = vpop.f32.mrb[0].mxu0
  %v8005 = vpop.f32.mrb[0].mxu0
  %v8006 = vadd.f32 %v7901, %v8005
  %8007 = vmatprep.mubr.f32.mxu0 0.0
  %8008 = vmatmul.mubr.f32.gmra.mrb[0].mxu0 %v7357
  %v8009 = vpop.f32.mrb[0].mxu0
  %v8010 = vpop.f32.mrb[0].mxu0
  %v8011 = vadd.f32 %v7906, %v8010
  %8012 = vmatprep.mubr.f32.mxu0 0.0
  %8013 = vmatmul.mubr.f32.gmra.mrb[0].mxu0 %v7360
  %v8014 = vpop.f32.mrb[0].mxu0
  %v8015 = vpop.f32.mrb[0].mxu0
  %v8016 = vadd.f32 %v7911, %v8015
  %8017 = vmatprep.mubr.f32.mxu0 0.0
  %8018 = vmatmul.mubr.f32.gmra.mrb[0].mxu0 %v7363
  %v8019 = vpop.f32.mrb[0].mxu0
  %v8020 = vpop.f32.mrb[0].mxu0
  %v8021 = vadd.f32 %v7916, %v8020
  %8022 = vmatprep.mubr.f32.mxu0 0.0
  %8023 = vmatmul.mubr.f32.gmra.mrb[0].mxu0 %v7366
  %v8024 = vpop.f32.mrb[0].mxu0
  %v8025 = vpop.f32.mrb[0].mxu0
  %v8026 = vadd.f32 %v7921, %v8025
  %8027 = vmatprep.mubr.f32.mxu0 0.0
  %8028 = vmatmul.mubr.f32.gmra.mrb[0].mxu0 %v7369
  %v8029 = vpop.f32.mrb[0].mxu0
  %v8030 = vpop.f32.mrb[0].mxu0
  %v8031 = vadd.f32 %v7926, %v8030
  %8032 = vdwg.mxu0
  %8033 = vmatprep.subr.mxu0 %v6621
  %8034 = vmatpush1.msra.mxu0 %v6620
  %8035 = vmatprep.subr.mxu0 %v6640
  %8036 = vmatpush1.msra.mxu0 %v6639
  %8037 = vmatprep.subr.mxu0 %v6659
  %8038 = vmatpush1.msra.mxu0 %v6658
  %8039 = vmatprep.subr.mxu0 %v6678
  %8040 = vmatpush1.msra.mxu0 %v6677
  %8041 = vmatprep.subr.mxu0 %v6697
  %8042 = vmatpush1.msra.mxu0 %v6696
  %8043 = vmatprep.subr.mxu0 %v6716
  %8044 = vmatpush1.msra.mxu0 %v6715
  %8045 = vmatprep.subr.mxu0 %v6735
  %8046 = vmatpush1.msra.mxu0 %v6734
  %8047 = vmatprep.subr.mxu0 %v6754
  %8048 = vmatpush1.msra.mxu0 %v6753
  %8049 = vmatprep.subr.mxu0 %v6773
  %8050 = vmatpush1.msra.mxu0 %v6772
  %8051 = vmatprep.subr.mxu0 %v6792
  %8052 = vmatpush1.msra.mxu0 %v6791
  %8053 = vmatprep.subr.mxu0 %v6811
  %8054 = vmatpush1.msra.mxu0 %v6810
  %8055 = vmatprep.subr.mxu0 %v6830
  %8056 = vmatpush1.msra.mxu0 %v6829
  %8057 = vmatprep.subr.mxu0 %v6849
  %8058 = vmatpush1.msra.mxu0 %v6848
  %8059 = vmatprep.subr.mxu0 %v6868
  %8060 = vmatpush1.msra.mxu0 %v6867
  %8061 = vmatprep.subr.mxu0 %v6887
  %8062 = vmatpush1.msra.mxu0 %v6886
  %8063 = vmatprep.subr.mxu0 %v6906
  %8064 = vmatpush1.msra.mxu0 %v6905
  %8065 = vmatprep.subr.mxu0 %v6925
  %8066 = vmatpush1.msra.mxu0 %v6924
  %8067 = vmatprep.subr.mxu0 %v6944
  %8068 = vmatpush1.msra.mxu0 %v6943
  %8069 = vmatprep.subr.mxu0 %v6963
  %8070 = vmatpush1.msra.mxu0 %v6962
  %8071 = vmatprep.subr.mxu0 %v6982
  %8072 = vmatpush1.msra.mxu0 %v6981
  %8073 = vmatprep.subr.mxu0 %v7001
  %8074 = vmatpush1.msra.mxu0 %v7000
  %8075 = vmatprep.subr.mxu0 %v7020
  %8076 = vmatpush1.msra.mxu0 %v7019
  %8077 = vmatprep.subr.mxu0 %v7039
  %8078 = vmatpush1.msra.mxu0 %v7038
  %8079 = vmatprep.subr.mxu0 %v7058
  %8080 = vmatpush1.msra.mxu0 %v7057
  %8081 = vmatprep.subr.mxu0 %v7077
  %8082 = vmatpush1.msra.mxu0 %v7076
  %8083 = vmatprep.subr.mxu0 %v7096
  %8084 = vmatpush1.msra.mxu0 %v7095
  %8085 = vmatprep.subr.mxu0 %v7115
  %8086 = vmatpush1.msra.mxu0 %v7114
  %8087 = vmatprep.subr.mxu0 %v7134
  %8088 = vmatpush1.msra.mxu0 %v7133
  %8089 = vmatprep.subr.mxu0 %v7153
  %8090 = vmatpush1.msra.mxu0 %v7152
  %8091 = vmatprep.subr.mxu0 %v7172
  %8092 = vmatpush1.msra.mxu0 %v7171
  %8093 = vmatprep.subr.mxu0 %v7191
  %8094 = vmatpush1.msra.mxu0 %v7190
  %8095 = vmatprep.subr.mxu0 %v7210
  %8096 = vmatpush1.msra.mxu0 %v7209
  %8097 = vmatprep.mubr.f32.mxu0 %v6591
  %8098 = vmatmul.mubr.f32.gmra.mrb[0].mxu0 %v6590
  %v8099 = vpop.f32.mrb[0].mxu0
  %v8100 = vadd.f32 %v7309, %v8099
  %v8101 = vpop.f32.mrb[0].mxu0
  %v8102 = vadd.f32 %v7309, %v8101
  %8103 = vmatprep.mubr.f32.mxu0 %v6594
  %8104 = vmatmul.mubr.f32.gmra.mrb[0].mxu0 %v6593
  %v8105 = vpop.f32.mrb[0].mxu0
  %v8106 = vadd.f32 %v7314, %v8105
  %v8107 = vpop.f32.mrb[0].mxu0
  %v8108 = vadd.f32 %v7314, %v8107
  %8109 = vmatprep.mubr.f32.mxu0 %v6597
  %8110 = vmatmul.mubr.f32.gmra.mrb[0].mxu0 %v6596
  %v8111 = vpop.f32.mrb[0].mxu0
  %v8112 = vadd.f32 %v7319, %v8111
  %v8113 = vpop.f32.mrb[0].mxu0
  %v8114 = vadd.f32 %v7319, %v8113
  %8115 = vmatprep.mubr.f32.mxu0 %v6600
  %8116 = vmatmul.mubr.f32.gmra.mrb[0].mxu0 %v6599
  %v8117 = vpop.f32.mrb[0].mxu0
  %v8118 = vadd.f32 %v7324, %v8117
  %v8119 = vpop.f32.mrb[0].mxu0
  %v8120 = vadd.f32 %v7324, %v8119
  %8121 = vmatprep.mubr.f32.mxu0 %v6603
  %8122 = vmatmul.mubr.f32.gmra.mrb[0].mxu0 %v6602
  %v8123 = vpop.f32.mrb[0].mxu0
  %v8124 = vadd.f32 %v7329, %v8123
  %v8125 = vpop.f32.mrb[0].mxu0
  %v8126 = vadd.f32 %v7329, %v8125
  %8127 = vmatprep.mubr.f32.mxu0 %v6606
  %8128 = vmatmul.mubr.f32.gmra.mrb[0].mxu0 %v6605
  %v8129 = vpop.f32.mrb[0].mxu0
  %v8130 = vadd.f32 %v7334, %v8129
  %v8131 = vpop.f32.mrb[0].mxu0
  %v8132 = vadd.f32 %v7334, %v8131
  %8133 = vmatprep.mubr.f32.mxu0 %v6609
  %8134 = vmatmul.mubr.f32.gmra.mrb[0].mxu0 %v6608
  %v8135 = vpop.f32.mrb[0].mxu0
  %v8136 = vadd.f32 %v7339, %v8135
  %v8137 = vpop.f32.mrb[0].mxu0
  %v8138 = vadd.f32 %v7339, %v8137
  %8139 = vmatprep.mubr.f32.mxu0 %v6612
  %8140 = vmatmul.mubr.f32.gmra.mrb[0].mxu0 %v6611
  %v8141 = vpop.f32.mrb[0].mxu0
  %v8142 = vadd.f32 %v7344, %v8141
  %v8143 = vpop.f32.mrb[0].mxu0
  %v8144 = vadd.f32 %v7344, %v8143
  %8145 = vdwg.mxu0
  %8146 = vmatprep.subr.mxu0 %v7229
  %8147 = vmatpush1.msra.mxu0 %v7228
  %8148 = vmatprep.subr.mxu0 %v7248
  %8149 = vmatpush1.msra.mxu0 %v7247
  %8150 = vmatprep.subr.mxu0 %v7267
  %8151 = vmatpush1.msra.mxu0 %v7266
  %8152 = vmatprep.subr.mxu0 %v7286
  %8153 = vmatpush1.msra.mxu0 %v7285
  %8154 = vmatprep.subr.mxu0 0.0
  %8155 = vmatpush1.msra.mxu0 0.0
  %8156 = vmatprep.subr.mxu0 0.0
  %8157 = vmatpush1.msra.mxu0 0.0
  %8158 = vmatprep.subr.mxu0 0.0
  %8159 = vmatpush1.msra.mxu0 0.0
  %8160 = vmatprep.subr.mxu0 0.0
  %8161 = vmatpush1.msra.mxu0 0.0
  %8162 = vmatprep.subr.mxu0 0.0
  %8163 = vmatpush1.msra.mxu0 0.0
  %8164 = vmatprep.subr.mxu0 0.0
  %8165 = vmatpush1.msra.mxu0 0.0
  %8166 = vmatprep.subr.mxu0 0.0
  %8167 = vmatpush1.msra.mxu0 0.0
  %8168 = vmatprep.subr.mxu0 0.0
  %8169 = vmatpush1.msra.mxu0 0.0
  %8170 = vmatprep.subr.mxu0 0.0
  %8171 = vmatpush1.msra.mxu0 0.0
  %8172 = vmatprep.subr.mxu0 0.0
  %8173 = vmatpush1.msra.mxu0 0.0
  %8174 = vmatprep.subr.mxu0 0.0
  %8175 = vmatpush1.msra.mxu0 0.0
  %8176 = vmatprep.subr.mxu0 0.0
  %8177 = vmatpush1.msra.mxu0 0.0
  %8178 = vmatprep.subr.mxu0 0.0
  %8179 = vmatpush1.msra.mxu0 0.0
  %8180 = vmatprep.subr.mxu0 0.0
  %8181 = vmatpush1.msra.mxu0 0.0
  %8182 = vmatprep.subr.mxu0 0.0
  %8183 = vmatpush1.msra.mxu0 0.0
  %8184 = vmatprep.subr.mxu0 0.0
  %8185 = vmatpush1.msra.mxu0 0.0
  %8186 = vmatprep.subr.mxu0 0.0
  %8187 = vmatpush1.msra.mxu0 0.0
  %8188 = vmatprep.subr.mxu0 0.0
  %8189 = vmatpush1.msra.mxu0 0.0
  %8190 = vmatprep.subr.mxu0 0.0
  %8191 = vmatpush1.msra.mxu0 0.0
  %8192 = vmatprep.subr.mxu0 0.0
  %8193 = vmatpush1.msra.mxu0 0.0
  %8194 = vmatprep.subr.mxu0 0.0
  %8195 = vmatpush1.msra.mxu0 0.0
  %8196 = vmatprep.subr.mxu0 0.0
  %8197 = vmatpush1.msra.mxu0 0.0
  %8198 = vmatprep.subr.mxu0 0.0
  %8199 = vmatpush1.msra.mxu0 0.0
  %8200 = vmatprep.subr.mxu0 0.0
  %8201 = vmatpush1.msra.mxu0 0.0
  %8202 = vmatprep.subr.mxu0 0.0
  %8203 = vmatpush1.msra.mxu0 0.0
  %8204 = vmatprep.subr.mxu0 0.0
  %8205 = vmatpush1.msra.mxu0 0.0
  %8206 = vmatprep.subr.mxu0 0.0
  %8207 = vmatpush1.msra.mxu0 0.0
  %8208 = vmatprep.subr.mxu0 0.0
  %8209 = vmatpush1.msra.mxu0 0.0
  %8210 = vmatprep.mubr.f32.mxu0 0.0
  %8211 = vmatmul.mubr.f32.gmra.mrb[0].mxu0 %v7348
  %v8212 = vpop.f32.mrb[0].mxu0
  %v8213 = vadd.f32 %v8100, %v8212
  %v8214 = vpop.f32.mrb[0].mxu0
  %v8215 = vadd.f32 %v8102, %v8214
  %8216 = vmatprep.mubr.f32.mxu0 0.0
  %8217 = vmatmul.mubr.f32.gmra.mrb[0].mxu0 %v7351
  %v8218 = vpop.f32.mrb[0].mxu0
  %v8219 = vadd.f32 %v8106, %v8218
  %v8220 = vpop.f32.mrb[0].mxu0
  %v8221 = vadd.f32 %v8108, %v8220
  %8222 = vmatprep.mubr.f32.mxu0 0.0
  %8223 = vmatmul.mubr.f32.gmra.mrb[0].mxu0 %v7354
  %v8224 = vpop.f32.mrb[0].mxu0
  %v8225 = vadd.f32 %v8112, %v8224
  %v8226 = vpop.f32.mrb[0].mxu0
  %v8227 = vadd.f32 %v8114, %v8226
  %8228 = vmatprep.mubr.f32.mxu0 0.0
  %8229 = vmatmul.mubr.f32.gmra.mrb[0].mxu0 %v7357
  %v8230 = vpop.f32.mrb[0].mxu0
  %v8231 = vadd.f32 %v8118, %v8230
  %v8232 = vpop.f32.mrb[0].mxu0
  %v8233 = vadd.f32 %v8120, %v8232
  %8234 = vmatprep.mubr.f32.mxu0 0.0
  %8235 = vmatmul.mubr.f32.gmra.mrb[0].mxu0 %v7360
  %v8236 = vpop.f32.mrb[0].mxu0
  %v8237 = vadd.f32 %v8124, %v8236
  %v8238 = vpop.f32.mrb[0].mxu0
  %v8239 = vadd.f32 %v8126, %v8238
  %8240 = vmatprep.mubr.f32.mxu0 0.0
  %8241 = vmatmul.mubr.f32.gmra.mrb[0].mxu0 %v7363
  %v8242 = vpop.f32.mrb[0].mxu0
  %v8243 = vadd.f32 %v8130, %v8242
  %v8244 = vpop.f32.mrb[0].mxu0
  %v8245 = vadd.f32 %v8132, %v8244
  %8246 = vmatprep.mubr.f32.mxu0 0.0
  %8247 = vmatmul.mubr.f32.gmra.mrb[0].mxu0 %v7366
  %v8248 = vpop.f32.mrb[0].mxu0
  %v8249 = vadd.f32 %v8136, %v8248
  %v8250 = vpop.f32.mrb[0].mxu0
  %v8251 = vadd.f32 %v8138, %v8250
  %8252 = vmatprep.mubr.f32.mxu0 0.0
  %8253 = vmatmul.mubr.f32.gmra.mrb[0].mxu0 %v7369
  %v8254 = vpop.f32.mrb[0].mxu0
  %v8255 = vadd.f32 %v8142, %v8254
  %v8256 = vpop.f32.mrb[0].mxu0
  %v8257 = vadd.f32 %v8144, %v8256
  %8258 = vdwg.mxu0
  %8259 = vmatprep.subr.mxu0 %v6623
  %8260 = vmatpush1.msra.mxu0 %v6622
  %8261 = vmatprep.subr.mxu0 %v6642
  %8262 = vmatpush1.msra.mxu0 %v6641
  %8263 = vmatprep.subr.mxu0 %v6661
  %8264 = vmatpush1.msra.mxu0 %v6660
  %8265 = vmatprep.subr.mxu0 %v6680
  %8266 = vmatpush1.msra.mxu0 %v6679
  %8267 = vmatprep.subr.mxu0 %v6699
  %8268 = vmatpush1.msra.mxu0 %v6698
  %8269 = vmatprep.subr.mxu0 %v6718
  %8270 = vmatpush1.msra.mxu0 %v6717
  %8271 = vmatprep.subr.mxu0 %v6737
  %8272 = vmatpush1.msra.mxu0 %v6736
  %8273 = vmatprep.subr.mxu0 %v6756
  %8274 = vmatpush1.msra.mxu0 %v6755
  %8275 = vmatprep.subr.mxu0 %v6775
  %8276 = vmatpush1.msra.mxu0 %v6774
  %8277 = vmatprep.subr.mxu0 %v6794
  %8278 = vmatpush1.msra.mxu0 %v6793
  %8279 = vmatprep.subr.mxu0 %v6813
  %8280 = vmatpush1.msra.mxu0 %v6812
  %8281 = vmatprep.subr.mxu0 %v6832
  %8282 = vmatpush1.msra.mxu0 %v6831
  %8283 = vmatprep.subr.mxu0 %v6851
  %8284 = vmatpush1.msra.mxu0 %v6850
  %8285 = vmatprep.subr.mxu0 %v6870
  %8286 = vmatpush1.msra.mxu0 %v6869
  %8287 = vmatprep.subr.mxu0 %v6889
  %8288 = vmatpush1.msra.mxu0 %v6888
  %8289 = vmatprep.subr.mxu0 %v6908
  %8290 = vmatpush1.msra.mxu0 %v6907
  %8291 = vmatprep.subr.mxu0 %v6927
  %8292 = vmatpush1.msra.mxu0 %v6926
  %8293 = vmatprep.subr.mxu0 %v6946
  %8294 = vmatpush1.msra.mxu0 %v6945
  %8295 = vmatprep.subr.mxu0 %v6965
  %8296 = vmatpush1.msra.mxu0 %v6964
  %8297 = vmatprep.subr.mxu0 %v6984
  %8298 = vmatpush1.msra.mxu0 %v6983
  %8299 = vmatprep.subr.mxu0 %v7003
  %8300 = vmatpush1.msra.mxu0 %v7002
  %8301 = vmatprep.subr.mxu0 %v7022
  %8302 = vmatpush1.msra.mxu0 %v7021
  %8303 = vmatprep.subr.mxu0 %v7041
  %8304 = vmatpush1.msra.mxu0 %v7040
  %8305 = vmatprep.subr.mxu0 %v7060
  %8306 = vmatpush1.msra.mxu0 %v7059
  %8307 = vmatprep.subr.mxu0 %v7079
  %8308 = vmatpush1.msra.mxu0 %v7078
  %8309 = vmatprep.subr.mxu0 %v7098
  %8310 = vmatpush1.msra.mxu0 %v7097
  %8311 = vmatprep.subr.mxu0 %v7117
  %8312 = vmatpush1.msra.mxu0 %v7116
  %8313 = vmatprep.subr.mxu0 %v7136
  %8314 = vmatpush1.msra.mxu0 %v7135
  %8315 = vmatprep.subr.mxu0 %v7155
  %8316 = vmatpush1.msra.mxu0 %v7154
  %8317 = vmatprep.subr.mxu0 %v7174
  %8318 = vmatpush1.msra.mxu0 %v7173
  %8319 = vmatprep.subr.mxu0 %v7193
  %8320 = vmatpush1.msra.mxu0 %v7192
  %8321 = vmatprep.subr.mxu0 %v7212
  %8322 = vmatpush1.msra.mxu0 %v7211
  %8323 = vmatprep.mubr.f32.mxu0 %v6591
  %8324 = vmatmul.mubr.f32.gmra.mrb[0].mxu0 %v6590
  %v8325 = vpop.f32.mrb[0].mxu0
  %v8326 = vadd.f32 %v7309, %v8325
  %v8327 = vpop.f32.mrb[0].mxu0
  %8328 = vmatprep.mubr.f32.mxu0 %v6594
  %8329 = vmatmul.mubr.f32.gmra.mrb[0].mxu0 %v6593
  %v8330 = vpop.f32.mrb[0].mxu0
  %v8331 = vadd.f32 %v7314, %v8330
  %v8332 = vpop.f32.mrb[0].mxu0
  %8333 = vmatprep.mubr.f32.mxu0 %v6597
  %8334 = vmatmul.mubr.f32.gmra.mrb[0].mxu0 %v6596
  %v8335 = vpop.f32.mrb[0].mxu0
  %v8336 = vadd.f32 %v7319, %v8335
  %v8337 = vpop.f32.mrb[0].mxu0
  %8338 = vmatprep.mubr.f32.mxu0 %v6600
  %8339 = vmatmul.mubr.f32.gmra.mrb[0].mxu0 %v6599
  %v8340 = vpop.f32.mrb[0].mxu0
  %v8341 = vadd.f32 %v7324, %v8340
  %v8342 = vpop.f32.mrb[0].mxu0
  %8343 = vmatprep.mubr.f32.mxu0 %v6603
  %8344 = vmatmul.mubr.f32.gmra.mrb[0].mxu0 %v6602
  %v8345 = vpop.f32.mrb[0].mxu0
  %v8346 = vadd.f32 %v7329, %v8345
  %v8347 = vpop.f32.mrb[0].mxu0
  %8348 = vmatprep.mubr.f32.mxu0 %v6606
  %8349 = vmatmul.mubr.f32.gmra.mrb[0].mxu0 %v6605
  %v8350 = vpop.f32.mrb[0].mxu0
  %v8351 = vadd.f32 %v7334, %v8350
  %v8352 = vpop.f32.mrb[0].mxu0
  %8353 = vmatprep.mubr.f32.mxu0 %v6609
  %8354 = vmatmul.mubr.f32.gmra.mrb[0].mxu0 %v6608
  %v8355 = vpop.f32.mrb[0].mxu0
  %v8356 = vadd.f32 %v7339, %v8355
  %v8357 = vpop.f32.mrb[0].mxu0
  %8358 = vmatprep.mubr.f32.mxu0 %v6612
  %8359 = vmatmul.mubr.f32.gmra.mrb[0].mxu0 %v6611
  %v8360 = vpop.f32.mrb[0].mxu0
  %v8361 = vadd.f32 %v7344, %v8360
  %v8362 = vpop.f32.mrb[0].mxu0
  %8363 = vdwg.mxu0
  %8364 = vmatprep.subr.mxu0 %v7231
  %8365 = vmatpush1.msra.mxu0 %v7230
  %8366 = vmatprep.subr.mxu0 %v7250
  %8367 = vmatpush1.msra.mxu0 %v7249
  %8368 = vmatprep.subr.mxu0 %v7269
  %8369 = vmatpush1.msra.mxu0 %v7268
  %8370 = vmatprep.subr.mxu0 %v7288
  %8371 = vmatpush1.msra.mxu0 %v7287
  %8372 = vmatprep.subr.mxu0 0.0
  %8373 = vmatpush1.msra.mxu0 0.0
  %8374 = vmatprep.subr.mxu0 0.0
  %8375 = vmatpush1.msra.mxu0 0.0
  %8376 = vmatprep.subr.mxu0 0.0
  %8377 = vmatpush1.msra.mxu0 0.0
  %8378 = vmatprep.subr.mxu0 0.0
  %8379 = vmatpush1.msra.mxu0 0.0
  %8380 = vmatprep.subr.mxu0 0.0
  %8381 = vmatpush1.msra.mxu0 0.0
  %8382 = vmatprep.subr.mxu0 0.0
  %8383 = vmatpush1.msra.mxu0 0.0
  %8384 = vmatprep.subr.mxu0 0.0
  %8385 = vmatpush1.msra.mxu0 0.0
  %8386 = vmatprep.subr.mxu0 0.0
  %8387 = vmatpush1.msra.mxu0 0.0
  %8388 = vmatprep.subr.mxu0 0.0
  %8389 = vmatpush1.msra.mxu0 0.0
  %8390 = vmatprep.subr.mxu0 0.0
  %8391 = vmatpush1.msra.mxu0 0.0
  %8392 = vmatprep.subr.mxu0 0.0
  %8393 = vmatpush1.msra.mxu0 0.0
  %8394 = vmatprep.subr.mxu0 0.0
  %8395 = vmatpush1.msra.mxu0 0.0
  %8396 = vmatprep.subr.mxu0 0.0
  %8397 = vmatpush1.msra.mxu0 0.0
  %8398 = vmatprep.subr.mxu0 0.0
  %8399 = vmatpush1.msra.mxu0 0.0
  %8400 = vmatprep.subr.mxu0 0.0
  %8401 = vmatpush1.msra.mxu0 0.0
  %8402 = vmatprep.subr.mxu0 0.0
  %8403 = vmatpush1.msra.mxu0 0.0
  %8404 = vmatprep.subr.mxu0 0.0
  %8405 = vmatpush1.msra.mxu0 0.0
  %8406 = vmatprep.subr.mxu0 0.0
  %8407 = vmatpush1.msra.mxu0 0.0
  %8408 = vmatprep.subr.mxu0 0.0
  %8409 = vmatpush1.msra.mxu0 0.0
  %8410 = vmatprep.subr.mxu0 0.0
  %8411 = vmatpush1.msra.mxu0 0.0
  %8412 = vmatprep.subr.mxu0 0.0
  %8413 = vmatpush1.msra.mxu0 0.0
  %8414 = vmatprep.subr.mxu0 0.0
  %8415 = vmatpush1.msra.mxu0 0.0
  %8416 = vmatprep.subr.mxu0 0.0
  %8417 = vmatpush1.msra.mxu0 0.0
  %8418 = vmatprep.subr.mxu0 0.0
  %8419 = vmatpush1.msra.mxu0 0.0
  %8420 = vmatprep.subr.mxu0 0.0
  %8421 = vmatpush1.msra.mxu0 0.0
  %8422 = vmatprep.subr.mxu0 0.0
  %8423 = vmatpush1.msra.mxu0 0.0
  %8424 = vmatprep.subr.mxu0 0.0
  %8425 = vmatpush1.msra.mxu0 0.0
  %8426 = vmatprep.subr.mxu0 0.0
  %8427 = vmatpush1.msra.mxu0 0.0
  %8428 = vmatprep.mubr.f32.mxu0 0.0
  %8429 = vmatmul.mubr.f32.gmra.mrb[0].mxu0 %v7348
  %v8430 = vpop.f32.mrb[0].mxu0
  %v8431 = vadd.f32 %v8326, %v8430
  %v8432 = vpop.f32.mrb[0].mxu0
  %8433 = vmatprep.mubr.f32.mxu0 0.0
  %8434 = vmatmul.mubr.f32.gmra.mrb[0].mxu0 %v7351
  %v8435 = vpop.f32.mrb[0].mxu0
  %v8436 = vadd.f32 %v8331, %v8435
  %v8437 = vpop.f32.mrb[0].mxu0
  %8438 = vmatprep.mubr.f32.mxu0 0.0
  %8439 = vmatmul.mubr.f32.gmra.mrb[0].mxu0 %v7354
  %v8440 = vpop.f32.mrb[0].mxu0
  %v8441 = vadd.f32 %v8336, %v8440
  %v8442 = vpop.f32.mrb[0].mxu0
  %8443 = vmatprep.mubr.f32.mxu0 0.0
  %8444 = vmatmul.mubr.f32.gmra.mrb[0].mxu0 %v7357
  %v8445 = vpop.f32.mrb[0].mxu0
  %v8446 = vadd.f32 %v8341, %v8445
  %v8447 = vpop.f32.mrb[0].mxu0
  %8448 = vmatprep.mubr.f32.mxu0 0.0
  %8449 = vmatmul.mubr.f32.gmra.mrb[0].mxu0 %v7360
  %v8450 = vpop.f32.mrb[0].mxu0
  %v8451 = vadd.f32 %v8346, %v8450
  %v8452 = vpop.f32.mrb[0].mxu0
  %8453 = vmatprep.mubr.f32.mxu0 0.0
  %8454 = vmatmul.mubr.f32.gmra.mrb[0].mxu0 %v7363
  %v8455 = vpop.f32.mrb[0].mxu0
  %v8456 = vadd.f32 %v8351, %v8455
  %v8457 = vpop.f32.mrb[0].mxu0
  %8458 = vmatprep.mubr.f32.mxu0 0.0
  %8459 = vmatmul.mubr.f32.gmra.mrb[0].mxu0 %v7366
  %v8460 = vpop.f32.mrb[0].mxu0
  %v8461 = vadd.f32 %v8356, %v8460
  %v8462 = vpop.f32.mrb[0].mxu0
  %8463 = vmatprep.mubr.f32.mxu0 0.0
  %8464 = vmatmul.mubr.f32.gmra.mrb[0].mxu0 %v7369
  %v8465 = vpop.f32.mrb[0].mxu0
  %v8466 = vadd.f32 %v8361, %v8465
  %v8467 = vpop.f32.mrb[0].mxu0
  %8468 = vdwg.mxu0
  %8469 = vmatprep.subr.mxu0 %v6625
  %8470 = vmatpush1.msra.mxu0 %v6624
  %8471 = vmatprep.subr.mxu0 %v6644
  %8472 = vmatpush1.msra.mxu0 %v6643
  %8473 = vmatprep.subr.mxu0 %v6663
  %8474 = vmatpush1.msra.mxu0 %v6662
  %8475 = vmatprep.subr.mxu0 %v6682
  %8476 = vmatpush1.msra.mxu0 %v6681
  %8477 = vmatprep.subr.mxu0 %v6701
  %8478 = vmatpush1.msra.mxu0 %v6700
  %8479 = vmatprep.subr.mxu0 %v6720
  %8480 = vmatpush1.msra.mxu0 %v6719
  %8481 = vmatprep.subr.mxu0 %v6739
  %8482 = vmatpush1.msra.mxu0 %v6738
  %8483 = vmatprep.subr.mxu0 %v6758
  %8484 = vmatpush1.msra.mxu0 %v6757
  %8485 = vmatprep.subr.mxu0 %v6777
  %8486 = vmatpush1.msra.mxu0 %v6776
  %8487 = vmatprep.subr.mxu0 %v6796
  %8488 = vmatpush1.msra.mxu0 %v6795
  %8489 = vmatprep.subr.mxu0 %v6815
  %8490 = vmatpush1.msra.mxu0 %v6814
  %8491 = vmatprep.subr.mxu0 %v6834
  %8492 = vmatpush1.msra.mxu0 %v6833
  %8493 = vmatprep.subr.mxu0 %v6853
  %8494 = vmatpush1.msra.mxu0 %v6852
  %8495 = vmatprep.subr.mxu0 %v6872
  %8496 = vmatpush1.msra.mxu0 %v6871
  %8497 = vmatprep.subr.mxu0 %v6891
  %8498 = vmatpush1.msra.mxu0 %v6890
  %8499 = vmatprep.subr.mxu0 %v6910
  %8500 = vmatpush1.msra.mxu0 %v6909
  %8501 = vmatprep.subr.mxu0 %v6929
  %8502 = vmatpush1.msra.mxu0 %v6928
  %8503 = vmatprep.subr.mxu0 %v6948
  %8504 = vmatpush1.msra.mxu0 %v6947
  %8505 = vmatprep.subr.mxu0 %v6967
  %8506 = vmatpush1.msra.mxu0 %v6966
  %8507 = vmatprep.subr.mxu0 %v6986
  %8508 = vmatpush1.msra.mxu0 %v6985
  %8509 = vmatprep.subr.mxu0 %v7005
  %8510 = vmatpush1.msra.mxu0 %v7004
  %8511 = vmatprep.subr.mxu0 %v7024
  %8512 = vmatpush1.msra.mxu0 %v7023
  %8513 = vmatprep.subr.mxu0 %v7043
  %8514 = vmatpush1.msra.mxu0 %v7042
  %8515 = vmatprep.subr.mxu0 %v7062
  %8516 = vmatpush1.msra.mxu0 %v7061
  %8517 = vmatprep.subr.mxu0 %v7081
  %8518 = vmatpush1.msra.mxu0 %v7080
  %8519 = vmatprep.subr.mxu0 %v7100
  %8520 = vmatpush1.msra.mxu0 %v7099
  %8521 = vmatprep.subr.mxu0 %v7119
  %8522 = vmatpush1.msra.mxu0 %v7118
  %8523 = vmatprep.subr.mxu0 %v7138
  %8524 = vmatpush1.msra.mxu0 %v7137
  %8525 = vmatprep.subr.mxu0 %v7157
  %8526 = vmatpush1.msra.mxu0 %v7156
  %8527 = vmatprep.subr.mxu0 %v7176
  %8528 = vmatpush1.msra.mxu0 %v7175
  %8529 = vmatprep.subr.mxu0 %v7195
  %8530 = vmatpush1.msra.mxu0 %v7194
  %8531 = vmatprep.subr.mxu0 %v7214
  %8532 = vmatpush1.msra.mxu0 %v7213
  %8533 = vmatprep.mubr.f32.mxu0 %v6591
  %8534 = vmatmul.mubr.f32.gmra.mrb[0].mxu0 %v6590
  %v8535 = vpop.f32.mrb[0].mxu0
  %v8536 = vadd.f32 %v7309, %v8535
  %v8537 = vpop.f32.mrb[0].mxu0
  %v8538 = vadd.f32 %v7309, %v8537
  %8539 = vmatprep.mubr.f32.mxu0 %v6594
  %8540 = vmatmul.mubr.f32.gmra.mrb[0].mxu0 %v6593
  %v8541 = vpop.f32.mrb[0].mxu0
  %v8542 = vadd.f32 %v7314, %v8541
  %v8543 = vpop.f32.mrb[0].mxu0
  %v8544 = vadd.f32 %v7314, %v8543
  %8545 = vmatprep.mubr.f32.mxu0 %v6597
  %8546 = vmatmul.mubr.f32.gmra.mrb[0].mxu0 %v6596
  %v8547 = vpop.f32.mrb[0].mxu0
  %v8548 = vadd.f32 %v7319, %v8547
  %v8549 = vpop.f32.mrb[0].mxu0
  %v8550 = vadd.f32 %v7319, %v8549
  %8551 = vmatprep.mubr.f32.mxu0 %v6600
  %8552 = vmatmul.mubr.f32.gmra.mrb[0].mxu0 %v6599
  %v8553 = vpop.f32.mrb[0].mxu0
  %v8554 = vadd.f32 %v7324, %v8553
  %v8555 = vpop.f32.mrb[0].mxu0
  %v8556 = vadd.f32 %v7324, %v8555
  %8557 = vmatprep.mubr.f32.mxu0 %v6603
  %8558 = vmatmul.mubr.f32.gmra.mrb[0].mxu0 %v6602
  %v8559 = vpop.f32.mrb[0].mxu0
  %v8560 = vadd.f32 %v7329, %v8559
  %v8561 = vpop.f32.mrb[0].mxu0
  %v8562 = vadd.f32 %v7329, %v8561
  %8563 = vmatprep.mubr.f32.mxu0 %v6606
  %8564 = vmatmul.mubr.f32.gmra.mrb[0].mxu0 %v6605
  %v8565 = vpop.f32.mrb[0].mxu0
  %v8566 = vadd.f32 %v7334, %v8565
  %v8567 = vpop.f32.mrb[0].mxu0
  %v8568 = vadd.f32 %v7334, %v8567
  %8569 = vmatprep.mubr.f32.mxu0 %v6609
  %8570 = vmatmul.mubr.f32.gmra.mrb[0].mxu0 %v6608
  %v8571 = vpop.f32.mrb[0].mxu0
  %v8572 = vadd.f32 %v7339, %v8571
  %v8573 = vpop.f32.mrb[0].mxu0
  %v8574 = vadd.f32 %v7339, %v8573
  %8575 = vmatprep.mubr.f32.mxu0 %v6612
  %8576 = vmatmul.mubr.f32.gmra.mrb[0].mxu0 %v6611
  %v8577 = vpop.f32.mrb[0].mxu0
  %v8578 = vadd.f32 %v7344, %v8577
  %v8579 = vpop.f32.mrb[0].mxu0
  %v8580 = vadd.f32 %v7344, %v8579
  %8581 = vdwg.mxu0
  %8582 = vmatprep.subr.mxu0 %v7233
  %8583 = vmatpush1.msra.mxu0 %v7232
  %8584 = vmatprep.subr.mxu0 %v7252
  %8585 = vmatpush1.msra.mxu0 %v7251
  %8586 = vmatprep.subr.mxu0 %v7271
  %8587 = vmatpush1.msra.mxu0 %v7270
  %8588 = vmatprep.subr.mxu0 %v7290
  %8589 = vmatpush1.msra.mxu0 %v7289
  %8590 = vmatprep.subr.mxu0 0.0
  %8591 = vmatpush1.msra.mxu0 0.0
  %8592 = vmatprep.subr.mxu0 0.0
  %8593 = vmatpush1.msra.mxu0 0.0
  %8594 = vmatprep.subr.mxu0 0.0
  %8595 = vmatpush1.msra.mxu0 0.0
  %8596 = vmatprep.subr.mxu0 0.0
  %8597 = vmatpush1.msra.mxu0 0.0
  %8598 = vmatprep.subr.mxu0 0.0
  %8599 = vmatpush1.msra.mxu0 0.0
  %8600 = vmatprep.subr.mxu0 0.0
  %8601 = vmatpush1.msra.mxu0 0.0
  %8602 = vmatprep.subr.mxu0 0.0
  %8603 = vmatpush1.msra.mxu0 0.0
  %8604 = vmatprep.subr.mxu0 0.0
  %8605 = vmatpush1.msra.mxu0 0.0
  %8606 = vmatprep.subr.mxu0 0.0
  %8607 = vmatpush1.msra.mxu0 0.0
  %8608 = vmatprep.subr.mxu0 0.0
  %8609 = vmatpush1.msra.mxu0 0.0
  %8610 = vmatprep.subr.mxu0 0.0
  %8611 = vmatpush1.msra.mxu0 0.0
  %8612 = vmatprep.subr.mxu0 0.0
  %8613 = vmatpush1.msra.mxu0 0.0
  %8614 = vmatprep.subr.mxu0 0.0
  %8615 = vmatpush1.msra.mxu0 0.0
  %8616 = vmatprep.subr.mxu0 0.0
  %8617 = vmatpush1.msra.mxu0 0.0
  %8618 = vmatprep.subr.mxu0 0.0
  %8619 = vmatpush1.msra.mxu0 0.0
  %8620 = vmatprep.subr.mxu0 0.0
  %8621 = vmatpush1.msra.mxu0 0.0
  %8622 = vmatprep.subr.mxu0 0.0
  %8623 = vmatpush1.msra.mxu0 0.0
  %8624 = vmatprep.subr.mxu0 0.0
  %8625 = vmatpush1.msra.mxu0 0.0
  %8626 = vmatprep.subr.mxu0 0.0
  %8627 = vmatpush1.msra.mxu0 0.0
  %8628 = vmatprep.subr.mxu0 0.0
  %8629 = vmatpush1.msra.mxu0 0.0
  %8630 = vmatprep.subr.mxu0 0.0
  %8631 = vmatpush1.msra.mxu0 0.0
  %8632 = vmatprep.subr.mxu0 0.0
  %8633 = vmatpush1.msra.mxu0 0.0
  %8634 = vmatprep.subr.mxu0 0.0
  %8635 = vmatpush1.msra.mxu0 0.0
  %8636 = vmatprep.subr.mxu0 0.0
  %8637 = vmatpush1.msra.mxu0 0.0
  %8638 = vmatprep.subr.mxu0 0.0
  %8639 = vmatpush1.msra.mxu0 0.0
  %8640 = vmatprep.subr.mxu0 0.0
  %8641 = vmatpush1.msra.mxu0 0.0
  %8642 = vmatprep.subr.mxu0 0.0
  %8643 = vmatpush1.msra.mxu0 0.0
  %8644 = vmatprep.subr.mxu0 0.0
  %8645 = vmatpush1.msra.mxu0 0.0
  %8646 = vmatprep.mubr.f32.mxu0 0.0
  %8647 = vmatmul.mubr.f32.gmra.mrb[0].mxu0 %v7348
  %v8648 = vpop.f32.mrb[0].mxu0
  %v8649 = vadd.f32 %v8536, %v8648
  %v8650 = vpop.f32.mrb[0].mxu0
  %v8651 = vadd.f32 %v8538, %v8650
  %8652 = vmatprep.mubr.f32.mxu0 0.0
  %8653 = vmatmul.mubr.f32.gmra.mrb[0].mxu0 %v7351
  %v8654 = vpop.f32.mrb[0].mxu0
  %v8655 = vadd.f32 %v8542, %v8654
  %v8656 = vpop.f32.mrb[0].mxu0
  %v8657 = vadd.f32 %v8544, %v8656
  %8658 = vmatprep.mubr.f32.mxu0 0.0
  %8659 = vmatmul.mubr.f32.gmra.mrb[0].mxu0 %v7354
  %v8660 = vpop.f32.mrb[0].mxu0
  %v8661 = vadd.f32 %v8548, %v8660
  %v8662 = vpop.f32.mrb[0].mxu0
  %v8663 = vadd.f32 %v8550, %v8662
  %8664 = vmatprep.mubr.f32.mxu0 0.0
  %8665 = vmatmul.mubr.f32.gmra.mrb[0].mxu0 %v7357
  %v8666 = vpop.f32.mrb[0].mxu0
  %v8667 = vadd.f32 %v8554, %v8666
  %v8668 = vpop.f32.mrb[0].mxu0
  %v8669 = vadd.f32 %v8556, %v8668
  %8670 = vmatprep.mubr.f32.mxu0 0.0
  %8671 = vmatmul.mubr.f32.gmra.mrb[0].mxu0 %v7360
  %v8672 = vpop.f32.mrb[0].mxu0
  %v8673 = vadd.f32 %v8560, %v8672
  %v8674 = vpop.f32.mrb[0].mxu0
  %v8675 = vadd.f32 %v8562, %v8674
  %8676 = vmatprep.mubr.f32.mxu0 0.0
  %8677 = vmatmul.mubr.f32.gmra.mrb[0].mxu0 %v7363
  %v8678 = vpop.f32.mrb[0].mxu0
  %v8679 = vadd.f32 %v8566, %v8678
  %v8680 = vpop.f32.mrb[0].mxu0
  %v8681 = vadd.f32 %v8568, %v8680
  %8682 = vmatprep.mubr.f32.mxu0 0.0
  %8683 = vmatmul.mubr.f32.gmra.mrb[0].mxu0 %v7366
  %v8684 = vpop.f32.mrb[0].mxu0
  %v8685 = vadd.f32 %v8572, %v8684
  %v8686 = vpop.f32.mrb[0].mxu0
  %v8687 = vadd.f32 %v8574, %v8686
  %8688 = vmatprep.mubr.f32.mxu0 0.0
  %8689 = vmatmul.mubr.f32.gmra.mrb[0].mxu0 %v7369
  %v8690 = vpop.f32.mrb[0].mxu0
  %v8691 = vadd.f32 %v8578, %v8690
  %v8692 = vpop.f32.mrb[0].mxu0
  %v8693 = vadd.f32 %v8580, %v8692
  %8694 = vdwg.mxu0
  %8695 = vmatprep.subr.mxu0 %v6627
  %8696 = vmatpush1.msra.mxu0 %v6626
  %8697 = vmatprep.subr.mxu0 %v6646
  %8698 = vmatpush1.msra.mxu0 %v6645
  %8699 = vmatprep.subr.mxu0 %v6665
  %8700 = vmatpush1.msra.mxu0 %v6664
  %8701 = vmatprep.subr.mxu0 %v6684
  %8702 = vmatpush1.msra.mxu0 %v6683
  %8703 = vmatprep.subr.mxu0 %v6703
  %8704 = vmatpush1.msra.mxu0 %v6702
  %8705 = vmatprep.subr.mxu0 %v6722
  %8706 = vmatpush1.msra.mxu0 %v6721
  %8707 = vmatprep.subr.mxu0 %v6741
  %8708 = vmatpush1.msra.mxu0 %v6740
  %8709 = vmatprep.subr.mxu0 %v6760
  %8710 = vmatpush1.msra.mxu0 %v6759
  %8711 = vmatprep.subr.mxu0 %v6779
  %8712 = vmatpush1.msra.mxu0 %v6778
  %8713 = vmatprep.subr.mxu0 %v6798
  %8714 = vmatpush1.msra.mxu0 %v6797
  %8715 = vmatprep.subr.mxu0 %v6817
  %8716 = vmatpush1.msra.mxu0 %v6816
  %8717 = vmatprep.subr.mxu0 %v6836
  %8718 = vmatpush1.msra.mxu0 %v6835
  %8719 = vmatprep.subr.mxu0 %v6855
  %8720 = vmatpush1.msra.mxu0 %v6854
  %8721 = vmatprep.subr.mxu0 %v6874
  %8722 = vmatpush1.msra.mxu0 %v6873
  %8723 = vmatprep.subr.mxu0 %v6893
  %8724 = vmatpush1.msra.mxu0 %v6892
  %8725 = vmatprep.subr.mxu0 %v6912
  %8726 = vmatpush1.msra.mxu0 %v6911
  %8727 = vmatprep.subr.mxu0 %v6931
  %8728 = vmatpush1.msra.mxu0 %v6930
  %8729 = vmatprep.subr.mxu0 %v6950
  %8730 = vmatpush1.msra.mxu0 %v6949
  %8731 = vmatprep.subr.mxu0 %v6969
  %8732 = vmatpush1.msra.mxu0 %v6968
  %8733 = vmatprep.subr.mxu0 %v6988
  %8734 = vmatpush1.msra.mxu0 %v6987
  %8735 = vmatprep.subr.mxu0 %v7007
  %8736 = vmatpush1.msra.mxu0 %v7006
  %8737 = vmatprep.subr.mxu0 %v7026
  %8738 = vmatpush1.msra.mxu0 %v7025
  %8739 = vmatprep.subr.mxu0 %v7045
  %8740 = vmatpush1.msra.mxu0 %v7044
  %8741 = vmatprep.subr.mxu0 %v7064
  %8742 = vmatpush1.msra.mxu0 %v7063
  %8743 = vmatprep.subr.mxu0 %v7083
  %8744 = vmatpush1.msra.mxu0 %v7082
  %8745 = vmatprep.subr.mxu0 %v7102
  %8746 = vmatpush1.msra.mxu0 %v7101
  %8747 = vmatprep.subr.mxu0 %v7121
  %8748 = vmatpush1.msra.mxu0 %v7120
  %8749 = vmatprep.subr.mxu0 %v7140
  %8750 = vmatpush1.msra.mxu0 %v7139
  %8751 = vmatprep.subr.mxu0 %v7159
  %8752 = vmatpush1.msra.mxu0 %v7158
  %8753 = vmatprep.subr.mxu0 %v7178
  %8754 = vmatpush1.msra.mxu0 %v7177
  %8755 = vmatprep.subr.mxu0 %v7197
  %8756 = vmatpush1.msra.mxu0 %v7196
  %8757 = vmatprep.subr.mxu0 %v7216
  %8758 = vmatpush1.msra.mxu0 %v7215
  %8759 = vmatprep.mubr.f32.mxu0 %v6591
  %8760 = vmatmul.mubr.f32.gmra.mrb[0].mxu0 %v6590
  %v8761 = vpop.f32.mrb[0].mxu0
  %v8762 = vadd.f32 %v7309, %v8761
  %v8763 = vpop.f32.mrb[0].mxu0
  %v8764 = vadd.f32 %v7309, %v8763
  %8765 = vmatprep.mubr.f32.mxu0 %v6594
  %8766 = vmatmul.mubr.f32.gmra.mrb[0].mxu0 %v6593
  %v8767 = vpop.f32.mrb[0].mxu0
  %v8768 = vadd.f32 %v7314, %v8767
  %v8769 = vpop.f32.mrb[0].mxu0
  %v8770 = vadd.f32 %v7314, %v8769
  %8771 = vmatprep.mubr.f32.mxu0 %v6597
  %8772 = vmatmul.mubr.f32.gmra.mrb[0].mxu0 %v6596
  %v8773 = vpop.f32.mrb[0].mxu0
  %v8774 = vadd.f32 %v7319, %v8773
  %v8775 = vpop.f32.mrb[0].mxu0
  %v8776 = vadd.f32 %v7319, %v8775
  %8777 = vmatprep.mubr.f32.mxu0 %v6600
  %8778 = vmatmul.mubr.f32.gmra.mrb[0].mxu0 %v6599
  %v8779 = vpop.f32.mrb[0].mxu0
  %v8780 = vadd.f32 %v7324, %v8779
  %v8781 = vpop.f32.mrb[0].mxu0
  %v8782 = vadd.f32 %v7324, %v8781
  %8783 = vmatprep.mubr.f32.mxu0 %v6603
  %8784 = vmatmul.mubr.f32.gmra.mrb[0].mxu0 %v6602
  %v8785 = vpop.f32.mrb[0].mxu0
  %v8786 = vadd.f32 %v7329, %v8785
  %v8787 = vpop.f32.mrb[0].mxu0
  %v8788 = vadd.f32 %v7329, %v8787
  %8789 = vmatprep.mubr.f32.mxu0 %v6606
  %8790 = vmatmul.mubr.f32.gmra.mrb[0].mxu0 %v6605
  %v8791 = vpop.f32.mrb[0].mxu0
  %v8792 = vadd.f32 %v7334, %v8791
  %v8793 = vpop.f32.mrb[0].mxu0
  %v8794 = vadd.f32 %v7334, %v8793
  %8795 = vmatprep.mubr.f32.mxu0 %v6609
  %8796 = vmatmul.mubr.f32.gmra.mrb[0].mxu0 %v6608
  %v8797 = vpop.f32.mrb[0].mxu0
  %v8798 = vadd.f32 %v7339, %v8797
  %v8799 = vpop.f32.mrb[0].mxu0
  %v8800 = vadd.f32 %v7339, %v8799
  %8801 = vmatprep.mubr.f32.mxu0 %v6612
  %8802 = vmatmul.mubr.f32.gmra.mrb[0].mxu0 %v6611
  %v8803 = vpop.f32.mrb[0].mxu0
  %v8804 = vadd.f32 %v7344, %v8803
  %v8805 = vpop.f32.mrb[0].mxu0
  %v8806 = vadd.f32 %v7344, %v8805
  %8807 = vdwg.mxu0
  %8808 = vmatprep.subr.mxu0 %v7235
  %8809 = vmatpush1.msra.mxu0 %v7234
  %8810 = vmatprep.subr.mxu0 %v7254
  %8811 = vmatpush1.msra.mxu0 %v7253
  %8812 = vmatprep.subr.mxu0 %v7273
  %8813 = vmatpush1.msra.mxu0 %v7272
  %8814 = vmatprep.subr.mxu0 %v7292
  %8815 = vmatpush1.msra.mxu0 %v7291
  %8816 = vmatprep.subr.mxu0 0.0
  %8817 = vmatpush1.msra.mxu0 0.0
  %8818 = vmatprep.subr.mxu0 0.0
  %8819 = vmatpush1.msra.mxu0 0.0
  %8820 = vmatprep.subr.mxu0 0.0
  %8821 = vmatpush1.msra.mxu0 0.0
  %8822 = vmatprep.subr.mxu0 0.0
  %8823 = vmatpush1.msra.mxu0 0.0
  %8824 = vmatprep.subr.mxu0 0.0
  %8825 = vmatpush1.msra.mxu0 0.0
  %8826 = vmatprep.subr.mxu0 0.0
  %8827 = vmatpush1.msra.mxu0 0.0
  %8828 = vmatprep.subr.mxu0 0.0
  %8829 = vmatpush1.msra.mxu0 0.0
  %8830 = vmatprep.subr.mxu0 0.0
  %8831 = vmatpush1.msra.mxu0 0.0
  %8832 = vmatprep.subr.mxu0 0.0
  %8833 = vmatpush1.msra.mxu0 0.0
  %8834 = vmatprep.subr.mxu0 0.0
  %8835 = vmatpush1.msra.mxu0 0.0
  %8836 = vmatprep.subr.mxu0 0.0
  %8837 = vmatpush1.msra.mxu0 0.0
  %8838 = vmatprep.subr.mxu0 0.0
  %8839 = vmatpush1.msra.mxu0 0.0
  %8840 = vmatprep.subr.mxu0 0.0
  %8841 = vmatpush1.msra.mxu0 0.0
  %8842 = vmatprep.subr.mxu0 0.0
  %8843 = vmatpush1.msra.mxu0 0.0
  %8844 = vmatprep.subr.mxu0 0.0
  %8845 = vmatpush1.msra.mxu0 0.0
  %8846 = vmatprep.subr.mxu0 0.0
  %8847 = vmatpush1.msra.mxu0 0.0
  %8848 = vmatprep.subr.mxu0 0.0
  %8849 = vmatpush1.msra.mxu0 0.0
  %8850 = vmatprep.subr.mxu0 0.0
  %8851 = vmatpush1.msra.mxu0 0.0
  %8852 = vmatprep.subr.mxu0 0.0
  %8853 = vmatpush1.msra.mxu0 0.0
  %8854 = vmatprep.subr.mxu0 0.0
  %8855 = vmatpush1.msra.mxu0 0.0
  %8856 = vmatprep.subr.mxu0 0.0
  %8857 = vmatpush1.msra.mxu0 0.0
  %8858 = vmatprep.subr.mxu0 0.0
  %8859 = vmatpush1.msra.mxu0 0.0
  %8860 = vmatprep.subr.mxu0 0.0
  %8861 = vmatpush1.msra.mxu0 0.0
  %8862 = vmatprep.subr.mxu0 0.0
  %8863 = vmatpush1.msra.mxu0 0.0
  %8864 = vmatprep.subr.mxu0 0.0
  %8865 = vmatpush1.msra.mxu0 0.0
  %8866 = vmatprep.subr.mxu0 0.0
  %8867 = vmatpush1.msra.mxu0 0.0
  %8868 = vmatprep.subr.mxu0 0.0
  %8869 = vmatpush1.msra.mxu0 0.0
  %8870 = vmatprep.subr.mxu0 0.0
  %8871 = vmatpush1.msra.mxu0 0.0
  %8872 = vmatprep.mubr.f32.mxu0 0.0
  %8873 = vmatmul.mubr.f32.gmra.mrb[0].mxu0 %v7348
  %v8874 = vpop.f32.mrb[0].mxu0
  %v8875 = vadd.f32 %v8762, %v8874
  %v8876 = vpop.f32.mrb[0].mxu0
  %v8877 = vadd.f32 %v8764, %v8876
  %8878 = vmatprep.mubr.f32.mxu0 0.0
  %8879 = vmatmul.mubr.f32.gmra.mrb[0].mxu0 %v7351
  %v8880 = vpop.f32.mrb[0].mxu0
  %v8881 = vadd.f32 %v8768, %v8880
  %v8882 = vpop.f32.mrb[0].mxu0
  %v8883 = vadd.f32 %v8770, %v8882
  %8884 = vmatprep.mubr.f32.mxu0 0.0
  %8885 = vmatmul.mubr.f32.gmra.mrb[0].mxu0 %v7354
  %v8886 = vpop.f32.mrb[0].mxu0
  %v8887 = vadd.f32 %v8774, %v8886
  %v8888 = vpop.f32.mrb[0].mxu0
  %v8889 = vadd.f32 %v8776, %v8888
  %8890 = vmatprep.mubr.f32.mxu0 0.0
  %8891 = vmatmul.mubr.f32.gmra.mrb[0].mxu0 %v7357
  %v8892 = vpop.f32.mrb[0].mxu0
  %v8893 = vadd.f32 %v8780, %v8892
  %v8894 = vpop.f32.mrb[0].mxu0
  %v8895 = vadd.f32 %v8782, %v8894
  %8896 = vmatprep.mubr.f32.mxu0 0.0
  %8897 = vmatmul.mubr.f32.gmra.mrb[0].mxu0 %v7360
  %v8898 = vpop.f32.mrb[0].mxu0
  %v8899 = vadd.f32 %v8786, %v8898
  %v8900 = vpop.f32.mrb[0].mxu0
  %v8901 = vadd.f32 %v8788, %v8900
  %8902 = vmatprep.mubr.f32.mxu0 0.0
  %8903 = vmatmul.mubr.f32.gmra.mrb[0].mxu0 %v7363
  %v8904 = vpop.f32.mrb[0].mxu0
  %v8905 = vadd.f32 %v8792, %v8904
  %v8906 = vpop.f32.mrb[0].mxu0
  %v8907 = vadd.f32 %v8794, %v8906
  %8908 = vmatprep.mubr.f32.mxu0 0.0
  %8909 = vmatmul.mubr.f32.gmra.mrb[0].mxu0 %v7366
  %v8910 = vpop.f32.mrb[0].mxu0
  %v8911 = vadd.f32 %v8798, %v8910
  %v8912 = vpop.f32.mrb[0].mxu0
  %v8913 = vadd.f32 %v8800, %v8912
  %8914 = vmatprep.mubr.f32.mxu0 0.0
  %8915 = vmatmul.mubr.f32.gmra.mrb[0].mxu0 %v7369
  %v8916 = vpop.f32.mrb[0].mxu0
  %v8917 = vadd.f32 %v8804, %v8916
  %v8918 = vpop.f32.mrb[0].mxu0
  %v8919 = vadd.f32 %v8806, %v8918
  %8920 = vdwg.mxu0
  %8921 = vmatprep.subr.mxu0 %v6629
  %8922 = vmatpush1.msra.mxu0 %v6628
  %8923 = vmatprep.subr.mxu0 %v6648
  %8924 = vmatpush1.msra.mxu0 %v6647
  %8925 = vmatprep.subr.mxu0 %v6667
  %8926 = vmatpush1.msra.mxu0 %v6666
  %8927 = vmatprep.subr.mxu0 %v6686
  %8928 = vmatpush1.msra.mxu0 %v6685
  %8929 = vmatprep.subr.mxu0 %v6705
  %8930 = vmatpush1.msra.mxu0 %v6704
  %8931 = vmatprep.subr.mxu0 %v6724
  %8932 = vmatpush1.msra.mxu0 %v6723
  %8933 = vmatprep.subr.mxu0 %v6743
  %8934 = vmatpush1.msra.mxu0 %v6742
  %8935 = vmatprep.subr.mxu0 %v6762
  %8936 = vmatpush1.msra.mxu0 %v6761
  %8937 = vmatprep.subr.mxu0 %v6781
  %8938 = vmatpush1.msra.mxu0 %v6780
  %8939 = vmatprep.subr.mxu0 %v6800
  %8940 = vmatpush1.msra.mxu0 %v6799
  %8941 = vmatprep.subr.mxu0 %v6819
  %8942 = vmatpush1.msra.mxu0 %v6818
  %8943 = vmatprep.subr.mxu0 %v6838
  %8944 = vmatpush1.msra.mxu0 %v6837
  %8945 = vmatprep.subr.mxu0 %v6857
  %8946 = vmatpush1.msra.mxu0 %v6856
  %8947 = vmatprep.subr.mxu0 %v6876
  %8948 = vmatpush1.msra.mxu0 %v6875
  %8949 = vmatprep.subr.mxu0 %v6895
  %8950 = vmatpush1.msra.mxu0 %v6894
  %8951 = vmatprep.subr.mxu0 %v6914
  %8952 = vmatpush1.msra.mxu0 %v6913
  %8953 = vmatprep.subr.mxu0 %v6933
  %8954 = vmatpush1.msra.mxu0 %v6932
  %8955 = vmatprep.subr.mxu0 %v6952
  %8956 = vmatpush1.msra.mxu0 %v6951
  %8957 = vmatprep.subr.mxu0 %v6971
  %8958 = vmatpush1.msra.mxu0 %v6970
  %8959 = vmatprep.subr.mxu0 %v6990
  %8960 = vmatpush1.msra.mxu0 %v6989
  %8961 = vmatprep.subr.mxu0 %v7009
  %8962 = vmatpush1.msra.mxu0 %v7008
  %8963 = vmatprep.subr.mxu0 %v7028
  %8964 = vmatpush1.msra.mxu0 %v7027
  %8965 = vmatprep.subr.mxu0 %v7047
  %8966 = vmatpush1.msra.mxu0 %v7046
  %8967 = vmatprep.subr.mxu0 %v7066
  %8968 = vmatpush1.msra.mxu0 %v7065
  %8969 = vmatprep.subr.mxu0 %v7085
  %8970 = vmatpush1.msra.mxu0 %v7084
  %8971 = vmatprep.subr.mxu0 %v7104
  %8972 = vmatpush1.msra.mxu0 %v7103
  %8973 = vmatprep.subr.mxu0 %v7123
  %8974 = vmatpush1.msra.mxu0 %v7122
  %8975 = vmatprep.subr.mxu0 %v7142
  %8976 = vmatpush1.msra.mxu0 %v7141
  %8977 = vmatprep.subr.mxu0 %v7161
  %8978 = vmatpush1.msra.mxu0 %v7160
  %8979 = vmatprep.subr.mxu0 %v7180
  %8980 = vmatpush1.msra.mxu0 %v7179
  %8981 = vmatprep.subr.mxu0 %v7199
  %8982 = vmatpush1.msra.mxu0 %v7198
  %8983 = vmatprep.subr.mxu0 %v7218
  %8984 = vmatpush1.msra.mxu0 %v7217
  %8985 = vmatprep.mubr.f32.mxu0 %v6591
  %8986 = vmatmul.mubr.f32.gmra.mrb[0].mxu0 %v6590
  %v8987 = vpop.f32.mrb[0].mxu0
  %v8988 = vpop.f32.mrb[0].mxu0
  %v8989 = vadd.f32 %v7309, %v8988
  %8990 = vmatprep.mubr.f32.mxu0 %v6594
  %8991 = vmatmul.mubr.f32.gmra.mrb[0].mxu0 %v6593
  %v8992 = vpop.f32.mrb[0].mxu0
  %v8993 = vpop.f32.mrb[0].mxu0
  %v8994 = vadd.f32 %v7314, %v8993
  %8995 = vmatprep.mubr.f32.mxu0 %v6597
  %8996 = vmatmul.mubr.f32.gmra.mrb[0].mxu0 %v6596
  %v8997 = vpop.f32.mrb[0].mxu0
  %v8998 = vpop.f32.mrb[0].mxu0
  %v8999 = vadd.f32 %v7319, %v8998
  %9000 = vmatprep.mubr.f32.mxu0 %v6600
  %9001 = vmatmul.mubr.f32.gmra.mrb[0].mxu0 %v6599
  %v9002 = vpop.f32.mrb[0].mxu0
  %v9003 = vpop.f32.mrb[0].mxu0
  %v9004 = vadd.f32 %v7324, %v9003
  %9005 = vmatprep.mubr.f32.mxu0 %v6603
  %9006 = vmatmul.mubr.f32.gmra.mrb[0].mxu0 %v6602
  %v9007 = vpop.f32.mrb[0].mxu0
  %v9008 = vpop.f32.mrb[0].mxu0
  %v9009 = vadd.f32 %v7329, %v9008
  %9010 = vmatprep.mubr.f32.mxu0 %v6606
  %9011 = vmatmul.mubr.f32.gmra.mrb[0].mxu0 %v6605
  %v9012 = vpop.f32.mrb[0].mxu0
  %v9013 = vpop.f32.mrb[0].mxu0
  %v9014 = vadd.f32 %v7334, %v9013
  %9015 = vmatprep.mubr.f32.mxu0 %v6609
  %9016 = vmatmul.mubr.f32.gmra.mrb[0].mxu0 %v6608
  %v9017 = vpop.f32.mrb[0].mxu0
  %v9018 = vpop.f32.mrb[0].mxu0
  %v9019 = vadd.f32 %v7339, %v9018
  %9020 = vmatprep.mubr.f32.mxu0 %v6612
  %9021 = vmatmul.mubr.f32.gmra.mrb[0].mxu0 %v6611
  %v9022 = vpop.f32.mrb[0].mxu0
  %v9023 = vpop.f32.mrb[0].mxu0
  %v9024 = vadd.f32 %v7344, %v9023
  %9025 = vdwg.mxu0
  %9026 = vmatprep.subr.mxu0 %v7237
  %9027 = vmatpush1.msra.mxu0 %v7236
  %9028 = vmatprep.subr.mxu0 %v7256
  %9029 = vmatpush1.msra.mxu0 %v7255
  %9030 = vmatprep.subr.mxu0 %v7275
  %9031 = vmatpush1.msra.mxu0 %v7274
  %9032 = vmatprep.subr.mxu0 %v7294
  %9033 = vmatpush1.msra.mxu0 %v7293
  %9034 = vmatprep.subr.mxu0 0.0
  %9035 = vmatpush1.msra.mxu0 0.0
  %9036 = vmatprep.subr.mxu0 0.0
  %9037 = vmatpush1.msra.mxu0 0.0
  %9038 = vmatprep.subr.mxu0 0.0
  %9039 = vmatpush1.msra.mxu0 0.0
  %9040 = vmatprep.subr.mxu0 0.0
  %9041 = vmatpush1.msra.mxu0 0.0
  %9042 = vmatprep.subr.mxu0 0.0
  %9043 = vmatpush1.msra.mxu0 0.0
  %9044 = vmatprep.subr.mxu0 0.0
  %9045 = vmatpush1.msra.mxu0 0.0
  %9046 = vmatprep.subr.mxu0 0.0
  %9047 = vmatpush1.msra.mxu0 0.0
  %9048 = vmatprep.subr.mxu0 0.0
  %9049 = vmatpush1.msra.mxu0 0.0
  %9050 = vmatprep.subr.mxu0 0.0
  %9051 = vmatpush1.msra.mxu0 0.0
  %9052 = vmatprep.subr.mxu0 0.0
  %9053 = vmatpush1.msra.mxu0 0.0
  %9054 = vmatprep.subr.mxu0 0.0
  %9055 = vmatpush1.msra.mxu0 0.0
  %9056 = vmatprep.subr.mxu0 0.0
  %9057 = vmatpush1.msra.mxu0 0.0
  %9058 = vmatprep.subr.mxu0 0.0
  %9059 = vmatpush1.msra.mxu0 0.0
  %9060 = vmatprep.subr.mxu0 0.0
  %9061 = vmatpush1.msra.mxu0 0.0
  %9062 = vmatprep.subr.mxu0 0.0
  %9063 = vmatpush1.msra.mxu0 0.0
  %9064 = vmatprep.subr.mxu0 0.0
  %9065 = vmatpush1.msra.mxu0 0.0
  %9066 = vmatprep.subr.mxu0 0.0
  %9067 = vmatpush1.msra.mxu0 0.0
  %9068 = vmatprep.subr.mxu0 0.0
  %9069 = vmatpush1.msra.mxu0 0.0
  %9070 = vmatprep.subr.mxu0 0.0
  %9071 = vmatpush1.msra.mxu0 0.0
  %9072 = vmatprep.subr.mxu0 0.0
  %9073 = vmatpush1.msra.mxu0 0.0
  %9074 = vmatprep.subr.mxu0 0.0
  %9075 = vmatpush1.msra.mxu0 0.0
  %9076 = vmatprep.subr.mxu0 0.0
  %9077 = vmatpush1.msra.mxu0 0.0
  %9078 = vmatprep.subr.mxu0 0.0
  %9079 = vmatpush1.msra.mxu0 0.0
  %9080 = vmatprep.subr.mxu0 0.0
  %9081 = vmatpush1.msra.mxu0 0.0
  %9082 = vmatprep.subr.mxu0 0.0
  %9083 = vmatpush1.msra.mxu0 0.0
  %9084 = vmatprep.subr.mxu0 0.0
  %9085 = vmatpush1.msra.mxu0 0.0
  %9086 = vmatprep.subr.mxu0 0.0
  %9087 = vmatpush1.msra.mxu0 0.0
  %9088 = vmatprep.subr.mxu0 0.0
  %9089 = vmatpush1.msra.mxu0 0.0
  %9090 = vmatprep.mubr.f32.mxu0 0.0
  %9091 = vmatmul.mubr.f32.gmra.mrb[0].mxu0 %v7348
  %v9092 = vpop.f32.mrb[0].mxu0
  %v9093 = vpop.f32.mrb[0].mxu0
  %v9094 = vadd.f32 %v8989, %v9093
  %9095 = vmatprep.mubr.f32.mxu0 0.0
  %9096 = vmatmul.mubr.f32.gmra.mrb[0].mxu0 %v7351
  %v9097 = vpop.f32.mrb[0].mxu0
  %v9098 = vpop.f32.mrb[0].mxu0
  %v9099 = vadd.f32 %v8994, %v9098
  %9100 = vmatprep.mubr.f32.mxu0 0.0
  %9101 = vmatmul.mubr.f32.gmra.mrb[0].mxu0 %v7354
  %v9102 = vpop.f32.mrb[0].mxu0
  %v9103 = vpop.f32.mrb[0].mxu0
  %v9104 = vadd.f32 %v8999, %v9103
  %9105 = vmatprep.mubr.f32.mxu0 0.0
  %9106 = vmatmul.mubr.f32.gmra.mrb[0].mxu0 %v7357
  %v9107 = vpop.f32.mrb[0].mxu0
  %v9108 = vpop.f32.mrb[0].mxu0
  %v9109 = vadd.f32 %v9004, %v9108
  %9110 = vmatprep.mubr.f32.mxu0 0.0
  %9111 = vmatmul.mubr.f32.gmra.mrb[0].mxu0 %v7360
  %v9112 = vpop.f32.mrb[0].mxu0
  %v9113 = vpop.f32.mrb[0].mxu0
  %v9114 = vadd.f32 %v9009, %v9113
  %9115 = vmatprep.mubr.f32.mxu0 0.0
  %9116 = vmatmul.mubr.f32.gmra.mrb[0].mxu0 %v7363
  %v9117 = vpop.f32.mrb[0].mxu0
  %v9118 = vpop.f32.mrb[0].mxu0
  %v9119 = vadd.f32 %v9014, %v9118
  %9120 = vmatprep.mubr.f32.mxu0 0.0
  %9121 = vmatmul.mubr.f32.gmra.mrb[0].mxu0 %v7366
  %v9122 = vpop.f32.mrb[0].mxu0
  %v9123 = vpop.f32.mrb[0].mxu0
  %v9124 = vadd.f32 %v9019, %v9123
  %9125 = vmatprep.mubr.f32.mxu0 0.0
  %9126 = vmatmul.mubr.f32.gmra.mrb[0].mxu0 %v7369
  %v9127 = vpop.f32.mrb[0].mxu0
  %v9128 = vpop.f32.mrb[0].mxu0
  %v9129 = vadd.f32 %v9024, %v9128
  %9130 = vdwg.mxu0
  %9131 = vmatprep.subr.mxu0 %v6631
  %9132 = vmatpush1.msra.mxu0 %v6630
  %9133 = vmatprep.subr.mxu0 %v6650
  %9134 = vmatpush1.msra.mxu0 %v6649
  %9135 = vmatprep.subr.mxu0 %v6669
  %9136 = vmatpush1.msra.mxu0 %v6668
  %9137 = vmatprep.subr.mxu0 %v6688
  %9138 = vmatpush1.msra.mxu0 %v6687
  %9139 = vmatprep.subr.mxu0 %v6707
  %9140 = vmatpush1.msra.mxu0 %v6706
  %9141 = vmatprep.subr.mxu0 %v6726
  %9142 = vmatpush1.msra.mxu0 %v6725
  %9143 = vmatprep.subr.mxu0 %v6745
  %9144 = vmatpush1.msra.mxu0 %v6744
  %9145 = vmatprep.subr.mxu0 %v6764
  %9146 = vmatpush1.msra.mxu0 %v6763
  %9147 = vmatprep.subr.mxu0 %v6783
  %9148 = vmatpush1.msra.mxu0 %v6782
  %9149 = vmatprep.subr.mxu0 %v6802
  %9150 = vmatpush1.msra.mxu0 %v6801
  %9151 = vmatprep.subr.mxu0 %v6821
  %9152 = vmatpush1.msra.mxu0 %v6820
  %9153 = vmatprep.subr.mxu0 %v6840
  %9154 = vmatpush1.msra.mxu0 %v6839
  %9155 = vmatprep.subr.mxu0 %v6859
  %9156 = vmatpush1.msra.mxu0 %v6858
  %9157 = vmatprep.subr.mxu0 %v6878
  %9158 = vmatpush1.msra.mxu0 %v6877
  %9159 = vmatprep.subr.mxu0 %v6897
  %9160 = vmatpush1.msra.mxu0 %v6896
  %9161 = vmatprep.subr.mxu0 %v6916
  %9162 = vmatpush1.msra.mxu0 %v6915
  %9163 = vmatprep.subr.mxu0 %v6935
  %9164 = vmatpush1.msra.mxu0 %v6934
  %9165 = vmatprep.subr.mxu0 %v6954
  %9166 = vmatpush1.msra.mxu0 %v6953
  %9167 = vmatprep.subr.mxu0 %v6973
  %9168 = vmatpush1.msra.mxu0 %v6972
  %9169 = vmatprep.subr.mxu0 %v6992
  %9170 = vmatpush1.msra.mxu0 %v6991
  %9171 = vmatprep.subr.mxu0 %v7011
  %9172 = vmatpush1.msra.mxu0 %v7010
  %9173 = vmatprep.subr.mxu0 %v7030
  %9174 = vmatpush1.msra.mxu0 %v7029
  %9175 = vmatprep.subr.mxu0 %v7049
  %9176 = vmatpush1.msra.mxu0 %v7048
  %9177 = vmatprep.subr.mxu0 %v7068
  %9178 = vmatpush1.msra.mxu0 %v7067
  %9179 = vmatprep.subr.mxu0 %v7087
  %9180 = vmatpush1.msra.mxu0 %v7086
  %9181 = vmatprep.subr.mxu0 %v7106
  %9182 = vmatpush1.msra.mxu0 %v7105
  %9183 = vmatprep.subr.mxu0 %v7125
  %9184 = vmatpush1.msra.mxu0 %v7124
  %9185 = vmatprep.subr.mxu0 %v7144
  %9186 = vmatpush1.msra.mxu0 %v7143
  %9187 = vmatprep.subr.mxu0 %v7163
  %9188 = vmatpush1.msra.mxu0 %v7162
  %9189 = vmatprep.subr.mxu0 %v7182
  %9190 = vmatpush1.msra.mxu0 %v7181
  %9191 = vmatprep.subr.mxu0 %v7201
  %9192 = vmatpush1.msra.mxu0 %v7200
  %9193 = vmatprep.subr.mxu0 %v7220
  %9194 = vmatpush1.msra.mxu0 %v7219
  %9195 = vmatprep.mubr.f32.mxu0 %v6591
  %9196 = vmatmul.mubr.f32.gmra.mrb[0].mxu0 %v6590
  %v9197 = vpop.f32.mrb[0].mxu0
  %v9198 = vadd.f32 %v7309, %v9197
  %v9199 = vpop.f32.mrb[0].mxu0
  %v9200 = vadd.f32 %v7309, %v9199
  %9201 = vmatprep.mubr.f32.mxu0 %v6594
  %9202 = vmatmul.mubr.f32.gmra.mrb[0].mxu0 %v6593
  %v9203 = vpop.f32.mrb[0].mxu0
  %v9204 = vadd.f32 %v7314, %v9203
  %v9205 = vpop.f32.mrb[0].mxu0
  %v9206 = vadd.f32 %v7314, %v9205
  %9207 = vmatprep.mubr.f32.mxu0 %v6597
  %9208 = vmatmul.mubr.f32.gmra.mrb[0].mxu0 %v6596
  %v9209 = vpop.f32.mrb[0].mxu0
  %v9210 = vadd.f32 %v7319, %v9209
  %v9211 = vpop.f32.mrb[0].mxu0
  %v9212 = vadd.f32 %v7319, %v9211
  %9213 = vmatprep.mubr.f32.mxu0 %v6600
  %9214 = vmatmul.mubr.f32.gmra.mrb[0].mxu0 %v6599
  %v9215 = vpop.f32.mrb[0].mxu0
  %v9216 = vadd.f32 %v7324, %v9215
  %v9217 = vpop.f32.mrb[0].mxu0
  %v9218 = vadd.f32 %v7324, %v9217
  %9219 = vmatprep.mubr.f32.mxu0 %v6603
  %9220 = vmatmul.mubr.f32.gmra.mrb[0].mxu0 %v6602
  %v9221 = vpop.f32.mrb[0].mxu0
  %v9222 = vadd.f32 %v7329, %v9221
  %v9223 = vpop.f32.mrb[0].mxu0
  %v9224 = vadd.f32 %v7329, %v9223
  %9225 = vmatprep.mubr.f32.mxu0 %v6606
  %9226 = vmatmul.mubr.f32.gmra.mrb[0].mxu0 %v6605
  %v9227 = vpop.f32.mrb[0].mxu0
  %v9228 = vadd.f32 %v7334, %v9227
  %v9229 = vpop.f32.mrb[0].mxu0
  %v9230 = vadd.f32 %v7334, %v9229
  %9231 = vmatprep.mubr.f32.mxu0 %v6609
  %9232 = vmatmul.mubr.f32.gmra.mrb[0].mxu0 %v6608
  %v9233 = vpop.f32.mrb[0].mxu0
  %v9234 = vadd.f32 %v7339, %v9233
  %v9235 = vpop.f32.mrb[0].mxu0
  %v9236 = vadd.f32 %v7339, %v9235
  %9237 = vmatprep.mubr.f32.mxu0 %v6612
  %9238 = vmatmul.mubr.f32.gmra.mrb[0].mxu0 %v6611
  %v9239 = vpop.f32.mrb[0].mxu0
  %v9240 = vadd.f32 %v7344, %v9239
  %v9241 = vpop.f32.mrb[0].mxu0
  %v9242 = vadd.f32 %v7344, %v9241
  %9243 = vdwg.mxu0
  %9244 = vmatprep.subr.mxu0 %v7239
  %9245 = vmatpush1.msra.mxu0 %v7238
  %9246 = vmatprep.subr.mxu0 %v7258
  %9247 = vmatpush1.msra.mxu0 %v7257
  %9248 = vmatprep.subr.mxu0 %v7277
  %9249 = vmatpush1.msra.mxu0 %v7276
  %9250 = vmatprep.subr.mxu0 %v7296
  %9251 = vmatpush1.msra.mxu0 %v7295
  %9252 = vmatprep.subr.mxu0 0.0
  %9253 = vmatpush1.msra.mxu0 0.0
  %9254 = vmatprep.subr.mxu0 0.0
  %9255 = vmatpush1.msra.mxu0 0.0
  %9256 = vmatprep.subr.mxu0 0.0
  %9257 = vmatpush1.msra.mxu0 0.0
  %9258 = vmatprep.subr.mxu0 0.0
  %9259 = vmatpush1.msra.mxu0 0.0
  %9260 = vmatprep.subr.mxu0 0.0
  %9261 = vmatpush1.msra.mxu0 0.0
  %9262 = vmatprep.subr.mxu0 0.0
  %9263 = vmatpush1.msra.mxu0 0.0
  %9264 = vmatprep.subr.mxu0 0.0
  %9265 = vmatpush1.msra.mxu0 0.0
  %9266 = vmatprep.subr.mxu0 0.0
  %9267 = vmatpush1.msra.mxu0 0.0
  %9268 = vmatprep.subr.mxu0 0.0
  %9269 = vmatpush1.msra.mxu0 0.0
  %9270 = vmatprep.subr.mxu0 0.0
  %9271 = vmatpush1.msra.mxu0 0.0
  %9272 = vmatprep.subr.mxu0 0.0
  %9273 = vmatpush1.msra.mxu0 0.0
  %9274 = vmatprep.subr.mxu0 0.0
  %9275 = vmatpush1.msra.mxu0 0.0
  %9276 = vmatprep.subr.mxu0 0.0
  %9277 = vmatpush1.msra.mxu0 0.0
  %9278 = vmatprep.subr.mxu0 0.0
  %9279 = vmatpush1.msra.mxu0 0.0
  %9280 = vmatprep.subr.mxu0 0.0
  %9281 = vmatpush1.msra.mxu0 0.0
  %9282 = vmatprep.subr.mxu0 0.0
  %9283 = vmatpush1.msra.mxu0 0.0
  %9284 = vmatprep.subr.mxu0 0.0
  %9285 = vmatpush1.msra.mxu0 0.0
  %9286 = vmatprep.subr.mxu0 0.0
  %9287 = vmatpush1.msra.mxu0 0.0
  %9288 = vmatprep.subr.mxu0 0.0
  %9289 = vmatpush1.msra.mxu0 0.0
  %9290 = vmatprep.subr.mxu0 0.0
  %9291 = vmatpush1.msra.mxu0 0.0
  %9292 = vmatprep.subr.mxu0 0.0
  %9293 = vmatpush1.msra.mxu0 0.0
  %9294 = vmatprep.subr.mxu0 0.0
  %9295 = vmatpush1.msra.mxu0 0.0
  %9296 = vmatprep.subr.mxu0 0.0
  %9297 = vmatpush1.msra.mxu0 0.0
  %9298 = vmatprep.subr.mxu0 0.0
  %9299 = vmatpush1.msra.mxu0 0.0
  %9300 = vmatprep.subr.mxu0 0.0
  %9301 = vmatpush1.msra.mxu0 0.0
  %9302 = vmatprep.subr.mxu0 0.0
  %9303 = vmatpush1.msra.mxu0 0.0
  %9304 = vmatprep.subr.mxu0 0.0
  %9305 = vmatpush1.msra.mxu0 0.0
  %9306 = vmatprep.subr.mxu0 0.0
  %9307 = vmatpush1.msra.mxu0 0.0
  %9308 = vmatprep.mubr.f32.mxu0 0.0
  %9309 = vmatmul.mubr.f32.gmra.mrb[0].mxu0 %v7348
  %v9310 = vpop.f32.mrb[0].mxu0
  %v9311 = vadd.f32 %v9198, %v9310
  %v9312 = vpop.f32.mrb[0].mxu0
  %v9313 = vadd.f32 %v9200, %v9312
  %9314 = vmatprep.mubr.f32.mxu0 0.0
  %9315 = vmatmul.mubr.f32.gmra.mrb[0].mxu0 %v7351
  %v9316 = vpop.f32.mrb[0].mxu0
  %v9317 = vadd.f32 %v9204, %v9316
  %v9318 = vpop.f32.mrb[0].mxu0
  %v9319 = vadd.f32 %v9206, %v9318
  %9320 = vmatprep.mubr.f32.mxu0 0.0
  %9321 = vmatmul.mubr.f32.gmra.mrb[0].mxu0 %v7354
  %v9322 = vpop.f32.mrb[0].mxu0
  %v9323 = vadd.f32 %v9210, %v9322
  %v9324 = vpop.f32.mrb[0].mxu0
  %v9325 = vadd.f32 %v9212, %v9324
  %9326 = vmatprep.mubr.f32.mxu0 0.0
  %9327 = vmatmul.mubr.f32.gmra.mrb[0].mxu0 %v7357
  %v9328 = vpop.f32.mrb[0].mxu0
  %v9329 = vadd.f32 %v9216, %v9328
  %v9330 = vpop.f32.mrb[0].mxu0
  %v9331 = vadd.f32 %v9218, %v9330
  %9332 = vmatprep.mubr.f32.mxu0 0.0
  %9333 = vmatmul.mubr.f32.gmra.mrb[0].mxu0 %v7360
  %v9334 = vpop.f32.mrb[0].mxu0
  %v9335 = vadd.f32 %v9222, %v9334
  %v9336 = vpop.f32.mrb[0].mxu0
  %v9337 = vadd.f32 %v9224, %v9336
  %9338 = vmatprep.mubr.f32.mxu0 0.0
  %9339 = vmatmul.mubr.f32.gmra.mrb[0].mxu0 %v7363
  %v9340 = vpop.f32.mrb[0].mxu0
  %v9341 = vadd.f32 %v9228, %v9340
  %v9342 = vpop.f32.mrb[0].mxu0
  %v9343 = vadd.f32 %v9230, %v9342
  %9344 = vmatprep.mubr.f32.mxu0 0.0
  %9345 = vmatmul.mubr.f32.gmra.mrb[0].mxu0 %v7366
  %v9346 = vpop.f32.mrb[0].mxu0
  %v9347 = vadd.f32 %v9234, %v9346
  %v9348 = vpop.f32.mrb[0].mxu0
  %v9349 = vadd.f32 %v9236, %v9348
  %9350 = vmatprep.mubr.f32.mxu0 0.0
  %9351 = vmatmul.mubr.f32.gmra.mrb[0].mxu0 %v7369
  %v9352 = vpop.f32.mrb[0].mxu0
  %v9353 = vadd.f32 %v9240, %v9352
  %v9354 = vpop.f32.mrb[0].mxu0
  %v9355 = vadd.f32 %v9242, %v9354
  %9356 = vdwg.mxu0
  %9357 = vmatprep.subr.mxu0 0.0
  %9358 = vmatpush1.msra.mxu0 %v6632
  %9359 = vmatprep.subr.mxu0 0.0
  %9360 = vmatpush1.msra.mxu0 %v6651
  %9361 = vmatprep.subr.mxu0 0.0
  %9362 = vmatpush1.msra.mxu0 %v6670
  %9363 = vmatprep.subr.mxu0 0.0
  %9364 = vmatpush1.msra.mxu0 %v6689
  %9365 = vmatprep.subr.mxu0 0.0
  %9366 = vmatpush1.msra.mxu0 %v6708
  %9367 = vmatprep.subr.mxu0 0.0
  %9368 = vmatpush1.msra.mxu0 %v6727
  %9369 = vmatprep.subr.mxu0 0.0
  %9370 = vmatpush1.msra.mxu0 %v6746
  %9371 = vmatprep.subr.mxu0 0.0
  %9372 = vmatpush1.msra.mxu0 %v6765
  %9373 = vmatprep.subr.mxu0 0.0
  %9374 = vmatpush1.msra.mxu0 %v6784
  %9375 = vmatprep.subr.mxu0 0.0
  %9376 = vmatpush1.msra.mxu0 %v6803
  %9377 = vmatprep.subr.mxu0 0.0
  %9378 = vmatpush1.msra.mxu0 %v6822
  %9379 = vmatprep.subr.mxu0 0.0
  %9380 = vmatpush1.msra.mxu0 %v6841
  %9381 = vmatprep.subr.mxu0 0.0
  %9382 = vmatpush1.msra.mxu0 %v6860
  %9383 = vmatprep.subr.mxu0 0.0
  %9384 = vmatpush1.msra.mxu0 %v6879
  %9385 = vmatprep.subr.mxu0 0.0
  %9386 = vmatpush1.msra.mxu0 %v6898
  %9387 = vmatprep.subr.mxu0 0.0
  %9388 = vmatpush1.msra.mxu0 %v6917
  %9389 = vmatprep.subr.mxu0 0.0
  %9390 = vmatpush1.msra.mxu0 %v6936
  %9391 = vmatprep.subr.mxu0 0.0
  %9392 = vmatpush1.msra.mxu0 %v6955
  %9393 = vmatprep.subr.mxu0 0.0
  %9394 = vmatpush1.msra.mxu0 %v6974
  %9395 = vmatprep.subr.mxu0 0.0
  %9396 = vmatpush1.msra.mxu0 %v6993
  %9397 = vmatprep.subr.mxu0 0.0
  %9398 = vmatpush1.msra.mxu0 %v7012
  %9399 = vmatprep.subr.mxu0 0.0
  %9400 = vmatpush1.msra.mxu0 %v7031
  %9401 = vmatprep.subr.mxu0 0.0
  %9402 = vmatpush1.msra.mxu0 %v7050
  %9403 = vmatprep.subr.mxu0 0.0
  %9404 = vmatpush1.msra.mxu0 %v7069
  %9405 = vmatprep.subr.mxu0 0.0
  %9406 = vmatpush1.msra.mxu0 %v7088
  %9407 = vmatprep.subr.mxu0 0.0
  %9408 = vmatpush1.msra.mxu0 %v7107
  %9409 = vmatprep.subr.mxu0 0.0
  %9410 = vmatpush1.msra.mxu0 %v7126
  %9411 = vmatprep.subr.mxu0 0.0
  %9412 = vmatpush1.msra.mxu0 %v7145
  %9413 = vmatprep.subr.mxu0 0.0
  %9414 = vmatpush1.msra.mxu0 %v7164
  %9415 = vmatprep.subr.mxu0 0.0
  %9416 = vmatpush1.msra.mxu0 %v7183
  %9417 = vmatprep.subr.mxu0 0.0
  %9418 = vmatpush1.msra.mxu0 %v7202
  %9419 = vmatprep.subr.mxu0 0.0
  %9420 = vmatpush1.msra.mxu0 %v7221
  %9421 = vmatprep.mubr.f32.mxu0 %v6591
  %9422 = vmatmul.mubr.f32.gmra.mrb[0].mxu0 %v6590
  %v9423 = vpop.f32.mrb[0].mxu0
  %v9424 = vadd.f32 %v7309, %v9423
  %v9425 = vpop.f32.mrb[0].mxu0
  %9426 = vmatprep.mubr.f32.mxu0 %v6594
  %9427 = vmatmul.mubr.f32.gmra.mrb[0].mxu0 %v6593
  %v9428 = vpop.f32.mrb[0].mxu0
  %v9429 = vadd.f32 %v7314, %v9428
  %v9430 = vpop.f32.mrb[0].mxu0
  %9431 = vmatprep.mubr.f32.mxu0 %v6597
  %9432 = vmatmul.mubr.f32.gmra.mrb[0].mxu0 %v6596
  %v9433 = vpop.f32.mrb[0].mxu0
  %v9434 = vadd.f32 %v7319, %v9433
  %v9435 = vpop.f32.mrb[0].mxu0
  %9436 = vmatprep.mubr.f32.mxu0 %v6600
  %9437 = vmatmul.mubr.f32.gmra.mrb[0].mxu0 %v6599
  %v9438 = vpop.f32.mrb[0].mxu0
  %v9439 = vadd.f32 %v7324, %v9438
  %v9440 = vpop.f32.mrb[0].mxu0
  %9441 = vmatprep.mubr.f32.mxu0 %v6603
  %9442 = vmatmul.mubr.f32.gmra.mrb[0].mxu0 %v6602
  %v9443 = vpop.f32.mrb[0].mxu0
  %v9444 = vadd.f32 %v7329, %v9443
  %v9445 = vpop.f32.mrb[0].mxu0
  %9446 = vmatprep.mubr.f32.mxu0 %v6606
  %9447 = vmatmul.mubr.f32.gmra.mrb[0].mxu0 %v6605
  %v9448 = vpop.f32.mrb[0].mxu0
  %v9449 = vadd.f32 %v7334, %v9448
  %v9450 = vpop.f32.mrb[0].mxu0
  %9451 = vmatprep.mubr.f32.mxu0 %v6609
  %9452 = vmatmul.mubr.f32.gmra.mrb[0].mxu0 %v6608
  %v9453 = vpop.f32.mrb[0].mxu0
  %v9454 = vadd.f32 %v7339, %v9453
  %v9455 = vpop.f32.mrb[0].mxu0
  %9456 = vmatprep.mubr.f32.mxu0 %v6612
  %9457 = vmatmul.mubr.f32.gmra.mrb[0].mxu0 %v6611
  %v9458 = vpop.f32.mrb[0].mxu0
  %v9459 = vadd.f32 %v7344, %v9458
  %v9460 = vpop.f32.mrb[0].mxu0
  %9461 = vdwg.mxu0
  %9462 = vmatprep.subr.mxu0 0.0
  %9463 = vmatpush1.msra.mxu0 %v7240
  %9464 = vmatprep.subr.mxu0 0.0
  %9465 = vmatpush1.msra.mxu0 %v7259
  %9466 = vmatprep.subr.mxu0 0.0
  %9467 = vmatpush1.msra.mxu0 %v7278
  %9468 = vmatprep.subr.mxu0 0.0
  %9469 = vmatpush1.msra.mxu0 %v7297
  %9470 = vmatprep.subr.mxu0 0.0
  %9471 = vmatpush1.msra.mxu0 0.0
  %9472 = vmatprep.subr.mxu0 0.0
  %9473 = vmatpush1.msra.mxu0 0.0
  %9474 = vmatprep.subr.mxu0 0.0
  %9475 = vmatpush1.msra.mxu0 0.0
  %9476 = vmatprep.subr.mxu0 0.0
  %9477 = vmatpush1.msra.mxu0 0.0
  %9478 = vmatprep.subr.mxu0 0.0
  %9479 = vmatpush1.msra.mxu0 0.0
  %9480 = vmatprep.subr.mxu0 0.0
  %9481 = vmatpush1.msra.mxu0 0.0
  %9482 = vmatprep.subr.mxu0 0.0
  %9483 = vmatpush1.msra.mxu0 0.0
  %9484 = vmatprep.subr.mxu0 0.0
  %9485 = vmatpush1.msra.mxu0 0.0
  %9486 = vmatprep.subr.mxu0 0.0
  %9487 = vmatpush1.msra.mxu0 0.0
  %9488 = vmatprep.subr.mxu0 0.0
  %9489 = vmatpush1.msra.mxu0 0.0
  %9490 = vmatprep.subr.mxu0 0.0
  %9491 = vmatpush1.msra.mxu0 0.0
  %9492 = vmatprep.subr.mxu0 0.0
  %9493 = vmatpush1.msra.mxu0 0.0
  %9494 = vmatprep.subr.mxu0 0.0
  %9495 = vmatpush1.msra.mxu0 0.0
  %9496 = vmatprep.subr.mxu0 0.0
  %9497 = vmatpush1.msra.mxu0 0.0
  %9498 = vmatprep.subr.mxu0 0.0
  %9499 = vmatpush1.msra.mxu0 0.0
  %9500 = vmatprep.subr.mxu0 0.0
  %9501 = vmatpush1.msra.mxu0 0.0
  %9502 = vmatprep.subr.mxu0 0.0
  %9503 = vmatpush1.msra.mxu0 0.0
  %9504 = vmatprep.subr.mxu0 0.0
  %9505 = vmatpush1.msra.mxu0 0.0
  %9506 = vmatprep.subr.mxu0 0.0
  %9507 = vmatpush1.msra.mxu0 0.0
  %9508 = vmatprep.subr.mxu0 0.0
  %9509 = vmatpush1.msra.mxu0 0.0
  %9510 = vmatprep.subr.mxu0 0.0
  %9511 = vmatpush1.msra.mxu0 0.0
  %9512 = vmatprep.subr.mxu0 0.0
  %9513 = vmatpush1.msra.mxu0 0.0
  %9514 = vmatprep.subr.mxu0 0.0
  %9515 = vmatpush1.msra.mxu0 0.0
  %9516 = vmatprep.subr.mxu0 0.0
  %9517 = vmatpush1.msra.mxu0 0.0
  %9518 = vmatprep.subr.mxu0 0.0
  %9519 = vmatpush1.msra.mxu0 0.0
  %9520 = vmatprep.subr.mxu0 0.0
  %9521 = vmatpush1.msra.mxu0 0.0
  %9522 = vmatprep.subr.mxu0 0.0
  %9523 = vmatpush1.msra.mxu0 0.0
  %9524 = vmatprep.subr.mxu0 0.0
  %9525 = vmatpush1.msra.mxu0 0.0
  %9526 = vmatprep.mubr.f32.mxu0 0.0
  %9527 = vmatmul.mubr.f32.gmra.mrb[0].mxu0 %v7348
  %v9528 = vpop.f32.mrb[0].mxu0
  %v9529 = vadd.f32 %v9424, %v9528
  %v9530 = vpop.f32.mrb[0].mxu0
  %9531 = vmatprep.mubr.f32.mxu0 0.0
  %9532 = vmatmul.mubr.f32.gmra.mrb[0].mxu0 %v7351
  %v9533 = vpop.f32.mrb[0].mxu0
  %v9534 = vadd.f32 %v9429, %v9533
  %v9535 = vpop.f32.mrb[0].mxu0
  %9536 = vmatprep.mubr.f32.mxu0 0.0
  %9537 = vmatmul.mubr.f32.gmra.mrb[0].mxu0 %v7354
  %v9538 = vpop.f32.mrb[0].mxu0
  %v9539 = vadd.f32 %v9434, %v9538
  %v9540 = vpop.f32.mrb[0].mxu0
  %9541 = vmatprep.mubr.f32.mxu0 0.0
  %9542 = vmatmul.mubr.f32.gmra.mrb[0].mxu0 %v7357
  %v9543 = vpop.f32.mrb[0].mxu0
  %v9544 = vadd.f32 %v9439, %v9543
  %v9545 = vpop.f32.mrb[0].mxu0
  %9546 = vmatprep.mubr.f32.mxu0 0.0
  %9547 = vmatmul.mubr.f32.gmra.mrb[0].mxu0 %v7360
  %v9548 = vpop.f32.mrb[0].mxu0
  %v9549 = vadd.f32 %v9444, %v9548
  %v9550 = vpop.f32.mrb[0].mxu0
  %9551 = vmatprep.mubr.f32.mxu0 0.0
  %9552 = vmatmul.mubr.f32.gmra.mrb[0].mxu0 %v7363
  %v9553 = vpop.f32.mrb[0].mxu0
  %v9554 = vadd.f32 %v9449, %v9553
  %v9555 = vpop.f32.mrb[0].mxu0
  %9556 = vmatprep.mubr.f32.mxu0 0.0
  %9557 = vmatmul.mubr.f32.gmra.mrb[0].mxu0 %v7366
  %v9558 = vpop.f32.mrb[0].mxu0
  %v9559 = vadd.f32 %v9454, %v9558
  %v9560 = vpop.f32.mrb[0].mxu0
  %9561 = vmatprep.mubr.f32.mxu0 0.0
  %9562 = vmatmul.mubr.f32.gmra.mrb[0].mxu0 %v7369
  %v9563 = vpop.f32.mrb[0].mxu0
  %v9564 = vadd.f32 %v9459, %v9563
  %v9565 = vpop.f32.mrb[0].mxu0
  %9566 = vdwg.mxu0
  %v9567 = vmax.f32 %v7551, 0.0
  %v9568 = vmax.f32 %v7553, 0.0
  %v9569 = vmax.f32 %v7777, 0.0
  %v9570 = vmax.f32 %v7779, 0.0
  %v9571 = vmax.f32 %v7996, 0.0
  %v9572 = vmax.f32 %v8213, 0.0
  %v9573 = vmax.f32 %v8215, 0.0
  %v9574 = vmax.f32 %v8431, 0.0
  %v9575 = vmax.f32 %v8649, 0.0
  %v9576 = vmax.f32 %v8651, 0.0
  %v9577 = vmax.f32 %v8875, 0.0
  %v9578 = vmax.f32 %v8877, 0.0
  %v9579 = vmax.f32 %v9094, 0.0
  %v9580 = vmax.f32 %v9311, 0.0
  %v9581 = vmax.f32 %v9313, 0.0
  %v9582 = vmax.f32 %v9529, 0.0
  %v9583 = vmax.f32 %v7557, 0.0
  %v9584 = vmax.f32 %v7559, 0.0
  %v9585 = vmax.f32 %v7783, 0.0
  %v9586 = vmax.f32 %v7785, 0.0
  %v9587 = vmax.f32 %v8001, 0.0
  %v9588 = vmax.f32 %v8219, 0.0
  %v9589 = vmax.f32 %v8221, 0.0
  %v9590 = vmax.f32 %v8436, 0.0
  %v9591 = vmax.f32 %v8655, 0.0
  %v9592 = vmax.f32 %v8657, 0.0
  %v9593 = vmax.f32 %v8881, 0.0
  %v9594 = vmax.f32 %v8883, 0.0
  %v9595 = vmax.f32 %v9099, 0.0
  %v9596 = vmax.f32 %v9317, 0.0
  %v9597 = vmax.f32 %v9319, 0.0
  %v9598 = vmax.f32 %v9534, 0.0
  %v9599 = vmax.f32 %v7563, 0.0
  %v9600 = vmax.f32 %v7565, 0.0
  %v9601 = vmax.f32 %v7789, 0.0
  %v9602 = vmax.f32 %v7791, 0.0
  %v9603 = vmax.f32 %v8006, 0.0
  %v9604 = vmax.f32 %v8225, 0.0
  %v9605 = vmax.f32 %v8227, 0.0
  %v9606 = vmax.f32 %v8441, 0.0
  %v9607 = vmax.f32 %v8661, 0.0
  %v9608 = vmax.f32 %v8663, 0.0
  %v9609 = vmax.f32 %v8887, 0.0
  %v9610 = vmax.f32 %v8889, 0.0
  %v9611 = vmax.f32 %v9104, 0.0
  %v9612 = vmax.f32 %v9323, 0.0
  %v9613 = vmax.f32 %v9325, 0.0
  %v9614 = vmax.f32 %v9539, 0.0
  %v9615 = vmax.f32 %v7569, 0.0
  %v9616 = vmax.f32 %v7571, 0.0
  %v9617 = vmax.f32 %v7795, 0.0
  %v9618 = vmax.f32 %v7797, 0.0
  %v9619 = vmax.f32 %v8011, 0.0
  %v9620 = vmax.f32 %v8231, 0.0
  %v9621 = vmax.f32 %v8233, 0.0
  %v9622 = vmax.f32 %v8446, 0.0
  %v9623 = vmax.f32 %v8667, 0.0
  %v9624 = vmax.f32 %v8669, 0.0
  %v9625 = vmax.f32 %v8893, 0.0
  %v9626 = vmax.f32 %v8895, 0.0
  %v9627 = vmax.f32 %v9109, 0.0
  %v9628 = vmax.f32 %v9329, 0.0
  %v9629 = vmax.f32 %v9331, 0.0
  %v9630 = vmax.f32 %v9544, 0.0
  %v9631 = vmax.f32 %v7575, 0.0
  %v9632 = vmax.f32 %v7577, 0.0
  %v9633 = vmax.f32 %v7801, 0.0
  %v9634 = vmax.f32 %v7803, 0.0
  %v9635 = vmax.f32 %v8016, 0.0
  %v9636 = vmax.f32 %v8237, 0.0
  %v9637 = vmax.f32 %v8239, 0.0
  %v9638 = vmax.f32 %v8451, 0.0
  %v9639 = vmax.f32 %v8673, 0.0
  %v9640 = vmax.f32 %v8675, 0.0
  %v9641 = vmax.f32 %v8899, 0.0
  %v9642 = vmax.f32 %v8901, 0.0
  %v9643 = vmax.f32 %v9114, 0.0
  %v9644 = vmax.f32 %v9335, 0.0
  %v9645 = vmax.f32 %v9337, 0.0
  %v9646 = vmax.f32 %v9549, 0.0
  %v9647 = vmax.f32 %v7581, 0.0
  %v9648 = vmax.f32 %v7583, 0.0
  %v9649 = vmax.f32 %v7807, 0.0
  %v9650 = vmax.f32 %v7809, 0.0
  %v9651 = vmax.f32 %v8021, 0.0
  %v9652 = vmax.f32 %v8243, 0.0
  %v9653 = vmax.f32 %v8245, 0.0
  %v9654 = vmax.f32 %v8456, 0.0
  %v9655 = vmax.f32 %v8679, 0.0
  %v9656 = vmax.f32 %v8681, 0.0
  %v9657 = vmax.f32 %v8905, 0.0
  %v9658 = vmax.f32 %v8907, 0.0
  %v9659 = vmax.f32 %v9119, 0.0
  %v9660 = vmax.f32 %v9341, 0.0
  %v9661 = vmax.f32 %v9343, 0.0
  %v9662 = vmax.f32 %v9554, 0.0
  %v9663 = vmax.f32 %v7587, 0.0
  %v9664 = vmax.f32 %v7589, 0.0
  %v9665 = vmax.f32 %v7813, 0.0
  %v9666 = vmax.f32 %v7815, 0.0
  %v9667 = vmax.f32 %v8026, 0.0
  %v9668 = vmax.f32 %v8249, 0.0
  %v9669 = vmax.f32 %v8251, 0.0
  %v9670 = vmax.f32 %v8461, 0.0
  %v9671 = vmax.f32 %v8685, 0.0
  %v9672 = vmax.f32 %v8687, 0.0
  %v9673 = vmax.f32 %v8911, 0.0
  %v9674 = vmax.f32 %v8913, 0.0
  %v9675 = vmax.f32 %v9124, 0.0
  %v9676 = vmax.f32 %v9347, 0.0
  %v9677 = vmax.f32 %v9349, 0.0
  %v9678 = vmax.f32 %v9559, 0.0
  %v9679 = vmax.f32 %v7593, 0.0
  %v9680 = vmax.f32 %v7595, 0.0
  %v9681 = vmax.f32 %v7819, 0.0
  %v9682 = vmax.f32 %v7821, 0.0
  %v9683 = vmax.f32 %v8031, 0.0
  %v9684 = vmax.f32 %v8255, 0.0
  %v9685 = vmax.f32 %v8257, 0.0
  %v9686 = vmax.f32 %v8466, 0.0
  %v9687 = vmax.f32 %v8691, 0.0
  %v9688 = vmax.f32 %v8693, 0.0
  %v9689 = vmax.f32 %v8917, 0.0
  %v9690 = vmax.f32 %v8919, 0.0
  %v9691 = vmax.f32 %v9129, 0.0
  %v9692 = vmax.f32 %v9353, 0.0
  %v9693 = vmax.f32 %v9355, 0.0
  %v9694 = vmax.f32 %v9564, 0.0
  %v9695 = vmax.f32 %v9567, %v9599
  %v9696 = vmax.f32 %v9568, %v9600
  %v9697 = vmax.f32 %v9569, %v9601
  %v9698 = vmax.f32 %v9570, %v9602
  %v9699 = vmax.f32 %v9571, %v9603
  %v9700 = vmax.f32 %v9572, %v9604
  %v9701 = vmax.f32 %v9573, %v9605
  %v9702 = vmax.f32 %v9574, %v9606
  %v9703 = vmax.f32 %v9575, %v9607
  %v9704 = vmax.f32 %v9576, %v9608
  %v9705 = vmax.f32 %v9577, %v9609
  %v9706 = vmax.f32 %v9578, %v9610
  %v9707 = vmax.f32 %v9579, %v9611
  %v9708 = vmax.f32 %v9580, %v9612
  %v9709 = vmax.f32 %v9581, %v9613
  %v9710 = vmax.f32 %v9582, %v9614
  %v9711 = vmax.f32 %v9583, %v9615
  %v9712 = vmax.f32 %v9584, %v9616
  %v9713 = vmax.f32 %v9585, %v9617
  %v9714 = vmax.f32 %v9586, %v9618
  %v9715 = vmax.f32 %v9587, %v9619
  %v9716 = vmax.f32 %v9588, %v9620
  %v9717 = vmax.f32 %v9589, %v9621
  %v9718 = vmax.f32 %v9590, %v9622
  %v9719 = vmax.f32 %v9591, %v9623
  %v9720 = vmax.f32 %v9592, %v9624
  %v9721 = vmax.f32 %v9593, %v9625
  %v9722 = vmax.f32 %v9594, %v9626
  %v9723 = vmax.f32 %v9595, %v9627
  %v9724 = vmax.f32 %v9596, %v9628
  %v9725 = vmax.f32 %v9597, %v9629
  %v9726 = vmax.f32 %v9598, %v9630
  %v9727 = vmax.f32 %v9631, %v9663
  %v9728 = vmax.f32 %v9632, %v9664
  %v9729 = vmax.f32 %v9633, %v9665
  %v9730 = vmax.f32 %v9634, %v9666
  %v9731 = vmax.f32 %v9635, %v9667
  %v9732 = vmax.f32 %v9636, %v9668
  %v9733 = vmax.f32 %v9637, %v9669
  %v9734 = vmax.f32 %v9638, %v9670
  %v9735 = vmax.f32 %v9639, %v9671
  %v9736 = vmax.f32 %v9640, %v9672
  %v9737 = vmax.f32 %v9641, %v9673
  %v9738 = vmax.f32 %v9642, %v9674
  %v9739 = vmax.f32 %v9643, %v9675
  %v9740 = vmax.f32 %v9644, %v9676
  %v9741 = vmax.f32 %v9645, %v9677
  %v9742 = vmax.f32 %v9646, %v9678
  %v9743 = vmax.f32 %v9647, %v9679
  %v9744 = vmax.f32 %v9648, %v9680
  %v9745 = vmax.f32 %v9649, %v9681
  %v9746 = vmax.f32 %v9650, %v9682
  %v9747 = vmax.f32 %v9651, %v9683
  %v9748 = vmax.f32 %v9652, %v9684
  %v9749 = vmax.f32 %v9653, %v9685
  %v9750 = vmax.f32 %v9654, %v9686
  %v9751 = vmax.f32 %v9655, %v9687
  %v9752 = vmax.f32 %v9656, %v9688
  %v9753 = vmax.f32 %v9657, %v9689
  %v9754 = vmax.f32 %v9658, %v9690
  %v9755 = vmax.f32 %v9659, %v9691
  %v9756 = vmax.f32 %v9660, %v9692
  %v9757 = vmax.f32 %v9661, %v9693
  %v9758 = vmax.f32 %v9662, %v9694
  %v9759 = vmax.f32 %v9695, %v9727
  %v9760 = vmax.f32 %v9696, %v9728
  %v9761 = vmax.f32 %v9697, %v9729
  %v9762 = vmax.f32 %v9698, %v9730
  %v9763 = vmax.f32 %v9699, %v9731
  %v9764 = vmax.f32 %v9700, %v9732
  %v9765 = vmax.f32 %v9701, %v9733
  %v9766 = vmax.f32 %v9702, %v9734
  %v9767 = vmax.f32 %v9703, %v9735
  %v9768 = vmax.f32 %v9704, %v9736
  %v9769 = vmax.f32 %v9705, %v9737
  %v9770 = vmax.f32 %v9706, %v9738
  %v9771 = vmax.f32 %v9707, %v9739
  %v9772 = vmax.f32 %v9708, %v9740
  %v9773 = vmax.f32 %v9709, %v9741
  %v9774 = vmax.f32 %v9710, %v9742
  %v9775 = vmax.f32 %v9711, %v9743
  %v9776 = vmax.f32 %v9712, %v9744
  %v9777 = vmax.f32 %v9713, %v9745
  %v9778 = vmax.f32 %v9714, %v9746
  %v9779 = vmax.f32 %v9715, %v9747
  %v9780 = vmax.f32 %v9716, %v9748
  %v9781 = vmax.f32 %v9717, %v9749
  %v9782 = vmax.f32 %v9718, %v9750
  %v9783 = vmax.f32 %v9719, %v9751
  %v9784 = vmax.f32 %v9720, %v9752
  %v9785 = vmax.f32 %v9721, %v9753
  %v9786 = vmax.f32 %v9722, %v9754
  %v9787 = vmax.f32 %v9723, %v9755
  %v9788 = vmax.f32 %v9724, %v9756
  %v9789 = vmax.f32 %v9725, %v9757
  %v9790 = vmax.f32 %v9726, %v9758
  %v9791 = vld [vmem:[%s5] sm:$0xff]
  %v9792 = vld [vmem:[%s5 + $0x8] sm:$0xff]
  %v9793 = vld [vmem:[%s5 + $0x10] sm:$0xff]
  %v9794 = vld [vmem:[%s5 + $0x18] sm:$0xff]
  %v9795 = vld [vmem:[%s5 + $0x20] sm:$0xff]
  %v9796 = vld [vmem:[%s5 + $0x28] sm:$0xff]
  %v9797 = vld [vmem:[%s5 + $0x30] sm:$0xff]
  %v9798 = vld [vmem:[%s5 + $0x38] sm:$0xff]
  %v9799 = vld [vmem:[%s5 + $0x40] sm:$0xff]
  %v9800 = vld [vmem:[%s5 + $0x48] sm:$0xff]
  %v9801 = vld [vmem:[%s5 + $0x50] sm:$0xff]
  %v9802 = vld [vmem:[%s5 + $0x58] sm:$0xff]
  %v9803 = vld [vmem:[%s5 + $0x60] sm:$0xff]
  %v9804 = vld [vmem:[%s5 + $0x68] sm:$0xff]
  %v9805 = vld [vmem:[%s5 + $0x70] sm:$0xff]
  %v9806 = vld [vmem:[%s5 + $0x78] sm:$0xff]
  %v9807 = vld [vmem:[%s5 + $0x80] sm:$0xff]
  %v9808 = vld [vmem:[%s5 + $0x88] sm:$0xff]
  %v9809 = vld [vmem:[%s5 + $0x90] sm:$0xff]
  %v9810 = vld [vmem:[%s5 + $0x98] sm:$0xff]
  %v9811 = vld [vmem:[%s5 + $0xa0] sm:$0xff]
  %v9812 = vld [vmem:[%s5 + $0xa8] sm:$0xff]
  %v9813 = vld [vmem:[%s5 + $0xb0] sm:$0xff]
  %v9814 = vld [vmem:[%s5 + $0xb8] sm:$0xff]
  %v9815 = vld [vmem:[%s5 + $0xc0] sm:$0xff]
  %v9816 = vld [vmem:[%s5 + $0xc8] sm:$0xff]
  %v9817 = vld [vmem:[%s5 + $0xd0] sm:$0xff]
  %v9818 = vld [vmem:[%s5 + $0xd8] sm:$0xff]
  %v9819 = vld [vmem:[%s5 + $0xe0] sm:$0xff]
  %v9820 = vld [vmem:[%s5 + $0xe8] sm:$0xff]
  %v9821 = vld [vmem:[%s5 + $0xf0] sm:$0xff]
  %v9822 = vld [vmem:[%s5 + $0xf8] sm:$0xff]
  %v9823 = vld [vmem:[%s6] sm:$0xff]
  %v9824 = vld [vmem:[%s6 + $0x8] sm:$0xff]
  %v9825 = vld [vmem:[%s6 + $0x10] sm:$0xff]
  %v9826 = vld [vmem:[%s6 + $0x18] sm:$0xff]
  %v9827 = vld [vmem:[%s6 + $0x20] sm:$0xff]
  %v9828 = vld [vmem:[%s6 + $0x28] sm:$0xff]
  %v9829 = vld [vmem:[%s6 + $0x30] sm:$0xff]
  %v9830 = vld [vmem:[%s6 + $0x38] sm:$0xff]
  %v9831 = vld [vmem:[%s6 + $0x40] sm:$0xff]
  %v9832 = vld [vmem:[%s6 + $0x48] sm:$0xff]
  %v9833 = vld [vmem:[%s6 + $0x50] sm:$0xff]
  %v9834 = vld [vmem:[%s6 + $0x58] sm:$0xff]
  %v9835 = vld [vmem:[%s6 + $0x60] sm:$0xff]
  %v9836 = vld [vmem:[%s6 + $0x68] sm:$0xff]
  %v9837 = vld [vmem:[%s6 + $0x70] sm:$0xff]
  %v9838 = vld [vmem:[%s6 + $0x78] sm:$0xff]
  %9840 = vset.pattern.permute.xlu0 0
  %9841 = vperm.xlu0 %9840, %v9823
  %v9842 = vpop.permute.xlu0 %9841
  %9845 = vset.pattern.permute.xlu0 0
  %9846 = vperm.xlu0 %9845, %v9824
  %v9847 = vpop.permute.xlu0 %9846
  %9850 = vset.pattern.permute.xlu0 0
  %9851 = vperm.xlu0 %9850, %v9825
  %v9852 = vpop.permute.xlu0 %9851
  %9855 = vset.pattern.permute.xlu0 0
  %9856 = vperm.xlu0 %9855, %v9826
  %v9857 = vpop.permute.xlu0 %9856
  %9860 = vset.pattern.permute.xlu0 0
  %9861 = vperm.xlu0 %9860, %v9827
  %v9862 = vpop.permute.xlu0 %9861
  %9865 = vset.pattern.permute.xlu0 0
  %9866 = vperm.xlu0 %9865, %v9828
  %v9867 = vpop.permute.xlu0 %9866
  %9870 = vset.pattern.permute.xlu0 0
  %9871 = vperm.xlu0 %9870, %v9829
  %v9872 = vpop.permute.xlu0 %9871
  %9875 = vset.pattern.permute.xlu0 0
  %9876 = vperm.xlu0 %9875, %v9830
  %v9877 = vpop.permute.xlu0 %9876
  %9880 = vset.pattern.permute.xlu0 0
  %9881 = vperm.xlu0 %9880, %v9831
  %v9882 = vpop.permute.xlu0 %9881
  %9885 = vset.pattern.permute.xlu0 0
  %9886 = vperm.xlu0 %9885, %v9832
  %v9887 = vpop.permute.xlu0 %9886
  %9890 = vset.pattern.permute.xlu0 0
  %9891 = vperm.xlu0 %9890, %v9833
  %v9892 = vpop.permute.xlu0 %9891
  %9895 = vset.pattern.permute.xlu0 0
  %9896 = vperm.xlu0 %9895, %v9834
  %v9897 = vpop.permute.xlu0 %9896
  %9900 = vset.pattern.permute.xlu0 0
  %9901 = vperm.xlu0 %9900, %v9835
  %v9902 = vpop.permute.xlu0 %9901
  %9905 = vset.pattern.permute.xlu0 0
  %9906 = vperm.xlu0 %9905, %v9836
  %v9907 = vpop.permute.xlu0 %9906
  %9910 = vset.pattern.permute.xlu0 0
  %9911 = vperm.xlu0 %9910, %v9837
  %v9912 = vpop.permute.xlu0 %9911
  %9915 = vset.pattern.permute.xlu0 0
  %9916 = vperm.xlu0 %9915, %v9838
  %v9917 = vpop.permute.xlu0 %9916
  %9919 = vmatprep.subr.mxu0 0.0
  %9920 = vmatpush1.msra.mxu0 %v9759
  %9921 = vmatprep.subr.mxu0 0.0
  %9922 = vmatpush1.msra.mxu0 %v9775
  %9923 = vmatprep.subr.mxu0 0.0
  %9924 = vmatpush1.msra.mxu0 %v9760
  %9925 = vmatprep.subr.mxu0 0.0
  %9926 = vmatpush1.msra.mxu0 %v9776
  %9927 = vmatprep.subr.mxu0 0.0
  %9928 = vmatpush1.msra.mxu0 %v9761
  %9929 = vmatprep.subr.mxu0 0.0
  %9930 = vmatpush1.msra.mxu0 %v9777
  %9931 = vmatprep.subr.mxu0 0.0
  %9932 = vmatpush1.msra.mxu0 %v9762
  %9933 = vmatprep.subr.mxu0 0.0
  %9934 = vmatpush1.msra.mxu0 %v9778
  %9935 = vmatprep.subr.mxu0 0.0
  %9936 = vmatpush1.msra.mxu0 %v9763
  %9937 = vmatprep.subr.mxu0 0.0
  %9938 = vmatpush1.msra.mxu0 %v9779
  %9939 = vmatprep.subr.mxu0 0.0
  %9940 = vmatpush1.msra.mxu0 %v9764
  %9941 = vmatprep.subr.mxu0 0.0
  %9942 = vmatpush1.msra.mxu0 %v9780
  %9943 = vmatprep.subr.mxu0 0.0
  %9944 = vmatpush1.msra.mxu0 %v9765
  %9945 = vmatprep.subr.mxu0 0.0
  %9946 = vmatpush1.msra.mxu0 %v9781
  %9947 = vmatprep.subr.mxu0 0.0
  %9948 = vmatpush1.msra.mxu0 %v9766
  %9949 = vmatprep.subr.mxu0 0.0
  %9950 = vmatpush1.msra.mxu0 %v9782
  %9951 = vmatprep.subr.mxu0 0.0
  %9952 = vmatpush1.msra.mxu0 %v9767
  %9953 = vmatprep.subr.mxu0 0.0
  %9954 = vmatpush1.msra.mxu0 %v9783
  %9955 = vmatprep.subr.mxu0 0.0
  %9956 = vmatpush1.msra.mxu0 %v9768
  %9957 = vmatprep.subr.mxu0 0.0
  %9958 = vmatpush1.msra.mxu0 %v9784
  %9959 = vmatprep.subr.mxu0 0.0
  %9960 = vmatpush1.msra.mxu0 %v9769
  %9961 = vmatprep.subr.mxu0 0.0
  %9962 = vmatpush1.msra.mxu0 %v9785
  %9963 = vmatprep.subr.mxu0 0.0
  %9964 = vmatpush1.msra.mxu0 %v9770
  %9965 = vmatprep.subr.mxu0 0.0
  %9966 = vmatpush1.msra.mxu0 %v9786
  %9967 = vmatprep.subr.mxu0 0.0
  %9968 = vmatpush1.msra.mxu0 %v9771
  %9969 = vmatprep.subr.mxu0 0.0
  %9970 = vmatpush1.msra.mxu0 %v9787
  %9971 = vmatprep.subr.mxu0 0.0
  %9972 = vmatpush1.msra.mxu0 %v9772
  %9973 = vmatprep.subr.mxu0 0.0
  %9974 = vmatpush1.msra.mxu0 %v9788
  %9975 = vmatprep.subr.mxu0 0.0
  %9976 = vmatpush1.msra.mxu0 %v9773
  %9977 = vmatprep.subr.mxu0 0.0
  %9978 = vmatpush1.msra.mxu0 %v9789
  %9979 = vmatprep.subr.mxu0 0.0
  %9980 = vmatpush1.msra.mxu0 %v9774
  %9981 = vmatprep.subr.mxu0 0.0
  %9982 = vmatpush1.msra.mxu0 %v9790
  %9983 = vmatprep.mubr.f32.mxu0 %v9792
  %9984 = vmatmul.mubr.f32.gmra.mrb[0].mxu0 %v9791
  %v9985 = vpop.f32.mrb[0].mxu0
  %v9986 = vadd.f32 %v9842, %v9985
  %v9987 = vpop.f32.mrb[0].mxu0
  %9988 = vmatprep.mubr.f32.mxu0 %v9794
  %9989 = vmatmul.mubr.f32.gmra.mrb[0].mxu0 %v9793
  %v9990 = vpop.f32.mrb[0].mxu0
  %v9991 = vadd.f32 %v9847, %v9990
  %v9992 = vpop.f32.mrb[0].mxu0
  %9993 = vmatprep.mubr.f32.mxu0 %v9796
  %9994 = vmatmul.mubr.f32.gmra.mrb[0].mxu0 %v9795
  %v9995 = vpop.f32.mrb[0].mxu0
  %v9996 = vadd.f32 %v9852, %v9995
  %v9997 = vpop.f32.mrb[0].mxu0
  %9998 = vmatprep.mubr.f32.mxu0 %v9798
  %9999 = vmatmul.mubr.f32.gmra.mrb[0].mxu0 %v9797
  %v10000 = vpop.f32.mrb[0].mxu0
  %v10001 = vadd.f32 %v9857, %v10000
  %v10002 = vpop.f32.mrb[0].mxu0
  %10003 = vmatprep.mubr.f32.mxu0 %v9800
  %10004 = vmatmul.mubr.f32.gmra.mrb[0].mxu0 %v9799
  %v10005 = vpop.f32.mrb[0].mxu0
  %v10006 = vadd.f32 %v9862, %v10005
  %v10007 = vpop.f32.mrb[0].mxu0
  %10008 = vmatprep.mubr.f32.mxu0 %v9802
  %10009 = vmatmul.mubr.f32.gmra.mrb[0].mxu0 %v9801
  %v10010 = vpop.f32.mrb[0].mxu0
  %v10011 = vadd.f32 %v9867, %v10010
  %v10012 = vpop.f32.mrb[0].mxu0
  %10013 = vmatprep.mubr.f32.mxu0 %v9804
  %10014 = vmatmul.mubr.f32.gmra.mrb[0].mxu0 %v9803
  %v10015 = vpop.f32.mrb[0].mxu0
  %v10016 = vadd.f32 %v9872, %v10015
  %v10017 = vpop.f32.mrb[0].mxu0
  %10018 = vmatprep.mubr.f32.mxu0 %v9806
  %10019 = vmatmul.mubr.f32.gmra.mrb[0].mxu0 %v9805
  %v10020 = vpop.f32.mrb[0].mxu0
  %v10021 = vadd.f32 %v9877, %v10020
  %v10022 = vpop.f32.mrb[0].mxu0
  %10023 = vmatprep.mubr.f32.mxu0 %v9808
  %10024 = vmatmul.mubr.f32.gmra.mrb[0].mxu0 %v9807
  %v10025 = vpop.f32.mrb[0].mxu0
  %v10026 = vadd.f32 %v9882, %v10025
  %v10027 = vpop.f32.mrb[0].mxu0
  %10028 = vmatprep.mubr.f32.mxu0 %v9810
  %10029 = vmatmul.mubr.f32.gmra.mrb[0].mxu0 %v9809
  %v10030 = vpop.f32.mrb[0].mxu0
  %v10031 = vadd.f32 %v9887, %v10030
  %v10032 = vpop.f32.mrb[0].mxu0
  %10033 = vmatprep.mubr.f32.mxu0 %v9812
  %10034 = vmatmul.mubr.f32.gmra.mrb[0].mxu0 %v9811
  %v10035 = vpop.f32.mrb[0].mxu0
  %v10036 = vadd.f32 %v9892, %v10035
  %v10037 = vpop.f32.mrb[0].mxu0
  %10038 = vmatprep.mubr.f32.mxu0 %v9814
  %10039 = vmatmul.mubr.f32.gmra.mrb[0].mxu0 %v9813
  %v10040 = vpop.f32.mrb[0].mxu0
  %v10041 = vadd.f32 %v9897, %v10040
  %v10042 = vpop.f32.mrb[0].mxu0
  %10043 = vmatprep.mubr.f32.mxu0 %v9816
  %10044 = vmatmul.mubr.f32.gmra.mrb[0].mxu0 %v9815
  %v10045 = vpop.f32.mrb[0].mxu0
  %v10046 = vadd.f32 %v9902, %v10045
  %v10047 = vpop.f32.mrb[0].mxu0
  %10048 = vmatprep.mubr.f32.mxu0 %v9818
  %10049 = vmatmul.mubr.f32.gmra.mrb[0].mxu0 %v9817
  %v10050 = vpop.f32.mrb[0].mxu0
  %v10051 = vadd.f32 %v9907, %v10050
  %v10052 = vpop.f32.mrb[0].mxu0
  %10053 = vmatprep.mubr.f32.mxu0 %v9820
  %10054 = vmatmul.mubr.f32.gmra.mrb[0].mxu0 %v9819
  %v10055 = vpop.f32.mrb[0].mxu0
  %v10056 = vadd.f32 %v9912, %v10055
  %v10057 = vpop.f32.mrb[0].mxu0
  %10058 = vmatprep.mubr.f32.mxu0 %v9822
  %10059 = vmatmul.mubr.f32.gmra.mrb[0].mxu0 %v9821
  %v10060 = vpop.f32.mrb[0].mxu0
  %v10061 = vadd.f32 %v9917, %v10060
  %v10062 = vpop.f32.mrb[0].mxu0
  %10063 = vdwg.mxu0
  %v10064 = vmax.f32 %v9986, 0.0
  %v10065 = vmax.f32 %v9991, 0.0
  %v10066 = vmax.f32 %v9996, 0.0
  %v10067 = vmax.f32 %v10001, 0.0
  %v10068 = vmax.f32 %v10006, 0.0
  %v10069 = vmax.f32 %v10011, 0.0
  %v10070 = vmax.f32 %v10016, 0.0
  %v10071 = vmax.f32 %v10021, 0.0
  %v10072 = vmax.f32 %v10026, 0.0
  %v10073 = vmax.f32 %v10031, 0.0
  %v10074 = vmax.f32 %v10036, 0.0
  %v10075 = vmax.f32 %v10041, 0.0
  %v10076 = vmax.f32 %v10046, 0.0
  %v10077 = vmax.f32 %v10051, 0.0
  %v10078 = vmax.f32 %v10056, 0.0
  %v10079 = vmax.f32 %v10061, 0.0
  %v10080 = vld [vmem:[%s7] sm:$0xff]
  %v10081 = vld [vmem:[%s7 + $0x8] sm:$0x3]
  %v10082 = vld [vmem:[%s8] sm:$0xff]
  %v10083 = vld [vmem:[%s8 + $0x8] sm:$0x3]
  %10085 = vset.pattern.permute.xlu0 0
  %10086 = vperm.xlu0 %10085, %v10082
  %v10087 = vpop.permute.xlu0 %10086
  %10090 = vset.pattern.permute.xlu0 0
  %10091 = vperm.xlu0 %10090, %v10083
  %v10092 = vpop.permute.xlu0 %10091
  %10094 = vmatprep.subr.mxu0 0.0
  %10095 = vmatpush1.msra.mxu0 %v10064
  %10096 = vmatprep.subr.mxu0 0.0
  %10097 = vmatpush1.msra.mxu0 %v10065
  %10098 = vmatprep.subr.mxu0 0.0
  %10099 = vmatpush1.msra.mxu0 %v10066
  %10100 = vmatprep.subr.mxu0 0.0
  %10101 = vmatpush1.msra.mxu0 %v10067
  %10102 = vmatprep.subr.mxu0 0.0
  %10103 = vmatpush1.msra.mxu0 %v10068
  %10104 = vmatprep.subr.mxu0 0.0
  %10105 = vmatpush1.msra.mxu0 %v10069
  %10106 = vmatprep.subr.mxu0 0.0
  %10107 = vmatpush1.msra.mxu0 %v10070
  %10108 = vmatprep.subr.mxu0 0.0
  %10109 = vmatpush1.msra.mxu0 %v10071
  %10110 = vmatprep.subr.mxu0 0.0
  %10111 = vmatpush1.msra.mxu0 %v10072
  %10112 = vmatprep.subr.mxu0 0.0
  %10113 = vmatpush1.msra.mxu0 %v10073
  %10114 = vmatprep.subr.mxu0 0.0
  %10115 = vmatpush1.msra.mxu0 %v10074
  %10116 = vmatprep.subr.mxu0 0.0
  %10117 = vmatpush1.msra.mxu0 %v10075
  %10118 = vmatprep.subr.mxu0 0.0
  %10119 = vmatpush1.msra.mxu0 %v10076
  %10120 = vmatprep.subr.mxu0 0.0
  %10121 = vmatpush1.msra.mxu0 %v10077
  %10122 = vmatprep.subr.mxu0 0.0
  %10123 = vmatpush1.msra.mxu0 %v10078
  %10124 = vmatprep.subr.mxu0 0.0
  %10125 = vmatpush1.msra.mxu0 %v10079
  %10126 = vmatprep.subr.mxu0 0.0
  %10127 = vmatpush1.msra.mxu0 0.0
  %10128 = vmatprep.subr.mxu0 0.0
  %10129 = vmatpush1.msra.mxu0 0.0
  %10130 = vmatprep.subr.mxu0 0.0
  %10131 = vmatpush1.msra.mxu0 0.0
  %10132 = vmatprep.subr.mxu0 0.0
  %10133 = vmatpush1.msra.mxu0 0.0
  %10134 = vmatprep.subr.mxu0 0.0
  %10135 = vmatpush1.msra.mxu0 0.0
  %10136 = vmatprep.subr.mxu0 0.0
  %10137 = vmatpush1.msra.mxu0 0.0
  %10138 = vmatprep.subr.mxu0 0.0
  %10139 = vmatpush1.msra.mxu0 0.0
  %10140 = vmatprep.subr.mxu0 0.0
  %10141 = vmatpush1.msra.mxu0 0.0
  %10142 = vmatprep.subr.mxu0 0.0
  %10143 = vmatpush1.msra.mxu0 0.0
  %10144 = vmatprep.subr.mxu0 0.0
  %10145 = vmatpush1.msra.mxu0 0.0
  %10146 = vmatprep.subr.mxu0 0.0
  %10147 = vmatpush1.msra.mxu0 0.0
  %10148 = vmatprep.subr.mxu0 0.0
  %10149 = vmatpush1.msra.mxu0 0.0
  %10150 = vmatprep.subr.mxu0 0.0
  %10151 = vmatpush1.msra.mxu0 0.0
  %10152 = vmatprep.subr.mxu0 0.0
  %10153 = vmatpush1.msra.mxu0 0.0
  %10154 = vmatprep.subr.mxu0 0.0
  %10155 = vmatpush1.msra.mxu0 0.0
  %10156 = vmatprep.subr.mxu0 0.0
  %10157 = vmatpush1.msra.mxu0 0.0
  %10158 = vmatprep.mubr.f32.mxu0 0.0
  %10159 = vmatmul.mubr.f32.gmra.mrb[0].mxu0 %v10080
  %v10160 = vpop.f32.mrb[0].mxu0
  %v10161 = vadd.f32 %v10087, %v10160
  %v10162 = vpop.f32.mrb[0].mxu0
  %10163 = vmatprep.mubr.f32.mxu0 0.0
  %10164 = vmatmul.mubr.f32.gmra.mrb[0].mxu0 %v10081
  %v10165 = vpop.f32.mrb[0].mxu0
  %v10166 = vadd.f32 %v10092, %v10165
  %v10167 = vpop.f32.mrb[0].mxu0
  %10168 = vdwg.mxu0
  %vm10169 = vcmask 1041408
  %v10170 = vsel %vm10169, %v10166, -inf
  %v10171 = vmax.f32 %v10161, %v10170
  %v10172 = vrot.slane %v10171, 4
  %v10173 = vmax.f32 %v10171, %v10172
  %v10174 = vrot.slane %v10173, 2
  %v10175 = vmax.f32 %v10173, %v10174
  %v10176 = vrot.slane %v10175, 1
  %v10177 = vmax.f32 %v10175, %v10176
  %v10178 = vsub.f32 %v10161, %v10177
  %v10179 = vsub.f32 %v10166, %v10177
  %v10180 = vmul.f32 %v10178, 1.442695
  %v10181 = vpow.pop %v10180
  %v10182 = vmul.f32 %v10179, 1.442695
  %v10183 = vpow.pop %v10182
  %v10184 = vsel %vm10169, %v10183, 0.0
  %v10185 = vadd.f32 %v10181, %v10184
  %v10186 = vrot.slane %v10185, 4
  %v10187 = vadd.f32 %v10185, %v10186
  %v10188 = vrot.slane %v10187, 2
  %v10189 = vadd.f32 %v10187, %v10188
  %v10190 = vrot.slane %v10189, 1
  %v10191 = vadd.f32 %v10189, %v10190
  %v10192 = vrcp.pop %v10191
  %v10193 = vmul.f32 %v10181, %v10192
  %v10194 = vmul.f32 %v10183, %v10192
  %10195 = vst [vmem:[%s9] sm:$0xff] %v10193
  %10196 = vst [vmem:[%s9 + $0x8] sm:$0x3] %v10194
  // Predicated region
  $region38: #{nn_forward.1} parent=0 // pred_check
    _
  $region39: #{nn_forward.1} parent=0 // pred_check_branch
    %10198 = sbr.rel (0) target = $region41
  $region40: #{nn_forward.1} parent=0 // pred_region
    _
  $region41: #{nn_forward.1} parent=0 // pred_fallthru
    _
  // Predicated region
  $region42: #{nn_forward.1} parent=0 // pred_check
    _
  $region43: #{nn_forward.1} parent=0 // pred_check_branch
    %10200 = sbr.rel (0) target = $region45
  $region44: #{nn_forward.1} parent=0 // pred_region
    _
  $region45: #{nn_forward.1} parent=0 // pred_fallthru
    _

</llo_original>
